<compile_context>
chip_gen: v7x
topology: tpu7x:2x2x1
jax: 0.10.0
libtpu: 0.0.40
codegen_flags: <defaults>
</compile_context>

<pallas_src>
import functools

import jax
import jax.numpy as jnp
from jax import lax
from jax.experimental import pallas as pl
from jax.experimental.pallas import tpu as pltpu

EPS = 1e-5  # PyTorch BatchNorm2d default eps


# ----------------------------------------------------------------------------- kernel
def repvit_block_kernel(x_ref, w3l_ref, w3c_ref, w3r_ref, dw_ref,
                        wa_ref, ba_ref, wb_ref, bb_ref, o_ref, *, use_roll):
    f32 = jnp.float32
    shift = pltpu.roll if use_roll else jnp.roll

    _, H, W, C = x_ref.shape

    # Single load of the whole image plane; reused as the identity branch, the
    # centre tap and the source of every shifted tap.
    x = x_ref[0, :, :, :].astype(f32)                           # (H, W, C)

    # Vertical neighbours via a roll along H; the wrapped row (image border) is
    # zeroed with a static row mask (whole H is inside the block, so the border
    # rows are always rows 0 / H-1 -- no grid dependence, no halo DMAs).
    row = lax.broadcasted_iota(jnp.int32, (H, 1, 1), 0)
    x_up = jnp.where(row > 0, shift(x, 1, axis=0), 0.0)         # value of x[h-1]
    x_dn = jnp.where(row < H - 1, shift(x, -1, axis=0), 0.0)    # value of x[h+1]

    # Folded tap weights (W-edge masks already baked in at trace time).
    w3l = w3l_ref[...]                                          # (3, W, C)
    w3c = w3c_ref[...]                                          # (3, 1, C)
    w3r = w3r_ref[...]                                          # (3, W, C)
    dw = dw_ref[...]                                            # (2, C)

    # Folded identity + depthwise-1x1 branch + every RepVGGDW bias term.
    acc = x * dw[0:1, :] + dw[1:2, :]

    # Depthwise 3x3: 9 multiply-adds.  dx=+-1 via a (sublane) roll; the wrap at
    # the W border is killed by the pre-masked tap weights w3l / w3r.
    for ky, a in enumerate((x_up, x, x_dn)):
        acc = acc + shift(a, 1, axis=1) * w3l[ky]               # tap x[., w-1, .]
        acc = acc + a * w3c[ky]                                 # tap x[., w  , .]
        acc = acc + shift(a, -1, axis=1) * w3r[ky]              # tap x[., w+1, .]

    # acc == RepVGGDW output == token-mixer output (use_se=False -> Identity).
    y = acc.reshape(H * W, C)

    # Channel mixer: Residual(1x1 ConvBN -> ReLU -> 1x1 ConvBN), BN folded into
    # (C,CH)/(CH,C) matrices + bias rows.
    wa = wa_ref[...]
    wb = wb_ref[...]
    ba = ba_ref[...].astype(f32)
    bb = bb_ref[...].astype(f32)
    CH = wa.shape[-1]
    if C >= 128 and CH >= 128:
        # Real RepViT widths: lane-dense channels -> MXU matmuls with bf16 (or
        # whatever dtype the folded weights carry) operands, f32 accumulation.
        h = jnp.dot(y.astype(wa.dtype), wa,
                    preferred_element_type=jnp.float32) + ba
        h = jnp.maximum(h, 0.0)
        z = jnp.dot(h.astype(wb.dtype), wb,
                    preferred_element_type=jnp.float32) + bb
    else:
        # Tiny test widths (C=4, CH=8) do not fill an MXU tile: exact-f32 VPU path.
        waf = wa.astype(f32)
        wbf = wb.astype(f32)
        h = (y[:, :, None] * waf[None, :, :]).sum(axis=1) + ba
        h = jnp.maximum(h, 0.0)
        z = (h[:, :, None] * wbf[None, :, :]).sum(axis=1) + bb
    out = y + z

    o_ref[0, :, :, :] = out.reshape(H, W, C).astype(o_ref.dtype)


# ----------------------------------------------------------------------------- wrapper
def repvit_block_pallas(x, folded, *, use_roll=True):
    """x: (N, H, W, C) channels-last. Returns (N, H, W, C) in x.dtype.

    Whole-image H blocks (a full RepViT stage plane is <1 MB, easily inside VMEM
    with double buffering), grid over the batch only.  NHWC end-to-end: a
    PyTorch NCHW caller should transpose once at the model boundary.
    """
    N, H, W, C = x.shape
    CH = folded["wa_eff"].shape[1]

    # Trace-time: fold the W-edge validity masks into the left/right tap weights
    # so the kernel does no per-step iota / mask multiplies for the W border.
    w3 = folded["w3_eff"].astype(jnp.float32)                   # (3, 3, C)
    wcol = jnp.arange(W, dtype=jnp.int32).reshape(1, W, 1)
    mask_l = (wcol > 0).astype(jnp.float32)                     # tap w-1 invalid at w == 0
    mask_r = (wcol < W - 1).astype(jnp.float32)                 # tap w+1 invalid at w == W-1
    w3l = w3[:, 0:1, :] * mask_l                                # (3, W, C)
    w3c = w3[:, 1:2, :]                                         # (3, 1, C)
    w3r = w3[:, 2:3, :] * mask_r                                # (3, W, C)

    # Scoped-VMEM request: real working set (double-buffered I/O blocks, in-kernel
    # f32 intermediates, folded weights) with generous headroom, clamped well
    # below v7x's 64 MiB physical per-TC VMEM.
    itemsize = jnp.dtype(x.dtype).itemsize
    io_block = H * W * C * itemsize
    f32_plane = H * W * C * 4
    hid_plane = H * W * CH * 4
    w_bytes = sum(int(v.size) * jnp.dtype(v.dtype).itemsize
                  for v in (w3l, w3c, w3r, folded["dw_aff"], folded["wa_eff"],
                            folded["ba_eff"], folded["wb_eff"], folded["bb_eff"]))
    vmem_est = (4 * io_block + 10 * f32_plane + 3 * hid_plane
                + 2 * w_bytes + (2 << 20))
    vmem_limit = int(min(max(vmem_est, 16 << 20), 48 << 20))

    kernel = functools.partial(repvit_block_kernel, use_roll=use_roll)

    img = lambda n: (n, 0, 0, 0)
    c3 = lambda n: (0, 0, 0)
    c2 = lambda n: (0, 0)

    # TODO(synk): for stages whose C is not a multiple of 128 (C=48/96) a
    # lane-dense (N, H, W*C) I/O layout would avoid masked partial stores.
    return pl.pallas_call(
        kernel,
        out_shape=jax.ShapeDtypeStruct((N, H, W, C), x.dtype),
        grid_spec=pltpu.PrefetchScalarGridSpec(
            num_scalar_prefetch=0,
            grid=(N,),                                          # >=2 parallel iters for v7x when N>=2
            in_specs=[
                pl.BlockSpec((1, H, W, C), img),                # whole image plane
                pl.BlockSpec((3, W, C), c3),                    # left taps (edge-masked)
                pl.BlockSpec((3, 1, C), c3),                    # centre taps
                pl.BlockSpec((3, W, C), c3),                    # right taps (edge-masked)
                pl.BlockSpec((2, C), c2),                       # [scale_x ; bias_y]
                pl.BlockSpec((C, CH), c2),                      # folded 1x1 #1 weight
                pl.BlockSpec((1, CH), c2),                      # folded 1x1 #1 bias
                pl.BlockSpec((CH, C), c2),                      # folded 1x1 #2 weight
                pl.BlockSpec((1, C), c2),                       # folded 1x1 #2 bias
            ],
            out_specs=pl.BlockSpec((1, H, W, C), img),
        ),
        compiler_params=pltpu.CompilerParams(
            dimension_semantics=("parallel",),
            vmem_limit_bytes=vmem_limit),
    )(x, w3l, w3c, w3r, folded["dw_aff"], folded["wa_eff"],
      folded["ba_eff"], folded["wb_eff"], folded["bb_eff"])


# ----------------------------------------------------------------------------- param folding
def fold_params(raw, eps=EPS, mixer_dtype=jnp.float32):
    """Fold every eval-mode BN / 1x1-depthwise affine factor at trace time.

    mixer_dtype=bf16 stores the channel-mixer matrices in bf16 (native MXU
    operands, half the weight DMA/VMEM); biases stay f32.
    """
    s1 = raw["bn1_g"] / jnp.sqrt(raw["bn1_v"] + eps)
    s2 = raw["bn2_g"] / jnp.sqrt(raw["bn2_v"] + eps)
    w3_eff = raw["w3"] * (s1 * s2)[None, None, :]                              # (3,3,C)
    scale_x = (raw["c1_w"] + 1.0) * s2
    bias_y = ((raw["bn1_b"] - raw["bn1_m"] * s1 + raw["c1_b"]) * s2
              + raw["bn2_b"] - raw["bn2_m"] * s2)
    sa = raw["bna_g"] / jnp.sqrt(raw["bna_v"] + eps)
    sb = raw["bnb_g"] / jnp.sqrt(raw["bnb_v"] + eps)
    f32 = jnp.float32
    return {
        "w3_eff": w3_eff.astype(f32),
        "dw_aff": jnp.stack([scale_x, bias_y], axis=0).astype(f32),            # (2,C)
        "wa_eff": (raw["wa"] * sa[:, None]).T.astype(mixer_dtype),             # (C,2C)
        "ba_eff": (raw["bna_b"] - raw["bna_m"] * sa)[None, :].astype(f32),     # (1,2C)
        "wb_eff": (raw["wb"] * sb[:, None]).T.astype(mixer_dtype),             # (2C,C)
        "bb_eff": (raw["bnb_b"] - raw["bnb_m"] * sb)[None, :].astype(f32),     # (1,C)
    }


def make_raw_params(key, chn):
    """Synthetic eval-mode parameters (shapes follow RepViTBlock(stride=1)).

    BN params that PyTorch initializes to constants (1/0, and 0 for the
    bn_weight_init=0 branch) are randomized so the test exercises every
    folded term; the forward math is unchanged.  The 1x1 weights are scaled
    by 1/sqrt(fan_in) so magnitudes stay moderate at large channel counts.
    """
    hid = 2 * chn
    ks = jax.random.split(key, 21)
    nrm = lambda k, shape, s: s * jax.random.normal(k, shape, jnp.float32)
    uni = lambda k, shape: jax.random.uniform(k, shape, jnp.float32, 0.7, 1.3)
    var = lambda k, shape: jax.random.uniform(k, shape, jnp.float32, 0.5, 1.5)
    return {
        # RepVGGDW: ConvBN(3x3 dw) + Conv2d(1x1 dw, bias) + BatchNorm2d
        "w3": nrm(ks[0], (3, 3, chn), 0.2),
        "bn1_g": uni(ks[1], (chn,)), "bn1_b": nrm(ks[2], (chn,), 0.1),
        "bn1_m": nrm(ks[3], (chn,), 0.1), "bn1_v": var(ks[4], (chn,)),
        "c1_w": nrm(ks[5], (chn,), 0.2), "c1_b": nrm(ks[6], (chn,), 0.1),
        "bn2_g": uni(ks[7], (chn,)), "bn2_b": nrm(ks[8], (chn,), 0.1),
        "bn2_m": nrm(ks[9], (chn,), 0.1), "bn2_v": var(ks[10], (chn,)),
        # channel mixer: ConvBN(chn->2chn,1x1) -> ReLU -> ConvBN(2chn->chn,1x1)
        "wa": nrm(ks[11], (hid, chn), 1.0 / (chn ** 0.5)),
        "bna_g": uni(ks[12], (hid,)), "bna_b": nrm(ks[13], (hid,), 0.1),
        "bna_m": nrm(ks[14], (hid,), 0.1), "bna_v": var(ks[15], (hid,)),
        "wb": nrm(ks[16], (chn, hid), 1.0 / (hid ** 0.5)),
        "bnb_g": uni(ks[17], (chn,)), "bnb_b": nrm(ks[18], (chn,), 0.1),
        "bnb_m": nrm(ks[19], (chn,), 0.1), "bnb_v": var(ks[20], (chn,)),
    }


# ----------------------------------------------------------------------------- reference
def repvit_block_ref(x, raw, eps=EPS):
    """Pure-JAX NHWC reference using the *unfolded* PyTorch formulation."""
    C = x.shape[-1]
    x = x.astype(jnp.float32)
    hp = lax.Precision.HIGHEST

    def bn(t, g, b, m, v):
        return (t - m) * (g / jnp.sqrt(v + eps)) + b

    # token mixer: RepVGGDW (use_se=False -> Identity afterwards)
    k3 = raw["w3"].reshape(3, 3, 1, C)
    conv = lax.conv_general_dilated(
        x, k3, (1, 1), ((1, 1), (1, 1)),
        dimension_numbers=("NHWC", "HWIO", "NHWC"),
        feature_group_count=C, precision=hp)
    t = bn(conv, raw["bn1_g"], raw["bn1_b"], raw["bn1_m"], raw["bn1_v"])
    u = x * raw["c1_w"] + raw["c1_b"]
    y = bn(t + u + x, raw["bn2_g"], raw["bn2_b"], raw["bn2_m"], raw["bn2_v"])

    # channel mixer: Residual(ConvBN 1x1 -> ReLU -> ConvBN 1x1)
    h = jnp.einsum("nhwc,dc->nhwd", y, raw["wa"], precision=hp)
    h = jnp.maximum(bn(h, raw["bna_g"], raw["bna_b"], raw["bna_m"], raw["bna_v"]), 0.0)
    z = jnp.einsum("nhwd,cd->nhwc", h, raw["wb"], precision=hp)
    z = bn(z, raw["bnb_g"], raw["bnb_b"], raw["bnb_m"], raw["bnb_v"])
    return y + z


# ----------------------------------------------------------------------------- test driver
def _run_verified(x_in, folded, ref, *, atol, rtol):
    """Try the XLU-roll fast path; fall back to jnp.roll shifts if this Mosaic
    build rejects (or mis-lowers) the rotate. Output is verified either way."""
    last_err = None
    for use_roll in (True, False):
        try:
            out = jax.block_until_ready(
                repvit_block_pallas(x_in, folded, use_roll=use_roll))
        except Exception as e:       # lowering failure -> try the fallback path
            last_err = e
            continue
        if jnp.allclose(out.astype(jnp.float32), ref, atol=atol, rtol=rtol):
            return out
        last_err = AssertionError("Pallas output does not match the reference")
    raise last_err


if __name__ == "__main__":
    key = jax.random.PRNGKey(0)
    k_x, k_p, k_x2, k_p2 = jax.random.split(key, 4)

    # ---- tiny widths: in_chn = out_chn = 4, hidden_dim = 8 (exact f32 VPU path)
    N, H, W, C = 2, 16, 16, 4
    x = jax.random.normal(k_x, (N, H, W, C), jnp.float32)      # channels-last (NHWC)
    raw = make_raw_params(k_p, C)
    folded = fold_params(raw)

    ref = repvit_block_ref(x, raw)
    out = _run_verified(x, folded, ref, atol=1e-4, rtol=1e-4)
    assert out.shape == (N, H, W, C)

    # ---- bf16 HBM I/O (f32 accumulation in-kernel): halves HBM traffic on this
    # memory-bound op; checked against an f32 reference at bf16-level tolerance.
    x_bf16 = x.astype(jnp.bfloat16)
    ref_bf16 = repvit_block_ref(x_bf16.astype(jnp.float32), raw)
    out_bf16 = _run_verified(x_bf16, folded, ref_bf16, atol=5e-2, rtol=5e-2)
    assert out_bf16.dtype == jnp.bfloat16

    # ---- realistic widths: C=128, hidden=256 -> exercises the MXU channel-mixer
    # path with bf16 operands / f32 accumulation.
    N2, H2, W2, C2 = 2, 8, 8, 128
    x2 = jax.random.normal(k_x2, (N2, H2, W2, C2), jnp.float32)
    raw2 = make_raw_params(k_p2, C2)
    folded2 = fold_params(raw2, mixer_dtype=jnp.bfloat16)
    ref2 = repvit_block_ref(x2, raw2)
    out2 = _run_verified(x2, folded2, ref2, atol=1e-1, rtol=3e-2)
    assert out2.shape == (N2, H2, W2, C2)

    # TODO(synk): SqueezeExcite (use_se=True), GELU (use_hs=True) and the
    # stride==2 token_mixer path are not implemented in this kernel.
    print("KERNEL_OK")
</pallas_src>

<mosaic_0001>
module attributes {stable_mosaic.version = 11 : i64} {
  func.func @repvit_block_kernel(%arg0: i32, %arg1: memref<1x16x16x4xf32, #tpu.memory_space<vmem>>, %arg2: memref<3x16x4xf32, #tpu.memory_space<vmem>>, %arg3: memref<3x1x4xf32, #tpu.memory_space<vmem>>, %arg4: memref<3x16x4xf32, #tpu.memory_space<vmem>>, %arg5: memref<2x4xf32, #tpu.memory_space<vmem>>, %arg6: memref<4x8xf32, #tpu.memory_space<vmem>>, %arg7: memref<1x8xf32, #tpu.memory_space<vmem>>, %arg8: memref<8x4xf32, #tpu.memory_space<vmem>>, %arg9: memref<1x4xf32, #tpu.memory_space<vmem>>, %arg10: memref<1x16x16x4xf32, #tpu.memory_space<vmem>>) attributes {dimension_semantics = [#tpu.dimension_semantics<parallel>], iteration_bounds = array<i64: 2>, scalar_prefetch = 0 : i64, scratch_operands = 0 : i64, tpu.core_type = #tpu.core_type<tc>, window_params = [{transform_indices = @transform_0, window_bounds = array<i64: 1, 16, 16, 4>}, {pipeline_mode = #tpu.pipeline_mode<synchronous>, transform_indices = @transform_1, window_bounds = array<i64: 3, 16, 4>}, {pipeline_mode = #tpu.pipeline_mode<synchronous>, transform_indices = @transform_2, window_bounds = array<i64: 3, 1, 4>}, {pipeline_mode = #tpu.pipeline_mode<synchronous>, transform_indices = @transform_3, window_bounds = array<i64: 3, 16, 4>}, {pipeline_mode = #tpu.pipeline_mode<synchronous>, transform_indices = @transform_4, window_bounds = array<i64: 2, 4>}, {pipeline_mode = #tpu.pipeline_mode<synchronous>, transform_indices = @transform_5, window_bounds = array<i64: 4, 8>}, {pipeline_mode = #tpu.pipeline_mode<synchronous>, transform_indices = @transform_6, window_bounds = array<i64: 1, 8>}, {pipeline_mode = #tpu.pipeline_mode<synchronous>, transform_indices = @transform_7, window_bounds = array<i64: 8, 4>}, {pipeline_mode = #tpu.pipeline_mode<synchronous>, transform_indices = @transform_8, window_bounds = array<i64: 1, 4>}, {transform_indices = @transform_9, window_bounds = array<i64: 1, 16, 16, 4>}]} {
    %c0 = arith.constant 0 : index
    %c0_0 = arith.constant 0 : index
    %c0_1 = arith.constant 0 : index
    %c0_2 = arith.constant 0 : index
    %0 = vector.load %arg1[%c0, %c0_0, %c0_1, %c0_2] : memref<1x16x16x4xf32, #tpu.memory_space<vmem>>, vector<1x16x16x4xf32>
    %1 = vector.shape_cast %0 : vector<1x16x16x4xf32> to vector<16x16x4xf32>
    %2 = tpu.iota {dimensions = array<i32: 0>} : vector<16x1x1xi32>
    %c0_i32 = arith.constant 0 : i32
    %3 = vector.broadcast %c0_i32 : i32 to vector<16x1x1xi32>
    %4 = arith.cmpi sgt, %2, %3 : vector<16x1x1xi32>
    %5 = vector.extract_strided_slice %1 {offsets = [15, 0, 0], sizes = [1, 16, 4], strides = [1, 1, 1]} : vector<16x16x4xf32> to vector<1x16x4xf32>
    %6 = vector.extract_strided_slice %1 {offsets = [0, 0, 0], sizes = [15, 16, 4], strides = [1, 1, 1]} : vector<16x16x4xf32> to vector<15x16x4xf32>
    %7 = tpu.concatenate %5, %6 in 0 : vector<1x16x4xf32>, vector<15x16x4xf32> -> vector<16x16x4xf32>
    %cst = arith.constant 0.000000e+00 : f32
    %8 = vector.shape_cast %4 : vector<16x1x1xi1> to vector<16x1x1xi1>
    %9 = vector.broadcast %8 : vector<16x1x1xi1> to vector<16x16x4xi1>
    %10 = vector.broadcast %cst : f32 to vector<16x16x4xf32>
    %11 = arith.select %9, %7, %10 : vector<16x16x4xi1>, vector<16x16x4xf32>
    %c15_i32 = arith.constant 15 : i32
    %12 = vector.broadcast %c15_i32 : i32 to vector<16x1x1xi32>
    %13 = arith.cmpi slt, %2, %12 : vector<16x1x1xi32>
    %14 = vector.extract_strided_slice %1 {offsets = [1, 0, 0], sizes = [15, 16, 4], strides = [1, 1, 1]} : vector<16x16x4xf32> to vector<15x16x4xf32>
    %15 = vector.extract_strided_slice %1 {offsets = [0, 0, 0], sizes = [1, 16, 4], strides = [1, 1, 1]} : vector<16x16x4xf32> to vector<1x16x4xf32>
    %16 = tpu.concatenate %14, %15 in 0 : vector<15x16x4xf32>, vector<1x16x4xf32> -> vector<16x16x4xf32>
    %cst_3 = arith.constant 0.000000e+00 : f32
    %17 = vector.shape_cast %13 : vector<16x1x1xi1> to vector<16x1x1xi1>
    %18 = vector.broadcast %17 : vector<16x1x1xi1> to vector<16x16x4xi1>
    %19 = vector.broadcast %cst_3 : f32 to vector<16x16x4xf32>
    %20 = arith.select %18, %16, %19 : vector<16x16x4xi1>, vector<16x16x4xf32>
    %c0_4 = arith.constant 0 : index
    %c0_5 = arith.constant 0 : index
    %c0_6 = arith.constant 0 : index
    %21 = vector.load %arg2[%c0_4, %c0_5, %c0_6] : memref<3x16x4xf32, #tpu.memory_space<vmem>>, vector<3x16x4xf32>
    %c0_7 = arith.constant 0 : index
    %c0_8 = arith.constant 0 : index
    %c0_9 = arith.constant 0 : index
    %22 = vector.load %arg3[%c0_7, %c0_8, %c0_9] : memref<3x1x4xf32, #tpu.memory_space<vmem>>, vector<3x1x4xf32>
    %c0_10 = arith.constant 0 : index
    %c0_11 = arith.constant 0 : index
    %c0_12 = arith.constant 0 : index
    %23 = vector.load %arg4[%c0_10, %c0_11, %c0_12] : memref<3x16x4xf32, #tpu.memory_space<vmem>>, vector<3x16x4xf32>
    %c0_13 = arith.constant 0 : index
    %c0_14 = arith.constant 0 : index
    %24 = vector.load %arg5[%c0_13, %c0_14] : memref<2x4xf32, #tpu.memory_space<vmem>>, vector<2x4xf32>
    %25 = vector.extract_strided_slice %24 {offsets = [0, 0], sizes = [1, 4], strides = [1, 1]} : vector<2x4xf32> to vector<1x4xf32>
    %26 = vector.shape_cast %25 : vector<1x4xf32> to vector<1x1x4xf32>
    %27 = vector.broadcast %26 : vector<1x1x4xf32> to vector<16x16x4xf32>
    %28 = arith.mulf %1, %27 : vector<16x16x4xf32>
    %29 = vector.extract_strided_slice %24 {offsets = [1, 0], sizes = [1, 4], strides = [1, 1]} : vector<2x4xf32> to vector<1x4xf32>
    %30 = vector.shape_cast %29 : vector<1x4xf32> to vector<1x1x4xf32>
    %31 = vector.broadcast %30 : vector<1x1x4xf32> to vector<16x16x4xf32>
    %32 = arith.addf %28, %31 : vector<16x16x4xf32>
    %33 = vector.extract_strided_slice %11 {offsets = [0, 15, 0], sizes = [16, 1, 4], strides = [1, 1, 1]} : vector<16x16x4xf32> to vector<16x1x4xf32>
    %34 = vector.extract_strided_slice %11 {offsets = [0, 0, 0], sizes = [16, 15, 4], strides = [1, 1, 1]} : vector<16x16x4xf32> to vector<16x15x4xf32>
    %35 = tpu.concatenate %33, %34 in 1 : vector<16x1x4xf32>, vector<16x15x4xf32> -> vector<16x16x4xf32>
    %36 = vector.extract_strided_slice %21 {offsets = [0, 0, 0], sizes = [1, 16, 4], strides = [1, 1, 1]} : vector<3x16x4xf32> to vector<1x16x4xf32>
    %37 = vector.shape_cast %36 : vector<1x16x4xf32> to vector<16x4xf32>
    %38 = vector.shape_cast %37 : vector<16x4xf32> to vector<1x16x4xf32>
    %39 = vector.broadcast %38 : vector<1x16x4xf32> to vector<16x16x4xf32>
    %40 = arith.mulf %35, %39 : vector<16x16x4xf32>
    %41 = arith.addf %32, %40 : vector<16x16x4xf32>
    %42 = vector.extract_strided_slice %22 {offsets = [0, 0, 0], sizes = [1, 1, 4], strides = [1, 1, 1]} : vector<3x1x4xf32> to vector<1x1x4xf32>
    %43 = vector.shape_cast %42 : vector<1x1x4xf32> to vector<1x4xf32>
    %44 = vector.shape_cast %43 : vector<1x4xf32> to vector<1x1x4xf32>
    %45 = vector.broadcast %44 : vector<1x1x4xf32> to vector<16x16x4xf32>
    %46 = arith.mulf %11, %45 : vector<16x16x4xf32>
    %47 = arith.addf %41, %46 : vector<16x16x4xf32>
    %48 = vector.extract_strided_slice %11 {offsets = [0, 1, 0], sizes = [16, 15, 4], strides = [1, 1, 1]} : vector<16x16x4xf32> to vector<16x15x4xf32>
    %49 = vector.extract_strided_slice %11 {offsets = [0, 0, 0], sizes = [16, 1, 4], strides = [1, 1, 1]} : vector<16x16x4xf32> to vector<16x1x4xf32>
    %50 = tpu.concatenate %48, %49 in 1 : vector<16x15x4xf32>, vector<16x1x4xf32> -> vector<16x16x4xf32>
    %51 = vector.extract_strided_slice %23 {offsets = [0, 0, 0], sizes = [1, 16, 4], strides = [1, 1, 1]} : vector<3x16x4xf32> to vector<1x16x4xf32>
    %52 = vector.shape_cast %51 : vector<1x16x4xf32> to vector<16x4xf32>
    %53 = vector.shape_cast %52 : vector<16x4xf32> to vector<1x16x4xf32>
    %54 = vector.broadcast %53 : vector<1x16x4xf32> to vector<16x16x4xf32>
    %55 = arith.mulf %50, %54 : vector<16x16x4xf32>
    %56 = arith.addf %47, %55 : vector<16x16x4xf32>
    %57 = vector.extract_strided_slice %1 {offsets = [0, 15, 0], sizes = [16, 1, 4], strides = [1, 1, 1]} : vector<16x16x4xf32> to vector<16x1x4xf32>
    %58 = vector.extract_strided_slice %1 {offsets = [0, 0, 0], sizes = [16, 15, 4], strides = [1, 1, 1]} : vector<16x16x4xf32> to vector<16x15x4xf32>
    %59 = tpu.concatenate %57, %58 in 1 : vector<16x1x4xf32>, vector<16x15x4xf32> -> vector<16x16x4xf32>
    %60 = vector.extract_strided_slice %21 {offsets = [1, 0, 0], sizes = [1, 16, 4], strides = [1, 1, 1]} : vector<3x16x4xf32> to vector<1x16x4xf32>
    %61 = vector.shape_cast %60 : vector<1x16x4xf32> to vector<16x4xf32>
    %62 = vector.shape_cast %61 : vector<16x4xf32> to vector<1x16x4xf32>
    %63 = vector.broadcast %62 : vector<1x16x4xf32> to vector<16x16x4xf32>
    %64 = arith.mulf %59, %63 : vector<16x16x4xf32>
    %65 = arith.addf %56, %64 : vector<16x16x4xf32>
    %66 = vector.extract_strided_slice %22 {offsets = [1, 0, 0], sizes = [1, 1, 4], strides = [1, 1, 1]} : vector<3x1x4xf32> to vector<1x1x4xf32>
    %67 = vector.shape_cast %66 : vector<1x1x4xf32> to vector<1x4xf32>
    %68 = vector.shape_cast %67 : vector<1x4xf32> to vector<1x1x4xf32>
    %69 = vector.broadcast %68 : vector<1x1x4xf32> to vector<16x16x4xf32>
    %70 = arith.mulf %1, %69 : vector<16x16x4xf32>
    %71 = arith.addf %65, %70 : vector<16x16x4xf32>
    %72 = vector.extract_strided_slice %1 {offsets = [0, 1, 0], sizes = [16, 15, 4], strides = [1, 1, 1]} : vector<16x16x4xf32> to vector<16x15x4xf32>
    %73 = vector.extract_strided_slice %1 {offsets = [0, 0, 0], sizes = [16, 1, 4], strides = [1, 1, 1]} : vector<16x16x4xf32> to vector<16x1x4xf32>
    %74 = tpu.concatenate %72, %73 in 1 : vector<16x15x4xf32>, vector<16x1x4xf32> -> vector<16x16x4xf32>
    %75 = vector.extract_strided_slice %23 {offsets = [1, 0, 0], sizes = [1, 16, 4], strides = [1, 1, 1]} : vector<3x16x4xf32> to vector<1x16x4xf32>
    %76 = vector.shape_cast %75 : vector<1x16x4xf32> to vector<16x4xf32>
    %77 = vector.shape_cast %76 : vector<16x4xf32> to vector<1x16x4xf32>
    %78 = vector.broadcast %77 : vector<1x16x4xf32> to vector<16x16x4xf32>
    %79 = arith.mulf %74, %78 : vector<16x16x4xf32>
    %80 = arith.addf %71, %79 : vector<16x16x4xf32>
    %81 = vector.extract_strided_slice %20 {offsets = [0, 15, 0], sizes = [16, 1, 4], strides = [1, 1, 1]} : vector<16x16x4xf32> to vector<16x1x4xf32>
    %82 = vector.extract_strided_slice %20 {offsets = [0, 0, 0], sizes = [16, 15, 4], strides = [1, 1, 1]} : vector<16x16x4xf32> to vector<16x15x4xf32>
    %83 = tpu.concatenate %81, %82 in 1 : vector<16x1x4xf32>, vector<16x15x4xf32> -> vector<16x16x4xf32>
    %84 = vector.extract_strided_slice %21 {offsets = [2, 0, 0], sizes = [1, 16, 4], strides = [1, 1, 1]} : vector<3x16x4xf32> to vector<1x16x4xf32>
    %85 = vector.shape_cast %84 : vector<1x16x4xf32> to vector<16x4xf32>
    %86 = vector.shape_cast %85 : vector<16x4xf32> to vector<1x16x4xf32>
    %87 = vector.broadcast %86 : vector<1x16x4xf32> to vector<16x16x4xf32>
    %88 = arith.mulf %83, %87 : vector<16x16x4xf32>
    %89 = arith.addf %80, %88 : vector<16x16x4xf32>
    %90 = vector.extract_strided_slice %22 {offsets = [2, 0, 0], sizes = [1, 1, 4], strides = [1, 1, 1]} : vector<3x1x4xf32> to vector<1x1x4xf32>
    %91 = vector.shape_cast %90 : vector<1x1x4xf32> to vector<1x4xf32>
    %92 = vector.shape_cast %91 : vector<1x4xf32> to vector<1x1x4xf32>
    %93 = vector.broadcast %92 : vector<1x1x4xf32> to vector<16x16x4xf32>
    %94 = arith.mulf %20, %93 : vector<16x16x4xf32>
    %95 = arith.addf %89, %94 : vector<16x16x4xf32>
    %96 = vector.extract_strided_slice %20 {offsets = [0, 1, 0], sizes = [16, 15, 4], strides = [1, 1, 1]} : vector<16x16x4xf32> to vector<16x15x4xf32>
    %97 = vector.extract_strided_slice %20 {offsets = [0, 0, 0], sizes = [16, 1, 4], strides = [1, 1, 1]} : vector<16x16x4xf32> to vector<16x1x4xf32>
    %98 = tpu.concatenate %96, %97 in 1 : vector<16x15x4xf32>, vector<16x1x4xf32> -> vector<16x16x4xf32>
    %99 = vector.extract_strided_slice %23 {offsets = [2, 0, 0], sizes = [1, 16, 4], strides = [1, 1, 1]} : vector<3x16x4xf32> to vector<1x16x4xf32>
    %100 = vector.shape_cast %99 : vector<1x16x4xf32> to vector<16x4xf32>
    %101 = vector.shape_cast %100 : vector<16x4xf32> to vector<1x16x4xf32>
    %102 = vector.broadcast %101 : vector<1x16x4xf32> to vector<16x16x4xf32>
    %103 = arith.mulf %98, %102 : vector<16x16x4xf32>
    %104 = arith.addf %95, %103 : vector<16x16x4xf32>
    %105 = vector.shape_cast %104 : vector<16x16x4xf32> to vector<256x4xf32>
    %c0_15 = arith.constant 0 : index
    %c0_16 = arith.constant 0 : index
    %106 = vector.load %arg6[%c0_15, %c0_16] : memref<4x8xf32, #tpu.memory_space<vmem>>, vector<4x8xf32>
    %c0_17 = arith.constant 0 : index
    %c0_18 = arith.constant 0 : index
    %107 = vector.load %arg8[%c0_17, %c0_18] : memref<8x4xf32, #tpu.memory_space<vmem>>, vector<8x4xf32>
    %c0_19 = arith.constant 0 : index
    %c0_20 = arith.constant 0 : index
    %108 = vector.load %arg7[%c0_19, %c0_20] : memref<1x8xf32, #tpu.memory_space<vmem>>, vector<1x8xf32>
    %c0_21 = arith.constant 0 : index
    %c0_22 = arith.constant 0 : index
    %109 = vector.load %arg9[%c0_21, %c0_22] : memref<1x4xf32, #tpu.memory_space<vmem>>, vector<1x4xf32>
    %110 = vector.shape_cast %105 : vector<256x4xf32> to vector<256x4x1xf32>
    %111 = vector.shape_cast %106 : vector<4x8xf32> to vector<1x4x8xf32>
    %112 = vector.broadcast %110 : vector<256x4x1xf32> to vector<256x4x8xf32>
    %113 = vector.broadcast %111 : vector<1x4x8xf32> to vector<256x4x8xf32>
    %114 = arith.mulf %112, %113 : vector<256x4x8xf32>
    %cst_23 = arith.constant dense<0.000000e+00> : vector<256x8xf32>
    %115 = vector.multi_reduction <add>, %114, %cst_23 [1] : vector<256x4x8xf32> to vector<256x8xf32>
    %116 = vector.broadcast %108 : vector<1x8xf32> to vector<256x8xf32>
    %117 = arith.addf %115, %116 : vector<256x8xf32>
    %cst_24 = arith.constant 0.000000e+00 : f32
    %118 = vector.broadcast %cst_24 : f32 to vector<256x8xf32>
    %119 = arith.maximumf %117, %118 : vector<256x8xf32>
    %120 = vector.shape_cast %119 : vector<256x8xf32> to vector<256x8x1xf32>
    %121 = vector.shape_cast %107 : vector<8x4xf32> to vector<1x8x4xf32>
    %122 = vector.broadcast %120 : vector<256x8x1xf32> to vector<256x8x4xf32>
    %123 = vector.broadcast %121 : vector<1x8x4xf32> to vector<256x8x4xf32>
    %124 = arith.mulf %122, %123 : vector<256x8x4xf32>
    %cst_25 = arith.constant dense<0.000000e+00> : vector<256x4xf32>
    %125 = vector.multi_reduction <add>, %124, %cst_25 [1] : vector<256x8x4xf32> to vector<256x4xf32>
    %126 = vector.broadcast %109 : vector<1x4xf32> to vector<256x4xf32>
    %127 = arith.addf %125, %126 : vector<256x4xf32>
    %128 = arith.addf %105, %127 : vector<256x4xf32>
    %129 = vector.shape_cast %128 : vector<256x4xf32> to vector<16x16x4xf32>
    %c0_26 = arith.constant 0 : index
    %c0_27 = arith.constant 0 : index
    %c0_28 = arith.constant 0 : index
    %c0_29 = arith.constant 0 : index
    %130 = vector.load %arg10[%c0_26, %c0_27, %c0_28, %c0_29] : memref<1x16x16x4xf32, #tpu.memory_space<vmem>>, vector<1x16x16x4xf32>
    %131 = vector.shape_cast %130 : vector<1x16x16x4xf32> to vector<16x16x4xf32>
    %132 = vector.shape_cast %129 : vector<16x16x4xf32> to vector<1x16x16x4xf32>
    tpu.vector_store %arg10[%c0_26, %c0_27, %c0_28, %c0_29], %132 {strides = array<i32>} : memref<1x16x16x4xf32, #tpu.memory_space<vmem>>, vector<1x16x16x4xf32>,
    return
  }
  func.func @transform_0(%arg0: i32) -> (i32, i32, i32, i32) {
    %c0_i32 = arith.constant 0 : i32
    %c0_i32_0 = arith.constant 0 : i32
    %c0_i32_1 = arith.constant 0 : i32
    %c0_i32_2 = arith.constant 0 : i32
    return %arg0, %c0_i32, %c0_i32_0, %c0_i32_1 : i32, i32, i32, i32
  }
  func.func @transform_1(%arg0: i32) -> (i32, i32, i32) {
    %c0_i32 = arith.constant 0 : i32
    %c0_i32_0 = arith.constant 0 : i32
    %c0_i32_1 = arith.constant 0 : i32
    %c0_i32_2 = arith.constant 0 : i32
    return %c0_i32, %c0_i32_0, %c0_i32_1 : i32, i32, i32
  }
  func.func @transform_2(%arg0: i32) -> (i32, i32, i32) {
    %c0_i32 = arith.constant 0 : i32
    %c0_i32_0 = arith.constant 0 : i32
    %c0_i32_1 = arith.constant 0 : i32
    %c0_i32_2 = arith.constant 0 : i32
    return %c0_i32, %c0_i32_0, %c0_i32_1 : i32, i32, i32
  }
  func.func @transform_3(%arg0: i32) -> (i32, i32, i32) {
    %c0_i32 = arith.constant 0 : i32
    %c0_i32_0 = arith.constant 0 : i32
    %c0_i32_1 = arith.constant 0 : i32
    %c0_i32_2 = arith.constant 0 : i32
    return %c0_i32, %c0_i32_0, %c0_i32_1 : i32, i32, i32
  }
  func.func @transform_4(%arg0: i32) -> (i32, i32) {
    %c0_i32 = arith.constant 0 : i32
    %c0_i32_0 = arith.constant 0 : i32
    %c0_i32_1 = arith.constant 0 : i32
    return %c0_i32, %c0_i32_0 : i32, i32
  }
  func.func @transform_5(%arg0: i32) -> (i32, i32) {
    %c0_i32 = arith.constant 0 : i32
    %c0_i32_0 = arith.constant 0 : i32
    %c0_i32_1 = arith.constant 0 : i32
    return %c0_i32, %c0_i32_0 : i32, i32
  }
  func.func @transform_6(%arg0: i32) -> (i32, i32) {
    %c0_i32 = arith.constant 0 : i32
    %c0_i32_0 = arith.constant 0 : i32
    %c0_i32_1 = arith.constant 0 : i32
    return %c0_i32, %c0_i32_0 : i32, i32
  }
  func.func @transform_7(%arg0: i32) -> (i32, i32) {
    %c0_i32 = arith.constant 0 : i32
    %c0_i32_0 = arith.constant 0 : i32
    %c0_i32_1 = arith.constant 0 : i32
    return %c0_i32, %c0_i32_0 : i32, i32
  }
  func.func @transform_8(%arg0: i32) -> (i32, i32) {
    %c0_i32 = arith.constant 0 : i32
    %c0_i32_0 = arith.constant 0 : i32
    %c0_i32_1 = arith.constant 0 : i32
    return %c0_i32, %c0_i32_0 : i32, i32
  }
  func.func @transform_9(%arg0: i32) -> (i32, i32, i32, i32) {
    %c0_i32 = arith.constant 0 : i32
    %c0_i32_0 = arith.constant 0 : i32
    %c0_i32_1 = arith.constant 0 : i32
    %c0_i32_2 = arith.constant 0 : i32
    return %arg0, %c0_i32, %c0_i32_0, %c0_i32_1 : i32, i32, i32, i32
  }
}

</mosaic_0001>

<llo_original>
// kernel: tpu_custom_call.1
$region0: #{tpu_custom_call.1}
  #allocation0 [shape = 'u32[]', space=smem, size = 0x4, offset = 0x4, fixed_abs, tag = 'smem constant byte address 0x4 - core index']
  #allocation1 [shape = 'u32[144,128]{1,0:T(1,128)}', space=vmem, size = 0x12000, scoped, tag = 'internal scratch']
  %s0 = inlined_call_operand.vmem [shape: f32[2,16,16,4], index: 0, kind: input, shape index: {}]
  %s1 = inlined_call_operand.vmem [shape: f32[3,16,4], index: 1, kind: input, shape index: {}]
  %s2 = inlined_call_operand.vmem [shape: f32[3,1,4], index: 2, kind: input, shape index: {}]
  %s3 = inlined_call_operand.vmem [shape: f32[3,16,4], index: 3, kind: input, shape index: {}]
  %s4 = inlined_call_operand.vmem [shape: f32[2,4], index: 4, kind: input, shape index: {}]
  %s5 = inlined_call_operand.vmem [shape: f32[4,8], index: 5, kind: input, shape index: {}]
  %s6 = inlined_call_operand.vmem [shape: f32[1,8], index: 6, kind: input, shape index: {}]
  %s7 = inlined_call_operand.vmem [shape: f32[8,4], index: 7, kind: input, shape index: {}]
  %s8 = inlined_call_operand.vmem [shape: f32[1,4], index: 8, kind: input, shape index: {}]
  %s9 = inlined_call_operand.vmem [shape: f32[2,16,16,4], index: 9, kind: output, shape index: {}]
  %s10 = sld [smem:[#allocation0]]
  $region69: #{tpu_custom_call.1} parent=0
    _
  %s12 = ssub.s32 1, %s10
  %s13 = scalar_select 0, %s12, %s10
  loop: start=0, step=1, limit=4
  $region2: #{tpu_custom_call.1} parent=0 // loop_pre_header
    _
  $region3: #{tpu_custom_call.1} parent=0 // loop_header
    %s15 = sphi 0, %s19
    %p16 = scmp.ge.s32.totalorder %s15, 4
    %s25 = sphi 0, %s27
    %s28 = sphi 0, %s25
    %s29 = sphi 0, %s28
    %s45 = sphi 0, %s29
    %s49 = sphi 0, %s49
    %s51 = sphi 0, %s49
    %s52 = sphi 0, %s51
    %s66 = sphi 0, %s52
    %s70 = sphi 0, %s70
    %s72 = sphi 0, %s70
    %s73 = sphi 0, %s72
    %s87 = sphi 0, %s73
    %s91 = sphi 0, %s91
    %s93 = sphi 0, %s91
    %s94 = sphi 0, %s93
    %s108 = sphi 0, %s94
    %s112 = sphi 0, %s112
    %s114 = sphi 0, %s112
    %s115 = sphi 0, %s114
    %s129 = sphi 0, %s115
    %s133 = sphi 0, %s133
    %s135 = sphi 0, %s133
    %s136 = sphi 0, %s135
    %s150 = sphi 0, %s136
    %s154 = sphi 0, %s154
    %s156 = sphi 0, %s154
    %s157 = sphi 0, %s156
    %s171 = sphi 0, %s157
    %s175 = sphi 0, %s175
    %s177 = sphi 0, %s175
    %s178 = sphi 0, %s177
    %s192 = sphi 0, %s178
    %s196 = sphi 0, %s196
    %s198 = sphi 0, %s196
    %s199 = sphi 0, %s198
    %s213 = sphi 0, %s199
    %s219 = sphi 0, %s221
    %s222 = sphi 0, %s219
    %s223 = sphi 0, %s222
    %s239 = sphi 0, %s223
  $region4: #{tpu_custom_call.1} parent=0 // loop_header_branch
    %18 = sbr.rel (%p16) target = $region8
  $region5: #{tpu_custom_call.1} parent=0 // loop_body
    %s20 = ssub.s32 %s15, 1
    %s21 = ssub.s32 %s15, 2
    %s22 = sadd.s32 %s15, 1
    %s23 = ssub.s32 %s15, %s22
    %p24 = scmp.eq.s32.totalorder %s23, 0
    %s26 = sadd.s32 %s25, 1
    %s27 = scalar_select %p24, %s25, %s26
    %p30 = pneg %p24
    %p31 = scmp.eq.s32.totalorder %s15, 1
    %p32 = por %p30, %p31
    %p33 = scmp.ne.s32.totalorder %s25, %s28
    %p34 = scmp.eq.s32.totalorder %s15, 0
    %p35 = por %p33, %p34
    %p36 = scmp.ne.s32.totalorder %s25, %s28
    %p37 = scmp.eq.s32.totalorder %s20, 1
    %p38 = por %p36, %p37
    %p39 = scmp.ne.s32.totalorder %s28, %s29
    %p40 = scmp.eq.s32.totalorder %s20, 0
    %p41 = por %p39, %p40
    %p42 = scmp.ne.s32.totalorder %s28, %s29
    %p43 = scmp.eq.s32.totalorder %s21, 1
    %p44 = por %p42, %p43
    %p46 = scmp.ne.s32.totalorder %s29, %s45
    %p47 = scmp.eq.s32.totalorder %s21, 0
    %p48 = por %p46, %p47
    %s50 = sadd.s32 %s49, 1
    %p53 = scmp.eq.s32.totalorder %s15, 1
    %p54 = scmp.ne.s32.totalorder %s49, %s51
    %p55 = scmp.eq.s32.totalorder %s15, 0
    %p56 = por %p54, %p55
    %p57 = scmp.ne.s32.totalorder %s49, %s51
    %p58 = scmp.eq.s32.totalorder %s20, 1
    %p59 = por %p57, %p58
    %p60 = scmp.ne.s32.totalorder %s51, %s52
    %p61 = scmp.eq.s32.totalorder %s20, 0
    %p62 = por %p60, %p61
    %p63 = scmp.ne.s32.totalorder %s51, %s52
    %p64 = scmp.eq.s32.totalorder %s21, 1
    %p65 = por %p63, %p64
    %p67 = scmp.ne.s32.totalorder %s52, %s66
    %p68 = scmp.eq.s32.totalorder %s21, 0
    %p69 = por %p67, %p68
    %s71 = sadd.s32 %s70, 1
    %p74 = scmp.eq.s32.totalorder %s15, 1
    %p75 = scmp.ne.s32.totalorder %s70, %s72
    %p76 = scmp.eq.s32.totalorder %s15, 0
    %p77 = por %p75, %p76
    %p78 = scmp.ne.s32.totalorder %s70, %s72
    %p79 = scmp.eq.s32.totalorder %s20, 1
    %p80 = por %p78, %p79
    %p81 = scmp.ne.s32.totalorder %s72, %s73
    %p82 = scmp.eq.s32.totalorder %s20, 0
    %p83 = por %p81, %p82
    %p84 = scmp.ne.s32.totalorder %s72, %s73
    %p85 = scmp.eq.s32.totalorder %s21, 1
    %p86 = por %p84, %p85
    %p88 = scmp.ne.s32.totalorder %s73, %s87
    %p89 = scmp.eq.s32.totalorder %s21, 0
    %p90 = por %p88, %p89
    %s92 = sadd.s32 %s91, 1
    %p95 = scmp.eq.s32.totalorder %s15, 1
    %p96 = scmp.ne.s32.totalorder %s91, %s93
    %p97 = scmp.eq.s32.totalorder %s15, 0
    %p98 = por %p96, %p97
    %p99 = scmp.ne.s32.totalorder %s91, %s93
    %p100 = scmp.eq.s32.totalorder %s20, 1
    %p101 = por %p99, %p100
    %p102 = scmp.ne.s32.totalorder %s93, %s94
    %p103 = scmp.eq.s32.totalorder %s20, 0
    %p104 = por %p102, %p103
    %p105 = scmp.ne.s32.totalorder %s93, %s94
    %p106 = scmp.eq.s32.totalorder %s21, 1
    %p107 = por %p105, %p106
    %p109 = scmp.ne.s32.totalorder %s94, %s108
    %p110 = scmp.eq.s32.totalorder %s21, 0
    %p111 = por %p109, %p110
    %s113 = sadd.s32 %s112, 1
    %p116 = scmp.eq.s32.totalorder %s15, 1
    %p117 = scmp.ne.s32.totalorder %s112, %s114
    %p118 = scmp.eq.s32.totalorder %s15, 0
    %p119 = por %p117, %p118
    %p120 = scmp.ne.s32.totalorder %s112, %s114
    %p121 = scmp.eq.s32.totalorder %s20, 1
    %p122 = por %p120, %p121
    %p123 = scmp.ne.s32.totalorder %s114, %s115
    %p124 = scmp.eq.s32.totalorder %s20, 0
    %p125 = por %p123, %p124
    %p126 = scmp.ne.s32.totalorder %s114, %s115
    %p127 = scmp.eq.s32.totalorder %s21, 1
    %p128 = por %p126, %p127
    %p130 = scmp.ne.s32.totalorder %s115, %s129
    %p131 = scmp.eq.s32.totalorder %s21, 0
    %p132 = por %p130, %p131
    %s134 = sadd.s32 %s133, 1
    %p137 = scmp.eq.s32.totalorder %s15, 1
    %p138 = scmp.ne.s32.totalorder %s133, %s135
    %p139 = scmp.eq.s32.totalorder %s15, 0
    %p140 = por %p138, %p139
    %p141 = scmp.ne.s32.totalorder %s133, %s135
    %p142 = scmp.eq.s32.totalorder %s20, 1
    %p143 = por %p141, %p142
    %p144 = scmp.ne.s32.totalorder %s135, %s136
    %p145 = scmp.eq.s32.totalorder %s20, 0
    %p146 = por %p144, %p145
    %p147 = scmp.ne.s32.totalorder %s135, %s136
    %p148 = scmp.eq.s32.totalorder %s21, 1
    %p149 = por %p147, %p148
    %p151 = scmp.ne.s32.totalorder %s136, %s150
    %p152 = scmp.eq.s32.totalorder %s21, 0
    %p153 = por %p151, %p152
    %s155 = sadd.s32 %s154, 1
    %p158 = scmp.eq.s32.totalorder %s15, 1
    %p159 = scmp.ne.s32.totalorder %s154, %s156
    %p160 = scmp.eq.s32.totalorder %s15, 0
    %p161 = por %p159, %p160
    %p162 = scmp.ne.s32.totalorder %s154, %s156
    %p163 = scmp.eq.s32.totalorder %s20, 1
    %p164 = por %p162, %p163
    %p165 = scmp.ne.s32.totalorder %s156, %s157
    %p166 = scmp.eq.s32.totalorder %s20, 0
    %p167 = por %p165, %p166
    %p168 = scmp.ne.s32.totalorder %s156, %s157
    %p169 = scmp.eq.s32.totalorder %s21, 1
    %p170 = por %p168, %p169
    %p172 = scmp.ne.s32.totalorder %s157, %s171
    %p173 = scmp.eq.s32.totalorder %s21, 0
    %p174 = por %p172, %p173
    %s176 = sadd.s32 %s175, 1
    %p179 = scmp.eq.s32.totalorder %s15, 1
    %p180 = scmp.ne.s32.totalorder %s175, %s177
    %p181 = scmp.eq.s32.totalorder %s15, 0
    %p182 = por %p180, %p181
    %p183 = scmp.ne.s32.totalorder %s175, %s177
    %p184 = scmp.eq.s32.totalorder %s20, 1
    %p185 = por %p183, %p184
    %p186 = scmp.ne.s32.totalorder %s177, %s178
    %p187 = scmp.eq.s32.totalorder %s20, 0
    %p188 = por %p186, %p187
    %p189 = scmp.ne.s32.totalorder %s177, %s178
    %p190 = scmp.eq.s32.totalorder %s21, 1
    %p191 = por %p189, %p190
    %p193 = scmp.ne.s32.totalorder %s178, %s192
    %p194 = scmp.eq.s32.totalorder %s21, 0
    %p195 = por %p193, %p194
    %s197 = sadd.s32 %s196, 1
    %p200 = scmp.eq.s32.totalorder %s15, 1
    %p201 = scmp.ne.s32.totalorder %s196, %s198
    %p202 = scmp.eq.s32.totalorder %s15, 0
    %p203 = por %p201, %p202
    %p204 = scmp.ne.s32.totalorder %s196, %s198
    %p205 = scmp.eq.s32.totalorder %s20, 1
    %p206 = por %p204, %p205
    %p207 = scmp.ne.s32.totalorder %s198, %s199
    %p208 = scmp.eq.s32.totalorder %s20, 0
    %p209 = por %p207, %p208
    %p210 = scmp.ne.s32.totalorder %s198, %s199
    %p211 = scmp.eq.s32.totalorder %s21, 1
    %p212 = por %p210, %p211
    %p214 = scmp.ne.s32.totalorder %s199, %s213
    %p215 = scmp.eq.s32.totalorder %s21, 0
    %p216 = por %p214, %p215
    %s217 = ssub.s32 %s15, %s22
    %p218 = scmp.eq.s32.totalorder %s217, 0
    %s220 = sadd.s32 %s219, 1
    %s221 = scalar_select %p218, %s219, %s220
    %p224 = pneg %p218
    %p225 = scmp.eq.s32.totalorder %s15, 1
    %p226 = por %p224, %p225
    %p227 = scmp.ne.s32.totalorder %s219, %s222
    %p228 = scmp.eq.s32.totalorder %s15, 0
    %p229 = por %p227, %p228
    %p230 = scmp.ne.s32.totalorder %s219, %s222
    %p231 = scmp.eq.s32.totalorder %s20, 1
    %p232 = por %p230, %p231
    %p233 = scmp.ne.s32.totalorder %s222, %s223
    %p234 = scmp.eq.s32.totalorder %s20, 0
    %p235 = por %p233, %p234
    %p236 = scmp.ne.s32.totalorder %s222, %s223
    %p237 = scmp.eq.s32.totalorder %s21, 1
    %p238 = por %p236, %p237
    %p240 = scmp.ne.s32.totalorder %s223, %s239
    %p241 = scmp.eq.s32.totalorder %s21, 0
    %p242 = por %p240, %p241
    %p243 = scmp.le.s32.totalorder 1, %s15
    %p244 = scmp.lt.s32.totalorder %s15, 3
    %p245 = pnand %p243, %p244
    %p246 = pneg %p245
    // Predicated region
    $region9: #{tpu_custom_call.1} parent=5 // pred_check
      _
    $region10: #{tpu_custom_call.1} parent=5 // pred_check_branch
      %248 = sbr.rel (%p245) target = $region12
    $region11: #{tpu_custom_call.1} parent=5 // pred_region
      %s249 = ssub.s32 %s15, 1
      // Predicated region
      $region13: #{tpu_custom_call.1} parent=11 // pred_check
        %p250 = pneg %p62
      $region14: #{tpu_custom_call.1} parent=11 // pred_check_branch
        %252 = sbr.rel (%p250) target = $region16
      $region15: #{tpu_custom_call.1} parent=11 // pred_region
        _
      $region16: #{tpu_custom_call.1} parent=11 // pred_fallthru
        _
      // Predicated region
      $region17: #{tpu_custom_call.1} parent=11 // pred_check
        %p253 = pneg %p83
      $region18: #{tpu_custom_call.1} parent=11 // pred_check_branch
        %255 = sbr.rel (%p253) target = $region20
      $region19: #{tpu_custom_call.1} parent=11 // pred_region
        _
      $region20: #{tpu_custom_call.1} parent=11 // pred_fallthru
        _
      // Predicated region
      $region21: #{tpu_custom_call.1} parent=11 // pred_check
        %p256 = pneg %p104
      $region22: #{tpu_custom_call.1} parent=11 // pred_check_branch
        %258 = sbr.rel (%p256) target = $region24
      $region23: #{tpu_custom_call.1} parent=11 // pred_region
        _
      $region24: #{tpu_custom_call.1} parent=11 // pred_fallthru
        _
      // Predicated region
      $region25: #{tpu_custom_call.1} parent=11 // pred_check
        %p259 = pneg %p125
      $region26: #{tpu_custom_call.1} parent=11 // pred_check_branch
        %261 = sbr.rel (%p259) target = $region28
      $region27: #{tpu_custom_call.1} parent=11 // pred_region
        _
      $region28: #{tpu_custom_call.1} parent=11 // pred_fallthru
        _
      // Predicated region
      $region29: #{tpu_custom_call.1} parent=11 // pred_check
        %p262 = pneg %p146
      $region30: #{tpu_custom_call.1} parent=11 // pred_check_branch
        %264 = sbr.rel (%p262) target = $region32
      $region31: #{tpu_custom_call.1} parent=11 // pred_region
        _
      $region32: #{tpu_custom_call.1} parent=11 // pred_fallthru
        _
      // Predicated region
      $region33: #{tpu_custom_call.1} parent=11 // pred_check
        %p265 = pneg %p167
      $region34: #{tpu_custom_call.1} parent=11 // pred_check_branch
        %267 = sbr.rel (%p265) target = $region36
      $region35: #{tpu_custom_call.1} parent=11 // pred_region
        _
      $region36: #{tpu_custom_call.1} parent=11 // pred_fallthru
        _
      // Predicated region
      $region37: #{tpu_custom_call.1} parent=11 // pred_check
        %p268 = pneg %p188
      $region38: #{tpu_custom_call.1} parent=11 // pred_check_branch
        %270 = sbr.rel (%p268) target = $region40
      $region39: #{tpu_custom_call.1} parent=11 // pred_region
        _
      $region40: #{tpu_custom_call.1} parent=11 // pred_fallthru
        _
      // Predicated region
      $region41: #{tpu_custom_call.1} parent=11 // pred_check
        %p271 = pneg %p209
      $region42: #{tpu_custom_call.1} parent=11 // pred_check_branch
        %273 = sbr.rel (%p271) target = $region44
      $region43: #{tpu_custom_call.1} parent=11 // pred_region
        _
      $region44: #{tpu_custom_call.1} parent=11 // pred_fallthru
        _
    $region12: #{tpu_custom_call.1} parent=5 // pred_fallthru
      _
    %p274 = scmp.lt.s32.totalorder %s15, 2
    // Predicated region
    $region45: #{tpu_custom_call.1} parent=5 // pred_check
      %p275 = pneg %p274
    $region46: #{tpu_custom_call.1} parent=5 // pred_check_branch
      %277 = sbr.rel (%p275) target = $region48
    $region47: #{tpu_custom_call.1} parent=5 // pred_region
      // Predicated region
      $region49: #{tpu_custom_call.1} parent=47 // pred_check
        %p278 = pneg %p35
      $region50: #{tpu_custom_call.1} parent=47 // pred_check_branch
        %280 = sbr.rel (%p278) target = $region52
      $region51: #{tpu_custom_call.1} parent=47 // pred_region
        %p281 = scmp.lt.s32.totalorder %s15, 1
        %s282 = scalar_select %p281, %s15, 1
        %s283 = smul.addr %s282, 32
        %s284 = smul.addr %s283, 8
        %s285 = scalar_lea.vmem %s0, %s284
      $region52: #{tpu_custom_call.1} parent=47 // pred_fallthru
        _
    $region48: #{tpu_custom_call.1} parent=5 // pred_fallthru
      _
    %p286 = scmp.le.s32.totalorder 1, %s15
    %p287 = scmp.lt.s32.totalorder %s15, 3
    %p288 = pnand %p286, %p287
    %p289 = pneg %p288
    // Predicated region
    $region53: #{tpu_custom_call.1} parent=5 // pred_check
      _
    $region54: #{tpu_custom_call.1} parent=5 // pred_check_branch
      %291 = sbr.rel (%p288) target = $region56
    $region55: #{tpu_custom_call.1} parent=5 // pred_region
      %s292 = ssub.s32 %s15, 1
      %p293 = scmp.lt.s32.totalorder %s20, 1
      %s294 = scalar_select %p293, %s20, 1
      %s295 = smul.addr %s294, 32
      %s296 = smul.addr %s295, 8
      %s297 = scalar_lea.vmem %s0, %s296
      %p298 = pneg %p41
      %p299 = pneg %p38
      %p300 = pneg %p62
      %p301 = pneg %p59
      %p302 = pneg %p83
      %p303 = pneg %p80
      %p304 = pneg %p104
      %p305 = pneg %p101
      %p306 = pneg %p125
      %p307 = pneg %p122
      %p308 = pneg %p146
      %p309 = pneg %p143
      %p310 = pneg %p167
      %p311 = pneg %p164
      %p312 = pneg %p188
      %p313 = pneg %p185
      %p314 = pneg %p209
      %p315 = pneg %p206
      %p316 = pneg %p235
      %p317 = pneg %p232
      %p318 = scmp.lt.s32.totalorder %s20, 1
      %s319 = scalar_select %p318, %s20, 1
      %s320 = smul.addr %s319, 32
      %s321 = smul.addr %s320, 8
      %s322 = scalar_lea.vmem %s9, %s321
      %p323 = scmp.lt.s32.totalorder %s20, 1
      %s324 = scalar_select %p323, %s20, 1
      %s325 = smul.addr %s324, 32
      %s326 = smul.addr %s325, 8
      %s327 = scalar_lea.vmem %s0, %s326
      %p328 = scmp.lt.s32.totalorder %s20, 1
      %s329 = scalar_select %p328, %s20, 1
      %s330 = smul.addr %s329, 32
      %s331 = smul.addr %s330, 8
      %s332 = scalar_lea.vmem %s9, %s331
      %v333 = vld [vmem:[%s327] sm:$0xff]
      %v334 = vld [vmem:[%s327 + $0x8] sm:$0xff]
      %v335 = vld [vmem:[%s327 + $0x10] sm:$0xff]
      %v336 = vld [vmem:[%s327 + $0x18] sm:$0xff]
      %v337 = vld [vmem:[%s327 + $0x20] sm:$0xff]
      %v338 = vld [vmem:[%s327 + $0x28] sm:$0xff]
      %v339 = vld [vmem:[%s327 + $0x30] sm:$0xff]
      %v340 = vld [vmem:[%s327 + $0x38] sm:$0xff]
      %v341 = vld [vmem:[%s327 + $0x40] sm:$0xff]
      %v342 = vld [vmem:[%s327 + $0x48] sm:$0xff]
      %v343 = vld [vmem:[%s327 + $0x50] sm:$0xff]
      %v344 = vld [vmem:[%s327 + $0x58] sm:$0xff]
      %v345 = vld [vmem:[%s327 + $0x60] sm:$0xff]
      %v346 = vld [vmem:[%s327 + $0x68] sm:$0xff]
      %v347 = vld [vmem:[%s327 + $0x70] sm:$0xff]
      %v348 = vld [vmem:[%s327 + $0x78] sm:$0xff]
      %v349 = vld [vmem:[%s327 + $0x80] sm:$0xff]
      %v350 = vld [vmem:[%s327 + $0x88] sm:$0xff]
      %v351 = vld [vmem:[%s327 + $0x90] sm:$0xff]
      %v352 = vld [vmem:[%s327 + $0x98] sm:$0xff]
      %v353 = vld [vmem:[%s327 + $0xa0] sm:$0xff]
      %v354 = vld [vmem:[%s327 + $0xa8] sm:$0xff]
      %v355 = vld [vmem:[%s327 + $0xb0] sm:$0xff]
      %v356 = vld [vmem:[%s327 + $0xb8] sm:$0xff]
      %v357 = vld [vmem:[%s327 + $0xc0] sm:$0xff]
      %v358 = vld [vmem:[%s327 + $0xc8] sm:$0xff]
      %v359 = vld [vmem:[%s327 + $0xd0] sm:$0xff]
      %v360 = vld [vmem:[%s327 + $0xd8] sm:$0xff]
      %v361 = vld [vmem:[%s327 + $0xe0] sm:$0xff]
      %v362 = vld [vmem:[%s327 + $0xe8] sm:$0xff]
      %v363 = vld [vmem:[%s327 + $0xf0] sm:$0xff]
      %v364 = vld [vmem:[%s327 + $0xf8] sm:$0xff]
      %v365 = vsel 0, %v363, 0.0
      %v366 = vsel 0, %v364, 0.0
      %v367 = vsel 1, %v333, 0.0
      %v368 = vsel 1, %v334, 0.0
      %v369 = vsel 1, %v335, 0.0
      %v370 = vsel 1, %v336, 0.0
      %v371 = vsel 1, %v337, 0.0
      %v372 = vsel 1, %v338, 0.0
      %v373 = vsel 1, %v339, 0.0
      %v374 = vsel 1, %v340, 0.0
      %v375 = vsel 1, %v341, 0.0
      %v376 = vsel 1, %v342, 0.0
      %v377 = vsel 1, %v343, 0.0
      %v378 = vsel 1, %v344, 0.0
      %v379 = vsel 1, %v345, 0.0
      %v380 = vsel 1, %v346, 0.0
      %v381 = vsel 1, %v347, 0.0
      %v382 = vsel 1, %v348, 0.0
      %v383 = vsel 1, %v349, 0.0
      %v384 = vsel 1, %v350, 0.0
      %v385 = vsel 1, %v351, 0.0
      %v386 = vsel 1, %v352, 0.0
      %v387 = vsel 1, %v353, 0.0
      %v388 = vsel 1, %v354, 0.0
      %v389 = vsel 1, %v355, 0.0
      %v390 = vsel 1, %v356, 0.0
      %v391 = vsel 1, %v357, 0.0
      %v392 = vsel 1, %v358, 0.0
      %v393 = vsel 1, %v359, 0.0
      %v394 = vsel 1, %v360, 0.0
      %v395 = vsel 1, %v361, 0.0
      %v396 = vsel 1, %v362, 0.0
      %v397 = vsel 1, %v363, 0.0
      %v398 = vsel 1, %v364, 0.0
      %v399 = vsel 0, %v333, 0.0
      %v400 = vsel 0, %v334, 0.0
      %v401 = vld [vmem:[%s1] sm:$0xff]
      %v402 = vld [vmem:[%s1 + $0x8] sm:$0xff]
      %v403 = vld [vmem:[%s1 + $0x10] sm:$0xff]
      %v404 = vld [vmem:[%s1 + $0x18] sm:$0xff]
      %v405 = vld [vmem:[%s1 + $0x20] sm:$0xff]
      %v406 = vld [vmem:[%s1 + $0x28] sm:$0xff]
      %v407 = vld [vmem:[%s2] sm:$0x1]
      %v408 = vld [vmem:[%s2 + $0x1] sm:$0x1]
      %v409 = vld [vmem:[%s2 + $0x2] sm:$0x1]
      %v410 = vld [vmem:[%s3] sm:$0xff]
      %v411 = vld [vmem:[%s3 + $0x8] sm:$0xff]
      %v412 = vld [vmem:[%s3 + $0x10] sm:$0xff]
      %v413 = vld [vmem:[%s3 + $0x18] sm:$0xff]
      %v414 = vld [vmem:[%s3 + $0x20] sm:$0xff]
      %v415 = vld [vmem:[%s3 + $0x28] sm:$0xff]
      %v416 = vld [vmem:[%s4] sm:$0x3]
      %v417 = vlaneseq
      %v418 = vshrl.u32 %v417, 7
      %v419 = vsub.s32 0, %v418
      %v420 = vrot.slane %v416, %v419
      %v421 = vmul.f32 %v333, %v420
      %v422 = vmul.f32 %v334, %v420
      %v423 = vmul.f32 %v335, %v420
      %v424 = vmul.f32 %v336, %v420
      %v425 = vmul.f32 %v337, %v420
      %v426 = vmul.f32 %v338, %v420
      %v427 = vmul.f32 %v339, %v420
      %v428 = vmul.f32 %v340, %v420
      %v429 = vmul.f32 %v341, %v420
      %v430 = vmul.f32 %v342, %v420
      %v431 = vmul.f32 %v343, %v420
      %v432 = vmul.f32 %v344, %v420
      %v433 = vmul.f32 %v345, %v420
      %v434 = vmul.f32 %v346, %v420
      %v435 = vmul.f32 %v347, %v420
      %v436 = vmul.f32 %v348, %v420
      %v437 = vmul.f32 %v349, %v420
      %v438 = vmul.f32 %v350, %v420
      %v439 = vmul.f32 %v351, %v420
      %v440 = vmul.f32 %v352, %v420
      %v441 = vmul.f32 %v353, %v420
      %v442 = vmul.f32 %v354, %v420
      %v443 = vmul.f32 %v355, %v420
      %v444 = vmul.f32 %v356, %v420
      %v445 = vmul.f32 %v357, %v420
      %v446 = vmul.f32 %v358, %v420
      %v447 = vmul.f32 %v359, %v420
      %v448 = vmul.f32 %v360, %v420
      %v449 = vmul.f32 %v361, %v420
      %v450 = vmul.f32 %v362, %v420
      %v451 = vmul.f32 %v363, %v420
      %v452 = vmul.f32 %v364, %v420
      %v453 = vlaneseq
      %v454 = vshrl.u32 %v453, 7
      %v455 = vsub.s32 1, %v454
      %v456 = vrot.slane %v416, %v455
      %v457 = vadd.f32 %v421, %v456
      %v458 = vadd.f32 %v422, %v456
      %v459 = vadd.f32 %v423, %v456
      %v460 = vadd.f32 %v424, %v456
      %v461 = vadd.f32 %v425, %v456
      %v462 = vadd.f32 %v426, %v456
      %v463 = vadd.f32 %v427, %v456
      %v464 = vadd.f32 %v428, %v456
      %v465 = vadd.f32 %v429, %v456
      %v466 = vadd.f32 %v430, %v456
      %v467 = vadd.f32 %v431, %v456
      %v468 = vadd.f32 %v432, %v456
      %v469 = vadd.f32 %v433, %v456
      %v470 = vadd.f32 %v434, %v456
      %v471 = vadd.f32 %v435, %v456
      %v472 = vadd.f32 %v436, %v456
      %v473 = vadd.f32 %v437, %v456
      %v474 = vadd.f32 %v438, %v456
      %v475 = vadd.f32 %v439, %v456
      %v476 = vadd.f32 %v440, %v456
      %v477 = vadd.f32 %v441, %v456
      %v478 = vadd.f32 %v442, %v456
      %v479 = vadd.f32 %v443, %v456
      %v480 = vadd.f32 %v444, %v456
      %v481 = vadd.f32 %v445, %v456
      %v482 = vadd.f32 %v446, %v456
      %v483 = vadd.f32 %v447, %v456
      %v484 = vadd.f32 %v448, %v456
      %v485 = vadd.f32 %v449, %v456
      %v486 = vadd.f32 %v450, %v456
      %v487 = vadd.f32 %v451, %v456
      %v488 = vadd.f32 %v452, %v456
      %v505 = vrot.slane %v366, 7
      %v506 = vrot.slane %v368, 7
      %v507 = vrot.slane %v370, 7
      %v508 = vrot.slane %v372, 7
      %v509 = vrot.slane %v374, 7
      %v510 = vrot.slane %v376, 7
      %v511 = vrot.slane %v378, 7
      %v512 = vrot.slane %v380, 7
      %v513 = vrot.slane %v382, 7
      %v514 = vrot.slane %v384, 7
      %v515 = vrot.slane %v386, 7
      %v516 = vrot.slane %v388, 7
      %v517 = vrot.slane %v390, 7
      %v518 = vrot.slane %v392, 7
      %v519 = vrot.slane %v394, 7
      %v520 = vrot.slane %v396, 7
      %vm553 = vcmask 1040384
      %v554 = vrot.slane %v365, 7
      %v555 = vsel %vm553, %v554, %v505
      %v556 = vrot.slane %v367, 7
      %v557 = vsel %vm553, %v556, %v506
      %v558 = vrot.slane %v369, 7
      %v559 = vsel %vm553, %v558, %v507
      %v560 = vrot.slane %v371, 7
      %v561 = vsel %vm553, %v560, %v508
      %v562 = vrot.slane %v373, 7
      %v563 = vsel %vm553, %v562, %v509
      %v564 = vrot.slane %v375, 7
      %v565 = vsel %vm553, %v564, %v510
      %v566 = vrot.slane %v377, 7
      %v567 = vsel %vm553, %v566, %v511
      %v568 = vrot.slane %v379, 7
      %v569 = vsel %vm553, %v568, %v512
      %v570 = vrot.slane %v381, 7
      %v571 = vsel %vm553, %v570, %v513
      %v572 = vrot.slane %v383, 7
      %v573 = vsel %vm553, %v572, %v514
      %v574 = vrot.slane %v385, 7
      %v575 = vsel %vm553, %v574, %v515
      %v576 = vrot.slane %v387, 7
      %v577 = vsel %vm553, %v576, %v516
      %v578 = vrot.slane %v389, 7
      %v579 = vsel %vm553, %v578, %v517
      %v580 = vrot.slane %v391, 7
      %v581 = vsel %vm553, %v580, %v518
      %v582 = vrot.slane %v393, 7
      %v583 = vsel %vm553, %v582, %v519
      %v584 = vrot.slane %v395, 7
      %v585 = vsel %vm553, %v584, %v520
      %v618 = vsel %vm553, %v505, %v554
      %v619 = vsel %vm553, %v506, %v556
      %v620 = vsel %vm553, %v507, %v558
      %v621 = vsel %vm553, %v508, %v560
      %v622 = vsel %vm553, %v509, %v562
      %v623 = vsel %vm553, %v510, %v564
      %v624 = vsel %vm553, %v511, %v566
      %v625 = vsel %vm553, %v512, %v568
      %v626 = vsel %vm553, %v513, %v570
      %v627 = vsel %vm553, %v514, %v572
      %v628 = vsel %vm553, %v515, %v574
      %v629 = vsel %vm553, %v516, %v576
      %v630 = vsel %vm553, %v517, %v578
      %v631 = vsel %vm553, %v518, %v580
      %v632 = vsel %vm553, %v519, %v582
      %v633 = vsel %vm553, %v520, %v584
      %v634 = vmul.f32 %v618, %v401
      %v635 = vmul.f32 %v555, %v402
      %v636 = vmul.f32 %v619, %v401
      %v637 = vmul.f32 %v557, %v402
      %v638 = vmul.f32 %v620, %v401
      %v639 = vmul.f32 %v559, %v402
      %v640 = vmul.f32 %v621, %v401
      %v641 = vmul.f32 %v561, %v402
      %v642 = vmul.f32 %v622, %v401
      %v643 = vmul.f32 %v563, %v402
      %v644 = vmul.f32 %v623, %v401
      %v645 = vmul.f32 %v565, %v402
      %v646 = vmul.f32 %v624, %v401
      %v647 = vmul.f32 %v567, %v402
      %v648 = vmul.f32 %v625, %v401
      %v649 = vmul.f32 %v569, %v402
      %v650 = vmul.f32 %v626, %v401
      %v651 = vmul.f32 %v571, %v402
      %v652 = vmul.f32 %v627, %v401
      %v653 = vmul.f32 %v573, %v402
      %v654 = vmul.f32 %v628, %v401
      %v655 = vmul.f32 %v575, %v402
      %v656 = vmul.f32 %v629, %v401
      %v657 = vmul.f32 %v577, %v402
      %v658 = vmul.f32 %v630, %v401
      %v659 = vmul.f32 %v579, %v402
      %v660 = vmul.f32 %v631, %v401
      %v661 = vmul.f32 %v581, %v402
      %v662 = vmul.f32 %v632, %v401
      %v663 = vmul.f32 %v583, %v402
      %v664 = vmul.f32 %v633, %v401
      %v665 = vmul.f32 %v585, %v402
      %v666 = vadd.f32 %v457, %v634
      %v667 = vadd.f32 %v458, %v635
      %v668 = vadd.f32 %v459, %v636
      %v669 = vadd.f32 %v460, %v637
      %v670 = vadd.f32 %v461, %v638
      %v671 = vadd.f32 %v462, %v639
      %v672 = vadd.f32 %v463, %v640
      %v673 = vadd.f32 %v464, %v641
      %v674 = vadd.f32 %v465, %v642
      %v675 = vadd.f32 %v466, %v643
      %v676 = vadd.f32 %v467, %v644
      %v677 = vadd.f32 %v468, %v645
      %v678 = vadd.f32 %v469, %v646
      %v679 = vadd.f32 %v470, %v647
      %v680 = vadd.f32 %v471, %v648
      %v681 = vadd.f32 %v472, %v649
      %v682 = vadd.f32 %v473, %v650
      %v683 = vadd.f32 %v474, %v651
      %v684 = vadd.f32 %v475, %v652
      %v685 = vadd.f32 %v476, %v653
      %v686 = vadd.f32 %v477, %v654
      %v687 = vadd.f32 %v478, %v655
      %v688 = vadd.f32 %v479, %v656
      %v689 = vadd.f32 %v480, %v657
      %v690 = vadd.f32 %v481, %v658
      %v691 = vadd.f32 %v482, %v659
      %v692 = vadd.f32 %v483, %v660
      %v693 = vadd.f32 %v484, %v661
      %v694 = vadd.f32 %v485, %v662
      %v695 = vadd.f32 %v486, %v663
      %v696 = vadd.f32 %v487, %v664
      %v697 = vadd.f32 %v488, %v665
      %v699 = vlaneseq
      %v700 = vshrl.u32 %v699, 7
      %v701 = vsub.s32 0, %v700
      %v702 = vrot.slane %v407, %v701
      %v704 = vmul.f32 %v365, %v702
      %v705 = vmul.f32 %v366, %v702
      %v706 = vmul.f32 %v367, %v702
      %v707 = vmul.f32 %v368, %v702
      %v708 = vmul.f32 %v369, %v702
      %v709 = vmul.f32 %v370, %v702
      %v710 = vmul.f32 %v371, %v702
      %v711 = vmul.f32 %v372, %v702
      %v712 = vmul.f32 %v373, %v702
      %v713 = vmul.f32 %v374, %v702
      %v714 = vmul.f32 %v375, %v702
      %v715 = vmul.f32 %v376, %v702
      %v716 = vmul.f32 %v377, %v702
      %v717 = vmul.f32 %v378, %v702
      %v718 = vmul.f32 %v379, %v702
      %v719 = vmul.f32 %v380, %v702
      %v720 = vmul.f32 %v381, %v702
      %v721 = vmul.f32 %v382, %v702
      %v722 = vmul.f32 %v383, %v702
      %v723 = vmul.f32 %v384, %v702
      %v724 = vmul.f32 %v385, %v702
      %v725 = vmul.f32 %v386, %v702
      %v726 = vmul.f32 %v387, %v702
      %v727 = vmul.f32 %v388, %v702
      %v728 = vmul.f32 %v389, %v702
      %v729 = vmul.f32 %v390, %v702
      %v730 = vmul.f32 %v391, %v702
      %v731 = vmul.f32 %v392, %v702
      %v732 = vmul.f32 %v393, %v702
      %v733 = vmul.f32 %v394, %v702
      %v734 = vmul.f32 %v395, %v702
      %v735 = vmul.f32 %v396, %v702
      %v736 = vadd.f32 %v666, %v704
      %v737 = vadd.f32 %v667, %v705
      %v738 = vadd.f32 %v668, %v706
      %v739 = vadd.f32 %v669, %v707
      %v740 = vadd.f32 %v670, %v708
      %v741 = vadd.f32 %v671, %v709
      %v742 = vadd.f32 %v672, %v710
      %v743 = vadd.f32 %v673, %v711
      %v744 = vadd.f32 %v674, %v712
      %v745 = vadd.f32 %v675, %v713
      %v746 = vadd.f32 %v676, %v714
      %v747 = vadd.f32 %v677, %v715
      %v748 = vadd.f32 %v678, %v716
      %v749 = vadd.f32 %v679, %v717
      %v750 = vadd.f32 %v680, %v718
      %v751 = vadd.f32 %v681, %v719
      %v752 = vadd.f32 %v682, %v720
      %v753 = vadd.f32 %v683, %v721
      %v754 = vadd.f32 %v684, %v722
      %v755 = vadd.f32 %v685, %v723
      %v756 = vadd.f32 %v686, %v724
      %v757 = vadd.f32 %v687, %v725
      %v758 = vadd.f32 %v688, %v726
      %v759 = vadd.f32 %v689, %v727
      %v760 = vadd.f32 %v690, %v728
      %v761 = vadd.f32 %v691, %v729
      %v762 = vadd.f32 %v692, %v730
      %v763 = vadd.f32 %v693, %v731
      %v764 = vadd.f32 %v694, %v732
      %v765 = vadd.f32 %v695, %v733
      %v766 = vadd.f32 %v696, %v734
      %v767 = vadd.f32 %v697, %v735
      %vm768 = vcmask 1046528
      %v769 = vrot.slane %v365, 1
      %v770 = vrot.slane %v366, 1
      %v771 = vsel %vm768, %v769, %v770
      %v772 = vrot.slane %v367, 1
      %v773 = vrot.slane %v368, 1
      %v774 = vsel %vm768, %v772, %v773
      %v775 = vrot.slane %v369, 1
      %v776 = vrot.slane %v370, 1
      %v777 = vsel %vm768, %v775, %v776
      %v778 = vrot.slane %v371, 1
      %v779 = vrot.slane %v372, 1
      %v780 = vsel %vm768, %v778, %v779
      %v781 = vrot.slane %v373, 1
      %v782 = vrot.slane %v374, 1
      %v783 = vsel %vm768, %v781, %v782
      %v784 = vrot.slane %v375, 1
      %v785 = vrot.slane %v376, 1
      %v786 = vsel %vm768, %v784, %v785
      %v787 = vrot.slane %v377, 1
      %v788 = vrot.slane %v378, 1
      %v789 = vsel %vm768, %v787, %v788
      %v790 = vrot.slane %v379, 1
      %v791 = vrot.slane %v380, 1
      %v792 = vsel %vm768, %v790, %v791
      %v793 = vrot.slane %v381, 1
      %v794 = vrot.slane %v382, 1
      %v795 = vsel %vm768, %v793, %v794
      %v796 = vrot.slane %v383, 1
      %v797 = vrot.slane %v384, 1
      %v798 = vsel %vm768, %v796, %v797
      %v799 = vrot.slane %v385, 1
      %v800 = vrot.slane %v386, 1
      %v801 = vsel %vm768, %v799, %v800
      %v802 = vrot.slane %v387, 1
      %v803 = vrot.slane %v388, 1
      %v804 = vsel %vm768, %v802, %v803
      %v805 = vrot.slane %v389, 1
      %v806 = vrot.slane %v390, 1
      %v807 = vsel %vm768, %v805, %v806
      %v808 = vrot.slane %v391, 1
      %v809 = vrot.slane %v392, 1
      %v810 = vsel %vm768, %v808, %v809
      %v811 = vrot.slane %v393, 1
      %v812 = vrot.slane %v394, 1
      %v813 = vsel %vm768, %v811, %v812
      %v814 = vrot.slane %v395, 1
      %v815 = vrot.slane %v396, 1
      %v816 = vsel %vm768, %v814, %v815
      %v865 = vsel %vm768, %v770, %v769
      %v866 = vsel %vm768, %v773, %v772
      %v867 = vsel %vm768, %v776, %v775
      %v868 = vsel %vm768, %v779, %v778
      %v869 = vsel %vm768, %v782, %v781
      %v870 = vsel %vm768, %v785, %v784
      %v871 = vsel %vm768, %v788, %v787
      %v872 = vsel %vm768, %v791, %v790
      %v873 = vsel %vm768, %v794, %v793
      %v874 = vsel %vm768, %v797, %v796
      %v875 = vsel %vm768, %v800, %v799
      %v876 = vsel %vm768, %v803, %v802
      %v877 = vsel %vm768, %v806, %v805
      %v878 = vsel %vm768, %v809, %v808
      %v879 = vsel %vm768, %v812, %v811
      %v880 = vsel %vm768, %v815, %v814
      %v881 = vmul.f32 %v771, %v410
      %v882 = vmul.f32 %v865, %v411
      %v883 = vmul.f32 %v774, %v410
      %v884 = vmul.f32 %v866, %v411
      %v885 = vmul.f32 %v777, %v410
      %v886 = vmul.f32 %v867, %v411
      %v887 = vmul.f32 %v780, %v410
      %v888 = vmul.f32 %v868, %v411
      %v889 = vmul.f32 %v783, %v410
      %v890 = vmul.f32 %v869, %v411
      %v891 = vmul.f32 %v786, %v410
      %v892 = vmul.f32 %v870, %v411
      %v893 = vmul.f32 %v789, %v410
      %v894 = vmul.f32 %v871, %v411
      %v895 = vmul.f32 %v792, %v410
      %v896 = vmul.f32 %v872, %v411
      %v897 = vmul.f32 %v795, %v410
      %v898 = vmul.f32 %v873, %v411
      %v899 = vmul.f32 %v798, %v410
      %v900 = vmul.f32 %v874, %v411
      %v901 = vmul.f32 %v801, %v410
      %v902 = vmul.f32 %v875, %v411
      %v903 = vmul.f32 %v804, %v410
      %v904 = vmul.f32 %v876, %v411
      %v905 = vmul.f32 %v807, %v410
      %v906 = vmul.f32 %v877, %v411
      %v907 = vmul.f32 %v810, %v410
      %v908 = vmul.f32 %v878, %v411
      %v909 = vmul.f32 %v813, %v410
      %v910 = vmul.f32 %v879, %v411
      %v911 = vmul.f32 %v816, %v410
      %v912 = vmul.f32 %v880, %v411
      %v913 = vadd.f32 %v736, %v881
      %v914 = vadd.f32 %v737, %v882
      %v915 = vadd.f32 %v738, %v883
      %v916 = vadd.f32 %v739, %v884
      %v917 = vadd.f32 %v740, %v885
      %v918 = vadd.f32 %v741, %v886
      %v919 = vadd.f32 %v742, %v887
      %v920 = vadd.f32 %v743, %v888
      %v921 = vadd.f32 %v744, %v889
      %v922 = vadd.f32 %v745, %v890
      %v923 = vadd.f32 %v746, %v891
      %v924 = vadd.f32 %v747, %v892
      %v925 = vadd.f32 %v748, %v893
      %v926 = vadd.f32 %v749, %v894
      %v927 = vadd.f32 %v750, %v895
      %v928 = vadd.f32 %v751, %v896
      %v929 = vadd.f32 %v752, %v897
      %v930 = vadd.f32 %v753, %v898
      %v931 = vadd.f32 %v754, %v899
      %v932 = vadd.f32 %v755, %v900
      %v933 = vadd.f32 %v756, %v901
      %v934 = vadd.f32 %v757, %v902
      %v935 = vadd.f32 %v758, %v903
      %v936 = vadd.f32 %v759, %v904
      %v937 = vadd.f32 %v760, %v905
      %v938 = vadd.f32 %v761, %v906
      %v939 = vadd.f32 %v762, %v907
      %v940 = vadd.f32 %v763, %v908
      %v941 = vadd.f32 %v764, %v909
      %v942 = vadd.f32 %v765, %v910
      %v943 = vadd.f32 %v766, %v911
      %v944 = vadd.f32 %v767, %v912
      %v961 = vrot.slane %v334, 7
      %v962 = vrot.slane %v336, 7
      %v963 = vrot.slane %v338, 7
      %v964 = vrot.slane %v340, 7
      %v965 = vrot.slane %v342, 7
      %v966 = vrot.slane %v344, 7
      %v967 = vrot.slane %v346, 7
      %v968 = vrot.slane %v348, 7
      %v969 = vrot.slane %v350, 7
      %v970 = vrot.slane %v352, 7
      %v971 = vrot.slane %v354, 7
      %v972 = vrot.slane %v356, 7
      %v973 = vrot.slane %v358, 7
      %v974 = vrot.slane %v360, 7
      %v975 = vrot.slane %v362, 7
      %v976 = vrot.slane %v364, 7
      %v1009 = vrot.slane %v333, 7
      %v1010 = vsel %vm553, %v1009, %v961
      %v1011 = vrot.slane %v335, 7
      %v1012 = vsel %vm553, %v1011, %v962
      %v1013 = vrot.slane %v337, 7
      %v1014 = vsel %vm553, %v1013, %v963
      %v1015 = vrot.slane %v339, 7
      %v1016 = vsel %vm553, %v1015, %v964
      %v1017 = vrot.slane %v341, 7
      %v1018 = vsel %vm553, %v1017, %v965
      %v1019 = vrot.slane %v343, 7
      %v1020 = vsel %vm553, %v1019, %v966
      %v1021 = vrot.slane %v345, 7
      %v1022 = vsel %vm553, %v1021, %v967
      %v1023 = vrot.slane %v347, 7
      %v1024 = vsel %vm553, %v1023, %v968
      %v1025 = vrot.slane %v349, 7
      %v1026 = vsel %vm553, %v1025, %v969
      %v1027 = vrot.slane %v351, 7
      %v1028 = vsel %vm553, %v1027, %v970
      %v1029 = vrot.slane %v353, 7
      %v1030 = vsel %vm553, %v1029, %v971
      %v1031 = vrot.slane %v355, 7
      %v1032 = vsel %vm553, %v1031, %v972
      %v1033 = vrot.slane %v357, 7
      %v1034 = vsel %vm553, %v1033, %v973
      %v1035 = vrot.slane %v359, 7
      %v1036 = vsel %vm553, %v1035, %v974
      %v1037 = vrot.slane %v361, 7
      %v1038 = vsel %vm553, %v1037, %v975
      %v1039 = vrot.slane %v363, 7
      %v1040 = vsel %vm553, %v1039, %v976
      %v1073 = vsel %vm553, %v961, %v1009
      %v1074 = vsel %vm553, %v962, %v1011
      %v1075 = vsel %vm553, %v963, %v1013
      %v1076 = vsel %vm553, %v964, %v1015
      %v1077 = vsel %vm553, %v965, %v1017
      %v1078 = vsel %vm553, %v966, %v1019
      %v1079 = vsel %vm553, %v967, %v1021
      %v1080 = vsel %vm553, %v968, %v1023
      %v1081 = vsel %vm553, %v969, %v1025
      %v1082 = vsel %vm553, %v970, %v1027
      %v1083 = vsel %vm553, %v971, %v1029
      %v1084 = vsel %vm553, %v972, %v1031
      %v1085 = vsel %vm553, %v973, %v1033
      %v1086 = vsel %vm553, %v974, %v1035
      %v1087 = vsel %vm553, %v975, %v1037
      %v1088 = vsel %vm553, %v976, %v1039
      %v1089 = vmul.f32 %v1073, %v403
      %v1090 = vmul.f32 %v1010, %v404
      %v1091 = vmul.f32 %v1074, %v403
      %v1092 = vmul.f32 %v1012, %v404
      %v1093 = vmul.f32 %v1075, %v403
      %v1094 = vmul.f32 %v1014, %v404
      %v1095 = vmul.f32 %v1076, %v403
      %v1096 = vmul.f32 %v1016, %v404
      %v1097 = vmul.f32 %v1077, %v403
      %v1098 = vmul.f32 %v1018, %v404
      %v1099 = vmul.f32 %v1078, %v403
      %v1100 = vmul.f32 %v1020, %v404
      %v1101 = vmul.f32 %v1079, %v403
      %v1102 = vmul.f32 %v1022, %v404
      %v1103 = vmul.f32 %v1080, %v403
      %v1104 = vmul.f32 %v1024, %v404
      %v1105 = vmul.f32 %v1081, %v403
      %v1106 = vmul.f32 %v1026, %v404
      %v1107 = vmul.f32 %v1082, %v403
      %v1108 = vmul.f32 %v1028, %v404
      %v1109 = vmul.f32 %v1083, %v403
      %v1110 = vmul.f32 %v1030, %v404
      %v1111 = vmul.f32 %v1084, %v403
      %v1112 = vmul.f32 %v1032, %v404
      %v1113 = vmul.f32 %v1085, %v403
      %v1114 = vmul.f32 %v1034, %v404
      %v1115 = vmul.f32 %v1086, %v403
      %v1116 = vmul.f32 %v1036, %v404
      %v1117 = vmul.f32 %v1087, %v403
      %v1118 = vmul.f32 %v1038, %v404
      %v1119 = vmul.f32 %v1088, %v403
      %v1120 = vmul.f32 %v1040, %v404
      %v1121 = vadd.f32 %v913, %v1089
      %v1122 = vadd.f32 %v914, %v1090
      %v1123 = vadd.f32 %v915, %v1091
      %v1124 = vadd.f32 %v916, %v1092
      %v1125 = vadd.f32 %v917, %v1093
      %v1126 = vadd.f32 %v918, %v1094
      %v1127 = vadd.f32 %v919, %v1095
      %v1128 = vadd.f32 %v920, %v1096
      %v1129 = vadd.f32 %v921, %v1097
      %v1130 = vadd.f32 %v922, %v1098
      %v1131 = vadd.f32 %v923, %v1099
      %v1132 = vadd.f32 %v924, %v1100
      %v1133 = vadd.f32 %v925, %v1101
      %v1134 = vadd.f32 %v926, %v1102
      %v1135 = vadd.f32 %v927, %v1103
      %v1136 = vadd.f32 %v928, %v1104
      %v1137 = vadd.f32 %v929, %v1105
      %v1138 = vadd.f32 %v930, %v1106
      %v1139 = vadd.f32 %v931, %v1107
      %v1140 = vadd.f32 %v932, %v1108
      %v1141 = vadd.f32 %v933, %v1109
      %v1142 = vadd.f32 %v934, %v1110
      %v1143 = vadd.f32 %v935, %v1111
      %v1144 = vadd.f32 %v936, %v1112
      %v1145 = vadd.f32 %v937, %v1113
      %v1146 = vadd.f32 %v938, %v1114
      %v1147 = vadd.f32 %v939, %v1115
      %v1148 = vadd.f32 %v940, %v1116
      %v1149 = vadd.f32 %v941, %v1117
      %v1150 = vadd.f32 %v942, %v1118
      %v1151 = vadd.f32 %v943, %v1119
      %v1152 = vadd.f32 %v944, %v1120
      %v1154 = vlaneseq
      %v1155 = vshrl.u32 %v1154, 7
      %v1156 = vsub.s32 0, %v1155
      %v1157 = vrot.slane %v408, %v1156
      %v1159 = vmul.f32 %v333, %v1157
      %v1160 = vmul.f32 %v334, %v1157
      %v1161 = vmul.f32 %v335, %v1157
      %v1162 = vmul.f32 %v336, %v1157
      %v1163 = vmul.f32 %v337, %v1157
      %v1164 = vmul.f32 %v338, %v1157
      %v1165 = vmul.f32 %v339, %v1157
      %v1166 = vmul.f32 %v340, %v1157
      %v1167 = vmul.f32 %v341, %v1157
      %v1168 = vmul.f32 %v342, %v1157
      %v1169 = vmul.f32 %v343, %v1157
      %v1170 = vmul.f32 %v344, %v1157
      %v1171 = vmul.f32 %v345, %v1157
      %v1172 = vmul.f32 %v346, %v1157
      %v1173 = vmul.f32 %v347, %v1157
      %v1174 = vmul.f32 %v348, %v1157
      %v1175 = vmul.f32 %v349, %v1157
      %v1176 = vmul.f32 %v350, %v1157
      %v1177 = vmul.f32 %v351, %v1157
      %v1178 = vmul.f32 %v352, %v1157
      %v1179 = vmul.f32 %v353, %v1157
      %v1180 = vmul.f32 %v354, %v1157
      %v1181 = vmul.f32 %v355, %v1157
      %v1182 = vmul.f32 %v356, %v1157
      %v1183 = vmul.f32 %v357, %v1157
      %v1184 = vmul.f32 %v358, %v1157
      %v1185 = vmul.f32 %v359, %v1157
      %v1186 = vmul.f32 %v360, %v1157
      %v1187 = vmul.f32 %v361, %v1157
      %v1188 = vmul.f32 %v362, %v1157
      %v1189 = vmul.f32 %v363, %v1157
      %v1190 = vmul.f32 %v364, %v1157
      %v1191 = vadd.f32 %v1121, %v1159
      %v1192 = vadd.f32 %v1122, %v1160
      %v1193 = vadd.f32 %v1123, %v1161
      %v1194 = vadd.f32 %v1124, %v1162
      %v1195 = vadd.f32 %v1125, %v1163
      %v1196 = vadd.f32 %v1126, %v1164
      %v1197 = vadd.f32 %v1127, %v1165
      %v1198 = vadd.f32 %v1128, %v1166
      %v1199 = vadd.f32 %v1129, %v1167
      %v1200 = vadd.f32 %v1130, %v1168
      %v1201 = vadd.f32 %v1131, %v1169
      %v1202 = vadd.f32 %v1132, %v1170
      %v1203 = vadd.f32 %v1133, %v1171
      %v1204 = vadd.f32 %v1134, %v1172
      %v1205 = vadd.f32 %v1135, %v1173
      %v1206 = vadd.f32 %v1136, %v1174
      %v1207 = vadd.f32 %v1137, %v1175
      %v1208 = vadd.f32 %v1138, %v1176
      %v1209 = vadd.f32 %v1139, %v1177
      %v1210 = vadd.f32 %v1140, %v1178
      %v1211 = vadd.f32 %v1141, %v1179
      %v1212 = vadd.f32 %v1142, %v1180
      %v1213 = vadd.f32 %v1143, %v1181
      %v1214 = vadd.f32 %v1144, %v1182
      %v1215 = vadd.f32 %v1145, %v1183
      %v1216 = vadd.f32 %v1146, %v1184
      %v1217 = vadd.f32 %v1147, %v1185
      %v1218 = vadd.f32 %v1148, %v1186
      %v1219 = vadd.f32 %v1149, %v1187
      %v1220 = vadd.f32 %v1150, %v1188
      %v1221 = vadd.f32 %v1151, %v1189
      %v1222 = vadd.f32 %v1152, %v1190
      %v1223 = vrot.slane %v333, 1
      %v1224 = vrot.slane %v334, 1
      %v1225 = vsel %vm768, %v1223, %v1224
      %v1226 = vrot.slane %v335, 1
      %v1227 = vrot.slane %v336, 1
      %v1228 = vsel %vm768, %v1226, %v1227
      %v1229 = vrot.slane %v337, 1
      %v1230 = vrot.slane %v338, 1
      %v1231 = vsel %vm768, %v1229, %v1230
      %v1232 = vrot.slane %v339, 1
      %v1233 = vrot.slane %v340, 1
      %v1234 = vsel %vm768, %v1232, %v1233
      %v1235 = vrot.slane %v341, 1
      %v1236 = vrot.slane %v342, 1
      %v1237 = vsel %vm768, %v1235, %v1236
      %v1238 = vrot.slane %v343, 1
      %v1239 = vrot.slane %v344, 1
      %v1240 = vsel %vm768, %v1238, %v1239
      %v1241 = vrot.slane %v345, 1
      %v1242 = vrot.slane %v346, 1
      %v1243 = vsel %vm768, %v1241, %v1242
      %v1244 = vrot.slane %v347, 1
      %v1245 = vrot.slane %v348, 1
      %v1246 = vsel %vm768, %v1244, %v1245
      %v1247 = vrot.slane %v349, 1
      %v1248 = vrot.slane %v350, 1
      %v1249 = vsel %vm768, %v1247, %v1248
      %v1250 = vrot.slane %v351, 1
      %v1251 = vrot.slane %v352, 1
      %v1252 = vsel %vm768, %v1250, %v1251
      %v1253 = vrot.slane %v353, 1
      %v1254 = vrot.slane %v354, 1
      %v1255 = vsel %vm768, %v1253, %v1254
      %v1256 = vrot.slane %v355, 1
      %v1257 = vrot.slane %v356, 1
      %v1258 = vsel %vm768, %v1256, %v1257
      %v1259 = vrot.slane %v357, 1
      %v1260 = vrot.slane %v358, 1
      %v1261 = vsel %vm768, %v1259, %v1260
      %v1262 = vrot.slane %v359, 1
      %v1263 = vrot.slane %v360, 1
      %v1264 = vsel %vm768, %v1262, %v1263
      %v1265 = vrot.slane %v361, 1
      %v1266 = vrot.slane %v362, 1
      %v1267 = vsel %vm768, %v1265, %v1266
      %v1268 = vrot.slane %v363, 1
      %v1269 = vrot.slane %v364, 1
      %v1270 = vsel %vm768, %v1268, %v1269
      %v1319 = vsel %vm768, %v1224, %v1223
      %v1320 = vsel %vm768, %v1227, %v1226
      %v1321 = vsel %vm768, %v1230, %v1229
      %v1322 = vsel %vm768, %v1233, %v1232
      %v1323 = vsel %vm768, %v1236, %v1235
      %v1324 = vsel %vm768, %v1239, %v1238
      %v1325 = vsel %vm768, %v1242, %v1241
      %v1326 = vsel %vm768, %v1245, %v1244
      %v1327 = vsel %vm768, %v1248, %v1247
      %v1328 = vsel %vm768, %v1251, %v1250
      %v1329 = vsel %vm768, %v1254, %v1253
      %v1330 = vsel %vm768, %v1257, %v1256
      %v1331 = vsel %vm768, %v1260, %v1259
      %v1332 = vsel %vm768, %v1263, %v1262
      %v1333 = vsel %vm768, %v1266, %v1265
      %v1334 = vsel %vm768, %v1269, %v1268
      %v1335 = vmul.f32 %v1225, %v412
      %v1336 = vmul.f32 %v1319, %v413
      %v1337 = vmul.f32 %v1228, %v412
      %v1338 = vmul.f32 %v1320, %v413
      %v1339 = vmul.f32 %v1231, %v412
      %v1340 = vmul.f32 %v1321, %v413
      %v1341 = vmul.f32 %v1234, %v412
      %v1342 = vmul.f32 %v1322, %v413
      %v1343 = vmul.f32 %v1237, %v412
      %v1344 = vmul.f32 %v1323, %v413
      %v1345 = vmul.f32 %v1240, %v412
      %v1346 = vmul.f32 %v1324, %v413
      %v1347 = vmul.f32 %v1243, %v412
      %v1348 = vmul.f32 %v1325, %v413
      %v1349 = vmul.f32 %v1246, %v412
      %v1350 = vmul.f32 %v1326, %v413
      %v1351 = vmul.f32 %v1249, %v412
      %v1352 = vmul.f32 %v1327, %v413
      %v1353 = vmul.f32 %v1252, %v412
      %v1354 = vmul.f32 %v1328, %v413
      %v1355 = vmul.f32 %v1255, %v412
      %v1356 = vmul.f32 %v1329, %v413
      %v1357 = vmul.f32 %v1258, %v412
      %v1358 = vmul.f32 %v1330, %v413
      %v1359 = vmul.f32 %v1261, %v412
      %v1360 = vmul.f32 %v1331, %v413
      %v1361 = vmul.f32 %v1264, %v412
      %v1362 = vmul.f32 %v1332, %v413
      %v1363 = vmul.f32 %v1267, %v412
      %v1364 = vmul.f32 %v1333, %v413
      %v1365 = vmul.f32 %v1270, %v412
      %v1366 = vmul.f32 %v1334, %v413
      %v1367 = vadd.f32 %v1191, %v1335
      %v1368 = vadd.f32 %v1192, %v1336
      %v1369 = vadd.f32 %v1193, %v1337
      %v1370 = vadd.f32 %v1194, %v1338
      %v1371 = vadd.f32 %v1195, %v1339
      %v1372 = vadd.f32 %v1196, %v1340
      %v1373 = vadd.f32 %v1197, %v1341
      %v1374 = vadd.f32 %v1198, %v1342
      %v1375 = vadd.f32 %v1199, %v1343
      %v1376 = vadd.f32 %v1200, %v1344
      %v1377 = vadd.f32 %v1201, %v1345
      %v1378 = vadd.f32 %v1202, %v1346
      %v1379 = vadd.f32 %v1203, %v1347
      %v1380 = vadd.f32 %v1204, %v1348
      %v1381 = vadd.f32 %v1205, %v1349
      %v1382 = vadd.f32 %v1206, %v1350
      %v1383 = vadd.f32 %v1207, %v1351
      %v1384 = vadd.f32 %v1208, %v1352
      %v1385 = vadd.f32 %v1209, %v1353
      %v1386 = vadd.f32 %v1210, %v1354
      %v1387 = vadd.f32 %v1211, %v1355
      %v1388 = vadd.f32 %v1212, %v1356
      %v1389 = vadd.f32 %v1213, %v1357
      %v1390 = vadd.f32 %v1214, %v1358
      %v1391 = vadd.f32 %v1215, %v1359
      %v1392 = vadd.f32 %v1216, %v1360
      %v1393 = vadd.f32 %v1217, %v1361
      %v1394 = vadd.f32 %v1218, %v1362
      %v1395 = vadd.f32 %v1219, %v1363
      %v1396 = vadd.f32 %v1220, %v1364
      %v1397 = vadd.f32 %v1221, %v1365
      %v1398 = vadd.f32 %v1222, %v1366
      %v1401 = vrot.slane %v398, 7
      %v1402 = vrot.slane %v400, 7
      %v1407 = vrot.slane %v397, 7
      %v1408 = vsel %vm553, %v1407, %v1401
      %v1409 = vrot.slane %v399, 7
      %v1410 = vsel %vm553, %v1409, %v1402
      %v1415 = vsel %vm553, %v1401, %v1407
      %v1416 = vsel %vm553, %v1402, %v1409
      %v1417 = vmul.f32 %v620, %v405
      %v1418 = vmul.f32 %v559, %v406
      %v1419 = vmul.f32 %v621, %v405
      %v1420 = vmul.f32 %v561, %v406
      %v1421 = vmul.f32 %v622, %v405
      %v1422 = vmul.f32 %v563, %v406
      %v1423 = vmul.f32 %v623, %v405
      %v1424 = vmul.f32 %v565, %v406
      %v1425 = vmul.f32 %v624, %v405
      %v1426 = vmul.f32 %v567, %v406
      %v1427 = vmul.f32 %v625, %v405
      %v1428 = vmul.f32 %v569, %v406
      %v1429 = vmul.f32 %v626, %v405
      %v1430 = vmul.f32 %v571, %v406
      %v1431 = vmul.f32 %v627, %v405
      %v1432 = vmul.f32 %v573, %v406
      %v1433 = vmul.f32 %v628, %v405
      %v1434 = vmul.f32 %v575, %v406
      %v1435 = vmul.f32 %v629, %v405
      %v1436 = vmul.f32 %v577, %v406
      %v1437 = vmul.f32 %v630, %v405
      %v1438 = vmul.f32 %v579, %v406
      %v1439 = vmul.f32 %v631, %v405
      %v1440 = vmul.f32 %v581, %v406
      %v1441 = vmul.f32 %v632, %v405
      %v1442 = vmul.f32 %v583, %v406
      %v1443 = vmul.f32 %v633, %v405
      %v1444 = vmul.f32 %v585, %v406
      %v1445 = vmul.f32 %v1415, %v405
      %v1446 = vmul.f32 %v1408, %v406
      %v1447 = vmul.f32 %v1416, %v405
      %v1448 = vmul.f32 %v1410, %v406
      %v1449 = vadd.f32 %v1367, %v1417
      %v1450 = vadd.f32 %v1368, %v1418
      %v1451 = vadd.f32 %v1369, %v1419
      %v1452 = vadd.f32 %v1370, %v1420
      %v1453 = vadd.f32 %v1371, %v1421
      %v1454 = vadd.f32 %v1372, %v1422
      %v1455 = vadd.f32 %v1373, %v1423
      %v1456 = vadd.f32 %v1374, %v1424
      %v1457 = vadd.f32 %v1375, %v1425
      %v1458 = vadd.f32 %v1376, %v1426
      %v1459 = vadd.f32 %v1377, %v1427
      %v1460 = vadd.f32 %v1378, %v1428
      %v1461 = vadd.f32 %v1379, %v1429
      %v1462 = vadd.f32 %v1380, %v1430
      %v1463 = vadd.f32 %v1381, %v1431
      %v1464 = vadd.f32 %v1382, %v1432
      %v1465 = vadd.f32 %v1383, %v1433
      %v1466 = vadd.f32 %v1384, %v1434
      %v1467 = vadd.f32 %v1385, %v1435
      %v1468 = vadd.f32 %v1386, %v1436
      %v1469 = vadd.f32 %v1387, %v1437
      %v1470 = vadd.f32 %v1388, %v1438
      %v1471 = vadd.f32 %v1389, %v1439
      %v1472 = vadd.f32 %v1390, %v1440
      %v1473 = vadd.f32 %v1391, %v1441
      %v1474 = vadd.f32 %v1392, %v1442
      %v1475 = vadd.f32 %v1393, %v1443
      %v1476 = vadd.f32 %v1394, %v1444
      %v1477 = vadd.f32 %v1395, %v1445
      %v1478 = vadd.f32 %v1396, %v1446
      %v1479 = vadd.f32 %v1397, %v1447
      %v1480 = vadd.f32 %v1398, %v1448
      %v1482 = vlaneseq
      %v1483 = vshrl.u32 %v1482, 7
      %v1484 = vsub.s32 0, %v1483
      %v1485 = vrot.slane %v409, %v1484
      %v1487 = vmul.f32 %v369, %v1485
      %v1488 = vmul.f32 %v370, %v1485
      %v1489 = vmul.f32 %v371, %v1485
      %v1490 = vmul.f32 %v372, %v1485
      %v1491 = vmul.f32 %v373, %v1485
      %v1492 = vmul.f32 %v374, %v1485
      %v1493 = vmul.f32 %v375, %v1485
      %v1494 = vmul.f32 %v376, %v1485
      %v1495 = vmul.f32 %v377, %v1485
      %v1496 = vmul.f32 %v378, %v1485
      %v1497 = vmul.f32 %v379, %v1485
      %v1498 = vmul.f32 %v380, %v1485
      %v1499 = vmul.f32 %v381, %v1485
      %v1500 = vmul.f32 %v382, %v1485
      %v1501 = vmul.f32 %v383, %v1485
      %v1502 = vmul.f32 %v384, %v1485
      %v1503 = vmul.f32 %v385, %v1485
      %v1504 = vmul.f32 %v386, %v1485
      %v1505 = vmul.f32 %v387, %v1485
      %v1506 = vmul.f32 %v388, %v1485
      %v1507 = vmul.f32 %v389, %v1485
      %v1508 = vmul.f32 %v390, %v1485
      %v1509 = vmul.f32 %v391, %v1485
      %v1510 = vmul.f32 %v392, %v1485
      %v1511 = vmul.f32 %v393, %v1485
      %v1512 = vmul.f32 %v394, %v1485
      %v1513 = vmul.f32 %v395, %v1485
      %v1514 = vmul.f32 %v396, %v1485
      %v1515 = vmul.f32 %v397, %v1485
      %v1516 = vmul.f32 %v398, %v1485
      %v1517 = vmul.f32 %v399, %v1485
      %v1518 = vmul.f32 %v400, %v1485
      %v1519 = vadd.f32 %v1449, %v1487
      %v1520 = vadd.f32 %v1450, %v1488
      %v1521 = vadd.f32 %v1451, %v1489
      %v1522 = vadd.f32 %v1452, %v1490
      %v1523 = vadd.f32 %v1453, %v1491
      %v1524 = vadd.f32 %v1454, %v1492
      %v1525 = vadd.f32 %v1455, %v1493
      %v1526 = vadd.f32 %v1456, %v1494
      %v1527 = vadd.f32 %v1457, %v1495
      %v1528 = vadd.f32 %v1458, %v1496
      %v1529 = vadd.f32 %v1459, %v1497
      %v1530 = vadd.f32 %v1460, %v1498
      %v1531 = vadd.f32 %v1461, %v1499
      %v1532 = vadd.f32 %v1462, %v1500
      %v1533 = vadd.f32 %v1463, %v1501
      %v1534 = vadd.f32 %v1464, %v1502
      %v1535 = vadd.f32 %v1465, %v1503
      %v1536 = vadd.f32 %v1466, %v1504
      %v1537 = vadd.f32 %v1467, %v1505
      %v1538 = vadd.f32 %v1468, %v1506
      %v1539 = vadd.f32 %v1469, %v1507
      %v1540 = vadd.f32 %v1470, %v1508
      %v1541 = vadd.f32 %v1471, %v1509
      %v1542 = vadd.f32 %v1472, %v1510
      %v1543 = vadd.f32 %v1473, %v1511
      %v1544 = vadd.f32 %v1474, %v1512
      %v1545 = vadd.f32 %v1475, %v1513
      %v1546 = vadd.f32 %v1476, %v1514
      %v1547 = vadd.f32 %v1477, %v1515
      %v1548 = vadd.f32 %v1478, %v1516
      %v1549 = vadd.f32 %v1479, %v1517
      %v1550 = vadd.f32 %v1480, %v1518
      %v1551 = vrot.slane %v397, 1
      %v1552 = vrot.slane %v398, 1
      %v1553 = vsel %vm768, %v1551, %v1552
      %v1554 = vrot.slane %v399, 1
      %v1555 = vrot.slane %v400, 1
      %v1556 = vsel %vm768, %v1554, %v1555
      %v1563 = vsel %vm768, %v1552, %v1551
      %v1564 = vsel %vm768, %v1555, %v1554
      %v1565 = vmul.f32 %v777, %v414
      %v1566 = vmul.f32 %v867, %v415
      %v1567 = vmul.f32 %v780, %v414
      %v1568 = vmul.f32 %v868, %v415
      %v1569 = vmul.f32 %v783, %v414
      %v1570 = vmul.f32 %v869, %v415
      %v1571 = vmul.f32 %v786, %v414
      %v1572 = vmul.f32 %v870, %v415
      %v1573 = vmul.f32 %v789, %v414
      %v1574 = vmul.f32 %v871, %v415
      %v1575 = vmul.f32 %v792, %v414
      %v1576 = vmul.f32 %v872, %v415
      %v1577 = vmul.f32 %v795, %v414
      %v1578 = vmul.f32 %v873, %v415
      %v1579 = vmul.f32 %v798, %v414
      %v1580 = vmul.f32 %v874, %v415
      %v1581 = vmul.f32 %v801, %v414
      %v1582 = vmul.f32 %v875, %v415
      %v1583 = vmul.f32 %v804, %v414
      %v1584 = vmul.f32 %v876, %v415
      %v1585 = vmul.f32 %v807, %v414
      %v1586 = vmul.f32 %v877, %v415
      %v1587 = vmul.f32 %v810, %v414
      %v1588 = vmul.f32 %v878, %v415
      %v1589 = vmul.f32 %v813, %v414
      %v1590 = vmul.f32 %v879, %v415
      %v1591 = vmul.f32 %v816, %v414
      %v1592 = vmul.f32 %v880, %v415
      %v1593 = vmul.f32 %v1553, %v414
      %v1594 = vmul.f32 %v1563, %v415
      %v1595 = vmul.f32 %v1556, %v414
      %v1596 = vmul.f32 %v1564, %v415
      %v1597 = vadd.f32 %v1519, %v1565
      %v1598 = vadd.f32 %v1520, %v1566
      %v1599 = vadd.f32 %v1521, %v1567
      %v1600 = vadd.f32 %v1522, %v1568
      %v1601 = vadd.f32 %v1523, %v1569
      %v1602 = vadd.f32 %v1524, %v1570
      %v1603 = vadd.f32 %v1525, %v1571
      %v1604 = vadd.f32 %v1526, %v1572
      %v1605 = vadd.f32 %v1527, %v1573
      %v1606 = vadd.f32 %v1528, %v1574
      %v1607 = vadd.f32 %v1529, %v1575
      %v1608 = vadd.f32 %v1530, %v1576
      %v1609 = vadd.f32 %v1531, %v1577
      %v1610 = vadd.f32 %v1532, %v1578
      %v1611 = vadd.f32 %v1533, %v1579
      %v1612 = vadd.f32 %v1534, %v1580
      %v1613 = vadd.f32 %v1535, %v1581
      %v1614 = vadd.f32 %v1536, %v1582
      %v1615 = vadd.f32 %v1537, %v1583
      %v1616 = vadd.f32 %v1538, %v1584
      %v1617 = vadd.f32 %v1539, %v1585
      %v1618 = vadd.f32 %v1540, %v1586
      %v1619 = vadd.f32 %v1541, %v1587
      %v1620 = vadd.f32 %v1542, %v1588
      %v1621 = vadd.f32 %v1543, %v1589
      %v1622 = vadd.f32 %v1544, %v1590
      %v1623 = vadd.f32 %v1545, %v1591
      %v1624 = vadd.f32 %v1546, %v1592
      %v1625 = vadd.f32 %v1547, %v1593
      %v1626 = vadd.f32 %v1548, %v1594
      %v1627 = vadd.f32 %v1549, %v1595
      %v1628 = vadd.f32 %v1550, %v1596
      %v1629 = vld [vmem:[%s5] sm:$0xf]
      %v1630 = vld [vmem:[%s7] sm:$0xff]
      %v1631 = vld [vmem:[%s6] sm:$0x1]
      %v1632 = vld [vmem:[%s8] sm:$0x1]
      %v1633 = vlaneseq
      %v1634 = vshrl.u32 %v1633, 7
      %v1635 = vsub.s32 0, %v1634
      %v1636 = vrot.slane %v1597, %v1635
      %1638 = vbcast.lane.b32.xlu0 %v1636, 256
      %v1639 = vpop.permute.xlu0 %1638
      %v1640 = vlaneseq
      %v1641 = vshrl.u32 %v1640, 7
      %v1642 = vsub.s32 1, %v1641
      %v1643 = vrot.slane %v1597, %v1642
      %1645 = vbcast.lane.b32.xlu0 %v1643, 256
      %v1646 = vpop.permute.xlu0 %1645
      %v1647 = vlaneseq
      %v1648 = vshrl.u32 %v1647, 7
      %v1649 = vsub.s32 2, %v1648
      %v1650 = vrot.slane %v1597, %v1649
      %1652 = vbcast.lane.b32.xlu0 %v1650, 256
      %v1653 = vpop.permute.xlu0 %1652
      %v1654 = vlaneseq
      %v1655 = vshrl.u32 %v1654, 7
      %v1656 = vsub.s32 3, %v1655
      %v1657 = vrot.slane %v1597, %v1656
      %1659 = vbcast.lane.b32.xlu0 %v1657, 256
      %v1660 = vpop.permute.xlu0 %1659
      %v1661 = vlaneseq
      %v1662 = vshrl.u32 %v1661, 7
      %v1663 = vsub.s32 4, %v1662
      %v1664 = vrot.slane %v1597, %v1663
      %1666 = vbcast.lane.b32.xlu0 %v1664, 256
      %v1667 = vpop.permute.xlu0 %1666
      %v1668 = vlaneseq
      %v1669 = vshrl.u32 %v1668, 7
      %v1670 = vsub.s32 5, %v1669
      %v1671 = vrot.slane %v1597, %v1670
      %1673 = vbcast.lane.b32.xlu0 %v1671, 256
      %v1674 = vpop.permute.xlu0 %1673
      %v1675 = vlaneseq
      %v1676 = vshrl.u32 %v1675, 7
      %v1677 = vsub.s32 6, %v1676
      %v1678 = vrot.slane %v1597, %v1677
      %1680 = vbcast.lane.b32.xlu0 %v1678, 256
      %v1681 = vpop.permute.xlu0 %1680
      %v1682 = vlaneseq
      %v1683 = vshrl.u32 %v1682, 7
      %v1684 = vsub.s32 7, %v1683
      %v1685 = vrot.slane %v1597, %v1684
      %1687 = vbcast.lane.b32.xlu0 %v1685, 256
      %v1688 = vpop.permute.xlu0 %1687
      %v1689 = vlaneseq
      %v1690 = vshrl.u32 %v1689, 7
      %v1691 = vsub.s32 0, %v1690
      %v1692 = vrot.slane %v1598, %v1691
      %1694 = vbcast.lane.b32.xlu0 %v1692, 256
      %v1695 = vpop.permute.xlu0 %1694
      %v1696 = vlaneseq
      %v1697 = vshrl.u32 %v1696, 7
      %v1698 = vsub.s32 1, %v1697
      %v1699 = vrot.slane %v1598, %v1698
      %1701 = vbcast.lane.b32.xlu0 %v1699, 256
      %v1702 = vpop.permute.xlu0 %1701
      %v1703 = vlaneseq
      %v1704 = vshrl.u32 %v1703, 7
      %v1705 = vsub.s32 2, %v1704
      %v1706 = vrot.slane %v1598, %v1705
      %1708 = vbcast.lane.b32.xlu0 %v1706, 256
      %v1709 = vpop.permute.xlu0 %1708
      %v1710 = vlaneseq
      %v1711 = vshrl.u32 %v1710, 7
      %v1712 = vsub.s32 3, %v1711
      %v1713 = vrot.slane %v1598, %v1712
      %1715 = vbcast.lane.b32.xlu0 %v1713, 256
      %v1716 = vpop.permute.xlu0 %1715
      %v1717 = vlaneseq
      %v1718 = vshrl.u32 %v1717, 7
      %v1719 = vsub.s32 4, %v1718
      %v1720 = vrot.slane %v1598, %v1719
      %1722 = vbcast.lane.b32.xlu0 %v1720, 256
      %v1723 = vpop.permute.xlu0 %1722
      %v1724 = vlaneseq
      %v1725 = vshrl.u32 %v1724, 7
      %v1726 = vsub.s32 5, %v1725
      %v1727 = vrot.slane %v1598, %v1726
      %1729 = vbcast.lane.b32.xlu0 %v1727, 256
      %v1730 = vpop.permute.xlu0 %1729
      %v1731 = vlaneseq
      %v1732 = vshrl.u32 %v1731, 7
      %v1733 = vsub.s32 6, %v1732
      %v1734 = vrot.slane %v1598, %v1733
      %1736 = vbcast.lane.b32.xlu0 %v1734, 256
      %v1737 = vpop.permute.xlu0 %1736
      %v1738 = vlaneseq
      %v1739 = vshrl.u32 %v1738, 7
      %v1740 = vsub.s32 7, %v1739
      %v1741 = vrot.slane %v1598, %v1740
      %1743 = vbcast.lane.b32.xlu0 %v1741, 256
      %v1744 = vpop.permute.xlu0 %1743
      %v1745 = vlaneseq
      %v1746 = vshrl.u32 %v1745, 7
      %v1747 = vsub.s32 0, %v1746
      %v1748 = vrot.slane %v1599, %v1747
      %1750 = vbcast.lane.b32.xlu0 %v1748, 256
      %v1751 = vpop.permute.xlu0 %1750
      %v1752 = vlaneseq
      %v1753 = vshrl.u32 %v1752, 7
      %v1754 = vsub.s32 1, %v1753
      %v1755 = vrot.slane %v1599, %v1754
      %1757 = vbcast.lane.b32.xlu0 %v1755, 256
      %v1758 = vpop.permute.xlu0 %1757
      %v1759 = vlaneseq
      %v1760 = vshrl.u32 %v1759, 7
      %v1761 = vsub.s32 2, %v1760
      %v1762 = vrot.slane %v1599, %v1761
      %1764 = vbcast.lane.b32.xlu0 %v1762, 256
      %v1765 = vpop.permute.xlu0 %1764
      %v1766 = vlaneseq
      %v1767 = vshrl.u32 %v1766, 7
      %v1768 = vsub.s32 3, %v1767
      %v1769 = vrot.slane %v1599, %v1768
      %1771 = vbcast.lane.b32.xlu0 %v1769, 256
      %v1772 = vpop.permute.xlu0 %1771
      %v1773 = vlaneseq
      %v1774 = vshrl.u32 %v1773, 7
      %v1775 = vsub.s32 4, %v1774
      %v1776 = vrot.slane %v1599, %v1775
      %1778 = vbcast.lane.b32.xlu0 %v1776, 256
      %v1779 = vpop.permute.xlu0 %1778
      %v1780 = vlaneseq
      %v1781 = vshrl.u32 %v1780, 7
      %v1782 = vsub.s32 5, %v1781
      %v1783 = vrot.slane %v1599, %v1782
      %1785 = vbcast.lane.b32.xlu0 %v1783, 256
      %v1786 = vpop.permute.xlu0 %1785
      %v1787 = vlaneseq
      %v1788 = vshrl.u32 %v1787, 7
      %v1789 = vsub.s32 6, %v1788
      %v1790 = vrot.slane %v1599, %v1789
      %1792 = vbcast.lane.b32.xlu0 %v1790, 256
      %v1793 = vpop.permute.xlu0 %1792
      %v1794 = vlaneseq
      %v1795 = vshrl.u32 %v1794, 7
      %v1796 = vsub.s32 7, %v1795
      %v1797 = vrot.slane %v1599, %v1796
      %1799 = vbcast.lane.b32.xlu0 %v1797, 256
      %v1800 = vpop.permute.xlu0 %1799
      %v1801 = vlaneseq
      %v1802 = vshrl.u32 %v1801, 7
      %v1803 = vsub.s32 0, %v1802
      %v1804 = vrot.slane %v1600, %v1803
      %1806 = vbcast.lane.b32.xlu0 %v1804, 256
      %v1807 = vpop.permute.xlu0 %1806
      %v1808 = vlaneseq
      %v1809 = vshrl.u32 %v1808, 7
      %v1810 = vsub.s32 1, %v1809
      %v1811 = vrot.slane %v1600, %v1810
      %1813 = vbcast.lane.b32.xlu0 %v1811, 256
      %v1814 = vpop.permute.xlu0 %1813
      %v1815 = vlaneseq
      %v1816 = vshrl.u32 %v1815, 7
      %v1817 = vsub.s32 2, %v1816
      %v1818 = vrot.slane %v1600, %v1817
      %1820 = vbcast.lane.b32.xlu0 %v1818, 256
      %v1821 = vpop.permute.xlu0 %1820
      %v1822 = vlaneseq
      %v1823 = vshrl.u32 %v1822, 7
      %v1824 = vsub.s32 3, %v1823
      %v1825 = vrot.slane %v1600, %v1824
      %1827 = vbcast.lane.b32.xlu0 %v1825, 256
      %v1828 = vpop.permute.xlu0 %1827
      %v1829 = vlaneseq
      %v1830 = vshrl.u32 %v1829, 7
      %v1831 = vsub.s32 4, %v1830
      %v1832 = vrot.slane %v1600, %v1831
      %1834 = vbcast.lane.b32.xlu0 %v1832, 256
      %v1835 = vpop.permute.xlu0 %1834
      %v1836 = vlaneseq
      %v1837 = vshrl.u32 %v1836, 7
      %v1838 = vsub.s32 5, %v1837
      %v1839 = vrot.slane %v1600, %v1838
      %1841 = vbcast.lane.b32.xlu0 %v1839, 256
      %v1842 = vpop.permute.xlu0 %1841
      %v1843 = vlaneseq
      %v1844 = vshrl.u32 %v1843, 7
      %v1845 = vsub.s32 6, %v1844
      %v1846 = vrot.slane %v1600, %v1845
      %1848 = vbcast.lane.b32.xlu0 %v1846, 256
      %v1849 = vpop.permute.xlu0 %1848
      %v1850 = vlaneseq
      %v1851 = vshrl.u32 %v1850, 7
      %v1852 = vsub.s32 7, %v1851
      %v1853 = vrot.slane %v1600, %v1852
      %1855 = vbcast.lane.b32.xlu0 %v1853, 256
      %v1856 = vpop.permute.xlu0 %1855
      %v1857 = vlaneseq
      %v1858 = vshrl.u32 %v1857, 7
      %v1859 = vsub.s32 0, %v1858
      %v1860 = vrot.slane %v1601, %v1859
      %1862 = vbcast.lane.b32.xlu0 %v1860, 256
      %v1863 = vpop.permute.xlu0 %1862
      %v1864 = vlaneseq
      %v1865 = vshrl.u32 %v1864, 7
      %v1866 = vsub.s32 1, %v1865
      %v1867 = vrot.slane %v1601, %v1866
      %1869 = vbcast.lane.b32.xlu0 %v1867, 256
      %v1870 = vpop.permute.xlu0 %1869
      %v1871 = vlaneseq
      %v1872 = vshrl.u32 %v1871, 7
      %v1873 = vsub.s32 2, %v1872
      %v1874 = vrot.slane %v1601, %v1873
      %1876 = vbcast.lane.b32.xlu0 %v1874, 256
      %v1877 = vpop.permute.xlu0 %1876
      %v1878 = vlaneseq
      %v1879 = vshrl.u32 %v1878, 7
      %v1880 = vsub.s32 3, %v1879
      %v1881 = vrot.slane %v1601, %v1880
      %1883 = vbcast.lane.b32.xlu0 %v1881, 256
      %v1884 = vpop.permute.xlu0 %1883
      %v1885 = vlaneseq
      %v1886 = vshrl.u32 %v1885, 7
      %v1887 = vsub.s32 4, %v1886
      %v1888 = vrot.slane %v1601, %v1887
      %1890 = vbcast.lane.b32.xlu0 %v1888, 256
      %v1891 = vpop.permute.xlu0 %1890
      %v1892 = vlaneseq
      %v1893 = vshrl.u32 %v1892, 7
      %v1894 = vsub.s32 5, %v1893
      %v1895 = vrot.slane %v1601, %v1894
      %1897 = vbcast.lane.b32.xlu0 %v1895, 256
      %v1898 = vpop.permute.xlu0 %1897
      %v1899 = vlaneseq
      %v1900 = vshrl.u32 %v1899, 7
      %v1901 = vsub.s32 6, %v1900
      %v1902 = vrot.slane %v1601, %v1901
      %1904 = vbcast.lane.b32.xlu0 %v1902, 256
      %v1905 = vpop.permute.xlu0 %1904
      %v1906 = vlaneseq
      %v1907 = vshrl.u32 %v1906, 7
      %v1908 = vsub.s32 7, %v1907
      %v1909 = vrot.slane %v1601, %v1908
      %1911 = vbcast.lane.b32.xlu0 %v1909, 256
      %v1912 = vpop.permute.xlu0 %1911
      %v1913 = vlaneseq
      %v1914 = vshrl.u32 %v1913, 7
      %v1915 = vsub.s32 0, %v1914
      %v1916 = vrot.slane %v1602, %v1915
      %1918 = vbcast.lane.b32.xlu0 %v1916, 256
      %v1919 = vpop.permute.xlu0 %1918
      %v1920 = vlaneseq
      %v1921 = vshrl.u32 %v1920, 7
      %v1922 = vsub.s32 1, %v1921
      %v1923 = vrot.slane %v1602, %v1922
      %1925 = vbcast.lane.b32.xlu0 %v1923, 256
      %v1926 = vpop.permute.xlu0 %1925
      %v1927 = vlaneseq
      %v1928 = vshrl.u32 %v1927, 7
      %v1929 = vsub.s32 2, %v1928
      %v1930 = vrot.slane %v1602, %v1929
      %1932 = vbcast.lane.b32.xlu0 %v1930, 256
      %v1933 = vpop.permute.xlu0 %1932
      %v1934 = vlaneseq
      %v1935 = vshrl.u32 %v1934, 7
      %v1936 = vsub.s32 3, %v1935
      %v1937 = vrot.slane %v1602, %v1936
      %1939 = vbcast.lane.b32.xlu0 %v1937, 256
      %v1940 = vpop.permute.xlu0 %1939
      %v1941 = vlaneseq
      %v1942 = vshrl.u32 %v1941, 7
      %v1943 = vsub.s32 4, %v1942
      %v1944 = vrot.slane %v1602, %v1943
      %1946 = vbcast.lane.b32.xlu0 %v1944, 256
      %v1947 = vpop.permute.xlu0 %1946
      %v1948 = vlaneseq
      %v1949 = vshrl.u32 %v1948, 7
      %v1950 = vsub.s32 5, %v1949
      %v1951 = vrot.slane %v1602, %v1950
      %1953 = vbcast.lane.b32.xlu0 %v1951, 256
      %v1954 = vpop.permute.xlu0 %1953
      %v1955 = vlaneseq
      %v1956 = vshrl.u32 %v1955, 7
      %v1957 = vsub.s32 6, %v1956
      %v1958 = vrot.slane %v1602, %v1957
      %1960 = vbcast.lane.b32.xlu0 %v1958, 256
      %v1961 = vpop.permute.xlu0 %1960
      %v1962 = vlaneseq
      %v1963 = vshrl.u32 %v1962, 7
      %v1964 = vsub.s32 7, %v1963
      %v1965 = vrot.slane %v1602, %v1964
      %1967 = vbcast.lane.b32.xlu0 %v1965, 256
      %v1968 = vpop.permute.xlu0 %1967
      %v1969 = vlaneseq
      %v1970 = vshrl.u32 %v1969, 7
      %v1971 = vsub.s32 0, %v1970
      %v1972 = vrot.slane %v1603, %v1971
      %1974 = vbcast.lane.b32.xlu0 %v1972, 256
      %v1975 = vpop.permute.xlu0 %1974
      %v1976 = vlaneseq
      %v1977 = vshrl.u32 %v1976, 7
      %v1978 = vsub.s32 1, %v1977
      %v1979 = vrot.slane %v1603, %v1978
      %1981 = vbcast.lane.b32.xlu0 %v1979, 256
      %v1982 = vpop.permute.xlu0 %1981
      %v1983 = vlaneseq
      %v1984 = vshrl.u32 %v1983, 7
      %v1985 = vsub.s32 2, %v1984
      %v1986 = vrot.slane %v1603, %v1985
      %1988 = vbcast.lane.b32.xlu0 %v1986, 256
      %v1989 = vpop.permute.xlu0 %1988
      %v1990 = vlaneseq
      %v1991 = vshrl.u32 %v1990, 7
      %v1992 = vsub.s32 3, %v1991
      %v1993 = vrot.slane %v1603, %v1992
      %1995 = vbcast.lane.b32.xlu0 %v1993, 256
      %v1996 = vpop.permute.xlu0 %1995
      %v1997 = vlaneseq
      %v1998 = vshrl.u32 %v1997, 7
      %v1999 = vsub.s32 4, %v1998
      %v2000 = vrot.slane %v1603, %v1999
      %2002 = vbcast.lane.b32.xlu0 %v2000, 256
      %v2003 = vpop.permute.xlu0 %2002
      %v2004 = vlaneseq
      %v2005 = vshrl.u32 %v2004, 7
      %v2006 = vsub.s32 5, %v2005
      %v2007 = vrot.slane %v1603, %v2006
      %2009 = vbcast.lane.b32.xlu0 %v2007, 256
      %v2010 = vpop.permute.xlu0 %2009
      %v2011 = vlaneseq
      %v2012 = vshrl.u32 %v2011, 7
      %v2013 = vsub.s32 6, %v2012
      %v2014 = vrot.slane %v1603, %v2013
      %2016 = vbcast.lane.b32.xlu0 %v2014, 256
      %v2017 = vpop.permute.xlu0 %2016
      %v2018 = vlaneseq
      %v2019 = vshrl.u32 %v2018, 7
      %v2020 = vsub.s32 7, %v2019
      %v2021 = vrot.slane %v1603, %v2020
      %2023 = vbcast.lane.b32.xlu0 %v2021, 256
      %v2024 = vpop.permute.xlu0 %2023
      %v2025 = vlaneseq
      %v2026 = vshrl.u32 %v2025, 7
      %v2027 = vsub.s32 0, %v2026
      %v2028 = vrot.slane %v1604, %v2027
      %2030 = vbcast.lane.b32.xlu0 %v2028, 256
      %v2031 = vpop.permute.xlu0 %2030
      %v2032 = vlaneseq
      %v2033 = vshrl.u32 %v2032, 7
      %v2034 = vsub.s32 1, %v2033
      %v2035 = vrot.slane %v1604, %v2034
      %2037 = vbcast.lane.b32.xlu0 %v2035, 256
      %v2038 = vpop.permute.xlu0 %2037
      %v2039 = vlaneseq
      %v2040 = vshrl.u32 %v2039, 7
      %v2041 = vsub.s32 2, %v2040
      %v2042 = vrot.slane %v1604, %v2041
      %2044 = vbcast.lane.b32.xlu0 %v2042, 256
      %v2045 = vpop.permute.xlu0 %2044
      %v2046 = vlaneseq
      %v2047 = vshrl.u32 %v2046, 7
      %v2048 = vsub.s32 3, %v2047
      %v2049 = vrot.slane %v1604, %v2048
      %2051 = vbcast.lane.b32.xlu0 %v2049, 256
      %v2052 = vpop.permute.xlu0 %2051
      %v2053 = vlaneseq
      %v2054 = vshrl.u32 %v2053, 7
      %v2055 = vsub.s32 4, %v2054
      %v2056 = vrot.slane %v1604, %v2055
      %2058 = vbcast.lane.b32.xlu0 %v2056, 256
      %v2059 = vpop.permute.xlu0 %2058
      %v2060 = vlaneseq
      %v2061 = vshrl.u32 %v2060, 7
      %v2062 = vsub.s32 5, %v2061
      %v2063 = vrot.slane %v1604, %v2062
      %2065 = vbcast.lane.b32.xlu0 %v2063, 256
      %v2066 = vpop.permute.xlu0 %2065
      %v2067 = vlaneseq
      %v2068 = vshrl.u32 %v2067, 7
      %v2069 = vsub.s32 6, %v2068
      %v2070 = vrot.slane %v1604, %v2069
      %2072 = vbcast.lane.b32.xlu0 %v2070, 256
      %v2073 = vpop.permute.xlu0 %2072
      %v2074 = vlaneseq
      %v2075 = vshrl.u32 %v2074, 7
      %v2076 = vsub.s32 7, %v2075
      %v2077 = vrot.slane %v1604, %v2076
      %2079 = vbcast.lane.b32.xlu0 %v2077, 256
      %v2080 = vpop.permute.xlu0 %2079
      %v2081 = vlaneseq
      %v2082 = vshrl.u32 %v2081, 7
      %v2083 = vsub.s32 0, %v2082
      %v2084 = vrot.slane %v1605, %v2083
      %2086 = vbcast.lane.b32.xlu0 %v2084, 256
      %v2087 = vpop.permute.xlu0 %2086
      %v2088 = vlaneseq
      %v2089 = vshrl.u32 %v2088, 7
      %v2090 = vsub.s32 1, %v2089
      %v2091 = vrot.slane %v1605, %v2090
      %2093 = vbcast.lane.b32.xlu0 %v2091, 256
      %v2094 = vpop.permute.xlu0 %2093
      %v2095 = vlaneseq
      %v2096 = vshrl.u32 %v2095, 7
      %v2097 = vsub.s32 2, %v2096
      %v2098 = vrot.slane %v1605, %v2097
      %2100 = vbcast.lane.b32.xlu0 %v2098, 256
      %v2101 = vpop.permute.xlu0 %2100
      %v2102 = vlaneseq
      %v2103 = vshrl.u32 %v2102, 7
      %v2104 = vsub.s32 3, %v2103
      %v2105 = vrot.slane %v1605, %v2104
      %2107 = vbcast.lane.b32.xlu0 %v2105, 256
      %v2108 = vpop.permute.xlu0 %2107
      %v2109 = vlaneseq
      %v2110 = vshrl.u32 %v2109, 7
      %v2111 = vsub.s32 4, %v2110
      %v2112 = vrot.slane %v1605, %v2111
      %2114 = vbcast.lane.b32.xlu0 %v2112, 256
      %v2115 = vpop.permute.xlu0 %2114
      %v2116 = vlaneseq
      %v2117 = vshrl.u32 %v2116, 7
      %v2118 = vsub.s32 5, %v2117
      %v2119 = vrot.slane %v1605, %v2118
      %2121 = vbcast.lane.b32.xlu0 %v2119, 256
      %v2122 = vpop.permute.xlu0 %2121
      %v2123 = vlaneseq
      %v2124 = vshrl.u32 %v2123, 7
      %v2125 = vsub.s32 6, %v2124
      %v2126 = vrot.slane %v1605, %v2125
      %2128 = vbcast.lane.b32.xlu0 %v2126, 256
      %v2129 = vpop.permute.xlu0 %2128
      %v2130 = vlaneseq
      %v2131 = vshrl.u32 %v2130, 7
      %v2132 = vsub.s32 7, %v2131
      %v2133 = vrot.slane %v1605, %v2132
      %2135 = vbcast.lane.b32.xlu0 %v2133, 256
      %v2136 = vpop.permute.xlu0 %2135
      %v2137 = vlaneseq
      %v2138 = vshrl.u32 %v2137, 7
      %v2139 = vsub.s32 0, %v2138
      %v2140 = vrot.slane %v1606, %v2139
      %2142 = vbcast.lane.b32.xlu0 %v2140, 256
      %v2143 = vpop.permute.xlu0 %2142
      %v2144 = vlaneseq
      %v2145 = vshrl.u32 %v2144, 7
      %v2146 = vsub.s32 1, %v2145
      %v2147 = vrot.slane %v1606, %v2146
      %2149 = vbcast.lane.b32.xlu0 %v2147, 256
      %v2150 = vpop.permute.xlu0 %2149
      %v2151 = vlaneseq
      %v2152 = vshrl.u32 %v2151, 7
      %v2153 = vsub.s32 2, %v2152
      %v2154 = vrot.slane %v1606, %v2153
      %2156 = vbcast.lane.b32.xlu0 %v2154, 256
      %v2157 = vpop.permute.xlu0 %2156
      %v2158 = vlaneseq
      %v2159 = vshrl.u32 %v2158, 7
      %v2160 = vsub.s32 3, %v2159
      %v2161 = vrot.slane %v1606, %v2160
      %2163 = vbcast.lane.b32.xlu0 %v2161, 256
      %v2164 = vpop.permute.xlu0 %2163
      %v2165 = vlaneseq
      %v2166 = vshrl.u32 %v2165, 7
      %v2167 = vsub.s32 4, %v2166
      %v2168 = vrot.slane %v1606, %v2167
      %2170 = vbcast.lane.b32.xlu0 %v2168, 256
      %v2171 = vpop.permute.xlu0 %2170
      %v2172 = vlaneseq
      %v2173 = vshrl.u32 %v2172, 7
      %v2174 = vsub.s32 5, %v2173
      %v2175 = vrot.slane %v1606, %v2174
      %2177 = vbcast.lane.b32.xlu0 %v2175, 256
      %v2178 = vpop.permute.xlu0 %2177
      %v2179 = vlaneseq
      %v2180 = vshrl.u32 %v2179, 7
      %v2181 = vsub.s32 6, %v2180
      %v2182 = vrot.slane %v1606, %v2181
      %2184 = vbcast.lane.b32.xlu0 %v2182, 256
      %v2185 = vpop.permute.xlu0 %2184
      %v2186 = vlaneseq
      %v2187 = vshrl.u32 %v2186, 7
      %v2188 = vsub.s32 7, %v2187
      %v2189 = vrot.slane %v1606, %v2188
      %2191 = vbcast.lane.b32.xlu0 %v2189, 256
      %v2192 = vpop.permute.xlu0 %2191
      %v2193 = vlaneseq
      %v2194 = vshrl.u32 %v2193, 7
      %v2195 = vsub.s32 0, %v2194
      %v2196 = vrot.slane %v1607, %v2195
      %2198 = vbcast.lane.b32.xlu0 %v2196, 256
      %v2199 = vpop.permute.xlu0 %2198
      %v2200 = vlaneseq
      %v2201 = vshrl.u32 %v2200, 7
      %v2202 = vsub.s32 1, %v2201
      %v2203 = vrot.slane %v1607, %v2202
      %2205 = vbcast.lane.b32.xlu0 %v2203, 256
      %v2206 = vpop.permute.xlu0 %2205
      %v2207 = vlaneseq
      %v2208 = vshrl.u32 %v2207, 7
      %v2209 = vsub.s32 2, %v2208
      %v2210 = vrot.slane %v1607, %v2209
      %2212 = vbcast.lane.b32.xlu0 %v2210, 256
      %v2213 = vpop.permute.xlu0 %2212
      %v2214 = vlaneseq
      %v2215 = vshrl.u32 %v2214, 7
      %v2216 = vsub.s32 3, %v2215
      %v2217 = vrot.slane %v1607, %v2216
      %2219 = vbcast.lane.b32.xlu0 %v2217, 256
      %v2220 = vpop.permute.xlu0 %2219
      %v2221 = vlaneseq
      %v2222 = vshrl.u32 %v2221, 7
      %v2223 = vsub.s32 4, %v2222
      %v2224 = vrot.slane %v1607, %v2223
      %2226 = vbcast.lane.b32.xlu0 %v2224, 256
      %v2227 = vpop.permute.xlu0 %2226
      %v2228 = vlaneseq
      %v2229 = vshrl.u32 %v2228, 7
      %v2230 = vsub.s32 5, %v2229
      %v2231 = vrot.slane %v1607, %v2230
      %2233 = vbcast.lane.b32.xlu0 %v2231, 256
      %v2234 = vpop.permute.xlu0 %2233
      %v2235 = vlaneseq
      %v2236 = vshrl.u32 %v2235, 7
      %v2237 = vsub.s32 6, %v2236
      %v2238 = vrot.slane %v1607, %v2237
      %2240 = vbcast.lane.b32.xlu0 %v2238, 256
      %v2241 = vpop.permute.xlu0 %2240
      %v2242 = vlaneseq
      %v2243 = vshrl.u32 %v2242, 7
      %v2244 = vsub.s32 7, %v2243
      %v2245 = vrot.slane %v1607, %v2244
      %2247 = vbcast.lane.b32.xlu0 %v2245, 256
      %v2248 = vpop.permute.xlu0 %2247
      %v2249 = vlaneseq
      %v2250 = vshrl.u32 %v2249, 7
      %v2251 = vsub.s32 0, %v2250
      %v2252 = vrot.slane %v1608, %v2251
      %2254 = vbcast.lane.b32.xlu0 %v2252, 256
      %v2255 = vpop.permute.xlu0 %2254
      %v2256 = vlaneseq
      %v2257 = vshrl.u32 %v2256, 7
      %v2258 = vsub.s32 1, %v2257
      %v2259 = vrot.slane %v1608, %v2258
      %2261 = vbcast.lane.b32.xlu0 %v2259, 256
      %v2262 = vpop.permute.xlu0 %2261
      %v2263 = vlaneseq
      %v2264 = vshrl.u32 %v2263, 7
      %v2265 = vsub.s32 2, %v2264
      %v2266 = vrot.slane %v1608, %v2265
      %2268 = vbcast.lane.b32.xlu0 %v2266, 256
      %v2269 = vpop.permute.xlu0 %2268
      %v2270 = vlaneseq
      %v2271 = vshrl.u32 %v2270, 7
      %v2272 = vsub.s32 3, %v2271
      %v2273 = vrot.slane %v1608, %v2272
      %2275 = vbcast.lane.b32.xlu0 %v2273, 256
      %v2276 = vpop.permute.xlu0 %2275
      %v2277 = vlaneseq
      %v2278 = vshrl.u32 %v2277, 7
      %v2279 = vsub.s32 4, %v2278
      %v2280 = vrot.slane %v1608, %v2279
      %2282 = vbcast.lane.b32.xlu0 %v2280, 256
      %v2283 = vpop.permute.xlu0 %2282
      %v2284 = vlaneseq
      %v2285 = vshrl.u32 %v2284, 7
      %v2286 = vsub.s32 5, %v2285
      %v2287 = vrot.slane %v1608, %v2286
      %2289 = vbcast.lane.b32.xlu0 %v2287, 256
      %v2290 = vpop.permute.xlu0 %2289
      %v2291 = vlaneseq
      %v2292 = vshrl.u32 %v2291, 7
      %v2293 = vsub.s32 6, %v2292
      %v2294 = vrot.slane %v1608, %v2293
      %2296 = vbcast.lane.b32.xlu0 %v2294, 256
      %v2297 = vpop.permute.xlu0 %2296
      %v2298 = vlaneseq
      %v2299 = vshrl.u32 %v2298, 7
      %v2300 = vsub.s32 7, %v2299
      %v2301 = vrot.slane %v1608, %v2300
      %2303 = vbcast.lane.b32.xlu0 %v2301, 256
      %v2304 = vpop.permute.xlu0 %2303
      %v2305 = vlaneseq
      %v2306 = vshrl.u32 %v2305, 7
      %v2307 = vsub.s32 0, %v2306
      %v2308 = vrot.slane %v1609, %v2307
      %2310 = vbcast.lane.b32.xlu0 %v2308, 256
      %v2311 = vpop.permute.xlu0 %2310
      %v2312 = vlaneseq
      %v2313 = vshrl.u32 %v2312, 7
      %v2314 = vsub.s32 1, %v2313
      %v2315 = vrot.slane %v1609, %v2314
      %2317 = vbcast.lane.b32.xlu0 %v2315, 256
      %v2318 = vpop.permute.xlu0 %2317
      %v2319 = vlaneseq
      %v2320 = vshrl.u32 %v2319, 7
      %v2321 = vsub.s32 2, %v2320
      %v2322 = vrot.slane %v1609, %v2321
      %2324 = vbcast.lane.b32.xlu0 %v2322, 256
      %v2325 = vpop.permute.xlu0 %2324
      %v2326 = vlaneseq
      %v2327 = vshrl.u32 %v2326, 7
      %v2328 = vsub.s32 3, %v2327
      %v2329 = vrot.slane %v1609, %v2328
      %2331 = vbcast.lane.b32.xlu0 %v2329, 256
      %v2332 = vpop.permute.xlu0 %2331
      %v2333 = vlaneseq
      %v2334 = vshrl.u32 %v2333, 7
      %v2335 = vsub.s32 4, %v2334
      %v2336 = vrot.slane %v1609, %v2335
      %2338 = vbcast.lane.b32.xlu0 %v2336, 256
      %v2339 = vpop.permute.xlu0 %2338
      %v2340 = vlaneseq
      %v2341 = vshrl.u32 %v2340, 7
      %v2342 = vsub.s32 5, %v2341
      %v2343 = vrot.slane %v1609, %v2342
      %2345 = vbcast.lane.b32.xlu0 %v2343, 256
      %v2346 = vpop.permute.xlu0 %2345
      %v2347 = vlaneseq
      %v2348 = vshrl.u32 %v2347, 7
      %v2349 = vsub.s32 6, %v2348
      %v2350 = vrot.slane %v1609, %v2349
      %2352 = vbcast.lane.b32.xlu0 %v2350, 256
      %v2353 = vpop.permute.xlu0 %2352
      %v2354 = vlaneseq
      %v2355 = vshrl.u32 %v2354, 7
      %v2356 = vsub.s32 7, %v2355
      %v2357 = vrot.slane %v1609, %v2356
      %2359 = vbcast.lane.b32.xlu0 %v2357, 256
      %v2360 = vpop.permute.xlu0 %2359
      %v2361 = vlaneseq
      %v2362 = vshrl.u32 %v2361, 7
      %v2363 = vsub.s32 0, %v2362
      %v2364 = vrot.slane %v1610, %v2363
      %2366 = vbcast.lane.b32.xlu0 %v2364, 256
      %v2367 = vpop.permute.xlu0 %2366
      %v2368 = vlaneseq
      %v2369 = vshrl.u32 %v2368, 7
      %v2370 = vsub.s32 1, %v2369
      %v2371 = vrot.slane %v1610, %v2370
      %2373 = vbcast.lane.b32.xlu0 %v2371, 256
      %v2374 = vpop.permute.xlu0 %2373
      %v2375 = vlaneseq
      %v2376 = vshrl.u32 %v2375, 7
      %v2377 = vsub.s32 2, %v2376
      %v2378 = vrot.slane %v1610, %v2377
      %2380 = vbcast.lane.b32.xlu0 %v2378, 256
      %v2381 = vpop.permute.xlu0 %2380
      %v2382 = vlaneseq
      %v2383 = vshrl.u32 %v2382, 7
      %v2384 = vsub.s32 3, %v2383
      %v2385 = vrot.slane %v1610, %v2384
      %2387 = vbcast.lane.b32.xlu0 %v2385, 256
      %v2388 = vpop.permute.xlu0 %2387
      %v2389 = vlaneseq
      %v2390 = vshrl.u32 %v2389, 7
      %v2391 = vsub.s32 4, %v2390
      %v2392 = vrot.slane %v1610, %v2391
      %2394 = vbcast.lane.b32.xlu0 %v2392, 256
      %v2395 = vpop.permute.xlu0 %2394
      %v2396 = vlaneseq
      %v2397 = vshrl.u32 %v2396, 7
      %v2398 = vsub.s32 5, %v2397
      %v2399 = vrot.slane %v1610, %v2398
      %2401 = vbcast.lane.b32.xlu0 %v2399, 256
      %v2402 = vpop.permute.xlu0 %2401
      %v2403 = vlaneseq
      %v2404 = vshrl.u32 %v2403, 7
      %v2405 = vsub.s32 6, %v2404
      %v2406 = vrot.slane %v1610, %v2405
      %2408 = vbcast.lane.b32.xlu0 %v2406, 256
      %v2409 = vpop.permute.xlu0 %2408
      %v2410 = vlaneseq
      %v2411 = vshrl.u32 %v2410, 7
      %v2412 = vsub.s32 7, %v2411
      %v2413 = vrot.slane %v1610, %v2412
      %2415 = vbcast.lane.b32.xlu0 %v2413, 256
      %v2416 = vpop.permute.xlu0 %2415
      %v2417 = vlaneseq
      %v2418 = vshrl.u32 %v2417, 7
      %v2419 = vsub.s32 0, %v2418
      %v2420 = vrot.slane %v1611, %v2419
      %2422 = vbcast.lane.b32.xlu0 %v2420, 256
      %v2423 = vpop.permute.xlu0 %2422
      %v2424 = vlaneseq
      %v2425 = vshrl.u32 %v2424, 7
      %v2426 = vsub.s32 1, %v2425
      %v2427 = vrot.slane %v1611, %v2426
      %2429 = vbcast.lane.b32.xlu0 %v2427, 256
      %v2430 = vpop.permute.xlu0 %2429
      %v2431 = vlaneseq
      %v2432 = vshrl.u32 %v2431, 7
      %v2433 = vsub.s32 2, %v2432
      %v2434 = vrot.slane %v1611, %v2433
      %2436 = vbcast.lane.b32.xlu0 %v2434, 256
      %v2437 = vpop.permute.xlu0 %2436
      %v2438 = vlaneseq
      %v2439 = vshrl.u32 %v2438, 7
      %v2440 = vsub.s32 3, %v2439
      %v2441 = vrot.slane %v1611, %v2440
      %2443 = vbcast.lane.b32.xlu0 %v2441, 256
      %v2444 = vpop.permute.xlu0 %2443
      %v2445 = vlaneseq
      %v2446 = vshrl.u32 %v2445, 7
      %v2447 = vsub.s32 4, %v2446
      %v2448 = vrot.slane %v1611, %v2447
      %2450 = vbcast.lane.b32.xlu0 %v2448, 256
      %v2451 = vpop.permute.xlu0 %2450
      %v2452 = vlaneseq
      %v2453 = vshrl.u32 %v2452, 7
      %v2454 = vsub.s32 5, %v2453
      %v2455 = vrot.slane %v1611, %v2454
      %2457 = vbcast.lane.b32.xlu0 %v2455, 256
      %v2458 = vpop.permute.xlu0 %2457
      %v2459 = vlaneseq
      %v2460 = vshrl.u32 %v2459, 7
      %v2461 = vsub.s32 6, %v2460
      %v2462 = vrot.slane %v1611, %v2461
      %2464 = vbcast.lane.b32.xlu0 %v2462, 256
      %v2465 = vpop.permute.xlu0 %2464
      %v2466 = vlaneseq
      %v2467 = vshrl.u32 %v2466, 7
      %v2468 = vsub.s32 7, %v2467
      %v2469 = vrot.slane %v1611, %v2468
      %2471 = vbcast.lane.b32.xlu0 %v2469, 256
      %v2472 = vpop.permute.xlu0 %2471
      %v2473 = vlaneseq
      %v2474 = vshrl.u32 %v2473, 7
      %v2475 = vsub.s32 0, %v2474
      %v2476 = vrot.slane %v1612, %v2475
      %2478 = vbcast.lane.b32.xlu0 %v2476, 256
      %v2479 = vpop.permute.xlu0 %2478
      %v2480 = vlaneseq
      %v2481 = vshrl.u32 %v2480, 7
      %v2482 = vsub.s32 1, %v2481
      %v2483 = vrot.slane %v1612, %v2482
      %2485 = vbcast.lane.b32.xlu0 %v2483, 256
      %v2486 = vpop.permute.xlu0 %2485
      %v2487 = vlaneseq
      %v2488 = vshrl.u32 %v2487, 7
      %v2489 = vsub.s32 2, %v2488
      %v2490 = vrot.slane %v1612, %v2489
      %2492 = vbcast.lane.b32.xlu0 %v2490, 256
      %v2493 = vpop.permute.xlu0 %2492
      %v2494 = vlaneseq
      %v2495 = vshrl.u32 %v2494, 7
      %v2496 = vsub.s32 3, %v2495
      %v2497 = vrot.slane %v1612, %v2496
      %2499 = vbcast.lane.b32.xlu0 %v2497, 256
      %v2500 = vpop.permute.xlu0 %2499
      %v2501 = vlaneseq
      %v2502 = vshrl.u32 %v2501, 7
      %v2503 = vsub.s32 4, %v2502
      %v2504 = vrot.slane %v1612, %v2503
      %2506 = vbcast.lane.b32.xlu0 %v2504, 256
      %v2507 = vpop.permute.xlu0 %2506
      %v2508 = vlaneseq
      %v2509 = vshrl.u32 %v2508, 7
      %v2510 = vsub.s32 5, %v2509
      %v2511 = vrot.slane %v1612, %v2510
      %2513 = vbcast.lane.b32.xlu0 %v2511, 256
      %v2514 = vpop.permute.xlu0 %2513
      %v2515 = vlaneseq
      %v2516 = vshrl.u32 %v2515, 7
      %v2517 = vsub.s32 6, %v2516
      %v2518 = vrot.slane %v1612, %v2517
      %2520 = vbcast.lane.b32.xlu0 %v2518, 256
      %v2521 = vpop.permute.xlu0 %2520
      %v2522 = vlaneseq
      %v2523 = vshrl.u32 %v2522, 7
      %v2524 = vsub.s32 7, %v2523
      %v2525 = vrot.slane %v1612, %v2524
      %2527 = vbcast.lane.b32.xlu0 %v2525, 256
      %v2528 = vpop.permute.xlu0 %2527
      %v2529 = vlaneseq
      %v2530 = vshrl.u32 %v2529, 7
      %v2531 = vsub.s32 0, %v2530
      %v2532 = vrot.slane %v1613, %v2531
      %2534 = vbcast.lane.b32.xlu0 %v2532, 256
      %v2535 = vpop.permute.xlu0 %2534
      %v2536 = vlaneseq
      %v2537 = vshrl.u32 %v2536, 7
      %v2538 = vsub.s32 1, %v2537
      %v2539 = vrot.slane %v1613, %v2538
      %2541 = vbcast.lane.b32.xlu0 %v2539, 256
      %v2542 = vpop.permute.xlu0 %2541
      %v2543 = vlaneseq
      %v2544 = vshrl.u32 %v2543, 7
      %v2545 = vsub.s32 2, %v2544
      %v2546 = vrot.slane %v1613, %v2545
      %2548 = vbcast.lane.b32.xlu0 %v2546, 256
      %v2549 = vpop.permute.xlu0 %2548
      %v2550 = vlaneseq
      %v2551 = vshrl.u32 %v2550, 7
      %v2552 = vsub.s32 3, %v2551
      %v2553 = vrot.slane %v1613, %v2552
      %2555 = vbcast.lane.b32.xlu0 %v2553, 256
      %v2556 = vpop.permute.xlu0 %2555
      %v2557 = vlaneseq
      %v2558 = vshrl.u32 %v2557, 7
      %v2559 = vsub.s32 4, %v2558
      %v2560 = vrot.slane %v1613, %v2559
      %2562 = vbcast.lane.b32.xlu0 %v2560, 256
      %v2563 = vpop.permute.xlu0 %2562
      %v2564 = vlaneseq
      %v2565 = vshrl.u32 %v2564, 7
      %v2566 = vsub.s32 5, %v2565
      %v2567 = vrot.slane %v1613, %v2566
      %2569 = vbcast.lane.b32.xlu0 %v2567, 256
      %v2570 = vpop.permute.xlu0 %2569
      %v2571 = vlaneseq
      %v2572 = vshrl.u32 %v2571, 7
      %v2573 = vsub.s32 6, %v2572
      %v2574 = vrot.slane %v1613, %v2573
      %2576 = vbcast.lane.b32.xlu0 %v2574, 256
      %v2577 = vpop.permute.xlu0 %2576
      %v2578 = vlaneseq
      %v2579 = vshrl.u32 %v2578, 7
      %v2580 = vsub.s32 7, %v2579
      %v2581 = vrot.slane %v1613, %v2580
      %2583 = vbcast.lane.b32.xlu0 %v2581, 256
      %v2584 = vpop.permute.xlu0 %2583
      %v2585 = vlaneseq
      %v2586 = vshrl.u32 %v2585, 7
      %v2587 = vsub.s32 0, %v2586
      %v2588 = vrot.slane %v1614, %v2587
      %2590 = vbcast.lane.b32.xlu0 %v2588, 256
      %v2591 = vpop.permute.xlu0 %2590
      %v2592 = vlaneseq
      %v2593 = vshrl.u32 %v2592, 7
      %v2594 = vsub.s32 1, %v2593
      %v2595 = vrot.slane %v1614, %v2594
      %2597 = vbcast.lane.b32.xlu0 %v2595, 256
      %v2598 = vpop.permute.xlu0 %2597
      %v2599 = vlaneseq
      %v2600 = vshrl.u32 %v2599, 7
      %v2601 = vsub.s32 2, %v2600
      %v2602 = vrot.slane %v1614, %v2601
      %2604 = vbcast.lane.b32.xlu0 %v2602, 256
      %v2605 = vpop.permute.xlu0 %2604
      %v2606 = vlaneseq
      %v2607 = vshrl.u32 %v2606, 7
      %v2608 = vsub.s32 3, %v2607
      %v2609 = vrot.slane %v1614, %v2608
      %2611 = vbcast.lane.b32.xlu0 %v2609, 256
      %v2612 = vpop.permute.xlu0 %2611
      %v2613 = vlaneseq
      %v2614 = vshrl.u32 %v2613, 7
      %v2615 = vsub.s32 4, %v2614
      %v2616 = vrot.slane %v1614, %v2615
      %2618 = vbcast.lane.b32.xlu0 %v2616, 256
      %v2619 = vpop.permute.xlu0 %2618
      %v2620 = vlaneseq
      %v2621 = vshrl.u32 %v2620, 7
      %v2622 = vsub.s32 5, %v2621
      %v2623 = vrot.slane %v1614, %v2622
      %2625 = vbcast.lane.b32.xlu0 %v2623, 256
      %v2626 = vpop.permute.xlu0 %2625
      %v2627 = vlaneseq
      %v2628 = vshrl.u32 %v2627, 7
      %v2629 = vsub.s32 6, %v2628
      %v2630 = vrot.slane %v1614, %v2629
      %2632 = vbcast.lane.b32.xlu0 %v2630, 256
      %v2633 = vpop.permute.xlu0 %2632
      %v2634 = vlaneseq
      %v2635 = vshrl.u32 %v2634, 7
      %v2636 = vsub.s32 7, %v2635
      %v2637 = vrot.slane %v1614, %v2636
      %2639 = vbcast.lane.b32.xlu0 %v2637, 256
      %v2640 = vpop.permute.xlu0 %2639
      %v2641 = vlaneseq
      %v2642 = vshrl.u32 %v2641, 7
      %v2643 = vsub.s32 0, %v2642
      %v2644 = vrot.slane %v1615, %v2643
      %2646 = vbcast.lane.b32.xlu0 %v2644, 256
      %v2647 = vpop.permute.xlu0 %2646
      %v2648 = vlaneseq
      %v2649 = vshrl.u32 %v2648, 7
      %v2650 = vsub.s32 1, %v2649
      %v2651 = vrot.slane %v1615, %v2650
      %2653 = vbcast.lane.b32.xlu0 %v2651, 256
      %v2654 = vpop.permute.xlu0 %2653
      %v2655 = vlaneseq
      %v2656 = vshrl.u32 %v2655, 7
      %v2657 = vsub.s32 2, %v2656
      %v2658 = vrot.slane %v1615, %v2657
      %2660 = vbcast.lane.b32.xlu0 %v2658, 256
      %v2661 = vpop.permute.xlu0 %2660
      %v2662 = vlaneseq
      %v2663 = vshrl.u32 %v2662, 7
      %v2664 = vsub.s32 3, %v2663
      %v2665 = vrot.slane %v1615, %v2664
      %2667 = vbcast.lane.b32.xlu0 %v2665, 256
      %v2668 = vpop.permute.xlu0 %2667
      %v2669 = vlaneseq
      %v2670 = vshrl.u32 %v2669, 7
      %v2671 = vsub.s32 4, %v2670
      %v2672 = vrot.slane %v1615, %v2671
      %2674 = vbcast.lane.b32.xlu0 %v2672, 256
      %v2675 = vpop.permute.xlu0 %2674
      %v2676 = vlaneseq
      %v2677 = vshrl.u32 %v2676, 7
      %v2678 = vsub.s32 5, %v2677
      %v2679 = vrot.slane %v1615, %v2678
      %2681 = vbcast.lane.b32.xlu0 %v2679, 256
      %v2682 = vpop.permute.xlu0 %2681
      %v2683 = vlaneseq
      %v2684 = vshrl.u32 %v2683, 7
      %v2685 = vsub.s32 6, %v2684
      %v2686 = vrot.slane %v1615, %v2685
      %2688 = vbcast.lane.b32.xlu0 %v2686, 256
      %v2689 = vpop.permute.xlu0 %2688
      %v2690 = vlaneseq
      %v2691 = vshrl.u32 %v2690, 7
      %v2692 = vsub.s32 7, %v2691
      %v2693 = vrot.slane %v1615, %v2692
      %2695 = vbcast.lane.b32.xlu0 %v2693, 256
      %v2696 = vpop.permute.xlu0 %2695
      %v2697 = vlaneseq
      %v2698 = vshrl.u32 %v2697, 7
      %v2699 = vsub.s32 0, %v2698
      %v2700 = vrot.slane %v1616, %v2699
      %2702 = vbcast.lane.b32.xlu0 %v2700, 256
      %v2703 = vpop.permute.xlu0 %2702
      %v2704 = vlaneseq
      %v2705 = vshrl.u32 %v2704, 7
      %v2706 = vsub.s32 1, %v2705
      %v2707 = vrot.slane %v1616, %v2706
      %2709 = vbcast.lane.b32.xlu0 %v2707, 256
      %v2710 = vpop.permute.xlu0 %2709
      %v2711 = vlaneseq
      %v2712 = vshrl.u32 %v2711, 7
      %v2713 = vsub.s32 2, %v2712
      %v2714 = vrot.slane %v1616, %v2713
      %2716 = vbcast.lane.b32.xlu0 %v2714, 256
      %v2717 = vpop.permute.xlu0 %2716
      %v2718 = vlaneseq
      %v2719 = vshrl.u32 %v2718, 7
      %v2720 = vsub.s32 3, %v2719
      %v2721 = vrot.slane %v1616, %v2720
      %2723 = vbcast.lane.b32.xlu0 %v2721, 256
      %v2724 = vpop.permute.xlu0 %2723
      %v2725 = vlaneseq
      %v2726 = vshrl.u32 %v2725, 7
      %v2727 = vsub.s32 4, %v2726
      %v2728 = vrot.slane %v1616, %v2727
      %2730 = vbcast.lane.b32.xlu0 %v2728, 256
      %v2731 = vpop.permute.xlu0 %2730
      %v2732 = vlaneseq
      %v2733 = vshrl.u32 %v2732, 7
      %v2734 = vsub.s32 5, %v2733
      %v2735 = vrot.slane %v1616, %v2734
      %2737 = vbcast.lane.b32.xlu0 %v2735, 256
      %v2738 = vpop.permute.xlu0 %2737
      %v2739 = vlaneseq
      %v2740 = vshrl.u32 %v2739, 7
      %v2741 = vsub.s32 6, %v2740
      %v2742 = vrot.slane %v1616, %v2741
      %2744 = vbcast.lane.b32.xlu0 %v2742, 256
      %v2745 = vpop.permute.xlu0 %2744
      %v2746 = vlaneseq
      %v2747 = vshrl.u32 %v2746, 7
      %v2748 = vsub.s32 7, %v2747
      %v2749 = vrot.slane %v1616, %v2748
      %2751 = vbcast.lane.b32.xlu0 %v2749, 256
      %v2752 = vpop.permute.xlu0 %2751
      %v2753 = vlaneseq
      %v2754 = vshrl.u32 %v2753, 7
      %v2755 = vsub.s32 0, %v2754
      %v2756 = vrot.slane %v1617, %v2755
      %2758 = vbcast.lane.b32.xlu0 %v2756, 256
      %v2759 = vpop.permute.xlu0 %2758
      %v2760 = vlaneseq
      %v2761 = vshrl.u32 %v2760, 7
      %v2762 = vsub.s32 1, %v2761
      %v2763 = vrot.slane %v1617, %v2762
      %2765 = vbcast.lane.b32.xlu0 %v2763, 256
      %v2766 = vpop.permute.xlu0 %2765
      %v2767 = vlaneseq
      %v2768 = vshrl.u32 %v2767, 7
      %v2769 = vsub.s32 2, %v2768
      %v2770 = vrot.slane %v1617, %v2769
      %2772 = vbcast.lane.b32.xlu0 %v2770, 256
      %v2773 = vpop.permute.xlu0 %2772
      %v2774 = vlaneseq
      %v2775 = vshrl.u32 %v2774, 7
      %v2776 = vsub.s32 3, %v2775
      %v2777 = vrot.slane %v1617, %v2776
      %2779 = vbcast.lane.b32.xlu0 %v2777, 256
      %v2780 = vpop.permute.xlu0 %2779
      %v2781 = vlaneseq
      %v2782 = vshrl.u32 %v2781, 7
      %v2783 = vsub.s32 4, %v2782
      %v2784 = vrot.slane %v1617, %v2783
      %2786 = vbcast.lane.b32.xlu0 %v2784, 256
      %v2787 = vpop.permute.xlu0 %2786
      %v2788 = vlaneseq
      %v2789 = vshrl.u32 %v2788, 7
      %v2790 = vsub.s32 5, %v2789
      %v2791 = vrot.slane %v1617, %v2790
      %2793 = vbcast.lane.b32.xlu0 %v2791, 256
      %v2794 = vpop.permute.xlu0 %2793
      %v2795 = vlaneseq
      %v2796 = vshrl.u32 %v2795, 7
      %v2797 = vsub.s32 6, %v2796
      %v2798 = vrot.slane %v1617, %v2797
      %2800 = vbcast.lane.b32.xlu0 %v2798, 256
      %v2801 = vpop.permute.xlu0 %2800
      %v2802 = vlaneseq
      %v2803 = vshrl.u32 %v2802, 7
      %v2804 = vsub.s32 7, %v2803
      %v2805 = vrot.slane %v1617, %v2804
      %2807 = vbcast.lane.b32.xlu0 %v2805, 256
      %v2808 = vpop.permute.xlu0 %2807
      %v2809 = vlaneseq
      %v2810 = vshrl.u32 %v2809, 7
      %v2811 = vsub.s32 0, %v2810
      %v2812 = vrot.slane %v1618, %v2811
      %2814 = vbcast.lane.b32.xlu0 %v2812, 256
      %v2815 = vpop.permute.xlu0 %2814
      %v2816 = vlaneseq
      %v2817 = vshrl.u32 %v2816, 7
      %v2818 = vsub.s32 1, %v2817
      %v2819 = vrot.slane %v1618, %v2818
      %2821 = vbcast.lane.b32.xlu0 %v2819, 256
      %v2822 = vpop.permute.xlu0 %2821
      %v2823 = vlaneseq
      %v2824 = vshrl.u32 %v2823, 7
      %v2825 = vsub.s32 2, %v2824
      %v2826 = vrot.slane %v1618, %v2825
      %2828 = vbcast.lane.b32.xlu0 %v2826, 256
      %v2829 = vpop.permute.xlu0 %2828
      %v2830 = vlaneseq
      %v2831 = vshrl.u32 %v2830, 7
      %v2832 = vsub.s32 3, %v2831
      %v2833 = vrot.slane %v1618, %v2832
      %2835 = vbcast.lane.b32.xlu0 %v2833, 256
      %v2836 = vpop.permute.xlu0 %2835
      %v2837 = vlaneseq
      %v2838 = vshrl.u32 %v2837, 7
      %v2839 = vsub.s32 4, %v2838
      %v2840 = vrot.slane %v1618, %v2839
      %2842 = vbcast.lane.b32.xlu0 %v2840, 256
      %v2843 = vpop.permute.xlu0 %2842
      %v2844 = vlaneseq
      %v2845 = vshrl.u32 %v2844, 7
      %v2846 = vsub.s32 5, %v2845
      %v2847 = vrot.slane %v1618, %v2846
      %2849 = vbcast.lane.b32.xlu0 %v2847, 256
      %v2850 = vpop.permute.xlu0 %2849
      %v2851 = vlaneseq
      %v2852 = vshrl.u32 %v2851, 7
      %v2853 = vsub.s32 6, %v2852
      %v2854 = vrot.slane %v1618, %v2853
      %2856 = vbcast.lane.b32.xlu0 %v2854, 256
      %v2857 = vpop.permute.xlu0 %2856
      %v2858 = vlaneseq
      %v2859 = vshrl.u32 %v2858, 7
      %v2860 = vsub.s32 7, %v2859
      %v2861 = vrot.slane %v1618, %v2860
      %2863 = vbcast.lane.b32.xlu0 %v2861, 256
      %v2864 = vpop.permute.xlu0 %2863
      %v2865 = vlaneseq
      %v2866 = vshrl.u32 %v2865, 7
      %v2867 = vsub.s32 0, %v2866
      %v2868 = vrot.slane %v1619, %v2867
      %2870 = vbcast.lane.b32.xlu0 %v2868, 256
      %v2871 = vpop.permute.xlu0 %2870
      %v2872 = vlaneseq
      %v2873 = vshrl.u32 %v2872, 7
      %v2874 = vsub.s32 1, %v2873
      %v2875 = vrot.slane %v1619, %v2874
      %2877 = vbcast.lane.b32.xlu0 %v2875, 256
      %v2878 = vpop.permute.xlu0 %2877
      %v2879 = vlaneseq
      %v2880 = vshrl.u32 %v2879, 7
      %v2881 = vsub.s32 2, %v2880
      %v2882 = vrot.slane %v1619, %v2881
      %2884 = vbcast.lane.b32.xlu0 %v2882, 256
      %v2885 = vpop.permute.xlu0 %2884
      %v2886 = vlaneseq
      %v2887 = vshrl.u32 %v2886, 7
      %v2888 = vsub.s32 3, %v2887
      %v2889 = vrot.slane %v1619, %v2888
      %2891 = vbcast.lane.b32.xlu0 %v2889, 256
      %v2892 = vpop.permute.xlu0 %2891
      %v2893 = vlaneseq
      %v2894 = vshrl.u32 %v2893, 7
      %v2895 = vsub.s32 4, %v2894
      %v2896 = vrot.slane %v1619, %v2895
      %2898 = vbcast.lane.b32.xlu0 %v2896, 256
      %v2899 = vpop.permute.xlu0 %2898
      %v2900 = vlaneseq
      %v2901 = vshrl.u32 %v2900, 7
      %v2902 = vsub.s32 5, %v2901
      %v2903 = vrot.slane %v1619, %v2902
      %2905 = vbcast.lane.b32.xlu0 %v2903, 256
      %v2906 = vpop.permute.xlu0 %2905
      %v2907 = vlaneseq
      %v2908 = vshrl.u32 %v2907, 7
      %v2909 = vsub.s32 6, %v2908
      %v2910 = vrot.slane %v1619, %v2909
      %2912 = vbcast.lane.b32.xlu0 %v2910, 256
      %v2913 = vpop.permute.xlu0 %2912
      %v2914 = vlaneseq
      %v2915 = vshrl.u32 %v2914, 7
      %v2916 = vsub.s32 7, %v2915
      %v2917 = vrot.slane %v1619, %v2916
      %2919 = vbcast.lane.b32.xlu0 %v2917, 256
      %v2920 = vpop.permute.xlu0 %2919
      %v2921 = vlaneseq
      %v2922 = vshrl.u32 %v2921, 7
      %v2923 = vsub.s32 0, %v2922
      %v2924 = vrot.slane %v1620, %v2923
      %2926 = vbcast.lane.b32.xlu0 %v2924, 256
      %v2927 = vpop.permute.xlu0 %2926
      %v2928 = vlaneseq
      %v2929 = vshrl.u32 %v2928, 7
      %v2930 = vsub.s32 1, %v2929
      %v2931 = vrot.slane %v1620, %v2930
      %2933 = vbcast.lane.b32.xlu0 %v2931, 256
      %v2934 = vpop.permute.xlu0 %2933
      %v2935 = vlaneseq
      %v2936 = vshrl.u32 %v2935, 7
      %v2937 = vsub.s32 2, %v2936
      %v2938 = vrot.slane %v1620, %v2937
      %2940 = vbcast.lane.b32.xlu0 %v2938, 256
      %v2941 = vpop.permute.xlu0 %2940
      %v2942 = vlaneseq
      %v2943 = vshrl.u32 %v2942, 7
      %v2944 = vsub.s32 3, %v2943
      %v2945 = vrot.slane %v1620, %v2944
      %2947 = vbcast.lane.b32.xlu0 %v2945, 256
      %v2948 = vpop.permute.xlu0 %2947
      %v2949 = vlaneseq
      %v2950 = vshrl.u32 %v2949, 7
      %v2951 = vsub.s32 4, %v2950
      %v2952 = vrot.slane %v1620, %v2951
      %2954 = vbcast.lane.b32.xlu0 %v2952, 256
      %v2955 = vpop.permute.xlu0 %2954
      %v2956 = vlaneseq
      %v2957 = vshrl.u32 %v2956, 7
      %v2958 = vsub.s32 5, %v2957
      %v2959 = vrot.slane %v1620, %v2958
      %2961 = vbcast.lane.b32.xlu0 %v2959, 256
      %v2962 = vpop.permute.xlu0 %2961
      %v2963 = vlaneseq
      %v2964 = vshrl.u32 %v2963, 7
      %v2965 = vsub.s32 6, %v2964
      %v2966 = vrot.slane %v1620, %v2965
      %2968 = vbcast.lane.b32.xlu0 %v2966, 256
      %v2969 = vpop.permute.xlu0 %2968
      %v2970 = vlaneseq
      %v2971 = vshrl.u32 %v2970, 7
      %v2972 = vsub.s32 7, %v2971
      %v2973 = vrot.slane %v1620, %v2972
      %2975 = vbcast.lane.b32.xlu0 %v2973, 256
      %v2976 = vpop.permute.xlu0 %2975
      %v2977 = vlaneseq
      %v2978 = vshrl.u32 %v2977, 7
      %v2979 = vsub.s32 0, %v2978
      %v2980 = vrot.slane %v1621, %v2979
      %2982 = vbcast.lane.b32.xlu0 %v2980, 256
      %v2983 = vpop.permute.xlu0 %2982
      %v2984 = vlaneseq
      %v2985 = vshrl.u32 %v2984, 7
      %v2986 = vsub.s32 1, %v2985
      %v2987 = vrot.slane %v1621, %v2986
      %2989 = vbcast.lane.b32.xlu0 %v2987, 256
      %v2990 = vpop.permute.xlu0 %2989
      %v2991 = vlaneseq
      %v2992 = vshrl.u32 %v2991, 7
      %v2993 = vsub.s32 2, %v2992
      %v2994 = vrot.slane %v1621, %v2993
      %2996 = vbcast.lane.b32.xlu0 %v2994, 256
      %v2997 = vpop.permute.xlu0 %2996
      %v2998 = vlaneseq
      %v2999 = vshrl.u32 %v2998, 7
      %v3000 = vsub.s32 3, %v2999
      %v3001 = vrot.slane %v1621, %v3000
      %3003 = vbcast.lane.b32.xlu0 %v3001, 256
      %v3004 = vpop.permute.xlu0 %3003
      %v3005 = vlaneseq
      %v3006 = vshrl.u32 %v3005, 7
      %v3007 = vsub.s32 4, %v3006
      %v3008 = vrot.slane %v1621, %v3007
      %3010 = vbcast.lane.b32.xlu0 %v3008, 256
      %v3011 = vpop.permute.xlu0 %3010
      %v3012 = vlaneseq
      %v3013 = vshrl.u32 %v3012, 7
      %v3014 = vsub.s32 5, %v3013
      %v3015 = vrot.slane %v1621, %v3014
      %3017 = vbcast.lane.b32.xlu0 %v3015, 256
      %v3018 = vpop.permute.xlu0 %3017
      %v3019 = vlaneseq
      %v3020 = vshrl.u32 %v3019, 7
      %v3021 = vsub.s32 6, %v3020
      %v3022 = vrot.slane %v1621, %v3021
      %3024 = vbcast.lane.b32.xlu0 %v3022, 256
      %v3025 = vpop.permute.xlu0 %3024
      %v3026 = vlaneseq
      %v3027 = vshrl.u32 %v3026, 7
      %v3028 = vsub.s32 7, %v3027
      %v3029 = vrot.slane %v1621, %v3028
      %3031 = vbcast.lane.b32.xlu0 %v3029, 256
      %v3032 = vpop.permute.xlu0 %3031
      %v3033 = vlaneseq
      %v3034 = vshrl.u32 %v3033, 7
      %v3035 = vsub.s32 0, %v3034
      %v3036 = vrot.slane %v1622, %v3035
      %3038 = vbcast.lane.b32.xlu0 %v3036, 256
      %v3039 = vpop.permute.xlu0 %3038
      %v3040 = vlaneseq
      %v3041 = vshrl.u32 %v3040, 7
      %v3042 = vsub.s32 1, %v3041
      %v3043 = vrot.slane %v1622, %v3042
      %3045 = vbcast.lane.b32.xlu0 %v3043, 256
      %v3046 = vpop.permute.xlu0 %3045
      %v3047 = vlaneseq
      %v3048 = vshrl.u32 %v3047, 7
      %v3049 = vsub.s32 2, %v3048
      %v3050 = vrot.slane %v1622, %v3049
      %3052 = vbcast.lane.b32.xlu0 %v3050, 256
      %v3053 = vpop.permute.xlu0 %3052
      %v3054 = vlaneseq
      %v3055 = vshrl.u32 %v3054, 7
      %v3056 = vsub.s32 3, %v3055
      %v3057 = vrot.slane %v1622, %v3056
      %3059 = vbcast.lane.b32.xlu0 %v3057, 256
      %v3060 = vpop.permute.xlu0 %3059
      %v3061 = vlaneseq
      %v3062 = vshrl.u32 %v3061, 7
      %v3063 = vsub.s32 4, %v3062
      %v3064 = vrot.slane %v1622, %v3063
      %3066 = vbcast.lane.b32.xlu0 %v3064, 256
      %v3067 = vpop.permute.xlu0 %3066
      %v3068 = vlaneseq
      %v3069 = vshrl.u32 %v3068, 7
      %v3070 = vsub.s32 5, %v3069
      %v3071 = vrot.slane %v1622, %v3070
      %3073 = vbcast.lane.b32.xlu0 %v3071, 256
      %v3074 = vpop.permute.xlu0 %3073
      %v3075 = vlaneseq
      %v3076 = vshrl.u32 %v3075, 7
      %v3077 = vsub.s32 6, %v3076
      %v3078 = vrot.slane %v1622, %v3077
      %3080 = vbcast.lane.b32.xlu0 %v3078, 256
      %v3081 = vpop.permute.xlu0 %3080
      %v3082 = vlaneseq
      %v3083 = vshrl.u32 %v3082, 7
      %v3084 = vsub.s32 7, %v3083
      %v3085 = vrot.slane %v1622, %v3084
      %3087 = vbcast.lane.b32.xlu0 %v3085, 256
      %v3088 = vpop.permute.xlu0 %3087
      %v3089 = vlaneseq
      %v3090 = vshrl.u32 %v3089, 7
      %v3091 = vsub.s32 0, %v3090
      %v3092 = vrot.slane %v1623, %v3091
      %3094 = vbcast.lane.b32.xlu0 %v3092, 256
      %v3095 = vpop.permute.xlu0 %3094
      %v3096 = vlaneseq
      %v3097 = vshrl.u32 %v3096, 7
      %v3098 = vsub.s32 1, %v3097
      %v3099 = vrot.slane %v1623, %v3098
      %3101 = vbcast.lane.b32.xlu0 %v3099, 256
      %v3102 = vpop.permute.xlu0 %3101
      %v3103 = vlaneseq
      %v3104 = vshrl.u32 %v3103, 7
      %v3105 = vsub.s32 2, %v3104
      %v3106 = vrot.slane %v1623, %v3105
      %3108 = vbcast.lane.b32.xlu0 %v3106, 256
      %v3109 = vpop.permute.xlu0 %3108
      %v3110 = vlaneseq
      %v3111 = vshrl.u32 %v3110, 7
      %v3112 = vsub.s32 3, %v3111
      %v3113 = vrot.slane %v1623, %v3112
      %3115 = vbcast.lane.b32.xlu0 %v3113, 256
      %v3116 = vpop.permute.xlu0 %3115
      %v3117 = vlaneseq
      %v3118 = vshrl.u32 %v3117, 7
      %v3119 = vsub.s32 4, %v3118
      %v3120 = vrot.slane %v1623, %v3119
      %3122 = vbcast.lane.b32.xlu0 %v3120, 256
      %v3123 = vpop.permute.xlu0 %3122
      %v3124 = vlaneseq
      %v3125 = vshrl.u32 %v3124, 7
      %v3126 = vsub.s32 5, %v3125
      %v3127 = vrot.slane %v1623, %v3126
      %3129 = vbcast.lane.b32.xlu0 %v3127, 256
      %v3130 = vpop.permute.xlu0 %3129
      %v3131 = vlaneseq
      %v3132 = vshrl.u32 %v3131, 7
      %v3133 = vsub.s32 6, %v3132
      %v3134 = vrot.slane %v1623, %v3133
      %3136 = vbcast.lane.b32.xlu0 %v3134, 256
      %v3137 = vpop.permute.xlu0 %3136
      %v3138 = vlaneseq
      %v3139 = vshrl.u32 %v3138, 7
      %v3140 = vsub.s32 7, %v3139
      %v3141 = vrot.slane %v1623, %v3140
      %3143 = vbcast.lane.b32.xlu0 %v3141, 256
      %v3144 = vpop.permute.xlu0 %3143
      %v3145 = vlaneseq
      %v3146 = vshrl.u32 %v3145, 7
      %v3147 = vsub.s32 0, %v3146
      %v3148 = vrot.slane %v1624, %v3147
      %3150 = vbcast.lane.b32.xlu0 %v3148, 256
      %v3151 = vpop.permute.xlu0 %3150
      %v3152 = vlaneseq
      %v3153 = vshrl.u32 %v3152, 7
      %v3154 = vsub.s32 1, %v3153
      %v3155 = vrot.slane %v1624, %v3154
      %3157 = vbcast.lane.b32.xlu0 %v3155, 256
      %v3158 = vpop.permute.xlu0 %3157
      %v3159 = vlaneseq
      %v3160 = vshrl.u32 %v3159, 7
      %v3161 = vsub.s32 2, %v3160
      %v3162 = vrot.slane %v1624, %v3161
      %3164 = vbcast.lane.b32.xlu0 %v3162, 256
      %v3165 = vpop.permute.xlu0 %3164
      %v3166 = vlaneseq
      %v3167 = vshrl.u32 %v3166, 7
      %v3168 = vsub.s32 3, %v3167
      %v3169 = vrot.slane %v1624, %v3168
      %3171 = vbcast.lane.b32.xlu0 %v3169, 256
      %v3172 = vpop.permute.xlu0 %3171
      %v3173 = vlaneseq
      %v3174 = vshrl.u32 %v3173, 7
      %v3175 = vsub.s32 4, %v3174
      %v3176 = vrot.slane %v1624, %v3175
      %3178 = vbcast.lane.b32.xlu0 %v3176, 256
      %v3179 = vpop.permute.xlu0 %3178
      %v3180 = vlaneseq
      %v3181 = vshrl.u32 %v3180, 7
      %v3182 = vsub.s32 5, %v3181
      %v3183 = vrot.slane %v1624, %v3182
      %3185 = vbcast.lane.b32.xlu0 %v3183, 256
      %v3186 = vpop.permute.xlu0 %3185
      %v3187 = vlaneseq
      %v3188 = vshrl.u32 %v3187, 7
      %v3189 = vsub.s32 6, %v3188
      %v3190 = vrot.slane %v1624, %v3189
      %3192 = vbcast.lane.b32.xlu0 %v3190, 256
      %v3193 = vpop.permute.xlu0 %3192
      %v3194 = vlaneseq
      %v3195 = vshrl.u32 %v3194, 7
      %v3196 = vsub.s32 7, %v3195
      %v3197 = vrot.slane %v1624, %v3196
      %3199 = vbcast.lane.b32.xlu0 %v3197, 256
      %v3200 = vpop.permute.xlu0 %3199
      %v3201 = vlaneseq
      %v3202 = vshrl.u32 %v3201, 7
      %v3203 = vsub.s32 0, %v3202
      %v3204 = vrot.slane %v1625, %v3203
      %3206 = vbcast.lane.b32.xlu0 %v3204, 256
      %v3207 = vpop.permute.xlu0 %3206
      %v3208 = vlaneseq
      %v3209 = vshrl.u32 %v3208, 7
      %v3210 = vsub.s32 1, %v3209
      %v3211 = vrot.slane %v1625, %v3210
      %3213 = vbcast.lane.b32.xlu0 %v3211, 256
      %v3214 = vpop.permute.xlu0 %3213
      %v3215 = vlaneseq
      %v3216 = vshrl.u32 %v3215, 7
      %v3217 = vsub.s32 2, %v3216
      %v3218 = vrot.slane %v1625, %v3217
      %3220 = vbcast.lane.b32.xlu0 %v3218, 256
      %v3221 = vpop.permute.xlu0 %3220
      %v3222 = vlaneseq
      %v3223 = vshrl.u32 %v3222, 7
      %v3224 = vsub.s32 3, %v3223
      %v3225 = vrot.slane %v1625, %v3224
      %3227 = vbcast.lane.b32.xlu0 %v3225, 256
      %v3228 = vpop.permute.xlu0 %3227
      %v3229 = vlaneseq
      %v3230 = vshrl.u32 %v3229, 7
      %v3231 = vsub.s32 4, %v3230
      %v3232 = vrot.slane %v1625, %v3231
      %3234 = vbcast.lane.b32.xlu0 %v3232, 256
      %v3235 = vpop.permute.xlu0 %3234
      %v3236 = vlaneseq
      %v3237 = vshrl.u32 %v3236, 7
      %v3238 = vsub.s32 5, %v3237
      %v3239 = vrot.slane %v1625, %v3238
      %3241 = vbcast.lane.b32.xlu0 %v3239, 256
      %v3242 = vpop.permute.xlu0 %3241
      %v3243 = vlaneseq
      %v3244 = vshrl.u32 %v3243, 7
      %v3245 = vsub.s32 6, %v3244
      %v3246 = vrot.slane %v1625, %v3245
      %3248 = vbcast.lane.b32.xlu0 %v3246, 256
      %v3249 = vpop.permute.xlu0 %3248
      %v3250 = vlaneseq
      %v3251 = vshrl.u32 %v3250, 7
      %v3252 = vsub.s32 7, %v3251
      %v3253 = vrot.slane %v1625, %v3252
      %3255 = vbcast.lane.b32.xlu0 %v3253, 256
      %v3256 = vpop.permute.xlu0 %3255
      %v3257 = vlaneseq
      %v3258 = vshrl.u32 %v3257, 7
      %v3259 = vsub.s32 0, %v3258
      %v3260 = vrot.slane %v1626, %v3259
      %3262 = vbcast.lane.b32.xlu0 %v3260, 256
      %v3263 = vpop.permute.xlu0 %3262
      %v3264 = vlaneseq
      %v3265 = vshrl.u32 %v3264, 7
      %v3266 = vsub.s32 1, %v3265
      %v3267 = vrot.slane %v1626, %v3266
      %3269 = vbcast.lane.b32.xlu0 %v3267, 256
      %v3270 = vpop.permute.xlu0 %3269
      %v3271 = vlaneseq
      %v3272 = vshrl.u32 %v3271, 7
      %v3273 = vsub.s32 2, %v3272
      %v3274 = vrot.slane %v1626, %v3273
      %3276 = vbcast.lane.b32.xlu0 %v3274, 256
      %v3277 = vpop.permute.xlu0 %3276
      %v3278 = vlaneseq
      %v3279 = vshrl.u32 %v3278, 7
      %v3280 = vsub.s32 3, %v3279
      %v3281 = vrot.slane %v1626, %v3280
      %3283 = vbcast.lane.b32.xlu0 %v3281, 256
      %v3284 = vpop.permute.xlu0 %3283
      %v3285 = vlaneseq
      %v3286 = vshrl.u32 %v3285, 7
      %v3287 = vsub.s32 4, %v3286
      %v3288 = vrot.slane %v1626, %v3287
      %3290 = vbcast.lane.b32.xlu0 %v3288, 256
      %v3291 = vpop.permute.xlu0 %3290
      %v3292 = vlaneseq
      %v3293 = vshrl.u32 %v3292, 7
      %v3294 = vsub.s32 5, %v3293
      %v3295 = vrot.slane %v1626, %v3294
      %3297 = vbcast.lane.b32.xlu0 %v3295, 256
      %v3298 = vpop.permute.xlu0 %3297
      %v3299 = vlaneseq
      %v3300 = vshrl.u32 %v3299, 7
      %v3301 = vsub.s32 6, %v3300
      %v3302 = vrot.slane %v1626, %v3301
      %3304 = vbcast.lane.b32.xlu0 %v3302, 256
      %v3305 = vpop.permute.xlu0 %3304
      %v3306 = vlaneseq
      %v3307 = vshrl.u32 %v3306, 7
      %v3308 = vsub.s32 7, %v3307
      %v3309 = vrot.slane %v1626, %v3308
      %3311 = vbcast.lane.b32.xlu0 %v3309, 256
      %v3312 = vpop.permute.xlu0 %3311
      %v3313 = vlaneseq
      %v3314 = vshrl.u32 %v3313, 7
      %v3315 = vsub.s32 0, %v3314
      %v3316 = vrot.slane %v1627, %v3315
      %3318 = vbcast.lane.b32.xlu0 %v3316, 256
      %v3319 = vpop.permute.xlu0 %3318
      %v3320 = vlaneseq
      %v3321 = vshrl.u32 %v3320, 7
      %v3322 = vsub.s32 1, %v3321
      %v3323 = vrot.slane %v1627, %v3322
      %3325 = vbcast.lane.b32.xlu0 %v3323, 256
      %v3326 = vpop.permute.xlu0 %3325
      %v3327 = vlaneseq
      %v3328 = vshrl.u32 %v3327, 7
      %v3329 = vsub.s32 2, %v3328
      %v3330 = vrot.slane %v1627, %v3329
      %3332 = vbcast.lane.b32.xlu0 %v3330, 256
      %v3333 = vpop.permute.xlu0 %3332
      %v3334 = vlaneseq
      %v3335 = vshrl.u32 %v3334, 7
      %v3336 = vsub.s32 3, %v3335
      %v3337 = vrot.slane %v1627, %v3336
      %3339 = vbcast.lane.b32.xlu0 %v3337, 256
      %v3340 = vpop.permute.xlu0 %3339
      %v3341 = vlaneseq
      %v3342 = vshrl.u32 %v3341, 7
      %v3343 = vsub.s32 4, %v3342
      %v3344 = vrot.slane %v1627, %v3343
      %3346 = vbcast.lane.b32.xlu0 %v3344, 256
      %v3347 = vpop.permute.xlu0 %3346
      %v3348 = vlaneseq
      %v3349 = vshrl.u32 %v3348, 7
      %v3350 = vsub.s32 5, %v3349
      %v3351 = vrot.slane %v1627, %v3350
      %3353 = vbcast.lane.b32.xlu0 %v3351, 256
      %v3354 = vpop.permute.xlu0 %3353
      %v3355 = vlaneseq
      %v3356 = vshrl.u32 %v3355, 7
      %v3357 = vsub.s32 6, %v3356
      %v3358 = vrot.slane %v1627, %v3357
      %3360 = vbcast.lane.b32.xlu0 %v3358, 256
      %v3361 = vpop.permute.xlu0 %3360
      %v3362 = vlaneseq
      %v3363 = vshrl.u32 %v3362, 7
      %v3364 = vsub.s32 7, %v3363
      %v3365 = vrot.slane %v1627, %v3364
      %3367 = vbcast.lane.b32.xlu0 %v3365, 256
      %v3368 = vpop.permute.xlu0 %3367
      %v3369 = vlaneseq
      %v3370 = vshrl.u32 %v3369, 7
      %v3371 = vsub.s32 0, %v3370
      %v3372 = vrot.slane %v1628, %v3371
      %3374 = vbcast.lane.b32.xlu0 %v3372, 256
      %v3375 = vpop.permute.xlu0 %3374
      %v3376 = vlaneseq
      %v3377 = vshrl.u32 %v3376, 7
      %v3378 = vsub.s32 1, %v3377
      %v3379 = vrot.slane %v1628, %v3378
      %3381 = vbcast.lane.b32.xlu0 %v3379, 256
      %v3382 = vpop.permute.xlu0 %3381
      %v3383 = vlaneseq
      %v3384 = vshrl.u32 %v3383, 7
      %v3385 = vsub.s32 2, %v3384
      %v3386 = vrot.slane %v1628, %v3385
      %3388 = vbcast.lane.b32.xlu0 %v3386, 256
      %v3389 = vpop.permute.xlu0 %3388
      %v3390 = vlaneseq
      %v3391 = vshrl.u32 %v3390, 7
      %v3392 = vsub.s32 3, %v3391
      %v3393 = vrot.slane %v1628, %v3392
      %3395 = vbcast.lane.b32.xlu0 %v3393, 256
      %v3396 = vpop.permute.xlu0 %3395
      %v3397 = vlaneseq
      %v3398 = vshrl.u32 %v3397, 7
      %v3399 = vsub.s32 4, %v3398
      %v3400 = vrot.slane %v1628, %v3399
      %3402 = vbcast.lane.b32.xlu0 %v3400, 256
      %v3403 = vpop.permute.xlu0 %3402
      %v3404 = vlaneseq
      %v3405 = vshrl.u32 %v3404, 7
      %v3406 = vsub.s32 5, %v3405
      %v3407 = vrot.slane %v1628, %v3406
      %3409 = vbcast.lane.b32.xlu0 %v3407, 256
      %v3410 = vpop.permute.xlu0 %3409
      %v3411 = vlaneseq
      %v3412 = vshrl.u32 %v3411, 7
      %v3413 = vsub.s32 6, %v3412
      %v3414 = vrot.slane %v1628, %v3413
      %3416 = vbcast.lane.b32.xlu0 %v3414, 256
      %v3417 = vpop.permute.xlu0 %3416
      %v3418 = vlaneseq
      %v3419 = vshrl.u32 %v3418, 7
      %v3420 = vsub.s32 7, %v3419
      %v3421 = vrot.slane %v1628, %v3420
      %3423 = vbcast.lane.b32.xlu0 %v3421, 256
      %v3424 = vpop.permute.xlu0 %3423
      %v3425 = vmul.f32 %v1639, %v1629
      %v3426 = vmul.f32 %v1646, %v1629
      %v3427 = vmul.f32 %v1653, %v1629
      %v3428 = vmul.f32 %v1660, %v1629
      %v3429 = vmul.f32 %v1667, %v1629
      %v3430 = vmul.f32 %v1674, %v1629
      %v3431 = vmul.f32 %v1681, %v1629
      %v3432 = vmul.f32 %v1688, %v1629
      %v3433 = vmul.f32 %v1695, %v1629
      %v3434 = vmul.f32 %v1702, %v1629
      %v3435 = vmul.f32 %v1709, %v1629
      %v3436 = vmul.f32 %v1716, %v1629
      %v3437 = vmul.f32 %v1723, %v1629
      %v3438 = vmul.f32 %v1730, %v1629
      %v3439 = vmul.f32 %v1737, %v1629
      %v3440 = vmul.f32 %v1744, %v1629
      %v3441 = vmul.f32 %v1751, %v1629
      %v3442 = vmul.f32 %v1758, %v1629
      %v3443 = vmul.f32 %v1765, %v1629
      %v3444 = vmul.f32 %v1772, %v1629
      %v3445 = vmul.f32 %v1779, %v1629
      %v3446 = vmul.f32 %v1786, %v1629
      %v3447 = vmul.f32 %v1793, %v1629
      %v3448 = vmul.f32 %v1800, %v1629
      %v3449 = vmul.f32 %v1807, %v1629
      %v3450 = vmul.f32 %v1814, %v1629
      %v3451 = vmul.f32 %v1821, %v1629
      %v3452 = vmul.f32 %v1828, %v1629
      %v3453 = vmul.f32 %v1835, %v1629
      %v3454 = vmul.f32 %v1842, %v1629
      %v3455 = vmul.f32 %v1849, %v1629
      %v3456 = vmul.f32 %v1856, %v1629
      %v3457 = vmul.f32 %v1863, %v1629
      %v3458 = vmul.f32 %v1870, %v1629
      %v3459 = vmul.f32 %v1877, %v1629
      %v3460 = vmul.f32 %v1884, %v1629
      %v3461 = vmul.f32 %v1891, %v1629
      %v3462 = vmul.f32 %v1898, %v1629
      %v3463 = vmul.f32 %v1905, %v1629
      %v3464 = vmul.f32 %v1912, %v1629
      %v3465 = vmul.f32 %v1919, %v1629
      %v3466 = vmul.f32 %v1926, %v1629
      %v3467 = vmul.f32 %v1933, %v1629
      %v3468 = vmul.f32 %v1940, %v1629
      %v3469 = vmul.f32 %v1947, %v1629
      %v3470 = vmul.f32 %v1954, %v1629
      %v3471 = vmul.f32 %v1961, %v1629
      %v3472 = vmul.f32 %v1968, %v1629
      %v3473 = vmul.f32 %v1975, %v1629
      %v3474 = vmul.f32 %v1982, %v1629
      %v3475 = vmul.f32 %v1989, %v1629
      %v3476 = vmul.f32 %v1996, %v1629
      %v3477 = vmul.f32 %v2003, %v1629
      %v3478 = vmul.f32 %v2010, %v1629
      %v3479 = vmul.f32 %v2017, %v1629
      %v3480 = vmul.f32 %v2024, %v1629
      %v3481 = vmul.f32 %v2031, %v1629
      %v3482 = vmul.f32 %v2038, %v1629
      %v3483 = vmul.f32 %v2045, %v1629
      %v3484 = vmul.f32 %v2052, %v1629
      %v3485 = vmul.f32 %v2059, %v1629
      %v3486 = vmul.f32 %v2066, %v1629
      %v3487 = vmul.f32 %v2073, %v1629
      %v3488 = vmul.f32 %v2080, %v1629
      %v3489 = vmul.f32 %v2087, %v1629
      %v3490 = vmul.f32 %v2094, %v1629
      %v3491 = vmul.f32 %v2101, %v1629
      %v3492 = vmul.f32 %v2108, %v1629
      %v3493 = vmul.f32 %v2115, %v1629
      %v3494 = vmul.f32 %v2122, %v1629
      %v3495 = vmul.f32 %v2129, %v1629
      %v3496 = vmul.f32 %v2136, %v1629
      %v3497 = vmul.f32 %v2143, %v1629
      %v3498 = vmul.f32 %v2150, %v1629
      %v3499 = vmul.f32 %v2157, %v1629
      %v3500 = vmul.f32 %v2164, %v1629
      %v3501 = vmul.f32 %v2171, %v1629
      %v3502 = vmul.f32 %v2178, %v1629
      %v3503 = vmul.f32 %v2185, %v1629
      %v3504 = vmul.f32 %v2192, %v1629
      %v3505 = vmul.f32 %v2199, %v1629
      %v3506 = vmul.f32 %v2206, %v1629
      %v3507 = vmul.f32 %v2213, %v1629
      %v3508 = vmul.f32 %v2220, %v1629
      %v3509 = vmul.f32 %v2227, %v1629
      %v3510 = vmul.f32 %v2234, %v1629
      %v3511 = vmul.f32 %v2241, %v1629
      %v3512 = vmul.f32 %v2248, %v1629
      %v3513 = vmul.f32 %v2255, %v1629
      %v3514 = vmul.f32 %v2262, %v1629
      %v3515 = vmul.f32 %v2269, %v1629
      %v3516 = vmul.f32 %v2276, %v1629
      %v3517 = vmul.f32 %v2283, %v1629
      %v3518 = vmul.f32 %v2290, %v1629
      %v3519 = vmul.f32 %v2297, %v1629
      %v3520 = vmul.f32 %v2304, %v1629
      %v3521 = vmul.f32 %v2311, %v1629
      %v3522 = vmul.f32 %v2318, %v1629
      %v3523 = vmul.f32 %v2325, %v1629
      %v3524 = vmul.f32 %v2332, %v1629
      %v3525 = vmul.f32 %v2339, %v1629
      %v3526 = vmul.f32 %v2346, %v1629
      %v3527 = vmul.f32 %v2353, %v1629
      %v3528 = vmul.f32 %v2360, %v1629
      %v3529 = vmul.f32 %v2367, %v1629
      %v3530 = vmul.f32 %v2374, %v1629
      %v3531 = vmul.f32 %v2381, %v1629
      %v3532 = vmul.f32 %v2388, %v1629
      %v3533 = vmul.f32 %v2395, %v1629
      %v3534 = vmul.f32 %v2402, %v1629
      %v3535 = vmul.f32 %v2409, %v1629
      %v3536 = vmul.f32 %v2416, %v1629
      %v3537 = vmul.f32 %v2423, %v1629
      %v3538 = vmul.f32 %v2430, %v1629
      %v3539 = vmul.f32 %v2437, %v1629
      %v3540 = vmul.f32 %v2444, %v1629
      %v3541 = vmul.f32 %v2451, %v1629
      %v3542 = vmul.f32 %v2458, %v1629
      %v3543 = vmul.f32 %v2465, %v1629
      %v3544 = vmul.f32 %v2472, %v1629
      %v3545 = vmul.f32 %v2479, %v1629
      %v3546 = vmul.f32 %v2486, %v1629
      %v3547 = vmul.f32 %v2493, %v1629
      %v3548 = vmul.f32 %v2500, %v1629
      %v3549 = vmul.f32 %v2507, %v1629
      %v3550 = vmul.f32 %v2514, %v1629
      %v3551 = vmul.f32 %v2521, %v1629
      %v3552 = vmul.f32 %v2528, %v1629
      %v3553 = vmul.f32 %v2535, %v1629
      %v3554 = vmul.f32 %v2542, %v1629
      %v3555 = vmul.f32 %v2549, %v1629
      %v3556 = vmul.f32 %v2556, %v1629
      %v3557 = vmul.f32 %v2563, %v1629
      %v3558 = vmul.f32 %v2570, %v1629
      %v3559 = vmul.f32 %v2577, %v1629
      %v3560 = vmul.f32 %v2584, %v1629
      %v3561 = vmul.f32 %v2591, %v1629
      %v3562 = vmul.f32 %v2598, %v1629
      %v3563 = vmul.f32 %v2605, %v1629
      %v3564 = vmul.f32 %v2612, %v1629
      %v3565 = vmul.f32 %v2619, %v1629
      %v3566 = vmul.f32 %v2626, %v1629
      %v3567 = vmul.f32 %v2633, %v1629
      %v3568 = vmul.f32 %v2640, %v1629
      %v3569 = vmul.f32 %v2647, %v1629
      %v3570 = vmul.f32 %v2654, %v1629
      %v3571 = vmul.f32 %v2661, %v1629
      %v3572 = vmul.f32 %v2668, %v1629
      %v3573 = vmul.f32 %v2675, %v1629
      %v3574 = vmul.f32 %v2682, %v1629
      %v3575 = vmul.f32 %v2689, %v1629
      %v3576 = vmul.f32 %v2696, %v1629
      %v3577 = vmul.f32 %v2703, %v1629
      %v3578 = vmul.f32 %v2710, %v1629
      %v3579 = vmul.f32 %v2717, %v1629
      %v3580 = vmul.f32 %v2724, %v1629
      %v3581 = vmul.f32 %v2731, %v1629
      %v3582 = vmul.f32 %v2738, %v1629
      %v3583 = vmul.f32 %v2745, %v1629
      %v3584 = vmul.f32 %v2752, %v1629
      %v3585 = vmul.f32 %v2759, %v1629
      %v3586 = vmul.f32 %v2766, %v1629
      %v3587 = vmul.f32 %v2773, %v1629
      %v3588 = vmul.f32 %v2780, %v1629
      %v3589 = vmul.f32 %v2787, %v1629
      %v3590 = vmul.f32 %v2794, %v1629
      %v3591 = vmul.f32 %v2801, %v1629
      %v3592 = vmul.f32 %v2808, %v1629
      %v3593 = vmul.f32 %v2815, %v1629
      %v3594 = vmul.f32 %v2822, %v1629
      %v3595 = vmul.f32 %v2829, %v1629
      %v3596 = vmul.f32 %v2836, %v1629
      %v3597 = vmul.f32 %v2843, %v1629
      %v3598 = vmul.f32 %v2850, %v1629
      %v3599 = vmul.f32 %v2857, %v1629
      %v3600 = vmul.f32 %v2864, %v1629
      %v3601 = vmul.f32 %v2871, %v1629
      %v3602 = vmul.f32 %v2878, %v1629
      %v3603 = vmul.f32 %v2885, %v1629
      %v3604 = vmul.f32 %v2892, %v1629
      %v3605 = vmul.f32 %v2899, %v1629
      %v3606 = vmul.f32 %v2906, %v1629
      %v3607 = vmul.f32 %v2913, %v1629
      %v3608 = vmul.f32 %v2920, %v1629
      %v3609 = vmul.f32 %v2927, %v1629
      %v3610 = vmul.f32 %v2934, %v1629
      %v3611 = vmul.f32 %v2941, %v1629
      %v3612 = vmul.f32 %v2948, %v1629
      %v3613 = vmul.f32 %v2955, %v1629
      %v3614 = vmul.f32 %v2962, %v1629
      %v3615 = vmul.f32 %v2969, %v1629
      %v3616 = vmul.f32 %v2976, %v1629
      %v3617 = vmul.f32 %v2983, %v1629
      %v3618 = vmul.f32 %v2990, %v1629
      %v3619 = vmul.f32 %v2997, %v1629
      %v3620 = vmul.f32 %v3004, %v1629
      %v3621 = vmul.f32 %v3011, %v1629
      %v3622 = vmul.f32 %v3018, %v1629
      %v3623 = vmul.f32 %v3025, %v1629
      %v3624 = vmul.f32 %v3032, %v1629
      %v3625 = vmul.f32 %v3039, %v1629
      %v3626 = vmul.f32 %v3046, %v1629
      %v3627 = vmul.f32 %v3053, %v1629
      %v3628 = vmul.f32 %v3060, %v1629
      %v3629 = vmul.f32 %v3067, %v1629
      %v3630 = vmul.f32 %v3074, %v1629
      %v3631 = vmul.f32 %v3081, %v1629
      %v3632 = vmul.f32 %v3088, %v1629
      %v3633 = vmul.f32 %v3095, %v1629
      %v3634 = vmul.f32 %v3102, %v1629
      %v3635 = vmul.f32 %v3109, %v1629
      %v3636 = vmul.f32 %v3116, %v1629
      %v3637 = vmul.f32 %v3123, %v1629
      %v3638 = vmul.f32 %v3130, %v1629
      %v3639 = vmul.f32 %v3137, %v1629
      %v3640 = vmul.f32 %v3144, %v1629
      %v3641 = vmul.f32 %v3151, %v1629
      %v3642 = vmul.f32 %v3158, %v1629
      %v3643 = vmul.f32 %v3165, %v1629
      %v3644 = vmul.f32 %v3172, %v1629
      %v3645 = vmul.f32 %v3179, %v1629
      %v3646 = vmul.f32 %v3186, %v1629
      %v3647 = vmul.f32 %v3193, %v1629
      %v3648 = vmul.f32 %v3200, %v1629
      %v3649 = vmul.f32 %v3207, %v1629
      %v3650 = vmul.f32 %v3214, %v1629
      %v3651 = vmul.f32 %v3221, %v1629
      %v3652 = vmul.f32 %v3228, %v1629
      %v3653 = vmul.f32 %v3235, %v1629
      %v3654 = vmul.f32 %v3242, %v1629
      %v3655 = vmul.f32 %v3249, %v1629
      %v3656 = vmul.f32 %v3256, %v1629
      %v3657 = vmul.f32 %v3263, %v1629
      %v3658 = vmul.f32 %v3270, %v1629
      %v3659 = vmul.f32 %v3277, %v1629
      %v3660 = vmul.f32 %v3284, %v1629
      %v3661 = vmul.f32 %v3291, %v1629
      %v3662 = vmul.f32 %v3298, %v1629
      %v3663 = vmul.f32 %v3305, %v1629
      %v3664 = vmul.f32 %v3312, %v1629
      %v3665 = vmul.f32 %v3319, %v1629
      %v3666 = vmul.f32 %v3326, %v1629
      %v3667 = vmul.f32 %v3333, %v1629
      %v3668 = vmul.f32 %v3340, %v1629
      %v3669 = vmul.f32 %v3347, %v1629
      %v3670 = vmul.f32 %v3354, %v1629
      %v3671 = vmul.f32 %v3361, %v1629
      %v3672 = vmul.f32 %v3368, %v1629
      %v3673 = vmul.f32 %v3375, %v1629
      %v3674 = vmul.f32 %v3382, %v1629
      %v3675 = vmul.f32 %v3389, %v1629
      %v3676 = vmul.f32 %v3396, %v1629
      %v3677 = vmul.f32 %v3403, %v1629
      %v3678 = vmul.f32 %v3410, %v1629
      %v3679 = vmul.f32 %v3417, %v1629
      %v3680 = vmul.f32 %v3424, %v1629
      %vm3681 = vcmask 60416
      %v3682 = vsel %vm3681, %v3425, 0.0
      %v3683 = vrot.slane %v3682, 4
      %v3684 = vadd.f32 %v3682, %v3683
      %v3685 = vrot.slane %v3684, 2
      %v3686 = vadd.f32 %v3684, %v3685
      %v3687 = vrot.slane %v3686, 1
      %v3688 = vadd.f32 %v3686, %v3687
      %v3689 = vsel %vm3681, %v3426, 0.0
      %v3690 = vrot.slane %v3689, 4
      %v3691 = vadd.f32 %v3689, %v3690
      %v3692 = vrot.slane %v3691, 2
      %v3693 = vadd.f32 %v3691, %v3692
      %v3694 = vrot.slane %v3693, 1
      %v3695 = vadd.f32 %v3693, %v3694
      %v3696 = vsel %vm3681, %v3427, 0.0
      %v3697 = vrot.slane %v3696, 4
      %v3698 = vadd.f32 %v3696, %v3697
      %v3699 = vrot.slane %v3698, 2
      %v3700 = vadd.f32 %v3698, %v3699
      %v3701 = vrot.slane %v3700, 1
      %v3702 = vadd.f32 %v3700, %v3701
      %v3703 = vsel %vm3681, %v3428, 0.0
      %v3704 = vrot.slane %v3703, 4
      %v3705 = vadd.f32 %v3703, %v3704
      %v3706 = vrot.slane %v3705, 2
      %v3707 = vadd.f32 %v3705, %v3706
      %v3708 = vrot.slane %v3707, 1
      %v3709 = vadd.f32 %v3707, %v3708
      %v3710 = vsel %vm3681, %v3429, 0.0
      %v3711 = vrot.slane %v3710, 4
      %v3712 = vadd.f32 %v3710, %v3711
      %v3713 = vrot.slane %v3712, 2
      %v3714 = vadd.f32 %v3712, %v3713
      %v3715 = vrot.slane %v3714, 1
      %v3716 = vadd.f32 %v3714, %v3715
      %v3717 = vsel %vm3681, %v3430, 0.0
      %v3718 = vrot.slane %v3717, 4
      %v3719 = vadd.f32 %v3717, %v3718
      %v3720 = vrot.slane %v3719, 2
      %v3721 = vadd.f32 %v3719, %v3720
      %v3722 = vrot.slane %v3721, 1
      %v3723 = vadd.f32 %v3721, %v3722
      %v3724 = vsel %vm3681, %v3431, 0.0
      %v3725 = vrot.slane %v3724, 4
      %v3726 = vadd.f32 %v3724, %v3725
      %v3727 = vrot.slane %v3726, 2
      %v3728 = vadd.f32 %v3726, %v3727
      %v3729 = vrot.slane %v3728, 1
      %v3730 = vadd.f32 %v3728, %v3729
      %v3731 = vsel %vm3681, %v3432, 0.0
      %v3732 = vrot.slane %v3731, 4
      %v3733 = vadd.f32 %v3731, %v3732
      %v3734 = vrot.slane %v3733, 2
      %v3735 = vadd.f32 %v3733, %v3734
      %v3736 = vrot.slane %v3735, 1
      %v3737 = vadd.f32 %v3735, %v3736
      %v3738 = vsel %vm3681, %v3433, 0.0
      %v3739 = vrot.slane %v3738, 4
      %v3740 = vadd.f32 %v3738, %v3739
      %v3741 = vrot.slane %v3740, 2
      %v3742 = vadd.f32 %v3740, %v3741
      %v3743 = vrot.slane %v3742, 1
      %v3744 = vadd.f32 %v3742, %v3743
      %v3745 = vsel %vm3681, %v3434, 0.0
      %v3746 = vrot.slane %v3745, 4
      %v3747 = vadd.f32 %v3745, %v3746
      %v3748 = vrot.slane %v3747, 2
      %v3749 = vadd.f32 %v3747, %v3748
      %v3750 = vrot.slane %v3749, 1
      %v3751 = vadd.f32 %v3749, %v3750
      %v3752 = vsel %vm3681, %v3435, 0.0
      %v3753 = vrot.slane %v3752, 4
      %v3754 = vadd.f32 %v3752, %v3753
      %v3755 = vrot.slane %v3754, 2
      %v3756 = vadd.f32 %v3754, %v3755
      %v3757 = vrot.slane %v3756, 1
      %v3758 = vadd.f32 %v3756, %v3757
      %v3759 = vsel %vm3681, %v3436, 0.0
      %v3760 = vrot.slane %v3759, 4
      %v3761 = vadd.f32 %v3759, %v3760
      %v3762 = vrot.slane %v3761, 2
      %v3763 = vadd.f32 %v3761, %v3762
      %v3764 = vrot.slane %v3763, 1
      %v3765 = vadd.f32 %v3763, %v3764
      %v3766 = vsel %vm3681, %v3437, 0.0
      %v3767 = vrot.slane %v3766, 4
      %v3768 = vadd.f32 %v3766, %v3767
      %v3769 = vrot.slane %v3768, 2
      %v3770 = vadd.f32 %v3768, %v3769
      %v3771 = vrot.slane %v3770, 1
      %v3772 = vadd.f32 %v3770, %v3771
      %v3773 = vsel %vm3681, %v3438, 0.0
      %v3774 = vrot.slane %v3773, 4
      %v3775 = vadd.f32 %v3773, %v3774
      %v3776 = vrot.slane %v3775, 2
      %v3777 = vadd.f32 %v3775, %v3776
      %v3778 = vrot.slane %v3777, 1
      %v3779 = vadd.f32 %v3777, %v3778
      %v3780 = vsel %vm3681, %v3439, 0.0
      %v3781 = vrot.slane %v3780, 4
      %v3782 = vadd.f32 %v3780, %v3781
      %v3783 = vrot.slane %v3782, 2
      %v3784 = vadd.f32 %v3782, %v3783
      %v3785 = vrot.slane %v3784, 1
      %v3786 = vadd.f32 %v3784, %v3785
      %v3787 = vsel %vm3681, %v3440, 0.0
      %v3788 = vrot.slane %v3787, 4
      %v3789 = vadd.f32 %v3787, %v3788
      %v3790 = vrot.slane %v3789, 2
      %v3791 = vadd.f32 %v3789, %v3790
      %v3792 = vrot.slane %v3791, 1
      %v3793 = vadd.f32 %v3791, %v3792
      %v3794 = vsel %vm3681, %v3441, 0.0
      %v3795 = vrot.slane %v3794, 4
      %v3796 = vadd.f32 %v3794, %v3795
      %v3797 = vrot.slane %v3796, 2
      %v3798 = vadd.f32 %v3796, %v3797
      %v3799 = vrot.slane %v3798, 1
      %v3800 = vadd.f32 %v3798, %v3799
      %v3801 = vsel %vm3681, %v3442, 0.0
      %v3802 = vrot.slane %v3801, 4
      %v3803 = vadd.f32 %v3801, %v3802
      %v3804 = vrot.slane %v3803, 2
      %v3805 = vadd.f32 %v3803, %v3804
      %v3806 = vrot.slane %v3805, 1
      %v3807 = vadd.f32 %v3805, %v3806
      %v3808 = vsel %vm3681, %v3443, 0.0
      %v3809 = vrot.slane %v3808, 4
      %v3810 = vadd.f32 %v3808, %v3809
      %v3811 = vrot.slane %v3810, 2
      %v3812 = vadd.f32 %v3810, %v3811
      %v3813 = vrot.slane %v3812, 1
      %v3814 = vadd.f32 %v3812, %v3813
      %v3815 = vsel %vm3681, %v3444, 0.0
      %v3816 = vrot.slane %v3815, 4
      %v3817 = vadd.f32 %v3815, %v3816
      %v3818 = vrot.slane %v3817, 2
      %v3819 = vadd.f32 %v3817, %v3818
      %v3820 = vrot.slane %v3819, 1
      %v3821 = vadd.f32 %v3819, %v3820
      %v3822 = vsel %vm3681, %v3445, 0.0
      %v3823 = vrot.slane %v3822, 4
      %v3824 = vadd.f32 %v3822, %v3823
      %v3825 = vrot.slane %v3824, 2
      %v3826 = vadd.f32 %v3824, %v3825
      %v3827 = vrot.slane %v3826, 1
      %v3828 = vadd.f32 %v3826, %v3827
      %v3829 = vsel %vm3681, %v3446, 0.0
      %v3830 = vrot.slane %v3829, 4
      %v3831 = vadd.f32 %v3829, %v3830
      %v3832 = vrot.slane %v3831, 2
      %v3833 = vadd.f32 %v3831, %v3832
      %v3834 = vrot.slane %v3833, 1
      %v3835 = vadd.f32 %v3833, %v3834
      %v3836 = vsel %vm3681, %v3447, 0.0
      %v3837 = vrot.slane %v3836, 4
      %v3838 = vadd.f32 %v3836, %v3837
      %v3839 = vrot.slane %v3838, 2
      %v3840 = vadd.f32 %v3838, %v3839
      %v3841 = vrot.slane %v3840, 1
      %v3842 = vadd.f32 %v3840, %v3841
      %v3843 = vsel %vm3681, %v3448, 0.0
      %v3844 = vrot.slane %v3843, 4
      %v3845 = vadd.f32 %v3843, %v3844
      %v3846 = vrot.slane %v3845, 2
      %v3847 = vadd.f32 %v3845, %v3846
      %v3848 = vrot.slane %v3847, 1
      %v3849 = vadd.f32 %v3847, %v3848
      %v3850 = vsel %vm3681, %v3449, 0.0
      %v3851 = vrot.slane %v3850, 4
      %v3852 = vadd.f32 %v3850, %v3851
      %v3853 = vrot.slane %v3852, 2
      %v3854 = vadd.f32 %v3852, %v3853
      %v3855 = vrot.slane %v3854, 1
      %v3856 = vadd.f32 %v3854, %v3855
      %v3857 = vsel %vm3681, %v3450, 0.0
      %v3858 = vrot.slane %v3857, 4
      %v3859 = vadd.f32 %v3857, %v3858
      %v3860 = vrot.slane %v3859, 2
      %v3861 = vadd.f32 %v3859, %v3860
      %v3862 = vrot.slane %v3861, 1
      %v3863 = vadd.f32 %v3861, %v3862
      %v3864 = vsel %vm3681, %v3451, 0.0
      %v3865 = vrot.slane %v3864, 4
      %v3866 = vadd.f32 %v3864, %v3865
      %v3867 = vrot.slane %v3866, 2
      %v3868 = vadd.f32 %v3866, %v3867
      %v3869 = vrot.slane %v3868, 1
      %v3870 = vadd.f32 %v3868, %v3869
      %v3871 = vsel %vm3681, %v3452, 0.0
      %v3872 = vrot.slane %v3871, 4
      %v3873 = vadd.f32 %v3871, %v3872
      %v3874 = vrot.slane %v3873, 2
      %v3875 = vadd.f32 %v3873, %v3874
      %v3876 = vrot.slane %v3875, 1
      %v3877 = vadd.f32 %v3875, %v3876
      %v3878 = vsel %vm3681, %v3453, 0.0
      %v3879 = vrot.slane %v3878, 4
      %v3880 = vadd.f32 %v3878, %v3879
      %v3881 = vrot.slane %v3880, 2
      %v3882 = vadd.f32 %v3880, %v3881
      %v3883 = vrot.slane %v3882, 1
      %v3884 = vadd.f32 %v3882, %v3883
      %v3885 = vsel %vm3681, %v3454, 0.0
      %v3886 = vrot.slane %v3885, 4
      %v3887 = vadd.f32 %v3885, %v3886
      %v3888 = vrot.slane %v3887, 2
      %v3889 = vadd.f32 %v3887, %v3888
      %v3890 = vrot.slane %v3889, 1
      %v3891 = vadd.f32 %v3889, %v3890
      %v3892 = vsel %vm3681, %v3455, 0.0
      %v3893 = vrot.slane %v3892, 4
      %v3894 = vadd.f32 %v3892, %v3893
      %v3895 = vrot.slane %v3894, 2
      %v3896 = vadd.f32 %v3894, %v3895
      %v3897 = vrot.slane %v3896, 1
      %v3898 = vadd.f32 %v3896, %v3897
      %v3899 = vsel %vm3681, %v3456, 0.0
      %v3900 = vrot.slane %v3899, 4
      %v3901 = vadd.f32 %v3899, %v3900
      %v3902 = vrot.slane %v3901, 2
      %v3903 = vadd.f32 %v3901, %v3902
      %v3904 = vrot.slane %v3903, 1
      %v3905 = vadd.f32 %v3903, %v3904
      %v3906 = vsel %vm3681, %v3457, 0.0
      %v3907 = vrot.slane %v3906, 4
      %v3908 = vadd.f32 %v3906, %v3907
      %v3909 = vrot.slane %v3908, 2
      %v3910 = vadd.f32 %v3908, %v3909
      %v3911 = vrot.slane %v3910, 1
      %v3912 = vadd.f32 %v3910, %v3911
      %v3913 = vsel %vm3681, %v3458, 0.0
      %v3914 = vrot.slane %v3913, 4
      %v3915 = vadd.f32 %v3913, %v3914
      %v3916 = vrot.slane %v3915, 2
      %v3917 = vadd.f32 %v3915, %v3916
      %v3918 = vrot.slane %v3917, 1
      %v3919 = vadd.f32 %v3917, %v3918
      %v3920 = vsel %vm3681, %v3459, 0.0
      %v3921 = vrot.slane %v3920, 4
      %v3922 = vadd.f32 %v3920, %v3921
      %v3923 = vrot.slane %v3922, 2
      %v3924 = vadd.f32 %v3922, %v3923
      %v3925 = vrot.slane %v3924, 1
      %v3926 = vadd.f32 %v3924, %v3925
      %v3927 = vsel %vm3681, %v3460, 0.0
      %v3928 = vrot.slane %v3927, 4
      %v3929 = vadd.f32 %v3927, %v3928
      %v3930 = vrot.slane %v3929, 2
      %v3931 = vadd.f32 %v3929, %v3930
      %v3932 = vrot.slane %v3931, 1
      %v3933 = vadd.f32 %v3931, %v3932
      %v3934 = vsel %vm3681, %v3461, 0.0
      %v3935 = vrot.slane %v3934, 4
      %v3936 = vadd.f32 %v3934, %v3935
      %v3937 = vrot.slane %v3936, 2
      %v3938 = vadd.f32 %v3936, %v3937
      %v3939 = vrot.slane %v3938, 1
      %v3940 = vadd.f32 %v3938, %v3939
      %v3941 = vsel %vm3681, %v3462, 0.0
      %v3942 = vrot.slane %v3941, 4
      %v3943 = vadd.f32 %v3941, %v3942
      %v3944 = vrot.slane %v3943, 2
      %v3945 = vadd.f32 %v3943, %v3944
      %v3946 = vrot.slane %v3945, 1
      %v3947 = vadd.f32 %v3945, %v3946
      %v3948 = vsel %vm3681, %v3463, 0.0
      %v3949 = vrot.slane %v3948, 4
      %v3950 = vadd.f32 %v3948, %v3949
      %v3951 = vrot.slane %v3950, 2
      %v3952 = vadd.f32 %v3950, %v3951
      %v3953 = vrot.slane %v3952, 1
      %v3954 = vadd.f32 %v3952, %v3953
      %v3955 = vsel %vm3681, %v3464, 0.0
      %v3956 = vrot.slane %v3955, 4
      %v3957 = vadd.f32 %v3955, %v3956
      %v3958 = vrot.slane %v3957, 2
      %v3959 = vadd.f32 %v3957, %v3958
      %v3960 = vrot.slane %v3959, 1
      %v3961 = vadd.f32 %v3959, %v3960
      %v3962 = vsel %vm3681, %v3465, 0.0
      %v3963 = vrot.slane %v3962, 4
      %v3964 = vadd.f32 %v3962, %v3963
      %v3965 = vrot.slane %v3964, 2
      %v3966 = vadd.f32 %v3964, %v3965
      %v3967 = vrot.slane %v3966, 1
      %v3968 = vadd.f32 %v3966, %v3967
      %v3969 = vsel %vm3681, %v3466, 0.0
      %v3970 = vrot.slane %v3969, 4
      %v3971 = vadd.f32 %v3969, %v3970
      %v3972 = vrot.slane %v3971, 2
      %v3973 = vadd.f32 %v3971, %v3972
      %v3974 = vrot.slane %v3973, 1
      %v3975 = vadd.f32 %v3973, %v3974
      %v3976 = vsel %vm3681, %v3467, 0.0
      %v3977 = vrot.slane %v3976, 4
      %v3978 = vadd.f32 %v3976, %v3977
      %v3979 = vrot.slane %v3978, 2
      %v3980 = vadd.f32 %v3978, %v3979
      %v3981 = vrot.slane %v3980, 1
      %v3982 = vadd.f32 %v3980, %v3981
      %v3983 = vsel %vm3681, %v3468, 0.0
      %v3984 = vrot.slane %v3983, 4
      %v3985 = vadd.f32 %v3983, %v3984
      %v3986 = vrot.slane %v3985, 2
      %v3987 = vadd.f32 %v3985, %v3986
      %v3988 = vrot.slane %v3987, 1
      %v3989 = vadd.f32 %v3987, %v3988
      %v3990 = vsel %vm3681, %v3469, 0.0
      %v3991 = vrot.slane %v3990, 4
      %v3992 = vadd.f32 %v3990, %v3991
      %v3993 = vrot.slane %v3992, 2
      %v3994 = vadd.f32 %v3992, %v3993
      %v3995 = vrot.slane %v3994, 1
      %v3996 = vadd.f32 %v3994, %v3995
      %v3997 = vsel %vm3681, %v3470, 0.0
      %v3998 = vrot.slane %v3997, 4
      %v3999 = vadd.f32 %v3997, %v3998
      %v4000 = vrot.slane %v3999, 2
      %v4001 = vadd.f32 %v3999, %v4000
      %v4002 = vrot.slane %v4001, 1
      %v4003 = vadd.f32 %v4001, %v4002
      %v4004 = vsel %vm3681, %v3471, 0.0
      %v4005 = vrot.slane %v4004, 4
      %v4006 = vadd.f32 %v4004, %v4005
      %v4007 = vrot.slane %v4006, 2
      %v4008 = vadd.f32 %v4006, %v4007
      %v4009 = vrot.slane %v4008, 1
      %v4010 = vadd.f32 %v4008, %v4009
      %v4011 = vsel %vm3681, %v3472, 0.0
      %v4012 = vrot.slane %v4011, 4
      %v4013 = vadd.f32 %v4011, %v4012
      %v4014 = vrot.slane %v4013, 2
      %v4015 = vadd.f32 %v4013, %v4014
      %v4016 = vrot.slane %v4015, 1
      %v4017 = vadd.f32 %v4015, %v4016
      %v4018 = vsel %vm3681, %v3473, 0.0
      %v4019 = vrot.slane %v4018, 4
      %v4020 = vadd.f32 %v4018, %v4019
      %v4021 = vrot.slane %v4020, 2
      %v4022 = vadd.f32 %v4020, %v4021
      %v4023 = vrot.slane %v4022, 1
      %v4024 = vadd.f32 %v4022, %v4023
      %v4025 = vsel %vm3681, %v3474, 0.0
      %v4026 = vrot.slane %v4025, 4
      %v4027 = vadd.f32 %v4025, %v4026
      %v4028 = vrot.slane %v4027, 2
      %v4029 = vadd.f32 %v4027, %v4028
      %v4030 = vrot.slane %v4029, 1
      %v4031 = vadd.f32 %v4029, %v4030
      %v4032 = vsel %vm3681, %v3475, 0.0
      %v4033 = vrot.slane %v4032, 4
      %v4034 = vadd.f32 %v4032, %v4033
      %v4035 = vrot.slane %v4034, 2
      %v4036 = vadd.f32 %v4034, %v4035
      %v4037 = vrot.slane %v4036, 1
      %v4038 = vadd.f32 %v4036, %v4037
      %v4039 = vsel %vm3681, %v3476, 0.0
      %v4040 = vrot.slane %v4039, 4
      %v4041 = vadd.f32 %v4039, %v4040
      %v4042 = vrot.slane %v4041, 2
      %v4043 = vadd.f32 %v4041, %v4042
      %v4044 = vrot.slane %v4043, 1
      %v4045 = vadd.f32 %v4043, %v4044
      %v4046 = vsel %vm3681, %v3477, 0.0
      %v4047 = vrot.slane %v4046, 4
      %v4048 = vadd.f32 %v4046, %v4047
      %v4049 = vrot.slane %v4048, 2
      %v4050 = vadd.f32 %v4048, %v4049
      %v4051 = vrot.slane %v4050, 1
      %v4052 = vadd.f32 %v4050, %v4051
      %v4053 = vsel %vm3681, %v3478, 0.0
      %v4054 = vrot.slane %v4053, 4
      %v4055 = vadd.f32 %v4053, %v4054
      %v4056 = vrot.slane %v4055, 2
      %v4057 = vadd.f32 %v4055, %v4056
      %v4058 = vrot.slane %v4057, 1
      %v4059 = vadd.f32 %v4057, %v4058
      %v4060 = vsel %vm3681, %v3479, 0.0
      %v4061 = vrot.slane %v4060, 4
      %v4062 = vadd.f32 %v4060, %v4061
      %v4063 = vrot.slane %v4062, 2
      %v4064 = vadd.f32 %v4062, %v4063
      %v4065 = vrot.slane %v4064, 1
      %v4066 = vadd.f32 %v4064, %v4065
      %v4067 = vsel %vm3681, %v3480, 0.0
      %v4068 = vrot.slane %v4067, 4
      %v4069 = vadd.f32 %v4067, %v4068
      %v4070 = vrot.slane %v4069, 2
      %v4071 = vadd.f32 %v4069, %v4070
      %v4072 = vrot.slane %v4071, 1
      %v4073 = vadd.f32 %v4071, %v4072
      %v4074 = vsel %vm3681, %v3481, 0.0
      %v4075 = vrot.slane %v4074, 4
      %v4076 = vadd.f32 %v4074, %v4075
      %v4077 = vrot.slane %v4076, 2
      %v4078 = vadd.f32 %v4076, %v4077
      %v4079 = vrot.slane %v4078, 1
      %v4080 = vadd.f32 %v4078, %v4079
      %v4081 = vsel %vm3681, %v3482, 0.0
      %v4082 = vrot.slane %v4081, 4
      %v4083 = vadd.f32 %v4081, %v4082
      %v4084 = vrot.slane %v4083, 2
      %v4085 = vadd.f32 %v4083, %v4084
      %v4086 = vrot.slane %v4085, 1
      %v4087 = vadd.f32 %v4085, %v4086
      %v4088 = vsel %vm3681, %v3483, 0.0
      %v4089 = vrot.slane %v4088, 4
      %v4090 = vadd.f32 %v4088, %v4089
      %v4091 = vrot.slane %v4090, 2
      %v4092 = vadd.f32 %v4090, %v4091
      %v4093 = vrot.slane %v4092, 1
      %v4094 = vadd.f32 %v4092, %v4093
      %v4095 = vsel %vm3681, %v3484, 0.0
      %v4096 = vrot.slane %v4095, 4
      %v4097 = vadd.f32 %v4095, %v4096
      %v4098 = vrot.slane %v4097, 2
      %v4099 = vadd.f32 %v4097, %v4098
      %v4100 = vrot.slane %v4099, 1
      %v4101 = vadd.f32 %v4099, %v4100
      %v4102 = vsel %vm3681, %v3485, 0.0
      %v4103 = vrot.slane %v4102, 4
      %v4104 = vadd.f32 %v4102, %v4103
      %v4105 = vrot.slane %v4104, 2
      %v4106 = vadd.f32 %v4104, %v4105
      %v4107 = vrot.slane %v4106, 1
      %v4108 = vadd.f32 %v4106, %v4107
      %v4109 = vsel %vm3681, %v3486, 0.0
      %v4110 = vrot.slane %v4109, 4
      %v4111 = vadd.f32 %v4109, %v4110
      %v4112 = vrot.slane %v4111, 2
      %v4113 = vadd.f32 %v4111, %v4112
      %v4114 = vrot.slane %v4113, 1
      %v4115 = vadd.f32 %v4113, %v4114
      %v4116 = vsel %vm3681, %v3487, 0.0
      %v4117 = vrot.slane %v4116, 4
      %v4118 = vadd.f32 %v4116, %v4117
      %v4119 = vrot.slane %v4118, 2
      %v4120 = vadd.f32 %v4118, %v4119
      %v4121 = vrot.slane %v4120, 1
      %v4122 = vadd.f32 %v4120, %v4121
      %v4123 = vsel %vm3681, %v3488, 0.0
      %v4124 = vrot.slane %v4123, 4
      %v4125 = vadd.f32 %v4123, %v4124
      %v4126 = vrot.slane %v4125, 2
      %v4127 = vadd.f32 %v4125, %v4126
      %v4128 = vrot.slane %v4127, 1
      %v4129 = vadd.f32 %v4127, %v4128
      %v4130 = vsel %vm3681, %v3489, 0.0
      %v4131 = vrot.slane %v4130, 4
      %v4132 = vadd.f32 %v4130, %v4131
      %v4133 = vrot.slane %v4132, 2
      %v4134 = vadd.f32 %v4132, %v4133
      %v4135 = vrot.slane %v4134, 1
      %v4136 = vadd.f32 %v4134, %v4135
      %v4137 = vsel %vm3681, %v3490, 0.0
      %v4138 = vrot.slane %v4137, 4
      %v4139 = vadd.f32 %v4137, %v4138
      %v4140 = vrot.slane %v4139, 2
      %v4141 = vadd.f32 %v4139, %v4140
      %v4142 = vrot.slane %v4141, 1
      %v4143 = vadd.f32 %v4141, %v4142
      %v4144 = vsel %vm3681, %v3491, 0.0
      %v4145 = vrot.slane %v4144, 4
      %v4146 = vadd.f32 %v4144, %v4145
      %v4147 = vrot.slane %v4146, 2
      %v4148 = vadd.f32 %v4146, %v4147
      %v4149 = vrot.slane %v4148, 1
      %v4150 = vadd.f32 %v4148, %v4149
      %v4151 = vsel %vm3681, %v3492, 0.0
      %v4152 = vrot.slane %v4151, 4
      %v4153 = vadd.f32 %v4151, %v4152
      %v4154 = vrot.slane %v4153, 2
      %v4155 = vadd.f32 %v4153, %v4154
      %v4156 = vrot.slane %v4155, 1
      %v4157 = vadd.f32 %v4155, %v4156
      %v4158 = vsel %vm3681, %v3493, 0.0
      %v4159 = vrot.slane %v4158, 4
      %v4160 = vadd.f32 %v4158, %v4159
      %v4161 = vrot.slane %v4160, 2
      %v4162 = vadd.f32 %v4160, %v4161
      %v4163 = vrot.slane %v4162, 1
      %v4164 = vadd.f32 %v4162, %v4163
      %v4165 = vsel %vm3681, %v3494, 0.0
      %v4166 = vrot.slane %v4165, 4
      %v4167 = vadd.f32 %v4165, %v4166
      %v4168 = vrot.slane %v4167, 2
      %v4169 = vadd.f32 %v4167, %v4168
      %v4170 = vrot.slane %v4169, 1
      %v4171 = vadd.f32 %v4169, %v4170
      %v4172 = vsel %vm3681, %v3495, 0.0
      %v4173 = vrot.slane %v4172, 4
      %v4174 = vadd.f32 %v4172, %v4173
      %v4175 = vrot.slane %v4174, 2
      %v4176 = vadd.f32 %v4174, %v4175
      %v4177 = vrot.slane %v4176, 1
      %v4178 = vadd.f32 %v4176, %v4177
      %v4179 = vsel %vm3681, %v3496, 0.0
      %v4180 = vrot.slane %v4179, 4
      %v4181 = vadd.f32 %v4179, %v4180
      %v4182 = vrot.slane %v4181, 2
      %v4183 = vadd.f32 %v4181, %v4182
      %v4184 = vrot.slane %v4183, 1
      %v4185 = vadd.f32 %v4183, %v4184
      %v4186 = vsel %vm3681, %v3497, 0.0
      %v4187 = vrot.slane %v4186, 4
      %v4188 = vadd.f32 %v4186, %v4187
      %v4189 = vrot.slane %v4188, 2
      %v4190 = vadd.f32 %v4188, %v4189
      %v4191 = vrot.slane %v4190, 1
      %v4192 = vadd.f32 %v4190, %v4191
      %v4193 = vsel %vm3681, %v3498, 0.0
      %v4194 = vrot.slane %v4193, 4
      %v4195 = vadd.f32 %v4193, %v4194
      %v4196 = vrot.slane %v4195, 2
      %v4197 = vadd.f32 %v4195, %v4196
      %v4198 = vrot.slane %v4197, 1
      %v4199 = vadd.f32 %v4197, %v4198
      %v4200 = vsel %vm3681, %v3499, 0.0
      %v4201 = vrot.slane %v4200, 4
      %v4202 = vadd.f32 %v4200, %v4201
      %v4203 = vrot.slane %v4202, 2
      %v4204 = vadd.f32 %v4202, %v4203
      %v4205 = vrot.slane %v4204, 1
      %v4206 = vadd.f32 %v4204, %v4205
      %v4207 = vsel %vm3681, %v3500, 0.0
      %v4208 = vrot.slane %v4207, 4
      %v4209 = vadd.f32 %v4207, %v4208
      %v4210 = vrot.slane %v4209, 2
      %v4211 = vadd.f32 %v4209, %v4210
      %v4212 = vrot.slane %v4211, 1
      %v4213 = vadd.f32 %v4211, %v4212
      %v4214 = vsel %vm3681, %v3501, 0.0
      %v4215 = vrot.slane %v4214, 4
      %v4216 = vadd.f32 %v4214, %v4215
      %v4217 = vrot.slane %v4216, 2
      %v4218 = vadd.f32 %v4216, %v4217
      %v4219 = vrot.slane %v4218, 1
      %v4220 = vadd.f32 %v4218, %v4219
      %v4221 = vsel %vm3681, %v3502, 0.0
      %v4222 = vrot.slane %v4221, 4
      %v4223 = vadd.f32 %v4221, %v4222
      %v4224 = vrot.slane %v4223, 2
      %v4225 = vadd.f32 %v4223, %v4224
      %v4226 = vrot.slane %v4225, 1
      %v4227 = vadd.f32 %v4225, %v4226
      %v4228 = vsel %vm3681, %v3503, 0.0
      %v4229 = vrot.slane %v4228, 4
      %v4230 = vadd.f32 %v4228, %v4229
      %v4231 = vrot.slane %v4230, 2
      %v4232 = vadd.f32 %v4230, %v4231
      %v4233 = vrot.slane %v4232, 1
      %v4234 = vadd.f32 %v4232, %v4233
      %v4235 = vsel %vm3681, %v3504, 0.0
      %v4236 = vrot.slane %v4235, 4
      %v4237 = vadd.f32 %v4235, %v4236
      %v4238 = vrot.slane %v4237, 2
      %v4239 = vadd.f32 %v4237, %v4238
      %v4240 = vrot.slane %v4239, 1
      %v4241 = vadd.f32 %v4239, %v4240
      %v4242 = vsel %vm3681, %v3505, 0.0
      %v4243 = vrot.slane %v4242, 4
      %v4244 = vadd.f32 %v4242, %v4243
      %v4245 = vrot.slane %v4244, 2
      %v4246 = vadd.f32 %v4244, %v4245
      %v4247 = vrot.slane %v4246, 1
      %v4248 = vadd.f32 %v4246, %v4247
      %v4249 = vsel %vm3681, %v3506, 0.0
      %v4250 = vrot.slane %v4249, 4
      %v4251 = vadd.f32 %v4249, %v4250
      %v4252 = vrot.slane %v4251, 2
      %v4253 = vadd.f32 %v4251, %v4252
      %v4254 = vrot.slane %v4253, 1
      %v4255 = vadd.f32 %v4253, %v4254
      %v4256 = vsel %vm3681, %v3507, 0.0
      %v4257 = vrot.slane %v4256, 4
      %v4258 = vadd.f32 %v4256, %v4257
      %v4259 = vrot.slane %v4258, 2
      %v4260 = vadd.f32 %v4258, %v4259
      %v4261 = vrot.slane %v4260, 1
      %v4262 = vadd.f32 %v4260, %v4261
      %v4263 = vsel %vm3681, %v3508, 0.0
      %v4264 = vrot.slane %v4263, 4
      %v4265 = vadd.f32 %v4263, %v4264
      %v4266 = vrot.slane %v4265, 2
      %v4267 = vadd.f32 %v4265, %v4266
      %v4268 = vrot.slane %v4267, 1
      %v4269 = vadd.f32 %v4267, %v4268
      %v4270 = vsel %vm3681, %v3509, 0.0
      %v4271 = vrot.slane %v4270, 4
      %v4272 = vadd.f32 %v4270, %v4271
      %v4273 = vrot.slane %v4272, 2
      %v4274 = vadd.f32 %v4272, %v4273
      %v4275 = vrot.slane %v4274, 1
      %v4276 = vadd.f32 %v4274, %v4275
      %v4277 = vsel %vm3681, %v3510, 0.0
      %v4278 = vrot.slane %v4277, 4
      %v4279 = vadd.f32 %v4277, %v4278
      %v4280 = vrot.slane %v4279, 2
      %v4281 = vadd.f32 %v4279, %v4280
      %v4282 = vrot.slane %v4281, 1
      %v4283 = vadd.f32 %v4281, %v4282
      %v4284 = vsel %vm3681, %v3511, 0.0
      %v4285 = vrot.slane %v4284, 4
      %v4286 = vadd.f32 %v4284, %v4285
      %v4287 = vrot.slane %v4286, 2
      %v4288 = vadd.f32 %v4286, %v4287
      %v4289 = vrot.slane %v4288, 1
      %v4290 = vadd.f32 %v4288, %v4289
      %v4291 = vsel %vm3681, %v3512, 0.0
      %v4292 = vrot.slane %v4291, 4
      %v4293 = vadd.f32 %v4291, %v4292
      %v4294 = vrot.slane %v4293, 2
      %v4295 = vadd.f32 %v4293, %v4294
      %v4296 = vrot.slane %v4295, 1
      %v4297 = vadd.f32 %v4295, %v4296
      %v4298 = vsel %vm3681, %v3513, 0.0
      %v4299 = vrot.slane %v4298, 4
      %v4300 = vadd.f32 %v4298, %v4299
      %v4301 = vrot.slane %v4300, 2
      %v4302 = vadd.f32 %v4300, %v4301
      %v4303 = vrot.slane %v4302, 1
      %v4304 = vadd.f32 %v4302, %v4303
      %v4305 = vsel %vm3681, %v3514, 0.0
      %v4306 = vrot.slane %v4305, 4
      %v4307 = vadd.f32 %v4305, %v4306
      %v4308 = vrot.slane %v4307, 2
      %v4309 = vadd.f32 %v4307, %v4308
      %v4310 = vrot.slane %v4309, 1
      %v4311 = vadd.f32 %v4309, %v4310
      %v4312 = vsel %vm3681, %v3515, 0.0
      %v4313 = vrot.slane %v4312, 4
      %v4314 = vadd.f32 %v4312, %v4313
      %v4315 = vrot.slane %v4314, 2
      %v4316 = vadd.f32 %v4314, %v4315
      %v4317 = vrot.slane %v4316, 1
      %v4318 = vadd.f32 %v4316, %v4317
      %v4319 = vsel %vm3681, %v3516, 0.0
      %v4320 = vrot.slane %v4319, 4
      %v4321 = vadd.f32 %v4319, %v4320
      %v4322 = vrot.slane %v4321, 2
      %v4323 = vadd.f32 %v4321, %v4322
      %v4324 = vrot.slane %v4323, 1
      %v4325 = vadd.f32 %v4323, %v4324
      %v4326 = vsel %vm3681, %v3517, 0.0
      %v4327 = vrot.slane %v4326, 4
      %v4328 = vadd.f32 %v4326, %v4327
      %v4329 = vrot.slane %v4328, 2
      %v4330 = vadd.f32 %v4328, %v4329
      %v4331 = vrot.slane %v4330, 1
      %v4332 = vadd.f32 %v4330, %v4331
      %v4333 = vsel %vm3681, %v3518, 0.0
      %v4334 = vrot.slane %v4333, 4
      %v4335 = vadd.f32 %v4333, %v4334
      %v4336 = vrot.slane %v4335, 2
      %v4337 = vadd.f32 %v4335, %v4336
      %v4338 = vrot.slane %v4337, 1
      %v4339 = vadd.f32 %v4337, %v4338
      %v4340 = vsel %vm3681, %v3519, 0.0
      %v4341 = vrot.slane %v4340, 4
      %v4342 = vadd.f32 %v4340, %v4341
      %v4343 = vrot.slane %v4342, 2
      %v4344 = vadd.f32 %v4342, %v4343
      %v4345 = vrot.slane %v4344, 1
      %v4346 = vadd.f32 %v4344, %v4345
      %v4347 = vsel %vm3681, %v3520, 0.0
      %v4348 = vrot.slane %v4347, 4
      %v4349 = vadd.f32 %v4347, %v4348
      %v4350 = vrot.slane %v4349, 2
      %v4351 = vadd.f32 %v4349, %v4350
      %v4352 = vrot.slane %v4351, 1
      %v4353 = vadd.f32 %v4351, %v4352
      %v4354 = vsel %vm3681, %v3521, 0.0
      %v4355 = vrot.slane %v4354, 4
      %v4356 = vadd.f32 %v4354, %v4355
      %v4357 = vrot.slane %v4356, 2
      %v4358 = vadd.f32 %v4356, %v4357
      %v4359 = vrot.slane %v4358, 1
      %v4360 = vadd.f32 %v4358, %v4359
      %v4361 = vsel %vm3681, %v3522, 0.0
      %v4362 = vrot.slane %v4361, 4
      %v4363 = vadd.f32 %v4361, %v4362
      %v4364 = vrot.slane %v4363, 2
      %v4365 = vadd.f32 %v4363, %v4364
      %v4366 = vrot.slane %v4365, 1
      %v4367 = vadd.f32 %v4365, %v4366
      %v4368 = vsel %vm3681, %v3523, 0.0
      %v4369 = vrot.slane %v4368, 4
      %v4370 = vadd.f32 %v4368, %v4369
      %v4371 = vrot.slane %v4370, 2
      %v4372 = vadd.f32 %v4370, %v4371
      %v4373 = vrot.slane %v4372, 1
      %v4374 = vadd.f32 %v4372, %v4373
      %v4375 = vsel %vm3681, %v3524, 0.0
      %v4376 = vrot.slane %v4375, 4
      %v4377 = vadd.f32 %v4375, %v4376
      %v4378 = vrot.slane %v4377, 2
      %v4379 = vadd.f32 %v4377, %v4378
      %v4380 = vrot.slane %v4379, 1
      %v4381 = vadd.f32 %v4379, %v4380
      %v4382 = vsel %vm3681, %v3525, 0.0
      %v4383 = vrot.slane %v4382, 4
      %v4384 = vadd.f32 %v4382, %v4383
      %v4385 = vrot.slane %v4384, 2
      %v4386 = vadd.f32 %v4384, %v4385
      %v4387 = vrot.slane %v4386, 1
      %v4388 = vadd.f32 %v4386, %v4387
      %v4389 = vsel %vm3681, %v3526, 0.0
      %v4390 = vrot.slane %v4389, 4
      %v4391 = vadd.f32 %v4389, %v4390
      %v4392 = vrot.slane %v4391, 2
      %v4393 = vadd.f32 %v4391, %v4392
      %v4394 = vrot.slane %v4393, 1
      %v4395 = vadd.f32 %v4393, %v4394
      %v4396 = vsel %vm3681, %v3527, 0.0
      %v4397 = vrot.slane %v4396, 4
      %v4398 = vadd.f32 %v4396, %v4397
      %v4399 = vrot.slane %v4398, 2
      %v4400 = vadd.f32 %v4398, %v4399
      %v4401 = vrot.slane %v4400, 1
      %v4402 = vadd.f32 %v4400, %v4401
      %v4403 = vsel %vm3681, %v3528, 0.0
      %v4404 = vrot.slane %v4403, 4
      %v4405 = vadd.f32 %v4403, %v4404
      %v4406 = vrot.slane %v4405, 2
      %v4407 = vadd.f32 %v4405, %v4406
      %v4408 = vrot.slane %v4407, 1
      %v4409 = vadd.f32 %v4407, %v4408
      %v4410 = vsel %vm3681, %v3529, 0.0
      %v4411 = vrot.slane %v4410, 4
      %v4412 = vadd.f32 %v4410, %v4411
      %v4413 = vrot.slane %v4412, 2
      %v4414 = vadd.f32 %v4412, %v4413
      %v4415 = vrot.slane %v4414, 1
      %v4416 = vadd.f32 %v4414, %v4415
      %v4417 = vsel %vm3681, %v3530, 0.0
      %v4418 = vrot.slane %v4417, 4
      %v4419 = vadd.f32 %v4417, %v4418
      %v4420 = vrot.slane %v4419, 2
      %v4421 = vadd.f32 %v4419, %v4420
      %v4422 = vrot.slane %v4421, 1
      %v4423 = vadd.f32 %v4421, %v4422
      %v4424 = vsel %vm3681, %v3531, 0.0
      %v4425 = vrot.slane %v4424, 4
      %v4426 = vadd.f32 %v4424, %v4425
      %v4427 = vrot.slane %v4426, 2
      %v4428 = vadd.f32 %v4426, %v4427
      %v4429 = vrot.slane %v4428, 1
      %v4430 = vadd.f32 %v4428, %v4429
      %v4431 = vsel %vm3681, %v3532, 0.0
      %v4432 = vrot.slane %v4431, 4
      %v4433 = vadd.f32 %v4431, %v4432
      %v4434 = vrot.slane %v4433, 2
      %v4435 = vadd.f32 %v4433, %v4434
      %v4436 = vrot.slane %v4435, 1
      %v4437 = vadd.f32 %v4435, %v4436
      %v4438 = vsel %vm3681, %v3533, 0.0
      %v4439 = vrot.slane %v4438, 4
      %v4440 = vadd.f32 %v4438, %v4439
      %v4441 = vrot.slane %v4440, 2
      %v4442 = vadd.f32 %v4440, %v4441
      %v4443 = vrot.slane %v4442, 1
      %v4444 = vadd.f32 %v4442, %v4443
      %v4445 = vsel %vm3681, %v3534, 0.0
      %v4446 = vrot.slane %v4445, 4
      %v4447 = vadd.f32 %v4445, %v4446
      %v4448 = vrot.slane %v4447, 2
      %v4449 = vadd.f32 %v4447, %v4448
      %v4450 = vrot.slane %v4449, 1
      %v4451 = vadd.f32 %v4449, %v4450
      %v4452 = vsel %vm3681, %v3535, 0.0
      %v4453 = vrot.slane %v4452, 4
      %v4454 = vadd.f32 %v4452, %v4453
      %v4455 = vrot.slane %v4454, 2
      %v4456 = vadd.f32 %v4454, %v4455
      %v4457 = vrot.slane %v4456, 1
      %v4458 = vadd.f32 %v4456, %v4457
      %v4459 = vsel %vm3681, %v3536, 0.0
      %v4460 = vrot.slane %v4459, 4
      %v4461 = vadd.f32 %v4459, %v4460
      %v4462 = vrot.slane %v4461, 2
      %v4463 = vadd.f32 %v4461, %v4462
      %v4464 = vrot.slane %v4463, 1
      %v4465 = vadd.f32 %v4463, %v4464
      %v4466 = vsel %vm3681, %v3537, 0.0
      %v4467 = vrot.slane %v4466, 4
      %v4468 = vadd.f32 %v4466, %v4467
      %v4469 = vrot.slane %v4468, 2
      %v4470 = vadd.f32 %v4468, %v4469
      %v4471 = vrot.slane %v4470, 1
      %v4472 = vadd.f32 %v4470, %v4471
      %v4473 = vsel %vm3681, %v3538, 0.0
      %v4474 = vrot.slane %v4473, 4
      %v4475 = vadd.f32 %v4473, %v4474
      %v4476 = vrot.slane %v4475, 2
      %v4477 = vadd.f32 %v4475, %v4476
      %v4478 = vrot.slane %v4477, 1
      %v4479 = vadd.f32 %v4477, %v4478
      %v4480 = vsel %vm3681, %v3539, 0.0
      %v4481 = vrot.slane %v4480, 4
      %v4482 = vadd.f32 %v4480, %v4481
      %v4483 = vrot.slane %v4482, 2
      %v4484 = vadd.f32 %v4482, %v4483
      %v4485 = vrot.slane %v4484, 1
      %v4486 = vadd.f32 %v4484, %v4485
      %v4487 = vsel %vm3681, %v3540, 0.0
      %v4488 = vrot.slane %v4487, 4
      %v4489 = vadd.f32 %v4487, %v4488
      %v4490 = vrot.slane %v4489, 2
      %v4491 = vadd.f32 %v4489, %v4490
      %v4492 = vrot.slane %v4491, 1
      %v4493 = vadd.f32 %v4491, %v4492
      %v4494 = vsel %vm3681, %v3541, 0.0
      %v4495 = vrot.slane %v4494, 4
      %v4496 = vadd.f32 %v4494, %v4495
      %v4497 = vrot.slane %v4496, 2
      %v4498 = vadd.f32 %v4496, %v4497
      %v4499 = vrot.slane %v4498, 1
      %v4500 = vadd.f32 %v4498, %v4499
      %v4501 = vsel %vm3681, %v3542, 0.0
      %v4502 = vrot.slane %v4501, 4
      %v4503 = vadd.f32 %v4501, %v4502
      %v4504 = vrot.slane %v4503, 2
      %v4505 = vadd.f32 %v4503, %v4504
      %v4506 = vrot.slane %v4505, 1
      %v4507 = vadd.f32 %v4505, %v4506
      %v4508 = vsel %vm3681, %v3543, 0.0
      %v4509 = vrot.slane %v4508, 4
      %v4510 = vadd.f32 %v4508, %v4509
      %v4511 = vrot.slane %v4510, 2
      %v4512 = vadd.f32 %v4510, %v4511
      %v4513 = vrot.slane %v4512, 1
      %v4514 = vadd.f32 %v4512, %v4513
      %v4515 = vsel %vm3681, %v3544, 0.0
      %v4516 = vrot.slane %v4515, 4
      %v4517 = vadd.f32 %v4515, %v4516
      %v4518 = vrot.slane %v4517, 2
      %v4519 = vadd.f32 %v4517, %v4518
      %v4520 = vrot.slane %v4519, 1
      %v4521 = vadd.f32 %v4519, %v4520
      %v4522 = vsel %vm3681, %v3545, 0.0
      %v4523 = vrot.slane %v4522, 4
      %v4524 = vadd.f32 %v4522, %v4523
      %v4525 = vrot.slane %v4524, 2
      %v4526 = vadd.f32 %v4524, %v4525
      %v4527 = vrot.slane %v4526, 1
      %v4528 = vadd.f32 %v4526, %v4527
      %v4529 = vsel %vm3681, %v3546, 0.0
      %v4530 = vrot.slane %v4529, 4
      %v4531 = vadd.f32 %v4529, %v4530
      %v4532 = vrot.slane %v4531, 2
      %v4533 = vadd.f32 %v4531, %v4532
      %v4534 = vrot.slane %v4533, 1
      %v4535 = vadd.f32 %v4533, %v4534
      %v4536 = vsel %vm3681, %v3547, 0.0
      %v4537 = vrot.slane %v4536, 4
      %v4538 = vadd.f32 %v4536, %v4537
      %v4539 = vrot.slane %v4538, 2
      %v4540 = vadd.f32 %v4538, %v4539
      %v4541 = vrot.slane %v4540, 1
      %v4542 = vadd.f32 %v4540, %v4541
      %v4543 = vsel %vm3681, %v3548, 0.0
      %v4544 = vrot.slane %v4543, 4
      %v4545 = vadd.f32 %v4543, %v4544
      %v4546 = vrot.slane %v4545, 2
      %v4547 = vadd.f32 %v4545, %v4546
      %v4548 = vrot.slane %v4547, 1
      %v4549 = vadd.f32 %v4547, %v4548
      %v4550 = vsel %vm3681, %v3549, 0.0
      %v4551 = vrot.slane %v4550, 4
      %v4552 = vadd.f32 %v4550, %v4551
      %v4553 = vrot.slane %v4552, 2
      %v4554 = vadd.f32 %v4552, %v4553
      %v4555 = vrot.slane %v4554, 1
      %v4556 = vadd.f32 %v4554, %v4555
      %v4557 = vsel %vm3681, %v3550, 0.0
      %v4558 = vrot.slane %v4557, 4
      %v4559 = vadd.f32 %v4557, %v4558
      %v4560 = vrot.slane %v4559, 2
      %v4561 = vadd.f32 %v4559, %v4560
      %v4562 = vrot.slane %v4561, 1
      %v4563 = vadd.f32 %v4561, %v4562
      %v4564 = vsel %vm3681, %v3551, 0.0
      %v4565 = vrot.slane %v4564, 4
      %v4566 = vadd.f32 %v4564, %v4565
      %v4567 = vrot.slane %v4566, 2
      %v4568 = vadd.f32 %v4566, %v4567
      %v4569 = vrot.slane %v4568, 1
      %v4570 = vadd.f32 %v4568, %v4569
      %v4571 = vsel %vm3681, %v3552, 0.0
      %v4572 = vrot.slane %v4571, 4
      %v4573 = vadd.f32 %v4571, %v4572
      %v4574 = vrot.slane %v4573, 2
      %v4575 = vadd.f32 %v4573, %v4574
      %v4576 = vrot.slane %v4575, 1
      %v4577 = vadd.f32 %v4575, %v4576
      %v4578 = vsel %vm3681, %v3553, 0.0
      %v4579 = vrot.slane %v4578, 4
      %v4580 = vadd.f32 %v4578, %v4579
      %v4581 = vrot.slane %v4580, 2
      %v4582 = vadd.f32 %v4580, %v4581
      %v4583 = vrot.slane %v4582, 1
      %v4584 = vadd.f32 %v4582, %v4583
      %v4585 = vsel %vm3681, %v3554, 0.0
      %v4586 = vrot.slane %v4585, 4
      %v4587 = vadd.f32 %v4585, %v4586
      %v4588 = vrot.slane %v4587, 2
      %v4589 = vadd.f32 %v4587, %v4588
      %v4590 = vrot.slane %v4589, 1
      %v4591 = vadd.f32 %v4589, %v4590
      %v4592 = vsel %vm3681, %v3555, 0.0
      %v4593 = vrot.slane %v4592, 4
      %v4594 = vadd.f32 %v4592, %v4593
      %v4595 = vrot.slane %v4594, 2
      %v4596 = vadd.f32 %v4594, %v4595
      %v4597 = vrot.slane %v4596, 1
      %v4598 = vadd.f32 %v4596, %v4597
      %v4599 = vsel %vm3681, %v3556, 0.0
      %v4600 = vrot.slane %v4599, 4
      %v4601 = vadd.f32 %v4599, %v4600
      %v4602 = vrot.slane %v4601, 2
      %v4603 = vadd.f32 %v4601, %v4602
      %v4604 = vrot.slane %v4603, 1
      %v4605 = vadd.f32 %v4603, %v4604
      %v4606 = vsel %vm3681, %v3557, 0.0
      %v4607 = vrot.slane %v4606, 4
      %v4608 = vadd.f32 %v4606, %v4607
      %v4609 = vrot.slane %v4608, 2
      %v4610 = vadd.f32 %v4608, %v4609
      %v4611 = vrot.slane %v4610, 1
      %v4612 = vadd.f32 %v4610, %v4611
      %v4613 = vsel %vm3681, %v3558, 0.0
      %v4614 = vrot.slane %v4613, 4
      %v4615 = vadd.f32 %v4613, %v4614
      %v4616 = vrot.slane %v4615, 2
      %v4617 = vadd.f32 %v4615, %v4616
      %v4618 = vrot.slane %v4617, 1
      %v4619 = vadd.f32 %v4617, %v4618
      %v4620 = vsel %vm3681, %v3559, 0.0
      %v4621 = vrot.slane %v4620, 4
      %v4622 = vadd.f32 %v4620, %v4621
      %v4623 = vrot.slane %v4622, 2
      %v4624 = vadd.f32 %v4622, %v4623
      %v4625 = vrot.slane %v4624, 1
      %v4626 = vadd.f32 %v4624, %v4625
      %v4627 = vsel %vm3681, %v3560, 0.0
      %v4628 = vrot.slane %v4627, 4
      %v4629 = vadd.f32 %v4627, %v4628
      %v4630 = vrot.slane %v4629, 2
      %v4631 = vadd.f32 %v4629, %v4630
      %v4632 = vrot.slane %v4631, 1
      %v4633 = vadd.f32 %v4631, %v4632
      %v4634 = vsel %vm3681, %v3561, 0.0
      %v4635 = vrot.slane %v4634, 4
      %v4636 = vadd.f32 %v4634, %v4635
      %v4637 = vrot.slane %v4636, 2
      %v4638 = vadd.f32 %v4636, %v4637
      %v4639 = vrot.slane %v4638, 1
      %v4640 = vadd.f32 %v4638, %v4639
      %v4641 = vsel %vm3681, %v3562, 0.0
      %v4642 = vrot.slane %v4641, 4
      %v4643 = vadd.f32 %v4641, %v4642
      %v4644 = vrot.slane %v4643, 2
      %v4645 = vadd.f32 %v4643, %v4644
      %v4646 = vrot.slane %v4645, 1
      %v4647 = vadd.f32 %v4645, %v4646
      %v4648 = vsel %vm3681, %v3563, 0.0
      %v4649 = vrot.slane %v4648, 4
      %v4650 = vadd.f32 %v4648, %v4649
      %v4651 = vrot.slane %v4650, 2
      %v4652 = vadd.f32 %v4650, %v4651
      %v4653 = vrot.slane %v4652, 1
      %v4654 = vadd.f32 %v4652, %v4653
      %v4655 = vsel %vm3681, %v3564, 0.0
      %v4656 = vrot.slane %v4655, 4
      %v4657 = vadd.f32 %v4655, %v4656
      %v4658 = vrot.slane %v4657, 2
      %v4659 = vadd.f32 %v4657, %v4658
      %v4660 = vrot.slane %v4659, 1
      %v4661 = vadd.f32 %v4659, %v4660
      %v4662 = vsel %vm3681, %v3565, 0.0
      %v4663 = vrot.slane %v4662, 4
      %v4664 = vadd.f32 %v4662, %v4663
      %v4665 = vrot.slane %v4664, 2
      %v4666 = vadd.f32 %v4664, %v4665
      %v4667 = vrot.slane %v4666, 1
      %v4668 = vadd.f32 %v4666, %v4667
      %v4669 = vsel %vm3681, %v3566, 0.0
      %v4670 = vrot.slane %v4669, 4
      %v4671 = vadd.f32 %v4669, %v4670
      %v4672 = vrot.slane %v4671, 2
      %v4673 = vadd.f32 %v4671, %v4672
      %v4674 = vrot.slane %v4673, 1
      %v4675 = vadd.f32 %v4673, %v4674
      %v4676 = vsel %vm3681, %v3567, 0.0
      %v4677 = vrot.slane %v4676, 4
      %v4678 = vadd.f32 %v4676, %v4677
      %v4679 = vrot.slane %v4678, 2
      %v4680 = vadd.f32 %v4678, %v4679
      %v4681 = vrot.slane %v4680, 1
      %v4682 = vadd.f32 %v4680, %v4681
      %v4683 = vsel %vm3681, %v3568, 0.0
      %v4684 = vrot.slane %v4683, 4
      %v4685 = vadd.f32 %v4683, %v4684
      %v4686 = vrot.slane %v4685, 2
      %v4687 = vadd.f32 %v4685, %v4686
      %v4688 = vrot.slane %v4687, 1
      %v4689 = vadd.f32 %v4687, %v4688
      %v4690 = vsel %vm3681, %v3569, 0.0
      %v4691 = vrot.slane %v4690, 4
      %v4692 = vadd.f32 %v4690, %v4691
      %v4693 = vrot.slane %v4692, 2
      %v4694 = vadd.f32 %v4692, %v4693
      %v4695 = vrot.slane %v4694, 1
      %v4696 = vadd.f32 %v4694, %v4695
      %v4697 = vsel %vm3681, %v3570, 0.0
      %v4698 = vrot.slane %v4697, 4
      %v4699 = vadd.f32 %v4697, %v4698
      %v4700 = vrot.slane %v4699, 2
      %v4701 = vadd.f32 %v4699, %v4700
      %v4702 = vrot.slane %v4701, 1
      %v4703 = vadd.f32 %v4701, %v4702
      %v4704 = vsel %vm3681, %v3571, 0.0
      %v4705 = vrot.slane %v4704, 4
      %v4706 = vadd.f32 %v4704, %v4705
      %v4707 = vrot.slane %v4706, 2
      %v4708 = vadd.f32 %v4706, %v4707
      %v4709 = vrot.slane %v4708, 1
      %v4710 = vadd.f32 %v4708, %v4709
      %v4711 = vsel %vm3681, %v3572, 0.0
      %v4712 = vrot.slane %v4711, 4
      %v4713 = vadd.f32 %v4711, %v4712
      %v4714 = vrot.slane %v4713, 2
      %v4715 = vadd.f32 %v4713, %v4714
      %v4716 = vrot.slane %v4715, 1
      %v4717 = vadd.f32 %v4715, %v4716
      %v4718 = vsel %vm3681, %v3573, 0.0
      %v4719 = vrot.slane %v4718, 4
      %v4720 = vadd.f32 %v4718, %v4719
      %v4721 = vrot.slane %v4720, 2
      %v4722 = vadd.f32 %v4720, %v4721
      %v4723 = vrot.slane %v4722, 1
      %v4724 = vadd.f32 %v4722, %v4723
      %v4725 = vsel %vm3681, %v3574, 0.0
      %v4726 = vrot.slane %v4725, 4
      %v4727 = vadd.f32 %v4725, %v4726
      %v4728 = vrot.slane %v4727, 2
      %v4729 = vadd.f32 %v4727, %v4728
      %v4730 = vrot.slane %v4729, 1
      %v4731 = vadd.f32 %v4729, %v4730
      %v4732 = vsel %vm3681, %v3575, 0.0
      %v4733 = vrot.slane %v4732, 4
      %v4734 = vadd.f32 %v4732, %v4733
      %v4735 = vrot.slane %v4734, 2
      %v4736 = vadd.f32 %v4734, %v4735
      %v4737 = vrot.slane %v4736, 1
      %v4738 = vadd.f32 %v4736, %v4737
      %v4739 = vsel %vm3681, %v3576, 0.0
      %v4740 = vrot.slane %v4739, 4
      %v4741 = vadd.f32 %v4739, %v4740
      %v4742 = vrot.slane %v4741, 2
      %v4743 = vadd.f32 %v4741, %v4742
      %v4744 = vrot.slane %v4743, 1
      %v4745 = vadd.f32 %v4743, %v4744
      %v4746 = vsel %vm3681, %v3577, 0.0
      %v4747 = vrot.slane %v4746, 4
      %v4748 = vadd.f32 %v4746, %v4747
      %v4749 = vrot.slane %v4748, 2
      %v4750 = vadd.f32 %v4748, %v4749
      %v4751 = vrot.slane %v4750, 1
      %v4752 = vadd.f32 %v4750, %v4751
      %v4753 = vsel %vm3681, %v3578, 0.0
      %v4754 = vrot.slane %v4753, 4
      %v4755 = vadd.f32 %v4753, %v4754
      %v4756 = vrot.slane %v4755, 2
      %v4757 = vadd.f32 %v4755, %v4756
      %v4758 = vrot.slane %v4757, 1
      %v4759 = vadd.f32 %v4757, %v4758
      %v4760 = vsel %vm3681, %v3579, 0.0
      %v4761 = vrot.slane %v4760, 4
      %v4762 = vadd.f32 %v4760, %v4761
      %v4763 = vrot.slane %v4762, 2
      %v4764 = vadd.f32 %v4762, %v4763
      %v4765 = vrot.slane %v4764, 1
      %v4766 = vadd.f32 %v4764, %v4765
      %v4767 = vsel %vm3681, %v3580, 0.0
      %v4768 = vrot.slane %v4767, 4
      %v4769 = vadd.f32 %v4767, %v4768
      %v4770 = vrot.slane %v4769, 2
      %v4771 = vadd.f32 %v4769, %v4770
      %v4772 = vrot.slane %v4771, 1
      %v4773 = vadd.f32 %v4771, %v4772
      %v4774 = vsel %vm3681, %v3581, 0.0
      %v4775 = vrot.slane %v4774, 4
      %v4776 = vadd.f32 %v4774, %v4775
      %v4777 = vrot.slane %v4776, 2
      %v4778 = vadd.f32 %v4776, %v4777
      %v4779 = vrot.slane %v4778, 1
      %v4780 = vadd.f32 %v4778, %v4779
      %v4781 = vsel %vm3681, %v3582, 0.0
      %v4782 = vrot.slane %v4781, 4
      %v4783 = vadd.f32 %v4781, %v4782
      %v4784 = vrot.slane %v4783, 2
      %v4785 = vadd.f32 %v4783, %v4784
      %v4786 = vrot.slane %v4785, 1
      %v4787 = vadd.f32 %v4785, %v4786
      %v4788 = vsel %vm3681, %v3583, 0.0
      %v4789 = vrot.slane %v4788, 4
      %v4790 = vadd.f32 %v4788, %v4789
      %v4791 = vrot.slane %v4790, 2
      %v4792 = vadd.f32 %v4790, %v4791
      %v4793 = vrot.slane %v4792, 1
      %v4794 = vadd.f32 %v4792, %v4793
      %v4795 = vsel %vm3681, %v3584, 0.0
      %v4796 = vrot.slane %v4795, 4
      %v4797 = vadd.f32 %v4795, %v4796
      %v4798 = vrot.slane %v4797, 2
      %v4799 = vadd.f32 %v4797, %v4798
      %v4800 = vrot.slane %v4799, 1
      %v4801 = vadd.f32 %v4799, %v4800
      %v4802 = vsel %vm3681, %v3585, 0.0
      %v4803 = vrot.slane %v4802, 4
      %v4804 = vadd.f32 %v4802, %v4803
      %v4805 = vrot.slane %v4804, 2
      %v4806 = vadd.f32 %v4804, %v4805
      %v4807 = vrot.slane %v4806, 1
      %v4808 = vadd.f32 %v4806, %v4807
      %v4809 = vsel %vm3681, %v3586, 0.0
      %v4810 = vrot.slane %v4809, 4
      %v4811 = vadd.f32 %v4809, %v4810
      %v4812 = vrot.slane %v4811, 2
      %v4813 = vadd.f32 %v4811, %v4812
      %v4814 = vrot.slane %v4813, 1
      %v4815 = vadd.f32 %v4813, %v4814
      %v4816 = vsel %vm3681, %v3587, 0.0
      %v4817 = vrot.slane %v4816, 4
      %v4818 = vadd.f32 %v4816, %v4817
      %v4819 = vrot.slane %v4818, 2
      %v4820 = vadd.f32 %v4818, %v4819
      %v4821 = vrot.slane %v4820, 1
      %v4822 = vadd.f32 %v4820, %v4821
      %v4823 = vsel %vm3681, %v3588, 0.0
      %v4824 = vrot.slane %v4823, 4
      %v4825 = vadd.f32 %v4823, %v4824
      %v4826 = vrot.slane %v4825, 2
      %v4827 = vadd.f32 %v4825, %v4826
      %v4828 = vrot.slane %v4827, 1
      %v4829 = vadd.f32 %v4827, %v4828
      %v4830 = vsel %vm3681, %v3589, 0.0
      %v4831 = vrot.slane %v4830, 4
      %v4832 = vadd.f32 %v4830, %v4831
      %v4833 = vrot.slane %v4832, 2
      %v4834 = vadd.f32 %v4832, %v4833
      %v4835 = vrot.slane %v4834, 1
      %v4836 = vadd.f32 %v4834, %v4835
      %v4837 = vsel %vm3681, %v3590, 0.0
      %v4838 = vrot.slane %v4837, 4
      %v4839 = vadd.f32 %v4837, %v4838
      %v4840 = vrot.slane %v4839, 2
      %v4841 = vadd.f32 %v4839, %v4840
      %v4842 = vrot.slane %v4841, 1
      %v4843 = vadd.f32 %v4841, %v4842
      %v4844 = vsel %vm3681, %v3591, 0.0
      %v4845 = vrot.slane %v4844, 4
      %v4846 = vadd.f32 %v4844, %v4845
      %v4847 = vrot.slane %v4846, 2
      %v4848 = vadd.f32 %v4846, %v4847
      %v4849 = vrot.slane %v4848, 1
      %v4850 = vadd.f32 %v4848, %v4849
      %v4851 = vsel %vm3681, %v3592, 0.0
      %v4852 = vrot.slane %v4851, 4
      %v4853 = vadd.f32 %v4851, %v4852
      %v4854 = vrot.slane %v4853, 2
      %v4855 = vadd.f32 %v4853, %v4854
      %v4856 = vrot.slane %v4855, 1
      %v4857 = vadd.f32 %v4855, %v4856
      %v4858 = vsel %vm3681, %v3593, 0.0
      %v4859 = vrot.slane %v4858, 4
      %v4860 = vadd.f32 %v4858, %v4859
      %v4861 = vrot.slane %v4860, 2
      %v4862 = vadd.f32 %v4860, %v4861
      %v4863 = vrot.slane %v4862, 1
      %v4864 = vadd.f32 %v4862, %v4863
      %v4865 = vsel %vm3681, %v3594, 0.0
      %v4866 = vrot.slane %v4865, 4
      %v4867 = vadd.f32 %v4865, %v4866
      %v4868 = vrot.slane %v4867, 2
      %v4869 = vadd.f32 %v4867, %v4868
      %v4870 = vrot.slane %v4869, 1
      %v4871 = vadd.f32 %v4869, %v4870
      %v4872 = vsel %vm3681, %v3595, 0.0
      %v4873 = vrot.slane %v4872, 4
      %v4874 = vadd.f32 %v4872, %v4873
      %v4875 = vrot.slane %v4874, 2
      %v4876 = vadd.f32 %v4874, %v4875
      %v4877 = vrot.slane %v4876, 1
      %v4878 = vadd.f32 %v4876, %v4877
      %v4879 = vsel %vm3681, %v3596, 0.0
      %v4880 = vrot.slane %v4879, 4
      %v4881 = vadd.f32 %v4879, %v4880
      %v4882 = vrot.slane %v4881, 2
      %v4883 = vadd.f32 %v4881, %v4882
      %v4884 = vrot.slane %v4883, 1
      %v4885 = vadd.f32 %v4883, %v4884
      %v4886 = vsel %vm3681, %v3597, 0.0
      %v4887 = vrot.slane %v4886, 4
      %v4888 = vadd.f32 %v4886, %v4887
      %v4889 = vrot.slane %v4888, 2
      %v4890 = vadd.f32 %v4888, %v4889
      %v4891 = vrot.slane %v4890, 1
      %v4892 = vadd.f32 %v4890, %v4891
      %v4893 = vsel %vm3681, %v3598, 0.0
      %v4894 = vrot.slane %v4893, 4
      %v4895 = vadd.f32 %v4893, %v4894
      %v4896 = vrot.slane %v4895, 2
      %v4897 = vadd.f32 %v4895, %v4896
      %v4898 = vrot.slane %v4897, 1
      %v4899 = vadd.f32 %v4897, %v4898
      %v4900 = vsel %vm3681, %v3599, 0.0
      %v4901 = vrot.slane %v4900, 4
      %v4902 = vadd.f32 %v4900, %v4901
      %v4903 = vrot.slane %v4902, 2
      %v4904 = vadd.f32 %v4902, %v4903
      %v4905 = vrot.slane %v4904, 1
      %v4906 = vadd.f32 %v4904, %v4905
      %v4907 = vsel %vm3681, %v3600, 0.0
      %v4908 = vrot.slane %v4907, 4
      %v4909 = vadd.f32 %v4907, %v4908
      %v4910 = vrot.slane %v4909, 2
      %v4911 = vadd.f32 %v4909, %v4910
      %v4912 = vrot.slane %v4911, 1
      %v4913 = vadd.f32 %v4911, %v4912
      %v4914 = vsel %vm3681, %v3601, 0.0
      %v4915 = vrot.slane %v4914, 4
      %v4916 = vadd.f32 %v4914, %v4915
      %v4917 = vrot.slane %v4916, 2
      %v4918 = vadd.f32 %v4916, %v4917
      %v4919 = vrot.slane %v4918, 1
      %v4920 = vadd.f32 %v4918, %v4919
      %v4921 = vsel %vm3681, %v3602, 0.0
      %v4922 = vrot.slane %v4921, 4
      %v4923 = vadd.f32 %v4921, %v4922
      %v4924 = vrot.slane %v4923, 2
      %v4925 = vadd.f32 %v4923, %v4924
      %v4926 = vrot.slane %v4925, 1
      %v4927 = vadd.f32 %v4925, %v4926
      %v4928 = vsel %vm3681, %v3603, 0.0
      %v4929 = vrot.slane %v4928, 4
      %v4930 = vadd.f32 %v4928, %v4929
      %v4931 = vrot.slane %v4930, 2
      %v4932 = vadd.f32 %v4930, %v4931
      %v4933 = vrot.slane %v4932, 1
      %v4934 = vadd.f32 %v4932, %v4933
      %v4935 = vsel %vm3681, %v3604, 0.0
      %v4936 = vrot.slane %v4935, 4
      %v4937 = vadd.f32 %v4935, %v4936
      %v4938 = vrot.slane %v4937, 2
      %v4939 = vadd.f32 %v4937, %v4938
      %v4940 = vrot.slane %v4939, 1
      %v4941 = vadd.f32 %v4939, %v4940
      %v4942 = vsel %vm3681, %v3605, 0.0
      %v4943 = vrot.slane %v4942, 4
      %v4944 = vadd.f32 %v4942, %v4943
      %v4945 = vrot.slane %v4944, 2
      %v4946 = vadd.f32 %v4944, %v4945
      %v4947 = vrot.slane %v4946, 1
      %v4948 = vadd.f32 %v4946, %v4947
      %v4949 = vsel %vm3681, %v3606, 0.0
      %v4950 = vrot.slane %v4949, 4
      %v4951 = vadd.f32 %v4949, %v4950
      %v4952 = vrot.slane %v4951, 2
      %v4953 = vadd.f32 %v4951, %v4952
      %v4954 = vrot.slane %v4953, 1
      %v4955 = vadd.f32 %v4953, %v4954
      %v4956 = vsel %vm3681, %v3607, 0.0
      %v4957 = vrot.slane %v4956, 4
      %v4958 = vadd.f32 %v4956, %v4957
      %v4959 = vrot.slane %v4958, 2
      %v4960 = vadd.f32 %v4958, %v4959
      %v4961 = vrot.slane %v4960, 1
      %v4962 = vadd.f32 %v4960, %v4961
      %v4963 = vsel %vm3681, %v3608, 0.0
      %v4964 = vrot.slane %v4963, 4
      %v4965 = vadd.f32 %v4963, %v4964
      %v4966 = vrot.slane %v4965, 2
      %v4967 = vadd.f32 %v4965, %v4966
      %v4968 = vrot.slane %v4967, 1
      %v4969 = vadd.f32 %v4967, %v4968
      %v4970 = vsel %vm3681, %v3609, 0.0
      %v4971 = vrot.slane %v4970, 4
      %v4972 = vadd.f32 %v4970, %v4971
      %v4973 = vrot.slane %v4972, 2
      %v4974 = vadd.f32 %v4972, %v4973
      %v4975 = vrot.slane %v4974, 1
      %v4976 = vadd.f32 %v4974, %v4975
      %v4977 = vsel %vm3681, %v3610, 0.0
      %v4978 = vrot.slane %v4977, 4
      %v4979 = vadd.f32 %v4977, %v4978
      %v4980 = vrot.slane %v4979, 2
      %v4981 = vadd.f32 %v4979, %v4980
      %v4982 = vrot.slane %v4981, 1
      %v4983 = vadd.f32 %v4981, %v4982
      %v4984 = vsel %vm3681, %v3611, 0.0
      %v4985 = vrot.slane %v4984, 4
      %v4986 = vadd.f32 %v4984, %v4985
      %v4987 = vrot.slane %v4986, 2
      %v4988 = vadd.f32 %v4986, %v4987
      %v4989 = vrot.slane %v4988, 1
      %v4990 = vadd.f32 %v4988, %v4989
      %v4991 = vsel %vm3681, %v3612, 0.0
      %v4992 = vrot.slane %v4991, 4
      %v4993 = vadd.f32 %v4991, %v4992
      %v4994 = vrot.slane %v4993, 2
      %v4995 = vadd.f32 %v4993, %v4994
      %v4996 = vrot.slane %v4995, 1
      %v4997 = vadd.f32 %v4995, %v4996
      %v4998 = vsel %vm3681, %v3613, 0.0
      %v4999 = vrot.slane %v4998, 4
      %v5000 = vadd.f32 %v4998, %v4999
      %v5001 = vrot.slane %v5000, 2
      %v5002 = vadd.f32 %v5000, %v5001
      %v5003 = vrot.slane %v5002, 1
      %v5004 = vadd.f32 %v5002, %v5003
      %v5005 = vsel %vm3681, %v3614, 0.0
      %v5006 = vrot.slane %v5005, 4
      %v5007 = vadd.f32 %v5005, %v5006
      %v5008 = vrot.slane %v5007, 2
      %v5009 = vadd.f32 %v5007, %v5008
      %v5010 = vrot.slane %v5009, 1
      %v5011 = vadd.f32 %v5009, %v5010
      %v5012 = vsel %vm3681, %v3615, 0.0
      %v5013 = vrot.slane %v5012, 4
      %v5014 = vadd.f32 %v5012, %v5013
      %v5015 = vrot.slane %v5014, 2
      %v5016 = vadd.f32 %v5014, %v5015
      %v5017 = vrot.slane %v5016, 1
      %v5018 = vadd.f32 %v5016, %v5017
      %v5019 = vsel %vm3681, %v3616, 0.0
      %v5020 = vrot.slane %v5019, 4
      %v5021 = vadd.f32 %v5019, %v5020
      %v5022 = vrot.slane %v5021, 2
      %v5023 = vadd.f32 %v5021, %v5022
      %v5024 = vrot.slane %v5023, 1
      %v5025 = vadd.f32 %v5023, %v5024
      %v5026 = vsel %vm3681, %v3617, 0.0
      %v5027 = vrot.slane %v5026, 4
      %v5028 = vadd.f32 %v5026, %v5027
      %v5029 = vrot.slane %v5028, 2
      %v5030 = vadd.f32 %v5028, %v5029
      %v5031 = vrot.slane %v5030, 1
      %v5032 = vadd.f32 %v5030, %v5031
      %v5033 = vsel %vm3681, %v3618, 0.0
      %v5034 = vrot.slane %v5033, 4
      %v5035 = vadd.f32 %v5033, %v5034
      %v5036 = vrot.slane %v5035, 2
      %v5037 = vadd.f32 %v5035, %v5036
      %v5038 = vrot.slane %v5037, 1
      %v5039 = vadd.f32 %v5037, %v5038
      %v5040 = vsel %vm3681, %v3619, 0.0
      %v5041 = vrot.slane %v5040, 4
      %v5042 = vadd.f32 %v5040, %v5041
      %v5043 = vrot.slane %v5042, 2
      %v5044 = vadd.f32 %v5042, %v5043
      %v5045 = vrot.slane %v5044, 1
      %v5046 = vadd.f32 %v5044, %v5045
      %v5047 = vsel %vm3681, %v3620, 0.0
      %v5048 = vrot.slane %v5047, 4
      %v5049 = vadd.f32 %v5047, %v5048
      %v5050 = vrot.slane %v5049, 2
      %v5051 = vadd.f32 %v5049, %v5050
      %v5052 = vrot.slane %v5051, 1
      %v5053 = vadd.f32 %v5051, %v5052
      %v5054 = vsel %vm3681, %v3621, 0.0
      %v5055 = vrot.slane %v5054, 4
      %v5056 = vadd.f32 %v5054, %v5055
      %v5057 = vrot.slane %v5056, 2
      %v5058 = vadd.f32 %v5056, %v5057
      %v5059 = vrot.slane %v5058, 1
      %v5060 = vadd.f32 %v5058, %v5059
      %v5061 = vsel %vm3681, %v3622, 0.0
      %v5062 = vrot.slane %v5061, 4
      %v5063 = vadd.f32 %v5061, %v5062
      %v5064 = vrot.slane %v5063, 2
      %v5065 = vadd.f32 %v5063, %v5064
      %v5066 = vrot.slane %v5065, 1
      %v5067 = vadd.f32 %v5065, %v5066
      %v5068 = vsel %vm3681, %v3623, 0.0
      %v5069 = vrot.slane %v5068, 4
      %v5070 = vadd.f32 %v5068, %v5069
      %v5071 = vrot.slane %v5070, 2
      %v5072 = vadd.f32 %v5070, %v5071
      %v5073 = vrot.slane %v5072, 1
      %v5074 = vadd.f32 %v5072, %v5073
      %v5075 = vsel %vm3681, %v3624, 0.0
      %v5076 = vrot.slane %v5075, 4
      %v5077 = vadd.f32 %v5075, %v5076
      %v5078 = vrot.slane %v5077, 2
      %v5079 = vadd.f32 %v5077, %v5078
      %v5080 = vrot.slane %v5079, 1
      %v5081 = vadd.f32 %v5079, %v5080
      %v5082 = vsel %vm3681, %v3625, 0.0
      %v5083 = vrot.slane %v5082, 4
      %v5084 = vadd.f32 %v5082, %v5083
      %v5085 = vrot.slane %v5084, 2
      %v5086 = vadd.f32 %v5084, %v5085
      %v5087 = vrot.slane %v5086, 1
      %v5088 = vadd.f32 %v5086, %v5087
      %v5089 = vsel %vm3681, %v3626, 0.0
      %v5090 = vrot.slane %v5089, 4
      %v5091 = vadd.f32 %v5089, %v5090
      %v5092 = vrot.slane %v5091, 2
      %v5093 = vadd.f32 %v5091, %v5092
      %v5094 = vrot.slane %v5093, 1
      %v5095 = vadd.f32 %v5093, %v5094
      %v5096 = vsel %vm3681, %v3627, 0.0
      %v5097 = vrot.slane %v5096, 4
      %v5098 = vadd.f32 %v5096, %v5097
      %v5099 = vrot.slane %v5098, 2
      %v5100 = vadd.f32 %v5098, %v5099
      %v5101 = vrot.slane %v5100, 1
      %v5102 = vadd.f32 %v5100, %v5101
      %v5103 = vsel %vm3681, %v3628, 0.0
      %v5104 = vrot.slane %v5103, 4
      %v5105 = vadd.f32 %v5103, %v5104
      %v5106 = vrot.slane %v5105, 2
      %v5107 = vadd.f32 %v5105, %v5106
      %v5108 = vrot.slane %v5107, 1
      %v5109 = vadd.f32 %v5107, %v5108
      %v5110 = vsel %vm3681, %v3629, 0.0
      %v5111 = vrot.slane %v5110, 4
      %v5112 = vadd.f32 %v5110, %v5111
      %v5113 = vrot.slane %v5112, 2
      %v5114 = vadd.f32 %v5112, %v5113
      %v5115 = vrot.slane %v5114, 1
      %v5116 = vadd.f32 %v5114, %v5115
      %v5117 = vsel %vm3681, %v3630, 0.0
      %v5118 = vrot.slane %v5117, 4
      %v5119 = vadd.f32 %v5117, %v5118
      %v5120 = vrot.slane %v5119, 2
      %v5121 = vadd.f32 %v5119, %v5120
      %v5122 = vrot.slane %v5121, 1
      %v5123 = vadd.f32 %v5121, %v5122
      %v5124 = vsel %vm3681, %v3631, 0.0
      %v5125 = vrot.slane %v5124, 4
      %v5126 = vadd.f32 %v5124, %v5125
      %v5127 = vrot.slane %v5126, 2
      %v5128 = vadd.f32 %v5126, %v5127
      %v5129 = vrot.slane %v5128, 1
      %v5130 = vadd.f32 %v5128, %v5129
      %v5131 = vsel %vm3681, %v3632, 0.0
      %v5132 = vrot.slane %v5131, 4
      %v5133 = vadd.f32 %v5131, %v5132
      %v5134 = vrot.slane %v5133, 2
      %v5135 = vadd.f32 %v5133, %v5134
      %v5136 = vrot.slane %v5135, 1
      %v5137 = vadd.f32 %v5135, %v5136
      %v5138 = vsel %vm3681, %v3633, 0.0
      %v5139 = vrot.slane %v5138, 4
      %v5140 = vadd.f32 %v5138, %v5139
      %v5141 = vrot.slane %v5140, 2
      %v5142 = vadd.f32 %v5140, %v5141
      %v5143 = vrot.slane %v5142, 1
      %v5144 = vadd.f32 %v5142, %v5143
      %v5145 = vsel %vm3681, %v3634, 0.0
      %v5146 = vrot.slane %v5145, 4
      %v5147 = vadd.f32 %v5145, %v5146
      %v5148 = vrot.slane %v5147, 2
      %v5149 = vadd.f32 %v5147, %v5148
      %v5150 = vrot.slane %v5149, 1
      %v5151 = vadd.f32 %v5149, %v5150
      %v5152 = vsel %vm3681, %v3635, 0.0
      %v5153 = vrot.slane %v5152, 4
      %v5154 = vadd.f32 %v5152, %v5153
      %v5155 = vrot.slane %v5154, 2
      %v5156 = vadd.f32 %v5154, %v5155
      %v5157 = vrot.slane %v5156, 1
      %v5158 = vadd.f32 %v5156, %v5157
      %v5159 = vsel %vm3681, %v3636, 0.0
      %v5160 = vrot.slane %v5159, 4
      %v5161 = vadd.f32 %v5159, %v5160
      %v5162 = vrot.slane %v5161, 2
      %v5163 = vadd.f32 %v5161, %v5162
      %v5164 = vrot.slane %v5163, 1
      %v5165 = vadd.f32 %v5163, %v5164
      %v5166 = vsel %vm3681, %v3637, 0.0
      %v5167 = vrot.slane %v5166, 4
      %v5168 = vadd.f32 %v5166, %v5167
      %v5169 = vrot.slane %v5168, 2
      %v5170 = vadd.f32 %v5168, %v5169
      %v5171 = vrot.slane %v5170, 1
      %v5172 = vadd.f32 %v5170, %v5171
      %v5173 = vsel %vm3681, %v3638, 0.0
      %v5174 = vrot.slane %v5173, 4
      %v5175 = vadd.f32 %v5173, %v5174
      %v5176 = vrot.slane %v5175, 2
      %v5177 = vadd.f32 %v5175, %v5176
      %v5178 = vrot.slane %v5177, 1
      %v5179 = vadd.f32 %v5177, %v5178
      %v5180 = vsel %vm3681, %v3639, 0.0
      %v5181 = vrot.slane %v5180, 4
      %v5182 = vadd.f32 %v5180, %v5181
      %v5183 = vrot.slane %v5182, 2
      %v5184 = vadd.f32 %v5182, %v5183
      %v5185 = vrot.slane %v5184, 1
      %v5186 = vadd.f32 %v5184, %v5185
      %v5187 = vsel %vm3681, %v3640, 0.0
      %v5188 = vrot.slane %v5187, 4
      %v5189 = vadd.f32 %v5187, %v5188
      %v5190 = vrot.slane %v5189, 2
      %v5191 = vadd.f32 %v5189, %v5190
      %v5192 = vrot.slane %v5191, 1
      %v5193 = vadd.f32 %v5191, %v5192
      %v5194 = vsel %vm3681, %v3641, 0.0
      %v5195 = vrot.slane %v5194, 4
      %v5196 = vadd.f32 %v5194, %v5195
      %v5197 = vrot.slane %v5196, 2
      %v5198 = vadd.f32 %v5196, %v5197
      %v5199 = vrot.slane %v5198, 1
      %v5200 = vadd.f32 %v5198, %v5199
      %v5201 = vsel %vm3681, %v3642, 0.0
      %v5202 = vrot.slane %v5201, 4
      %v5203 = vadd.f32 %v5201, %v5202
      %v5204 = vrot.slane %v5203, 2
      %v5205 = vadd.f32 %v5203, %v5204
      %v5206 = vrot.slane %v5205, 1
      %v5207 = vadd.f32 %v5205, %v5206
      %v5208 = vsel %vm3681, %v3643, 0.0
      %v5209 = vrot.slane %v5208, 4
      %v5210 = vadd.f32 %v5208, %v5209
      %v5211 = vrot.slane %v5210, 2
      %v5212 = vadd.f32 %v5210, %v5211
      %v5213 = vrot.slane %v5212, 1
      %v5214 = vadd.f32 %v5212, %v5213
      %v5215 = vsel %vm3681, %v3644, 0.0
      %v5216 = vrot.slane %v5215, 4
      %v5217 = vadd.f32 %v5215, %v5216
      %v5218 = vrot.slane %v5217, 2
      %v5219 = vadd.f32 %v5217, %v5218
      %v5220 = vrot.slane %v5219, 1
      %v5221 = vadd.f32 %v5219, %v5220
      %v5222 = vsel %vm3681, %v3645, 0.0
      %v5223 = vrot.slane %v5222, 4
      %v5224 = vadd.f32 %v5222, %v5223
      %v5225 = vrot.slane %v5224, 2
      %v5226 = vadd.f32 %v5224, %v5225
      %v5227 = vrot.slane %v5226, 1
      %v5228 = vadd.f32 %v5226, %v5227
      %v5229 = vsel %vm3681, %v3646, 0.0
      %v5230 = vrot.slane %v5229, 4
      %v5231 = vadd.f32 %v5229, %v5230
      %v5232 = vrot.slane %v5231, 2
      %v5233 = vadd.f32 %v5231, %v5232
      %v5234 = vrot.slane %v5233, 1
      %v5235 = vadd.f32 %v5233, %v5234
      %v5236 = vsel %vm3681, %v3647, 0.0
      %v5237 = vrot.slane %v5236, 4
      %v5238 = vadd.f32 %v5236, %v5237
      %v5239 = vrot.slane %v5238, 2
      %v5240 = vadd.f32 %v5238, %v5239
      %v5241 = vrot.slane %v5240, 1
      %v5242 = vadd.f32 %v5240, %v5241
      %v5243 = vsel %vm3681, %v3648, 0.0
      %v5244 = vrot.slane %v5243, 4
      %v5245 = vadd.f32 %v5243, %v5244
      %v5246 = vrot.slane %v5245, 2
      %v5247 = vadd.f32 %v5245, %v5246
      %v5248 = vrot.slane %v5247, 1
      %v5249 = vadd.f32 %v5247, %v5248
      %v5250 = vsel %vm3681, %v3649, 0.0
      %v5251 = vrot.slane %v5250, 4
      %v5252 = vadd.f32 %v5250, %v5251
      %v5253 = vrot.slane %v5252, 2
      %v5254 = vadd.f32 %v5252, %v5253
      %v5255 = vrot.slane %v5254, 1
      %v5256 = vadd.f32 %v5254, %v5255
      %v5257 = vsel %vm3681, %v3650, 0.0
      %v5258 = vrot.slane %v5257, 4
      %v5259 = vadd.f32 %v5257, %v5258
      %v5260 = vrot.slane %v5259, 2
      %v5261 = vadd.f32 %v5259, %v5260
      %v5262 = vrot.slane %v5261, 1
      %v5263 = vadd.f32 %v5261, %v5262
      %v5264 = vsel %vm3681, %v3651, 0.0
      %v5265 = vrot.slane %v5264, 4
      %v5266 = vadd.f32 %v5264, %v5265
      %v5267 = vrot.slane %v5266, 2
      %v5268 = vadd.f32 %v5266, %v5267
      %v5269 = vrot.slane %v5268, 1
      %v5270 = vadd.f32 %v5268, %v5269
      %v5271 = vsel %vm3681, %v3652, 0.0
      %v5272 = vrot.slane %v5271, 4
      %v5273 = vadd.f32 %v5271, %v5272
      %v5274 = vrot.slane %v5273, 2
      %v5275 = vadd.f32 %v5273, %v5274
      %v5276 = vrot.slane %v5275, 1
      %v5277 = vadd.f32 %v5275, %v5276
      %v5278 = vsel %vm3681, %v3653, 0.0
      %v5279 = vrot.slane %v5278, 4
      %v5280 = vadd.f32 %v5278, %v5279
      %v5281 = vrot.slane %v5280, 2
      %v5282 = vadd.f32 %v5280, %v5281
      %v5283 = vrot.slane %v5282, 1
      %v5284 = vadd.f32 %v5282, %v5283
      %v5285 = vsel %vm3681, %v3654, 0.0
      %v5286 = vrot.slane %v5285, 4
      %v5287 = vadd.f32 %v5285, %v5286
      %v5288 = vrot.slane %v5287, 2
      %v5289 = vadd.f32 %v5287, %v5288
      %v5290 = vrot.slane %v5289, 1
      %v5291 = vadd.f32 %v5289, %v5290
      %v5292 = vsel %vm3681, %v3655, 0.0
      %v5293 = vrot.slane %v5292, 4
      %v5294 = vadd.f32 %v5292, %v5293
      %v5295 = vrot.slane %v5294, 2
      %v5296 = vadd.f32 %v5294, %v5295
      %v5297 = vrot.slane %v5296, 1
      %v5298 = vadd.f32 %v5296, %v5297
      %v5299 = vsel %vm3681, %v3656, 0.0
      %v5300 = vrot.slane %v5299, 4
      %v5301 = vadd.f32 %v5299, %v5300
      %v5302 = vrot.slane %v5301, 2
      %v5303 = vadd.f32 %v5301, %v5302
      %v5304 = vrot.slane %v5303, 1
      %v5305 = vadd.f32 %v5303, %v5304
      %v5306 = vsel %vm3681, %v3657, 0.0
      %v5307 = vrot.slane %v5306, 4
      %v5308 = vadd.f32 %v5306, %v5307
      %v5309 = vrot.slane %v5308, 2
      %v5310 = vadd.f32 %v5308, %v5309
      %v5311 = vrot.slane %v5310, 1
      %v5312 = vadd.f32 %v5310, %v5311
      %v5313 = vsel %vm3681, %v3658, 0.0
      %v5314 = vrot.slane %v5313, 4
      %v5315 = vadd.f32 %v5313, %v5314
      %v5316 = vrot.slane %v5315, 2
      %v5317 = vadd.f32 %v5315, %v5316
      %v5318 = vrot.slane %v5317, 1
      %v5319 = vadd.f32 %v5317, %v5318
      %v5320 = vsel %vm3681, %v3659, 0.0
      %v5321 = vrot.slane %v5320, 4
      %v5322 = vadd.f32 %v5320, %v5321
      %v5323 = vrot.slane %v5322, 2
      %v5324 = vadd.f32 %v5322, %v5323
      %v5325 = vrot.slane %v5324, 1
      %v5326 = vadd.f32 %v5324, %v5325
      %v5327 = vsel %vm3681, %v3660, 0.0
      %v5328 = vrot.slane %v5327, 4
      %v5329 = vadd.f32 %v5327, %v5328
      %v5330 = vrot.slane %v5329, 2
      %v5331 = vadd.f32 %v5329, %v5330
      %v5332 = vrot.slane %v5331, 1
      %v5333 = vadd.f32 %v5331, %v5332
      %v5334 = vsel %vm3681, %v3661, 0.0
      %v5335 = vrot.slane %v5334, 4
      %v5336 = vadd.f32 %v5334, %v5335
      %v5337 = vrot.slane %v5336, 2
      %v5338 = vadd.f32 %v5336, %v5337
      %v5339 = vrot.slane %v5338, 1
      %v5340 = vadd.f32 %v5338, %v5339
      %v5341 = vsel %vm3681, %v3662, 0.0
      %v5342 = vrot.slane %v5341, 4
      %v5343 = vadd.f32 %v5341, %v5342
      %v5344 = vrot.slane %v5343, 2
      %v5345 = vadd.f32 %v5343, %v5344
      %v5346 = vrot.slane %v5345, 1
      %v5347 = vadd.f32 %v5345, %v5346
      %v5348 = vsel %vm3681, %v3663, 0.0
      %v5349 = vrot.slane %v5348, 4
      %v5350 = vadd.f32 %v5348, %v5349
      %v5351 = vrot.slane %v5350, 2
      %v5352 = vadd.f32 %v5350, %v5351
      %v5353 = vrot.slane %v5352, 1
      %v5354 = vadd.f32 %v5352, %v5353
      %v5355 = vsel %vm3681, %v3664, 0.0
      %v5356 = vrot.slane %v5355, 4
      %v5357 = vadd.f32 %v5355, %v5356
      %v5358 = vrot.slane %v5357, 2
      %v5359 = vadd.f32 %v5357, %v5358
      %v5360 = vrot.slane %v5359, 1
      %v5361 = vadd.f32 %v5359, %v5360
      %v5362 = vsel %vm3681, %v3665, 0.0
      %v5363 = vrot.slane %v5362, 4
      %v5364 = vadd.f32 %v5362, %v5363
      %v5365 = vrot.slane %v5364, 2
      %v5366 = vadd.f32 %v5364, %v5365
      %v5367 = vrot.slane %v5366, 1
      %v5368 = vadd.f32 %v5366, %v5367
      %v5369 = vsel %vm3681, %v3666, 0.0
      %v5370 = vrot.slane %v5369, 4
      %v5371 = vadd.f32 %v5369, %v5370
      %v5372 = vrot.slane %v5371, 2
      %v5373 = vadd.f32 %v5371, %v5372
      %v5374 = vrot.slane %v5373, 1
      %v5375 = vadd.f32 %v5373, %v5374
      %v5376 = vsel %vm3681, %v3667, 0.0
      %v5377 = vrot.slane %v5376, 4
      %v5378 = vadd.f32 %v5376, %v5377
      %v5379 = vrot.slane %v5378, 2
      %v5380 = vadd.f32 %v5378, %v5379
      %v5381 = vrot.slane %v5380, 1
      %v5382 = vadd.f32 %v5380, %v5381
      %v5383 = vsel %vm3681, %v3668, 0.0
      %v5384 = vrot.slane %v5383, 4
      %v5385 = vadd.f32 %v5383, %v5384
      %v5386 = vrot.slane %v5385, 2
      %v5387 = vadd.f32 %v5385, %v5386
      %v5388 = vrot.slane %v5387, 1
      %v5389 = vadd.f32 %v5387, %v5388
      %v5390 = vsel %vm3681, %v3669, 0.0
      %v5391 = vrot.slane %v5390, 4
      %v5392 = vadd.f32 %v5390, %v5391
      %v5393 = vrot.slane %v5392, 2
      %v5394 = vadd.f32 %v5392, %v5393
      %v5395 = vrot.slane %v5394, 1
      %v5396 = vadd.f32 %v5394, %v5395
      %v5397 = vsel %vm3681, %v3670, 0.0
      %v5398 = vrot.slane %v5397, 4
      %v5399 = vadd.f32 %v5397, %v5398
      %v5400 = vrot.slane %v5399, 2
      %v5401 = vadd.f32 %v5399, %v5400
      %v5402 = vrot.slane %v5401, 1
      %v5403 = vadd.f32 %v5401, %v5402
      %v5404 = vsel %vm3681, %v3671, 0.0
      %v5405 = vrot.slane %v5404, 4
      %v5406 = vadd.f32 %v5404, %v5405
      %v5407 = vrot.slane %v5406, 2
      %v5408 = vadd.f32 %v5406, %v5407
      %v5409 = vrot.slane %v5408, 1
      %v5410 = vadd.f32 %v5408, %v5409
      %v5411 = vsel %vm3681, %v3672, 0.0
      %v5412 = vrot.slane %v5411, 4
      %v5413 = vadd.f32 %v5411, %v5412
      %v5414 = vrot.slane %v5413, 2
      %v5415 = vadd.f32 %v5413, %v5414
      %v5416 = vrot.slane %v5415, 1
      %v5417 = vadd.f32 %v5415, %v5416
      %v5418 = vsel %vm3681, %v3673, 0.0
      %v5419 = vrot.slane %v5418, 4
      %v5420 = vadd.f32 %v5418, %v5419
      %v5421 = vrot.slane %v5420, 2
      %v5422 = vadd.f32 %v5420, %v5421
      %v5423 = vrot.slane %v5422, 1
      %v5424 = vadd.f32 %v5422, %v5423
      %v5425 = vsel %vm3681, %v3674, 0.0
      %v5426 = vrot.slane %v5425, 4
      %v5427 = vadd.f32 %v5425, %v5426
      %v5428 = vrot.slane %v5427, 2
      %v5429 = vadd.f32 %v5427, %v5428
      %v5430 = vrot.slane %v5429, 1
      %v5431 = vadd.f32 %v5429, %v5430
      %v5432 = vsel %vm3681, %v3675, 0.0
      %v5433 = vrot.slane %v5432, 4
      %v5434 = vadd.f32 %v5432, %v5433
      %v5435 = vrot.slane %v5434, 2
      %v5436 = vadd.f32 %v5434, %v5435
      %v5437 = vrot.slane %v5436, 1
      %v5438 = vadd.f32 %v5436, %v5437
      %v5439 = vsel %vm3681, %v3676, 0.0
      %v5440 = vrot.slane %v5439, 4
      %v5441 = vadd.f32 %v5439, %v5440
      %v5442 = vrot.slane %v5441, 2
      %v5443 = vadd.f32 %v5441, %v5442
      %v5444 = vrot.slane %v5443, 1
      %v5445 = vadd.f32 %v5443, %v5444
      %v5446 = vsel %vm3681, %v3677, 0.0
      %v5447 = vrot.slane %v5446, 4
      %v5448 = vadd.f32 %v5446, %v5447
      %v5449 = vrot.slane %v5448, 2
      %v5450 = vadd.f32 %v5448, %v5449
      %v5451 = vrot.slane %v5450, 1
      %v5452 = vadd.f32 %v5450, %v5451
      %v5453 = vsel %vm3681, %v3678, 0.0
      %v5454 = vrot.slane %v5453, 4
      %v5455 = vadd.f32 %v5453, %v5454
      %v5456 = vrot.slane %v5455, 2
      %v5457 = vadd.f32 %v5455, %v5456
      %v5458 = vrot.slane %v5457, 1
      %v5459 = vadd.f32 %v5457, %v5458
      %v5460 = vsel %vm3681, %v3679, 0.0
      %v5461 = vrot.slane %v5460, 4
      %v5462 = vadd.f32 %v5460, %v5461
      %v5463 = vrot.slane %v5462, 2
      %v5464 = vadd.f32 %v5462, %v5463
      %v5465 = vrot.slane %v5464, 1
      %v5466 = vadd.f32 %v5464, %v5465
      %v5467 = vsel %vm3681, %v3680, 0.0
      %v5468 = vrot.slane %v5467, 4
      %v5469 = vadd.f32 %v5467, %v5468
      %v5470 = vrot.slane %v5469, 2
      %v5471 = vadd.f32 %v5469, %v5470
      %v5472 = vrot.slane %v5471, 1
      %v5473 = vadd.f32 %v5471, %v5472
      %v5475 = vlaneseq
      %v5476 = vshrl.u32 %v5475, 7
      %v5477 = vsub.s32 0, %v5476
      %v5478 = vrot.slane %v1631, %v5477
      %v5480 = vadd.f32 %v3688, %v5478
      %v5481 = vadd.f32 %v3695, %v5478
      %v5482 = vadd.f32 %v3702, %v5478
      %v5483 = vadd.f32 %v3709, %v5478
      %v5484 = vadd.f32 %v3716, %v5478
      %v5485 = vadd.f32 %v3723, %v5478
      %v5486 = vadd.f32 %v3730, %v5478
      %v5487 = vadd.f32 %v3737, %v5478
      %v5488 = vadd.f32 %v3744, %v5478
      %v5489 = vadd.f32 %v3751, %v5478
      %v5490 = vadd.f32 %v3758, %v5478
      %v5491 = vadd.f32 %v3765, %v5478
      %v5492 = vadd.f32 %v3772, %v5478
      %v5493 = vadd.f32 %v3779, %v5478
      %v5494 = vadd.f32 %v3786, %v5478
      %v5495 = vadd.f32 %v3793, %v5478
      %v5496 = vadd.f32 %v3800, %v5478
      %v5497 = vadd.f32 %v3807, %v5478
      %v5498 = vadd.f32 %v3814, %v5478
      %v5499 = vadd.f32 %v3821, %v5478
      %v5500 = vadd.f32 %v3828, %v5478
      %v5501 = vadd.f32 %v3835, %v5478
      %v5502 = vadd.f32 %v3842, %v5478
      %v5503 = vadd.f32 %v3849, %v5478
      %v5504 = vadd.f32 %v3856, %v5478
      %v5505 = vadd.f32 %v3863, %v5478
      %v5506 = vadd.f32 %v3870, %v5478
      %v5507 = vadd.f32 %v3877, %v5478
      %v5508 = vadd.f32 %v3884, %v5478
      %v5509 = vadd.f32 %v3891, %v5478
      %v5510 = vadd.f32 %v3898, %v5478
      %v5511 = vadd.f32 %v3905, %v5478
      %v5512 = vadd.f32 %v3912, %v5478
      %v5513 = vadd.f32 %v3919, %v5478
      %v5514 = vadd.f32 %v3926, %v5478
      %v5515 = vadd.f32 %v3933, %v5478
      %v5516 = vadd.f32 %v3940, %v5478
      %v5517 = vadd.f32 %v3947, %v5478
      %v5518 = vadd.f32 %v3954, %v5478
      %v5519 = vadd.f32 %v3961, %v5478
      %v5520 = vadd.f32 %v3968, %v5478
      %v5521 = vadd.f32 %v3975, %v5478
      %v5522 = vadd.f32 %v3982, %v5478
      %v5523 = vadd.f32 %v3989, %v5478
      %v5524 = vadd.f32 %v3996, %v5478
      %v5525 = vadd.f32 %v4003, %v5478
      %v5526 = vadd.f32 %v4010, %v5478
      %v5527 = vadd.f32 %v4017, %v5478
      %v5528 = vadd.f32 %v4024, %v5478
      %v5529 = vadd.f32 %v4031, %v5478
      %v5530 = vadd.f32 %v4038, %v5478
      %v5531 = vadd.f32 %v4045, %v5478
      %v5532 = vadd.f32 %v4052, %v5478
      %v5533 = vadd.f32 %v4059, %v5478
      %v5534 = vadd.f32 %v4066, %v5478
      %v5535 = vadd.f32 %v4073, %v5478
      %v5536 = vadd.f32 %v4080, %v5478
      %v5537 = vadd.f32 %v4087, %v5478
      %v5538 = vadd.f32 %v4094, %v5478
      %v5539 = vadd.f32 %v4101, %v5478
      %v5540 = vadd.f32 %v4108, %v5478
      %v5541 = vadd.f32 %v4115, %v5478
      %v5542 = vadd.f32 %v4122, %v5478
      %v5543 = vadd.f32 %v4129, %v5478
      %v5544 = vadd.f32 %v4136, %v5478
      %v5545 = vadd.f32 %v4143, %v5478
      %v5546 = vadd.f32 %v4150, %v5478
      %v5547 = vadd.f32 %v4157, %v5478
      %v5548 = vadd.f32 %v4164, %v5478
      %v5549 = vadd.f32 %v4171, %v5478
      %v5550 = vadd.f32 %v4178, %v5478
      %v5551 = vadd.f32 %v4185, %v5478
      %v5552 = vadd.f32 %v4192, %v5478
      %v5553 = vadd.f32 %v4199, %v5478
      %v5554 = vadd.f32 %v4206, %v5478
      %v5555 = vadd.f32 %v4213, %v5478
      %v5556 = vadd.f32 %v4220, %v5478
      %v5557 = vadd.f32 %v4227, %v5478
      %v5558 = vadd.f32 %v4234, %v5478
      %v5559 = vadd.f32 %v4241, %v5478
      %v5560 = vadd.f32 %v4248, %v5478
      %v5561 = vadd.f32 %v4255, %v5478
      %v5562 = vadd.f32 %v4262, %v5478
      %v5563 = vadd.f32 %v4269, %v5478
      %v5564 = vadd.f32 %v4276, %v5478
      %v5565 = vadd.f32 %v4283, %v5478
      %v5566 = vadd.f32 %v4290, %v5478
      %v5567 = vadd.f32 %v4297, %v5478
      %v5568 = vadd.f32 %v4304, %v5478
      %v5569 = vadd.f32 %v4311, %v5478
      %v5570 = vadd.f32 %v4318, %v5478
      %v5571 = vadd.f32 %v4325, %v5478
      %v5572 = vadd.f32 %v4332, %v5478
      %v5573 = vadd.f32 %v4339, %v5478
      %v5574 = vadd.f32 %v4346, %v5478
      %v5575 = vadd.f32 %v4353, %v5478
      %v5576 = vadd.f32 %v4360, %v5478
      %v5577 = vadd.f32 %v4367, %v5478
      %v5578 = vadd.f32 %v4374, %v5478
      %v5579 = vadd.f32 %v4381, %v5478
      %v5580 = vadd.f32 %v4388, %v5478
      %v5581 = vadd.f32 %v4395, %v5478
      %v5582 = vadd.f32 %v4402, %v5478
      %v5583 = vadd.f32 %v4409, %v5478
      %v5584 = vadd.f32 %v4416, %v5478
      %v5585 = vadd.f32 %v4423, %v5478
      %v5586 = vadd.f32 %v4430, %v5478
      %v5587 = vadd.f32 %v4437, %v5478
      %v5588 = vadd.f32 %v4444, %v5478
      %v5589 = vadd.f32 %v4451, %v5478
      %v5590 = vadd.f32 %v4458, %v5478
      %v5591 = vadd.f32 %v4465, %v5478
      %v5592 = vadd.f32 %v4472, %v5478
      %v5593 = vadd.f32 %v4479, %v5478
      %v5594 = vadd.f32 %v4486, %v5478
      %v5595 = vadd.f32 %v4493, %v5478
      %v5596 = vadd.f32 %v4500, %v5478
      %v5597 = vadd.f32 %v4507, %v5478
      %v5598 = vadd.f32 %v4514, %v5478
      %v5599 = vadd.f32 %v4521, %v5478
      %v5600 = vadd.f32 %v4528, %v5478
      %v5601 = vadd.f32 %v4535, %v5478
      %v5602 = vadd.f32 %v4542, %v5478
      %v5603 = vadd.f32 %v4549, %v5478
      %v5604 = vadd.f32 %v4556, %v5478
      %v5605 = vadd.f32 %v4563, %v5478
      %v5606 = vadd.f32 %v4570, %v5478
      %v5607 = vadd.f32 %v4577, %v5478
      %v5608 = vadd.f32 %v4584, %v5478
      %v5609 = vadd.f32 %v4591, %v5478
      %v5610 = vadd.f32 %v4598, %v5478
      %v5611 = vadd.f32 %v4605, %v5478
      %v5612 = vadd.f32 %v4612, %v5478
      %v5613 = vadd.f32 %v4619, %v5478
      %v5614 = vadd.f32 %v4626, %v5478
      %v5615 = vadd.f32 %v4633, %v5478
      %v5616 = vadd.f32 %v4640, %v5478
      %v5617 = vadd.f32 %v4647, %v5478
      %v5618 = vadd.f32 %v4654, %v5478
      %v5619 = vadd.f32 %v4661, %v5478
      %v5620 = vadd.f32 %v4668, %v5478
      %v5621 = vadd.f32 %v4675, %v5478
      %v5622 = vadd.f32 %v4682, %v5478
      %v5623 = vadd.f32 %v4689, %v5478
      %v5624 = vadd.f32 %v4696, %v5478
      %v5625 = vadd.f32 %v4703, %v5478
      %v5626 = vadd.f32 %v4710, %v5478
      %v5627 = vadd.f32 %v4717, %v5478
      %v5628 = vadd.f32 %v4724, %v5478
      %v5629 = vadd.f32 %v4731, %v5478
      %v5630 = vadd.f32 %v4738, %v5478
      %v5631 = vadd.f32 %v4745, %v5478
      %v5632 = vadd.f32 %v4752, %v5478
      %v5633 = vadd.f32 %v4759, %v5478
      %v5634 = vadd.f32 %v4766, %v5478
      %v5635 = vadd.f32 %v4773, %v5478
      %v5636 = vadd.f32 %v4780, %v5478
      %v5637 = vadd.f32 %v4787, %v5478
      %v5638 = vadd.f32 %v4794, %v5478
      %v5639 = vadd.f32 %v4801, %v5478
      %v5640 = vadd.f32 %v4808, %v5478
      %v5641 = vadd.f32 %v4815, %v5478
      %v5642 = vadd.f32 %v4822, %v5478
      %v5643 = vadd.f32 %v4829, %v5478
      %v5644 = vadd.f32 %v4836, %v5478
      %v5645 = vadd.f32 %v4843, %v5478
      %v5646 = vadd.f32 %v4850, %v5478
      %v5647 = vadd.f32 %v4857, %v5478
      %v5648 = vadd.f32 %v4864, %v5478
      %v5649 = vadd.f32 %v4871, %v5478
      %v5650 = vadd.f32 %v4878, %v5478
      %v5651 = vadd.f32 %v4885, %v5478
      %v5652 = vadd.f32 %v4892, %v5478
      %v5653 = vadd.f32 %v4899, %v5478
      %v5654 = vadd.f32 %v4906, %v5478
      %v5655 = vadd.f32 %v4913, %v5478
      %v5656 = vadd.f32 %v4920, %v5478
      %v5657 = vadd.f32 %v4927, %v5478
      %v5658 = vadd.f32 %v4934, %v5478
      %v5659 = vadd.f32 %v4941, %v5478
      %v5660 = vadd.f32 %v4948, %v5478
      %v5661 = vadd.f32 %v4955, %v5478
      %v5662 = vadd.f32 %v4962, %v5478
      %v5663 = vadd.f32 %v4969, %v5478
      %v5664 = vadd.f32 %v4976, %v5478
      %v5665 = vadd.f32 %v4983, %v5478
      %v5666 = vadd.f32 %v4990, %v5478
      %v5667 = vadd.f32 %v4997, %v5478
      %v5668 = vadd.f32 %v5004, %v5478
      %v5669 = vadd.f32 %v5011, %v5478
      %v5670 = vadd.f32 %v5018, %v5478
      %v5671 = vadd.f32 %v5025, %v5478
      %v5672 = vadd.f32 %v5032, %v5478
      %v5673 = vadd.f32 %v5039, %v5478
      %v5674 = vadd.f32 %v5046, %v5478
      %v5675 = vadd.f32 %v5053, %v5478
      %v5676 = vadd.f32 %v5060, %v5478
      %v5677 = vadd.f32 %v5067, %v5478
      %v5678 = vadd.f32 %v5074, %v5478
      %v5679 = vadd.f32 %v5081, %v5478
      %v5680 = vadd.f32 %v5088, %v5478
      %v5681 = vadd.f32 %v5095, %v5478
      %v5682 = vadd.f32 %v5102, %v5478
      %v5683 = vadd.f32 %v5109, %v5478
      %v5684 = vadd.f32 %v5116, %v5478
      %v5685 = vadd.f32 %v5123, %v5478
      %v5686 = vadd.f32 %v5130, %v5478
      %v5687 = vadd.f32 %v5137, %v5478
      %v5688 = vadd.f32 %v5144, %v5478
      %v5689 = vadd.f32 %v5151, %v5478
      %v5690 = vadd.f32 %v5158, %v5478
      %v5691 = vadd.f32 %v5165, %v5478
      %v5692 = vadd.f32 %v5172, %v5478
      %v5693 = vadd.f32 %v5179, %v5478
      %v5694 = vadd.f32 %v5186, %v5478
      %v5695 = vadd.f32 %v5193, %v5478
      %v5696 = vadd.f32 %v5200, %v5478
      %v5697 = vadd.f32 %v5207, %v5478
      %v5698 = vadd.f32 %v5214, %v5478
      %v5699 = vadd.f32 %v5221, %v5478
      %v5700 = vadd.f32 %v5228, %v5478
      %v5701 = vadd.f32 %v5235, %v5478
      %v5702 = vadd.f32 %v5242, %v5478
      %v5703 = vadd.f32 %v5249, %v5478
      %v5704 = vadd.f32 %v5256, %v5478
      %v5705 = vadd.f32 %v5263, %v5478
      %v5706 = vadd.f32 %v5270, %v5478
      %v5707 = vadd.f32 %v5277, %v5478
      %v5708 = vadd.f32 %v5284, %v5478
      %v5709 = vadd.f32 %v5291, %v5478
      %v5710 = vadd.f32 %v5298, %v5478
      %v5711 = vadd.f32 %v5305, %v5478
      %v5712 = vadd.f32 %v5312, %v5478
      %v5713 = vadd.f32 %v5319, %v5478
      %v5714 = vadd.f32 %v5326, %v5478
      %v5715 = vadd.f32 %v5333, %v5478
      %v5716 = vadd.f32 %v5340, %v5478
      %v5717 = vadd.f32 %v5347, %v5478
      %v5718 = vadd.f32 %v5354, %v5478
      %v5719 = vadd.f32 %v5361, %v5478
      %v5720 = vadd.f32 %v5368, %v5478
      %v5721 = vadd.f32 %v5375, %v5478
      %v5722 = vadd.f32 %v5382, %v5478
      %v5723 = vadd.f32 %v5389, %v5478
      %v5724 = vadd.f32 %v5396, %v5478
      %v5725 = vadd.f32 %v5403, %v5478
      %v5726 = vadd.f32 %v5410, %v5478
      %v5727 = vadd.f32 %v5417, %v5478
      %v5728 = vadd.f32 %v5424, %v5478
      %v5729 = vadd.f32 %v5431, %v5478
      %v5730 = vadd.f32 %v5438, %v5478
      %v5731 = vadd.f32 %v5445, %v5478
      %v5732 = vadd.f32 %v5452, %v5478
      %v5733 = vadd.f32 %v5459, %v5478
      %v5734 = vadd.f32 %v5466, %v5478
      %v5735 = vadd.f32 %v5473, %v5478
      %v5736 = vmax.f32 %v5480, 0.0
      %v5737 = vmax.f32 %v5481, 0.0
      %v5738 = vmax.f32 %v5482, 0.0
      %v5739 = vmax.f32 %v5483, 0.0
      %v5740 = vmax.f32 %v5484, 0.0
      %v5741 = vmax.f32 %v5485, 0.0
      %v5742 = vmax.f32 %v5486, 0.0
      %v5743 = vmax.f32 %v5487, 0.0
      %v5744 = vmax.f32 %v5488, 0.0
      %v5745 = vmax.f32 %v5489, 0.0
      %v5746 = vmax.f32 %v5490, 0.0
      %v5747 = vmax.f32 %v5491, 0.0
      %v5748 = vmax.f32 %v5492, 0.0
      %v5749 = vmax.f32 %v5493, 0.0
      %v5750 = vmax.f32 %v5494, 0.0
      %v5751 = vmax.f32 %v5495, 0.0
      %v5752 = vmax.f32 %v5496, 0.0
      %v5753 = vmax.f32 %v5497, 0.0
      %v5754 = vmax.f32 %v5498, 0.0
      %v5755 = vmax.f32 %v5499, 0.0
      %v5756 = vmax.f32 %v5500, 0.0
      %v5757 = vmax.f32 %v5501, 0.0
      %v5758 = vmax.f32 %v5502, 0.0
      %v5759 = vmax.f32 %v5503, 0.0
      %v5760 = vmax.f32 %v5504, 0.0
      %v5761 = vmax.f32 %v5505, 0.0
      %v5762 = vmax.f32 %v5506, 0.0
      %v5763 = vmax.f32 %v5507, 0.0
      %v5764 = vmax.f32 %v5508, 0.0
      %v5765 = vmax.f32 %v5509, 0.0
      %v5766 = vmax.f32 %v5510, 0.0
      %v5767 = vmax.f32 %v5511, 0.0
      %v5768 = vmax.f32 %v5512, 0.0
      %v5769 = vmax.f32 %v5513, 0.0
      %v5770 = vmax.f32 %v5514, 0.0
      %v5771 = vmax.f32 %v5515, 0.0
      %v5772 = vmax.f32 %v5516, 0.0
      %v5773 = vmax.f32 %v5517, 0.0
      %v5774 = vmax.f32 %v5518, 0.0
      %v5775 = vmax.f32 %v5519, 0.0
      %v5776 = vmax.f32 %v5520, 0.0
      %v5777 = vmax.f32 %v5521, 0.0
      %v5778 = vmax.f32 %v5522, 0.0
      %v5779 = vmax.f32 %v5523, 0.0
      %v5780 = vmax.f32 %v5524, 0.0
      %v5781 = vmax.f32 %v5525, 0.0
      %v5782 = vmax.f32 %v5526, 0.0
      %v5783 = vmax.f32 %v5527, 0.0
      %v5784 = vmax.f32 %v5528, 0.0
      %v5785 = vmax.f32 %v5529, 0.0
      %v5786 = vmax.f32 %v5530, 0.0
      %v5787 = vmax.f32 %v5531, 0.0
      %v5788 = vmax.f32 %v5532, 0.0
      %v5789 = vmax.f32 %v5533, 0.0
      %v5790 = vmax.f32 %v5534, 0.0
      %v5791 = vmax.f32 %v5535, 0.0
      %v5792 = vmax.f32 %v5536, 0.0
      %v5793 = vmax.f32 %v5537, 0.0
      %v5794 = vmax.f32 %v5538, 0.0
      %v5795 = vmax.f32 %v5539, 0.0
      %v5796 = vmax.f32 %v5540, 0.0
      %v5797 = vmax.f32 %v5541, 0.0
      %v5798 = vmax.f32 %v5542, 0.0
      %v5799 = vmax.f32 %v5543, 0.0
      %v5800 = vmax.f32 %v5544, 0.0
      %v5801 = vmax.f32 %v5545, 0.0
      %v5802 = vmax.f32 %v5546, 0.0
      %v5803 = vmax.f32 %v5547, 0.0
      %v5804 = vmax.f32 %v5548, 0.0
      %v5805 = vmax.f32 %v5549, 0.0
      %v5806 = vmax.f32 %v5550, 0.0
      %v5807 = vmax.f32 %v5551, 0.0
      %v5808 = vmax.f32 %v5552, 0.0
      %v5809 = vmax.f32 %v5553, 0.0
      %v5810 = vmax.f32 %v5554, 0.0
      %v5811 = vmax.f32 %v5555, 0.0
      %v5812 = vmax.f32 %v5556, 0.0
      %v5813 = vmax.f32 %v5557, 0.0
      %v5814 = vmax.f32 %v5558, 0.0
      %v5815 = vmax.f32 %v5559, 0.0
      %v5816 = vmax.f32 %v5560, 0.0
      %v5817 = vmax.f32 %v5561, 0.0
      %v5818 = vmax.f32 %v5562, 0.0
      %v5819 = vmax.f32 %v5563, 0.0
      %v5820 = vmax.f32 %v5564, 0.0
      %v5821 = vmax.f32 %v5565, 0.0
      %v5822 = vmax.f32 %v5566, 0.0
      %v5823 = vmax.f32 %v5567, 0.0
      %v5824 = vmax.f32 %v5568, 0.0
      %v5825 = vmax.f32 %v5569, 0.0
      %v5826 = vmax.f32 %v5570, 0.0
      %v5827 = vmax.f32 %v5571, 0.0
      %v5828 = vmax.f32 %v5572, 0.0
      %v5829 = vmax.f32 %v5573, 0.0
      %v5830 = vmax.f32 %v5574, 0.0
      %v5831 = vmax.f32 %v5575, 0.0
      %v5832 = vmax.f32 %v5576, 0.0
      %v5833 = vmax.f32 %v5577, 0.0
      %v5834 = vmax.f32 %v5578, 0.0
      %v5835 = vmax.f32 %v5579, 0.0
      %v5836 = vmax.f32 %v5580, 0.0
      %v5837 = vmax.f32 %v5581, 0.0
      %v5838 = vmax.f32 %v5582, 0.0
      %v5839 = vmax.f32 %v5583, 0.0
      %v5840 = vmax.f32 %v5584, 0.0
      %v5841 = vmax.f32 %v5585, 0.0
      %v5842 = vmax.f32 %v5586, 0.0
      %v5843 = vmax.f32 %v5587, 0.0
      %v5844 = vmax.f32 %v5588, 0.0
      %v5845 = vmax.f32 %v5589, 0.0
      %v5846 = vmax.f32 %v5590, 0.0
      %v5847 = vmax.f32 %v5591, 0.0
      %v5848 = vmax.f32 %v5592, 0.0
      %v5849 = vmax.f32 %v5593, 0.0
      %v5850 = vmax.f32 %v5594, 0.0
      %v5851 = vmax.f32 %v5595, 0.0
      %v5852 = vmax.f32 %v5596, 0.0
      %v5853 = vmax.f32 %v5597, 0.0
      %v5854 = vmax.f32 %v5598, 0.0
      %v5855 = vmax.f32 %v5599, 0.0
      %v5856 = vmax.f32 %v5600, 0.0
      %v5857 = vmax.f32 %v5601, 0.0
      %v5858 = vmax.f32 %v5602, 0.0
      %v5859 = vmax.f32 %v5603, 0.0
      %v5860 = vmax.f32 %v5604, 0.0
      %v5861 = vmax.f32 %v5605, 0.0
      %v5862 = vmax.f32 %v5606, 0.0
      %v5863 = vmax.f32 %v5607, 0.0
      %v5864 = vmax.f32 %v5608, 0.0
      %v5865 = vmax.f32 %v5609, 0.0
      %v5866 = vmax.f32 %v5610, 0.0
      %v5867 = vmax.f32 %v5611, 0.0
      %v5868 = vmax.f32 %v5612, 0.0
      %v5869 = vmax.f32 %v5613, 0.0
      %v5870 = vmax.f32 %v5614, 0.0
      %v5871 = vmax.f32 %v5615, 0.0
      %v5872 = vmax.f32 %v5616, 0.0
      %v5873 = vmax.f32 %v5617, 0.0
      %v5874 = vmax.f32 %v5618, 0.0
      %v5875 = vmax.f32 %v5619, 0.0
      %v5876 = vmax.f32 %v5620, 0.0
      %v5877 = vmax.f32 %v5621, 0.0
      %v5878 = vmax.f32 %v5622, 0.0
      %v5879 = vmax.f32 %v5623, 0.0
      %v5880 = vmax.f32 %v5624, 0.0
      %v5881 = vmax.f32 %v5625, 0.0
      %v5882 = vmax.f32 %v5626, 0.0
      %v5883 = vmax.f32 %v5627, 0.0
      %v5884 = vmax.f32 %v5628, 0.0
      %v5885 = vmax.f32 %v5629, 0.0
      %v5886 = vmax.f32 %v5630, 0.0
      %v5887 = vmax.f32 %v5631, 0.0
      %v5888 = vmax.f32 %v5632, 0.0
      %v5889 = vmax.f32 %v5633, 0.0
      %v5890 = vmax.f32 %v5634, 0.0
      %v5891 = vmax.f32 %v5635, 0.0
      %v5892 = vmax.f32 %v5636, 0.0
      %v5893 = vmax.f32 %v5637, 0.0
      %v5894 = vmax.f32 %v5638, 0.0
      %v5895 = vmax.f32 %v5639, 0.0
      %v5896 = vmax.f32 %v5640, 0.0
      %v5897 = vmax.f32 %v5641, 0.0
      %v5898 = vmax.f32 %v5642, 0.0
      %v5899 = vmax.f32 %v5643, 0.0
      %v5900 = vmax.f32 %v5644, 0.0
      %v5901 = vmax.f32 %v5645, 0.0
      %v5902 = vmax.f32 %v5646, 0.0
      %v5903 = vmax.f32 %v5647, 0.0
      %v5904 = vmax.f32 %v5648, 0.0
      %v5905 = vmax.f32 %v5649, 0.0
      %v5906 = vmax.f32 %v5650, 0.0
      %v5907 = vmax.f32 %v5651, 0.0
      %v5908 = vmax.f32 %v5652, 0.0
      %v5909 = vmax.f32 %v5653, 0.0
      %v5910 = vmax.f32 %v5654, 0.0
      %v5911 = vmax.f32 %v5655, 0.0
      %v5912 = vmax.f32 %v5656, 0.0
      %v5913 = vmax.f32 %v5657, 0.0
      %v5914 = vmax.f32 %v5658, 0.0
      %v5915 = vmax.f32 %v5659, 0.0
      %v5916 = vmax.f32 %v5660, 0.0
      %v5917 = vmax.f32 %v5661, 0.0
      %v5918 = vmax.f32 %v5662, 0.0
      %v5919 = vmax.f32 %v5663, 0.0
      %v5920 = vmax.f32 %v5664, 0.0
      %v5921 = vmax.f32 %v5665, 0.0
      %v5922 = vmax.f32 %v5666, 0.0
      %v5923 = vmax.f32 %v5667, 0.0
      %v5924 = vmax.f32 %v5668, 0.0
      %v5925 = vmax.f32 %v5669, 0.0
      %v5926 = vmax.f32 %v5670, 0.0
      %v5927 = vmax.f32 %v5671, 0.0
      %v5928 = vmax.f32 %v5672, 0.0
      %v5929 = vmax.f32 %v5673, 0.0
      %v5930 = vmax.f32 %v5674, 0.0
      %v5931 = vmax.f32 %v5675, 0.0
      %v5932 = vmax.f32 %v5676, 0.0
      %v5933 = vmax.f32 %v5677, 0.0
      %v5934 = vmax.f32 %v5678, 0.0
      %v5935 = vmax.f32 %v5679, 0.0
      %v5936 = vmax.f32 %v5680, 0.0
      %v5937 = vmax.f32 %v5681, 0.0
      %v5938 = vmax.f32 %v5682, 0.0
      %v5939 = vmax.f32 %v5683, 0.0
      %v5940 = vmax.f32 %v5684, 0.0
      %v5941 = vmax.f32 %v5685, 0.0
      %v5942 = vmax.f32 %v5686, 0.0
      %v5943 = vmax.f32 %v5687, 0.0
      %v5944 = vmax.f32 %v5688, 0.0
      %v5945 = vmax.f32 %v5689, 0.0
      %v5946 = vmax.f32 %v5690, 0.0
      %v5947 = vmax.f32 %v5691, 0.0
      %v5948 = vmax.f32 %v5692, 0.0
      %v5949 = vmax.f32 %v5693, 0.0
      %v5950 = vmax.f32 %v5694, 0.0
      %v5951 = vmax.f32 %v5695, 0.0
      %v5952 = vmax.f32 %v5696, 0.0
      %v5953 = vmax.f32 %v5697, 0.0
      %v5954 = vmax.f32 %v5698, 0.0
      %v5955 = vmax.f32 %v5699, 0.0
      %v5956 = vmax.f32 %v5700, 0.0
      %v5957 = vmax.f32 %v5701, 0.0
      %v5958 = vmax.f32 %v5702, 0.0
      %v5959 = vmax.f32 %v5703, 0.0
      %v5960 = vmax.f32 %v5704, 0.0
      %v5961 = vmax.f32 %v5705, 0.0
      %v5962 = vmax.f32 %v5706, 0.0
      %v5963 = vmax.f32 %v5707, 0.0
      %v5964 = vmax.f32 %v5708, 0.0
      %v5965 = vmax.f32 %v5709, 0.0
      %v5966 = vmax.f32 %v5710, 0.0
      %v5967 = vmax.f32 %v5711, 0.0
      %v5968 = vmax.f32 %v5712, 0.0
      %v5969 = vmax.f32 %v5713, 0.0
      %v5970 = vmax.f32 %v5714, 0.0
      %v5971 = vmax.f32 %v5715, 0.0
      %v5972 = vmax.f32 %v5716, 0.0
      %v5973 = vmax.f32 %v5717, 0.0
      %v5974 = vmax.f32 %v5718, 0.0
      %v5975 = vmax.f32 %v5719, 0.0
      %v5976 = vmax.f32 %v5720, 0.0
      %v5977 = vmax.f32 %v5721, 0.0
      %v5978 = vmax.f32 %v5722, 0.0
      %v5979 = vmax.f32 %v5723, 0.0
      %v5980 = vmax.f32 %v5724, 0.0
      %v5981 = vmax.f32 %v5725, 0.0
      %v5982 = vmax.f32 %v5726, 0.0
      %v5983 = vmax.f32 %v5727, 0.0
      %v5984 = vmax.f32 %v5728, 0.0
      %v5985 = vmax.f32 %v5729, 0.0
      %v5986 = vmax.f32 %v5730, 0.0
      %v5987 = vmax.f32 %v5731, 0.0
      %v5988 = vmax.f32 %v5732, 0.0
      %v5989 = vmax.f32 %v5733, 0.0
      %v5990 = vmax.f32 %v5734, 0.0
      %v5991 = vmax.f32 %v5735, 0.0
      %v5992 = vlaneseq
      %v5993 = vshrl.u32 %v5992, 7
      %v5994 = vsub.s32 0, %v5993
      %v5995 = vrot.slane %v5736, %v5994
      %5997 = vbcast.lane.b32.xlu0 %v5995, 256
      %v5998 = vpop.permute.xlu0 %5997
      %v5999 = vlaneseq
      %v6000 = vshrl.u32 %v5999, 7
      %v6001 = vsub.s32 0, %v6000
      %v6002 = vrot.slane %v5737, %v6001
      %6004 = vbcast.lane.b32.xlu0 %v6002, 256
      %v6005 = vpop.permute.xlu0 %6004
      %v6006 = vlaneseq
      %v6007 = vshrl.u32 %v6006, 7
      %v6008 = vsub.s32 0, %v6007
      %v6009 = vrot.slane %v5738, %v6008
      %6011 = vbcast.lane.b32.xlu0 %v6009, 256
      %v6012 = vpop.permute.xlu0 %6011
      %v6013 = vlaneseq
      %v6014 = vshrl.u32 %v6013, 7
      %v6015 = vsub.s32 0, %v6014
      %v6016 = vrot.slane %v5739, %v6015
      %6018 = vbcast.lane.b32.xlu0 %v6016, 256
      %v6019 = vpop.permute.xlu0 %6018
      %v6020 = vlaneseq
      %v6021 = vshrl.u32 %v6020, 7
      %v6022 = vsub.s32 0, %v6021
      %v6023 = vrot.slane %v5740, %v6022
      %6025 = vbcast.lane.b32.xlu0 %v6023, 256
      %v6026 = vpop.permute.xlu0 %6025
      %v6027 = vlaneseq
      %v6028 = vshrl.u32 %v6027, 7
      %v6029 = vsub.s32 0, %v6028
      %v6030 = vrot.slane %v5741, %v6029
      %6032 = vbcast.lane.b32.xlu0 %v6030, 256
      %v6033 = vpop.permute.xlu0 %6032
      %v6034 = vlaneseq
      %v6035 = vshrl.u32 %v6034, 7
      %v6036 = vsub.s32 0, %v6035
      %v6037 = vrot.slane %v5742, %v6036
      %6039 = vbcast.lane.b32.xlu0 %v6037, 256
      %v6040 = vpop.permute.xlu0 %6039
      %v6041 = vlaneseq
      %v6042 = vshrl.u32 %v6041, 7
      %v6043 = vsub.s32 0, %v6042
      %v6044 = vrot.slane %v5743, %v6043
      %6046 = vbcast.lane.b32.xlu0 %v6044, 256
      %v6047 = vpop.permute.xlu0 %6046
      %v6048 = vlaneseq
      %v6049 = vshrl.u32 %v6048, 7
      %v6050 = vsub.s32 0, %v6049
      %v6051 = vrot.slane %v5744, %v6050
      %6053 = vbcast.lane.b32.xlu0 %v6051, 256
      %v6054 = vpop.permute.xlu0 %6053
      %v6055 = vlaneseq
      %v6056 = vshrl.u32 %v6055, 7
      %v6057 = vsub.s32 0, %v6056
      %v6058 = vrot.slane %v5745, %v6057
      %6060 = vbcast.lane.b32.xlu0 %v6058, 256
      %v6061 = vpop.permute.xlu0 %6060
      %v6062 = vlaneseq
      %v6063 = vshrl.u32 %v6062, 7
      %v6064 = vsub.s32 0, %v6063
      %v6065 = vrot.slane %v5746, %v6064
      %6067 = vbcast.lane.b32.xlu0 %v6065, 256
      %v6068 = vpop.permute.xlu0 %6067
      %v6069 = vlaneseq
      %v6070 = vshrl.u32 %v6069, 7
      %v6071 = vsub.s32 0, %v6070
      %v6072 = vrot.slane %v5747, %v6071
      %6074 = vbcast.lane.b32.xlu0 %v6072, 256
      %v6075 = vpop.permute.xlu0 %6074
      %v6076 = vlaneseq
      %v6077 = vshrl.u32 %v6076, 7
      %v6078 = vsub.s32 0, %v6077
      %v6079 = vrot.slane %v5748, %v6078
      %6081 = vbcast.lane.b32.xlu0 %v6079, 256
      %v6082 = vpop.permute.xlu0 %6081
      %v6083 = vlaneseq
      %v6084 = vshrl.u32 %v6083, 7
      %v6085 = vsub.s32 0, %v6084
      %v6086 = vrot.slane %v5749, %v6085
      %6088 = vbcast.lane.b32.xlu0 %v6086, 256
      %v6089 = vpop.permute.xlu0 %6088
      %v6090 = vlaneseq
      %v6091 = vshrl.u32 %v6090, 7
      %v6092 = vsub.s32 0, %v6091
      %v6093 = vrot.slane %v5750, %v6092
      %6095 = vbcast.lane.b32.xlu0 %v6093, 256
      %v6096 = vpop.permute.xlu0 %6095
      %v6097 = vlaneseq
      %v6098 = vshrl.u32 %v6097, 7
      %v6099 = vsub.s32 0, %v6098
      %v6100 = vrot.slane %v5751, %v6099
      %6102 = vbcast.lane.b32.xlu0 %v6100, 256
      %v6103 = vpop.permute.xlu0 %6102
      %v6104 = vlaneseq
      %v6105 = vshrl.u32 %v6104, 7
      %v6106 = vsub.s32 0, %v6105
      %v6107 = vrot.slane %v5752, %v6106
      %6109 = vbcast.lane.b32.xlu0 %v6107, 256
      %v6110 = vpop.permute.xlu0 %6109
      %v6111 = vlaneseq
      %v6112 = vshrl.u32 %v6111, 7
      %v6113 = vsub.s32 0, %v6112
      %v6114 = vrot.slane %v5753, %v6113
      %6116 = vbcast.lane.b32.xlu0 %v6114, 256
      %v6117 = vpop.permute.xlu0 %6116
      %v6118 = vlaneseq
      %v6119 = vshrl.u32 %v6118, 7
      %v6120 = vsub.s32 0, %v6119
      %v6121 = vrot.slane %v5754, %v6120
      %6123 = vbcast.lane.b32.xlu0 %v6121, 256
      %v6124 = vpop.permute.xlu0 %6123
      %v6125 = vlaneseq
      %v6126 = vshrl.u32 %v6125, 7
      %v6127 = vsub.s32 0, %v6126
      %v6128 = vrot.slane %v5755, %v6127
      %6130 = vbcast.lane.b32.xlu0 %v6128, 256
      %v6131 = vpop.permute.xlu0 %6130
      %v6132 = vlaneseq
      %v6133 = vshrl.u32 %v6132, 7
      %v6134 = vsub.s32 0, %v6133
      %v6135 = vrot.slane %v5756, %v6134
      %6137 = vbcast.lane.b32.xlu0 %v6135, 256
      %v6138 = vpop.permute.xlu0 %6137
      %v6139 = vlaneseq
      %v6140 = vshrl.u32 %v6139, 7
      %v6141 = vsub.s32 0, %v6140
      %v6142 = vrot.slane %v5757, %v6141
      %6144 = vbcast.lane.b32.xlu0 %v6142, 256
      %v6145 = vpop.permute.xlu0 %6144
      %v6146 = vlaneseq
      %v6147 = vshrl.u32 %v6146, 7
      %v6148 = vsub.s32 0, %v6147
      %v6149 = vrot.slane %v5758, %v6148
      %6151 = vbcast.lane.b32.xlu0 %v6149, 256
      %v6152 = vpop.permute.xlu0 %6151
      %v6153 = vlaneseq
      %v6154 = vshrl.u32 %v6153, 7
      %v6155 = vsub.s32 0, %v6154
      %v6156 = vrot.slane %v5759, %v6155
      %6158 = vbcast.lane.b32.xlu0 %v6156, 256
      %v6159 = vpop.permute.xlu0 %6158
      %v6160 = vlaneseq
      %v6161 = vshrl.u32 %v6160, 7
      %v6162 = vsub.s32 0, %v6161
      %v6163 = vrot.slane %v5760, %v6162
      %6165 = vbcast.lane.b32.xlu0 %v6163, 256
      %v6166 = vpop.permute.xlu0 %6165
      %v6167 = vlaneseq
      %v6168 = vshrl.u32 %v6167, 7
      %v6169 = vsub.s32 0, %v6168
      %v6170 = vrot.slane %v5761, %v6169
      %6172 = vbcast.lane.b32.xlu0 %v6170, 256
      %v6173 = vpop.permute.xlu0 %6172
      %v6174 = vlaneseq
      %v6175 = vshrl.u32 %v6174, 7
      %v6176 = vsub.s32 0, %v6175
      %v6177 = vrot.slane %v5762, %v6176
      %6179 = vbcast.lane.b32.xlu0 %v6177, 256
      %v6180 = vpop.permute.xlu0 %6179
      %v6181 = vlaneseq
      %v6182 = vshrl.u32 %v6181, 7
      %v6183 = vsub.s32 0, %v6182
      %v6184 = vrot.slane %v5763, %v6183
      %6186 = vbcast.lane.b32.xlu0 %v6184, 256
      %v6187 = vpop.permute.xlu0 %6186
      %v6188 = vlaneseq
      %v6189 = vshrl.u32 %v6188, 7
      %v6190 = vsub.s32 0, %v6189
      %v6191 = vrot.slane %v5764, %v6190
      %6193 = vbcast.lane.b32.xlu0 %v6191, 256
      %v6194 = vpop.permute.xlu0 %6193
      %v6195 = vlaneseq
      %v6196 = vshrl.u32 %v6195, 7
      %v6197 = vsub.s32 0, %v6196
      %v6198 = vrot.slane %v5765, %v6197
      %6200 = vbcast.lane.b32.xlu0 %v6198, 256
      %v6201 = vpop.permute.xlu0 %6200
      %v6202 = vlaneseq
      %v6203 = vshrl.u32 %v6202, 7
      %v6204 = vsub.s32 0, %v6203
      %v6205 = vrot.slane %v5766, %v6204
      %6207 = vbcast.lane.b32.xlu0 %v6205, 256
      %v6208 = vpop.permute.xlu0 %6207
      %v6209 = vlaneseq
      %v6210 = vshrl.u32 %v6209, 7
      %v6211 = vsub.s32 0, %v6210
      %v6212 = vrot.slane %v5767, %v6211
      %6214 = vbcast.lane.b32.xlu0 %v6212, 256
      %v6215 = vpop.permute.xlu0 %6214
      %v6216 = vlaneseq
      %v6217 = vshrl.u32 %v6216, 7
      %v6218 = vsub.s32 0, %v6217
      %v6219 = vrot.slane %v5768, %v6218
      %6221 = vbcast.lane.b32.xlu0 %v6219, 256
      %v6222 = vpop.permute.xlu0 %6221
      %v6223 = vlaneseq
      %v6224 = vshrl.u32 %v6223, 7
      %v6225 = vsub.s32 0, %v6224
      %v6226 = vrot.slane %v5769, %v6225
      %6228 = vbcast.lane.b32.xlu0 %v6226, 256
      %v6229 = vpop.permute.xlu0 %6228
      %v6230 = vlaneseq
      %v6231 = vshrl.u32 %v6230, 7
      %v6232 = vsub.s32 0, %v6231
      %v6233 = vrot.slane %v5770, %v6232
      %6235 = vbcast.lane.b32.xlu0 %v6233, 256
      %v6236 = vpop.permute.xlu0 %6235
      %v6237 = vlaneseq
      %v6238 = vshrl.u32 %v6237, 7
      %v6239 = vsub.s32 0, %v6238
      %v6240 = vrot.slane %v5771, %v6239
      %6242 = vbcast.lane.b32.xlu0 %v6240, 256
      %v6243 = vpop.permute.xlu0 %6242
      %v6244 = vlaneseq
      %v6245 = vshrl.u32 %v6244, 7
      %v6246 = vsub.s32 0, %v6245
      %v6247 = vrot.slane %v5772, %v6246
      %6249 = vbcast.lane.b32.xlu0 %v6247, 256
      %v6250 = vpop.permute.xlu0 %6249
      %v6251 = vlaneseq
      %v6252 = vshrl.u32 %v6251, 7
      %v6253 = vsub.s32 0, %v6252
      %v6254 = vrot.slane %v5773, %v6253
      %6256 = vbcast.lane.b32.xlu0 %v6254, 256
      %v6257 = vpop.permute.xlu0 %6256
      %v6258 = vlaneseq
      %v6259 = vshrl.u32 %v6258, 7
      %v6260 = vsub.s32 0, %v6259
      %v6261 = vrot.slane %v5774, %v6260
      %6263 = vbcast.lane.b32.xlu0 %v6261, 256
      %v6264 = vpop.permute.xlu0 %6263
      %v6265 = vlaneseq
      %v6266 = vshrl.u32 %v6265, 7
      %v6267 = vsub.s32 0, %v6266
      %v6268 = vrot.slane %v5775, %v6267
      %6270 = vbcast.lane.b32.xlu0 %v6268, 256
      %v6271 = vpop.permute.xlu0 %6270
      %v6272 = vlaneseq
      %v6273 = vshrl.u32 %v6272, 7
      %v6274 = vsub.s32 0, %v6273
      %v6275 = vrot.slane %v5776, %v6274
      %6277 = vbcast.lane.b32.xlu0 %v6275, 256
      %v6278 = vpop.permute.xlu0 %6277
      %v6279 = vlaneseq
      %v6280 = vshrl.u32 %v6279, 7
      %v6281 = vsub.s32 0, %v6280
      %v6282 = vrot.slane %v5777, %v6281
      %6284 = vbcast.lane.b32.xlu0 %v6282, 256
      %v6285 = vpop.permute.xlu0 %6284
      %v6286 = vlaneseq
      %v6287 = vshrl.u32 %v6286, 7
      %v6288 = vsub.s32 0, %v6287
      %v6289 = vrot.slane %v5778, %v6288
      %6291 = vbcast.lane.b32.xlu0 %v6289, 256
      %v6292 = vpop.permute.xlu0 %6291
      %v6293 = vlaneseq
      %v6294 = vshrl.u32 %v6293, 7
      %v6295 = vsub.s32 0, %v6294
      %v6296 = vrot.slane %v5779, %v6295
      %6298 = vbcast.lane.b32.xlu0 %v6296, 256
      %v6299 = vpop.permute.xlu0 %6298
      %v6300 = vlaneseq
      %v6301 = vshrl.u32 %v6300, 7
      %v6302 = vsub.s32 0, %v6301
      %v6303 = vrot.slane %v5780, %v6302
      %6305 = vbcast.lane.b32.xlu0 %v6303, 256
      %v6306 = vpop.permute.xlu0 %6305
      %v6307 = vlaneseq
      %v6308 = vshrl.u32 %v6307, 7
      %v6309 = vsub.s32 0, %v6308
      %v6310 = vrot.slane %v5781, %v6309
      %6312 = vbcast.lane.b32.xlu0 %v6310, 256
      %v6313 = vpop.permute.xlu0 %6312
      %v6314 = vlaneseq
      %v6315 = vshrl.u32 %v6314, 7
      %v6316 = vsub.s32 0, %v6315
      %v6317 = vrot.slane %v5782, %v6316
      %6319 = vbcast.lane.b32.xlu0 %v6317, 256
      %v6320 = vpop.permute.xlu0 %6319
      %v6321 = vlaneseq
      %v6322 = vshrl.u32 %v6321, 7
      %v6323 = vsub.s32 0, %v6322
      %v6324 = vrot.slane %v5783, %v6323
      %6326 = vbcast.lane.b32.xlu0 %v6324, 256
      %v6327 = vpop.permute.xlu0 %6326
      %v6328 = vlaneseq
      %v6329 = vshrl.u32 %v6328, 7
      %v6330 = vsub.s32 0, %v6329
      %v6331 = vrot.slane %v5784, %v6330
      %6333 = vbcast.lane.b32.xlu0 %v6331, 256
      %v6334 = vpop.permute.xlu0 %6333
      %v6335 = vlaneseq
      %v6336 = vshrl.u32 %v6335, 7
      %v6337 = vsub.s32 0, %v6336
      %v6338 = vrot.slane %v5785, %v6337
      %6340 = vbcast.lane.b32.xlu0 %v6338, 256
      %v6341 = vpop.permute.xlu0 %6340
      %v6342 = vlaneseq
      %v6343 = vshrl.u32 %v6342, 7
      %v6344 = vsub.s32 0, %v6343
      %v6345 = vrot.slane %v5786, %v6344
      %6347 = vbcast.lane.b32.xlu0 %v6345, 256
      %v6348 = vpop.permute.xlu0 %6347
      %v6349 = vlaneseq
      %v6350 = vshrl.u32 %v6349, 7
      %v6351 = vsub.s32 0, %v6350
      %v6352 = vrot.slane %v5787, %v6351
      %6354 = vbcast.lane.b32.xlu0 %v6352, 256
      %v6355 = vpop.permute.xlu0 %6354
      %v6356 = vlaneseq
      %v6357 = vshrl.u32 %v6356, 7
      %v6358 = vsub.s32 0, %v6357
      %v6359 = vrot.slane %v5788, %v6358
      %6361 = vbcast.lane.b32.xlu0 %v6359, 256
      %v6362 = vpop.permute.xlu0 %6361
      %v6363 = vlaneseq
      %v6364 = vshrl.u32 %v6363, 7
      %v6365 = vsub.s32 0, %v6364
      %v6366 = vrot.slane %v5789, %v6365
      %6368 = vbcast.lane.b32.xlu0 %v6366, 256
      %v6369 = vpop.permute.xlu0 %6368
      %v6370 = vlaneseq
      %v6371 = vshrl.u32 %v6370, 7
      %v6372 = vsub.s32 0, %v6371
      %v6373 = vrot.slane %v5790, %v6372
      %6375 = vbcast.lane.b32.xlu0 %v6373, 256
      %v6376 = vpop.permute.xlu0 %6375
      %v6377 = vlaneseq
      %v6378 = vshrl.u32 %v6377, 7
      %v6379 = vsub.s32 0, %v6378
      %v6380 = vrot.slane %v5791, %v6379
      %6382 = vbcast.lane.b32.xlu0 %v6380, 256
      %v6383 = vpop.permute.xlu0 %6382
      %v6384 = vlaneseq
      %v6385 = vshrl.u32 %v6384, 7
      %v6386 = vsub.s32 0, %v6385
      %v6387 = vrot.slane %v5792, %v6386
      %6389 = vbcast.lane.b32.xlu0 %v6387, 256
      %v6390 = vpop.permute.xlu0 %6389
      %v6391 = vlaneseq
      %v6392 = vshrl.u32 %v6391, 7
      %v6393 = vsub.s32 0, %v6392
      %v6394 = vrot.slane %v5793, %v6393
      %6396 = vbcast.lane.b32.xlu0 %v6394, 256
      %v6397 = vpop.permute.xlu0 %6396
      %v6398 = vlaneseq
      %v6399 = vshrl.u32 %v6398, 7
      %v6400 = vsub.s32 0, %v6399
      %v6401 = vrot.slane %v5794, %v6400
      %6403 = vbcast.lane.b32.xlu0 %v6401, 256
      %v6404 = vpop.permute.xlu0 %6403
      %v6405 = vlaneseq
      %v6406 = vshrl.u32 %v6405, 7
      %v6407 = vsub.s32 0, %v6406
      %v6408 = vrot.slane %v5795, %v6407
      %6410 = vbcast.lane.b32.xlu0 %v6408, 256
      %v6411 = vpop.permute.xlu0 %6410
      %v6412 = vlaneseq
      %v6413 = vshrl.u32 %v6412, 7
      %v6414 = vsub.s32 0, %v6413
      %v6415 = vrot.slane %v5796, %v6414
      %6417 = vbcast.lane.b32.xlu0 %v6415, 256
      %v6418 = vpop.permute.xlu0 %6417
      %v6419 = vlaneseq
      %v6420 = vshrl.u32 %v6419, 7
      %v6421 = vsub.s32 0, %v6420
      %v6422 = vrot.slane %v5797, %v6421
      %6424 = vbcast.lane.b32.xlu0 %v6422, 256
      %v6425 = vpop.permute.xlu0 %6424
      %v6426 = vlaneseq
      %v6427 = vshrl.u32 %v6426, 7
      %v6428 = vsub.s32 0, %v6427
      %v6429 = vrot.slane %v5798, %v6428
      %6431 = vbcast.lane.b32.xlu0 %v6429, 256
      %v6432 = vpop.permute.xlu0 %6431
      %v6433 = vlaneseq
      %v6434 = vshrl.u32 %v6433, 7
      %v6435 = vsub.s32 0, %v6434
      %v6436 = vrot.slane %v5799, %v6435
      %6438 = vbcast.lane.b32.xlu0 %v6436, 256
      %v6439 = vpop.permute.xlu0 %6438
      %v6440 = vlaneseq
      %v6441 = vshrl.u32 %v6440, 7
      %v6442 = vsub.s32 0, %v6441
      %v6443 = vrot.slane %v5800, %v6442
      %6445 = vbcast.lane.b32.xlu0 %v6443, 256
      %v6446 = vpop.permute.xlu0 %6445
      %v6447 = vlaneseq
      %v6448 = vshrl.u32 %v6447, 7
      %v6449 = vsub.s32 0, %v6448
      %v6450 = vrot.slane %v5801, %v6449
      %6452 = vbcast.lane.b32.xlu0 %v6450, 256
      %v6453 = vpop.permute.xlu0 %6452
      %v6454 = vlaneseq
      %v6455 = vshrl.u32 %v6454, 7
      %v6456 = vsub.s32 0, %v6455
      %v6457 = vrot.slane %v5802, %v6456
      %6459 = vbcast.lane.b32.xlu0 %v6457, 256
      %v6460 = vpop.permute.xlu0 %6459
      %v6461 = vlaneseq
      %v6462 = vshrl.u32 %v6461, 7
      %v6463 = vsub.s32 0, %v6462
      %v6464 = vrot.slane %v5803, %v6463
      %6466 = vbcast.lane.b32.xlu0 %v6464, 256
      %v6467 = vpop.permute.xlu0 %6466
      %v6468 = vlaneseq
      %v6469 = vshrl.u32 %v6468, 7
      %v6470 = vsub.s32 0, %v6469
      %v6471 = vrot.slane %v5804, %v6470
      %6473 = vbcast.lane.b32.xlu0 %v6471, 256
      %v6474 = vpop.permute.xlu0 %6473
      %v6475 = vlaneseq
      %v6476 = vshrl.u32 %v6475, 7
      %v6477 = vsub.s32 0, %v6476
      %v6478 = vrot.slane %v5805, %v6477
      %6480 = vbcast.lane.b32.xlu0 %v6478, 256
      %v6481 = vpop.permute.xlu0 %6480
      %v6482 = vlaneseq
      %v6483 = vshrl.u32 %v6482, 7
      %v6484 = vsub.s32 0, %v6483
      %v6485 = vrot.slane %v5806, %v6484
      %6487 = vbcast.lane.b32.xlu0 %v6485, 256
      %v6488 = vpop.permute.xlu0 %6487
      %v6489 = vlaneseq
      %v6490 = vshrl.u32 %v6489, 7
      %v6491 = vsub.s32 0, %v6490
      %v6492 = vrot.slane %v5807, %v6491
      %6494 = vbcast.lane.b32.xlu0 %v6492, 256
      %v6495 = vpop.permute.xlu0 %6494
      %v6496 = vlaneseq
      %v6497 = vshrl.u32 %v6496, 7
      %v6498 = vsub.s32 0, %v6497
      %v6499 = vrot.slane %v5808, %v6498
      %6501 = vbcast.lane.b32.xlu0 %v6499, 256
      %v6502 = vpop.permute.xlu0 %6501
      %v6503 = vlaneseq
      %v6504 = vshrl.u32 %v6503, 7
      %v6505 = vsub.s32 0, %v6504
      %v6506 = vrot.slane %v5809, %v6505
      %6508 = vbcast.lane.b32.xlu0 %v6506, 256
      %v6509 = vpop.permute.xlu0 %6508
      %v6510 = vlaneseq
      %v6511 = vshrl.u32 %v6510, 7
      %v6512 = vsub.s32 0, %v6511
      %v6513 = vrot.slane %v5810, %v6512
      %6515 = vbcast.lane.b32.xlu0 %v6513, 256
      %v6516 = vpop.permute.xlu0 %6515
      %v6517 = vlaneseq
      %v6518 = vshrl.u32 %v6517, 7
      %v6519 = vsub.s32 0, %v6518
      %v6520 = vrot.slane %v5811, %v6519
      %6522 = vbcast.lane.b32.xlu0 %v6520, 256
      %v6523 = vpop.permute.xlu0 %6522
      %v6524 = vlaneseq
      %v6525 = vshrl.u32 %v6524, 7
      %v6526 = vsub.s32 0, %v6525
      %v6527 = vrot.slane %v5812, %v6526
      %6529 = vbcast.lane.b32.xlu0 %v6527, 256
      %v6530 = vpop.permute.xlu0 %6529
      %v6531 = vlaneseq
      %v6532 = vshrl.u32 %v6531, 7
      %v6533 = vsub.s32 0, %v6532
      %v6534 = vrot.slane %v5813, %v6533
      %6536 = vbcast.lane.b32.xlu0 %v6534, 256
      %v6537 = vpop.permute.xlu0 %6536
      %v6538 = vlaneseq
      %v6539 = vshrl.u32 %v6538, 7
      %v6540 = vsub.s32 0, %v6539
      %v6541 = vrot.slane %v5814, %v6540
      %6543 = vbcast.lane.b32.xlu0 %v6541, 256
      %v6544 = vpop.permute.xlu0 %6543
      %v6545 = vlaneseq
      %v6546 = vshrl.u32 %v6545, 7
      %v6547 = vsub.s32 0, %v6546
      %v6548 = vrot.slane %v5815, %v6547
      %6550 = vbcast.lane.b32.xlu0 %v6548, 256
      %v6551 = vpop.permute.xlu0 %6550
      %v6552 = vlaneseq
      %v6553 = vshrl.u32 %v6552, 7
      %v6554 = vsub.s32 0, %v6553
      %v6555 = vrot.slane %v5816, %v6554
      %6557 = vbcast.lane.b32.xlu0 %v6555, 256
      %v6558 = vpop.permute.xlu0 %6557
      %v6559 = vlaneseq
      %v6560 = vshrl.u32 %v6559, 7
      %v6561 = vsub.s32 0, %v6560
      %v6562 = vrot.slane %v5817, %v6561
      %6564 = vbcast.lane.b32.xlu0 %v6562, 256
      %v6565 = vpop.permute.xlu0 %6564
      %v6566 = vlaneseq
      %v6567 = vshrl.u32 %v6566, 7
      %v6568 = vsub.s32 0, %v6567
      %v6569 = vrot.slane %v5818, %v6568
      %6571 = vbcast.lane.b32.xlu0 %v6569, 256
      %v6572 = vpop.permute.xlu0 %6571
      %v6573 = vlaneseq
      %v6574 = vshrl.u32 %v6573, 7
      %v6575 = vsub.s32 0, %v6574
      %v6576 = vrot.slane %v5819, %v6575
      %6578 = vbcast.lane.b32.xlu0 %v6576, 256
      %v6579 = vpop.permute.xlu0 %6578
      %v6580 = vlaneseq
      %v6581 = vshrl.u32 %v6580, 7
      %v6582 = vsub.s32 0, %v6581
      %v6583 = vrot.slane %v5820, %v6582
      %6585 = vbcast.lane.b32.xlu0 %v6583, 256
      %v6586 = vpop.permute.xlu0 %6585
      %v6587 = vlaneseq
      %v6588 = vshrl.u32 %v6587, 7
      %v6589 = vsub.s32 0, %v6588
      %v6590 = vrot.slane %v5821, %v6589
      %6592 = vbcast.lane.b32.xlu0 %v6590, 256
      %v6593 = vpop.permute.xlu0 %6592
      %v6594 = vlaneseq
      %v6595 = vshrl.u32 %v6594, 7
      %v6596 = vsub.s32 0, %v6595
      %v6597 = vrot.slane %v5822, %v6596
      %6599 = vbcast.lane.b32.xlu0 %v6597, 256
      %v6600 = vpop.permute.xlu0 %6599
      %v6601 = vlaneseq
      %v6602 = vshrl.u32 %v6601, 7
      %v6603 = vsub.s32 0, %v6602
      %v6604 = vrot.slane %v5823, %v6603
      %6606 = vbcast.lane.b32.xlu0 %v6604, 256
      %v6607 = vpop.permute.xlu0 %6606
      %v6608 = vlaneseq
      %v6609 = vshrl.u32 %v6608, 7
      %v6610 = vsub.s32 0, %v6609
      %v6611 = vrot.slane %v5824, %v6610
      %6613 = vbcast.lane.b32.xlu0 %v6611, 256
      %v6614 = vpop.permute.xlu0 %6613
      %v6615 = vlaneseq
      %v6616 = vshrl.u32 %v6615, 7
      %v6617 = vsub.s32 0, %v6616
      %v6618 = vrot.slane %v5825, %v6617
      %6620 = vbcast.lane.b32.xlu0 %v6618, 256
      %v6621 = vpop.permute.xlu0 %6620
      %v6622 = vlaneseq
      %v6623 = vshrl.u32 %v6622, 7
      %v6624 = vsub.s32 0, %v6623
      %v6625 = vrot.slane %v5826, %v6624
      %6627 = vbcast.lane.b32.xlu0 %v6625, 256
      %v6628 = vpop.permute.xlu0 %6627
      %v6629 = vlaneseq
      %v6630 = vshrl.u32 %v6629, 7
      %v6631 = vsub.s32 0, %v6630
      %v6632 = vrot.slane %v5827, %v6631
      %6634 = vbcast.lane.b32.xlu0 %v6632, 256
      %v6635 = vpop.permute.xlu0 %6634
      %v6636 = vlaneseq
      %v6637 = vshrl.u32 %v6636, 7
      %v6638 = vsub.s32 0, %v6637
      %v6639 = vrot.slane %v5828, %v6638
      %6641 = vbcast.lane.b32.xlu0 %v6639, 256
      %v6642 = vpop.permute.xlu0 %6641
      %v6643 = vlaneseq
      %v6644 = vshrl.u32 %v6643, 7
      %v6645 = vsub.s32 0, %v6644
      %v6646 = vrot.slane %v5829, %v6645
      %6648 = vbcast.lane.b32.xlu0 %v6646, 256
      %v6649 = vpop.permute.xlu0 %6648
      %v6650 = vlaneseq
      %v6651 = vshrl.u32 %v6650, 7
      %v6652 = vsub.s32 0, %v6651
      %v6653 = vrot.slane %v5830, %v6652
      %6655 = vbcast.lane.b32.xlu0 %v6653, 256
      %v6656 = vpop.permute.xlu0 %6655
      %v6657 = vlaneseq
      %v6658 = vshrl.u32 %v6657, 7
      %v6659 = vsub.s32 0, %v6658
      %v6660 = vrot.slane %v5831, %v6659
      %6662 = vbcast.lane.b32.xlu0 %v6660, 256
      %v6663 = vpop.permute.xlu0 %6662
      %v6664 = vlaneseq
      %v6665 = vshrl.u32 %v6664, 7
      %v6666 = vsub.s32 0, %v6665
      %v6667 = vrot.slane %v5832, %v6666
      %6669 = vbcast.lane.b32.xlu0 %v6667, 256
      %v6670 = vpop.permute.xlu0 %6669
      %v6671 = vlaneseq
      %v6672 = vshrl.u32 %v6671, 7
      %v6673 = vsub.s32 0, %v6672
      %v6674 = vrot.slane %v5833, %v6673
      %6676 = vbcast.lane.b32.xlu0 %v6674, 256
      %v6677 = vpop.permute.xlu0 %6676
      %v6678 = vlaneseq
      %v6679 = vshrl.u32 %v6678, 7
      %v6680 = vsub.s32 0, %v6679
      %v6681 = vrot.slane %v5834, %v6680
      %6683 = vbcast.lane.b32.xlu0 %v6681, 256
      %v6684 = vpop.permute.xlu0 %6683
      %v6685 = vlaneseq
      %v6686 = vshrl.u32 %v6685, 7
      %v6687 = vsub.s32 0, %v6686
      %v6688 = vrot.slane %v5835, %v6687
      %6690 = vbcast.lane.b32.xlu0 %v6688, 256
      %v6691 = vpop.permute.xlu0 %6690
      %v6692 = vlaneseq
      %v6693 = vshrl.u32 %v6692, 7
      %v6694 = vsub.s32 0, %v6693
      %v6695 = vrot.slane %v5836, %v6694
      %6697 = vbcast.lane.b32.xlu0 %v6695, 256
      %v6698 = vpop.permute.xlu0 %6697
      %v6699 = vlaneseq
      %v6700 = vshrl.u32 %v6699, 7
      %v6701 = vsub.s32 0, %v6700
      %v6702 = vrot.slane %v5837, %v6701
      %6704 = vbcast.lane.b32.xlu0 %v6702, 256
      %v6705 = vpop.permute.xlu0 %6704
      %v6706 = vlaneseq
      %v6707 = vshrl.u32 %v6706, 7
      %v6708 = vsub.s32 0, %v6707
      %v6709 = vrot.slane %v5838, %v6708
      %6711 = vbcast.lane.b32.xlu0 %v6709, 256
      %v6712 = vpop.permute.xlu0 %6711
      %v6713 = vlaneseq
      %v6714 = vshrl.u32 %v6713, 7
      %v6715 = vsub.s32 0, %v6714
      %v6716 = vrot.slane %v5839, %v6715
      %6718 = vbcast.lane.b32.xlu0 %v6716, 256
      %v6719 = vpop.permute.xlu0 %6718
      %v6720 = vlaneseq
      %v6721 = vshrl.u32 %v6720, 7
      %v6722 = vsub.s32 0, %v6721
      %v6723 = vrot.slane %v5840, %v6722
      %6725 = vbcast.lane.b32.xlu0 %v6723, 256
      %v6726 = vpop.permute.xlu0 %6725
      %v6727 = vlaneseq
      %v6728 = vshrl.u32 %v6727, 7
      %v6729 = vsub.s32 0, %v6728
      %v6730 = vrot.slane %v5841, %v6729
      %6732 = vbcast.lane.b32.xlu0 %v6730, 256
      %v6733 = vpop.permute.xlu0 %6732
      %v6734 = vlaneseq
      %v6735 = vshrl.u32 %v6734, 7
      %v6736 = vsub.s32 0, %v6735
      %v6737 = vrot.slane %v5842, %v6736
      %6739 = vbcast.lane.b32.xlu0 %v6737, 256
      %v6740 = vpop.permute.xlu0 %6739
      %v6741 = vlaneseq
      %v6742 = vshrl.u32 %v6741, 7
      %v6743 = vsub.s32 0, %v6742
      %v6744 = vrot.slane %v5843, %v6743
      %6746 = vbcast.lane.b32.xlu0 %v6744, 256
      %v6747 = vpop.permute.xlu0 %6746
      %v6748 = vlaneseq
      %v6749 = vshrl.u32 %v6748, 7
      %v6750 = vsub.s32 0, %v6749
      %v6751 = vrot.slane %v5844, %v6750
      %6753 = vbcast.lane.b32.xlu0 %v6751, 256
      %v6754 = vpop.permute.xlu0 %6753
      %v6755 = vlaneseq
      %v6756 = vshrl.u32 %v6755, 7
      %v6757 = vsub.s32 0, %v6756
      %v6758 = vrot.slane %v5845, %v6757
      %6760 = vbcast.lane.b32.xlu0 %v6758, 256
      %v6761 = vpop.permute.xlu0 %6760
      %v6762 = vlaneseq
      %v6763 = vshrl.u32 %v6762, 7
      %v6764 = vsub.s32 0, %v6763
      %v6765 = vrot.slane %v5846, %v6764
      %6767 = vbcast.lane.b32.xlu0 %v6765, 256
      %v6768 = vpop.permute.xlu0 %6767
      %v6769 = vlaneseq
      %v6770 = vshrl.u32 %v6769, 7
      %v6771 = vsub.s32 0, %v6770
      %v6772 = vrot.slane %v5847, %v6771
      %6774 = vbcast.lane.b32.xlu0 %v6772, 256
      %v6775 = vpop.permute.xlu0 %6774
      %v6776 = vlaneseq
      %v6777 = vshrl.u32 %v6776, 7
      %v6778 = vsub.s32 0, %v6777
      %v6779 = vrot.slane %v5848, %v6778
      %6781 = vbcast.lane.b32.xlu0 %v6779, 256
      %v6782 = vpop.permute.xlu0 %6781
      %v6783 = vlaneseq
      %v6784 = vshrl.u32 %v6783, 7
      %v6785 = vsub.s32 0, %v6784
      %v6786 = vrot.slane %v5849, %v6785
      %6788 = vbcast.lane.b32.xlu0 %v6786, 256
      %v6789 = vpop.permute.xlu0 %6788
      %v6790 = vlaneseq
      %v6791 = vshrl.u32 %v6790, 7
      %v6792 = vsub.s32 0, %v6791
      %v6793 = vrot.slane %v5850, %v6792
      %6795 = vbcast.lane.b32.xlu0 %v6793, 256
      %v6796 = vpop.permute.xlu0 %6795
      %v6797 = vlaneseq
      %v6798 = vshrl.u32 %v6797, 7
      %v6799 = vsub.s32 0, %v6798
      %v6800 = vrot.slane %v5851, %v6799
      %6802 = vbcast.lane.b32.xlu0 %v6800, 256
      %v6803 = vpop.permute.xlu0 %6802
      %v6804 = vlaneseq
      %v6805 = vshrl.u32 %v6804, 7
      %v6806 = vsub.s32 0, %v6805
      %v6807 = vrot.slane %v5852, %v6806
      %6809 = vbcast.lane.b32.xlu0 %v6807, 256
      %v6810 = vpop.permute.xlu0 %6809
      %v6811 = vlaneseq
      %v6812 = vshrl.u32 %v6811, 7
      %v6813 = vsub.s32 0, %v6812
      %v6814 = vrot.slane %v5853, %v6813
      %6816 = vbcast.lane.b32.xlu0 %v6814, 256
      %v6817 = vpop.permute.xlu0 %6816
      %v6818 = vlaneseq
      %v6819 = vshrl.u32 %v6818, 7
      %v6820 = vsub.s32 0, %v6819
      %v6821 = vrot.slane %v5854, %v6820
      %6823 = vbcast.lane.b32.xlu0 %v6821, 256
      %v6824 = vpop.permute.xlu0 %6823
      %v6825 = vlaneseq
      %v6826 = vshrl.u32 %v6825, 7
      %v6827 = vsub.s32 0, %v6826
      %v6828 = vrot.slane %v5855, %v6827
      %6830 = vbcast.lane.b32.xlu0 %v6828, 256
      %v6831 = vpop.permute.xlu0 %6830
      %v6832 = vlaneseq
      %v6833 = vshrl.u32 %v6832, 7
      %v6834 = vsub.s32 0, %v6833
      %v6835 = vrot.slane %v5856, %v6834
      %6837 = vbcast.lane.b32.xlu0 %v6835, 256
      %v6838 = vpop.permute.xlu0 %6837
      %v6839 = vlaneseq
      %v6840 = vshrl.u32 %v6839, 7
      %v6841 = vsub.s32 0, %v6840
      %v6842 = vrot.slane %v5857, %v6841
      %6844 = vbcast.lane.b32.xlu0 %v6842, 256
      %v6845 = vpop.permute.xlu0 %6844
      %v6846 = vlaneseq
      %v6847 = vshrl.u32 %v6846, 7
      %v6848 = vsub.s32 0, %v6847
      %v6849 = vrot.slane %v5858, %v6848
      %6851 = vbcast.lane.b32.xlu0 %v6849, 256
      %v6852 = vpop.permute.xlu0 %6851
      %v6853 = vlaneseq
      %v6854 = vshrl.u32 %v6853, 7
      %v6855 = vsub.s32 0, %v6854
      %v6856 = vrot.slane %v5859, %v6855
      %6858 = vbcast.lane.b32.xlu0 %v6856, 256
      %v6859 = vpop.permute.xlu0 %6858
      %v6860 = vlaneseq
      %v6861 = vshrl.u32 %v6860, 7
      %v6862 = vsub.s32 0, %v6861
      %v6863 = vrot.slane %v5860, %v6862
      %6865 = vbcast.lane.b32.xlu0 %v6863, 256
      %v6866 = vpop.permute.xlu0 %6865
      %v6867 = vlaneseq
      %v6868 = vshrl.u32 %v6867, 7
      %v6869 = vsub.s32 0, %v6868
      %v6870 = vrot.slane %v5861, %v6869
      %6872 = vbcast.lane.b32.xlu0 %v6870, 256
      %v6873 = vpop.permute.xlu0 %6872
      %v6874 = vlaneseq
      %v6875 = vshrl.u32 %v6874, 7
      %v6876 = vsub.s32 0, %v6875
      %v6877 = vrot.slane %v5862, %v6876
      %6879 = vbcast.lane.b32.xlu0 %v6877, 256
      %v6880 = vpop.permute.xlu0 %6879
      %v6881 = vlaneseq
      %v6882 = vshrl.u32 %v6881, 7
      %v6883 = vsub.s32 0, %v6882
      %v6884 = vrot.slane %v5863, %v6883
      %6886 = vbcast.lane.b32.xlu0 %v6884, 256
      %v6887 = vpop.permute.xlu0 %6886
      %v6888 = vlaneseq
      %v6889 = vshrl.u32 %v6888, 7
      %v6890 = vsub.s32 0, %v6889
      %v6891 = vrot.slane %v5864, %v6890
      %6893 = vbcast.lane.b32.xlu0 %v6891, 256
      %v6894 = vpop.permute.xlu0 %6893
      %v6895 = vlaneseq
      %v6896 = vshrl.u32 %v6895, 7
      %v6897 = vsub.s32 0, %v6896
      %v6898 = vrot.slane %v5865, %v6897
      %6900 = vbcast.lane.b32.xlu0 %v6898, 256
      %v6901 = vpop.permute.xlu0 %6900
      %v6902 = vlaneseq
      %v6903 = vshrl.u32 %v6902, 7
      %v6904 = vsub.s32 0, %v6903
      %v6905 = vrot.slane %v5866, %v6904
      %6907 = vbcast.lane.b32.xlu0 %v6905, 256
      %v6908 = vpop.permute.xlu0 %6907
      %v6909 = vlaneseq
      %v6910 = vshrl.u32 %v6909, 7
      %v6911 = vsub.s32 0, %v6910
      %v6912 = vrot.slane %v5867, %v6911
      %6914 = vbcast.lane.b32.xlu0 %v6912, 256
      %v6915 = vpop.permute.xlu0 %6914
      %v6916 = vlaneseq
      %v6917 = vshrl.u32 %v6916, 7
      %v6918 = vsub.s32 0, %v6917
      %v6919 = vrot.slane %v5868, %v6918
      %6921 = vbcast.lane.b32.xlu0 %v6919, 256
      %v6922 = vpop.permute.xlu0 %6921
      %v6923 = vlaneseq
      %v6924 = vshrl.u32 %v6923, 7
      %v6925 = vsub.s32 0, %v6924
      %v6926 = vrot.slane %v5869, %v6925
      %6928 = vbcast.lane.b32.xlu0 %v6926, 256
      %v6929 = vpop.permute.xlu0 %6928
      %v6930 = vlaneseq
      %v6931 = vshrl.u32 %v6930, 7
      %v6932 = vsub.s32 0, %v6931
      %v6933 = vrot.slane %v5870, %v6932
      %6935 = vbcast.lane.b32.xlu0 %v6933, 256
      %v6936 = vpop.permute.xlu0 %6935
      %v6937 = vlaneseq
      %v6938 = vshrl.u32 %v6937, 7
      %v6939 = vsub.s32 0, %v6938
      %v6940 = vrot.slane %v5871, %v6939
      %6942 = vbcast.lane.b32.xlu0 %v6940, 256
      %v6943 = vpop.permute.xlu0 %6942
      %v6944 = vlaneseq
      %v6945 = vshrl.u32 %v6944, 7
      %v6946 = vsub.s32 0, %v6945
      %v6947 = vrot.slane %v5872, %v6946
      %6949 = vbcast.lane.b32.xlu0 %v6947, 256
      %v6950 = vpop.permute.xlu0 %6949
      %v6951 = vlaneseq
      %v6952 = vshrl.u32 %v6951, 7
      %v6953 = vsub.s32 0, %v6952
      %v6954 = vrot.slane %v5873, %v6953
      %6956 = vbcast.lane.b32.xlu0 %v6954, 256
      %v6957 = vpop.permute.xlu0 %6956
      %v6958 = vlaneseq
      %v6959 = vshrl.u32 %v6958, 7
      %v6960 = vsub.s32 0, %v6959
      %v6961 = vrot.slane %v5874, %v6960
      %6963 = vbcast.lane.b32.xlu0 %v6961, 256
      %v6964 = vpop.permute.xlu0 %6963
      %v6965 = vlaneseq
      %v6966 = vshrl.u32 %v6965, 7
      %v6967 = vsub.s32 0, %v6966
      %v6968 = vrot.slane %v5875, %v6967
      %6970 = vbcast.lane.b32.xlu0 %v6968, 256
      %v6971 = vpop.permute.xlu0 %6970
      %v6972 = vlaneseq
      %v6973 = vshrl.u32 %v6972, 7
      %v6974 = vsub.s32 0, %v6973
      %v6975 = vrot.slane %v5876, %v6974
      %6977 = vbcast.lane.b32.xlu0 %v6975, 256
      %v6978 = vpop.permute.xlu0 %6977
      %v6979 = vlaneseq
      %v6980 = vshrl.u32 %v6979, 7
      %v6981 = vsub.s32 0, %v6980
      %v6982 = vrot.slane %v5877, %v6981
      %6984 = vbcast.lane.b32.xlu0 %v6982, 256
      %v6985 = vpop.permute.xlu0 %6984
      %v6986 = vlaneseq
      %v6987 = vshrl.u32 %v6986, 7
      %v6988 = vsub.s32 0, %v6987
      %v6989 = vrot.slane %v5878, %v6988
      %6991 = vbcast.lane.b32.xlu0 %v6989, 256
      %v6992 = vpop.permute.xlu0 %6991
      %v6993 = vlaneseq
      %v6994 = vshrl.u32 %v6993, 7
      %v6995 = vsub.s32 0, %v6994
      %v6996 = vrot.slane %v5879, %v6995
      %6998 = vbcast.lane.b32.xlu0 %v6996, 256
      %v6999 = vpop.permute.xlu0 %6998
      %v7000 = vlaneseq
      %v7001 = vshrl.u32 %v7000, 7
      %v7002 = vsub.s32 0, %v7001
      %v7003 = vrot.slane %v5880, %v7002
      %7005 = vbcast.lane.b32.xlu0 %v7003, 256
      %v7006 = vpop.permute.xlu0 %7005
      %v7007 = vlaneseq
      %v7008 = vshrl.u32 %v7007, 7
      %v7009 = vsub.s32 0, %v7008
      %v7010 = vrot.slane %v5881, %v7009
      %7012 = vbcast.lane.b32.xlu0 %v7010, 256
      %v7013 = vpop.permute.xlu0 %7012
      %v7014 = vlaneseq
      %v7015 = vshrl.u32 %v7014, 7
      %v7016 = vsub.s32 0, %v7015
      %v7017 = vrot.slane %v5882, %v7016
      %7019 = vbcast.lane.b32.xlu0 %v7017, 256
      %v7020 = vpop.permute.xlu0 %7019
      %v7021 = vlaneseq
      %v7022 = vshrl.u32 %v7021, 7
      %v7023 = vsub.s32 0, %v7022
      %v7024 = vrot.slane %v5883, %v7023
      %7026 = vbcast.lane.b32.xlu0 %v7024, 256
      %v7027 = vpop.permute.xlu0 %7026
      %v7028 = vlaneseq
      %v7029 = vshrl.u32 %v7028, 7
      %v7030 = vsub.s32 0, %v7029
      %v7031 = vrot.slane %v5884, %v7030
      %7033 = vbcast.lane.b32.xlu0 %v7031, 256
      %v7034 = vpop.permute.xlu0 %7033
      %v7035 = vlaneseq
      %v7036 = vshrl.u32 %v7035, 7
      %v7037 = vsub.s32 0, %v7036
      %v7038 = vrot.slane %v5885, %v7037
      %7040 = vbcast.lane.b32.xlu0 %v7038, 256
      %v7041 = vpop.permute.xlu0 %7040
      %v7042 = vlaneseq
      %v7043 = vshrl.u32 %v7042, 7
      %v7044 = vsub.s32 0, %v7043
      %v7045 = vrot.slane %v5886, %v7044
      %7047 = vbcast.lane.b32.xlu0 %v7045, 256
      %v7048 = vpop.permute.xlu0 %7047
      %v7049 = vlaneseq
      %v7050 = vshrl.u32 %v7049, 7
      %v7051 = vsub.s32 0, %v7050
      %v7052 = vrot.slane %v5887, %v7051
      %7054 = vbcast.lane.b32.xlu0 %v7052, 256
      %v7055 = vpop.permute.xlu0 %7054
      %v7056 = vlaneseq
      %v7057 = vshrl.u32 %v7056, 7
      %v7058 = vsub.s32 0, %v7057
      %v7059 = vrot.slane %v5888, %v7058
      %7061 = vbcast.lane.b32.xlu0 %v7059, 256
      %v7062 = vpop.permute.xlu0 %7061
      %v7063 = vlaneseq
      %v7064 = vshrl.u32 %v7063, 7
      %v7065 = vsub.s32 0, %v7064
      %v7066 = vrot.slane %v5889, %v7065
      %7068 = vbcast.lane.b32.xlu0 %v7066, 256
      %v7069 = vpop.permute.xlu0 %7068
      %v7070 = vlaneseq
      %v7071 = vshrl.u32 %v7070, 7
      %v7072 = vsub.s32 0, %v7071
      %v7073 = vrot.slane %v5890, %v7072
      %7075 = vbcast.lane.b32.xlu0 %v7073, 256
      %v7076 = vpop.permute.xlu0 %7075
      %v7077 = vlaneseq
      %v7078 = vshrl.u32 %v7077, 7
      %v7079 = vsub.s32 0, %v7078
      %v7080 = vrot.slane %v5891, %v7079
      %7082 = vbcast.lane.b32.xlu0 %v7080, 256
      %v7083 = vpop.permute.xlu0 %7082
      %v7084 = vlaneseq
      %v7085 = vshrl.u32 %v7084, 7
      %v7086 = vsub.s32 0, %v7085
      %v7087 = vrot.slane %v5892, %v7086
      %7089 = vbcast.lane.b32.xlu0 %v7087, 256
      %v7090 = vpop.permute.xlu0 %7089
      %v7091 = vlaneseq
      %v7092 = vshrl.u32 %v7091, 7
      %v7093 = vsub.s32 0, %v7092
      %v7094 = vrot.slane %v5893, %v7093
      %7096 = vbcast.lane.b32.xlu0 %v7094, 256
      %v7097 = vpop.permute.xlu0 %7096
      %v7098 = vlaneseq
      %v7099 = vshrl.u32 %v7098, 7
      %v7100 = vsub.s32 0, %v7099
      %v7101 = vrot.slane %v5894, %v7100
      %7103 = vbcast.lane.b32.xlu0 %v7101, 256
      %v7104 = vpop.permute.xlu0 %7103
      %v7105 = vlaneseq
      %v7106 = vshrl.u32 %v7105, 7
      %v7107 = vsub.s32 0, %v7106
      %v7108 = vrot.slane %v5895, %v7107
      %7110 = vbcast.lane.b32.xlu0 %v7108, 256
      %v7111 = vpop.permute.xlu0 %7110
      %v7112 = vlaneseq
      %v7113 = vshrl.u32 %v7112, 7
      %v7114 = vsub.s32 0, %v7113
      %v7115 = vrot.slane %v5896, %v7114
      %7117 = vbcast.lane.b32.xlu0 %v7115, 256
      %v7118 = vpop.permute.xlu0 %7117
      %v7119 = vlaneseq
      %v7120 = vshrl.u32 %v7119, 7
      %v7121 = vsub.s32 0, %v7120
      %v7122 = vrot.slane %v5897, %v7121
      %7124 = vbcast.lane.b32.xlu0 %v7122, 256
      %v7125 = vpop.permute.xlu0 %7124
      %v7126 = vlaneseq
      %v7127 = vshrl.u32 %v7126, 7
      %v7128 = vsub.s32 0, %v7127
      %v7129 = vrot.slane %v5898, %v7128
      %7131 = vbcast.lane.b32.xlu0 %v7129, 256
      %v7132 = vpop.permute.xlu0 %7131
      %v7133 = vlaneseq
      %v7134 = vshrl.u32 %v7133, 7
      %v7135 = vsub.s32 0, %v7134
      %v7136 = vrot.slane %v5899, %v7135
      %7138 = vbcast.lane.b32.xlu0 %v7136, 256
      %v7139 = vpop.permute.xlu0 %7138
      %v7140 = vlaneseq
      %v7141 = vshrl.u32 %v7140, 7
      %v7142 = vsub.s32 0, %v7141
      %v7143 = vrot.slane %v5900, %v7142
      %7145 = vbcast.lane.b32.xlu0 %v7143, 256
      %v7146 = vpop.permute.xlu0 %7145
      %v7147 = vlaneseq
      %v7148 = vshrl.u32 %v7147, 7
      %v7149 = vsub.s32 0, %v7148
      %v7150 = vrot.slane %v5901, %v7149
      %7152 = vbcast.lane.b32.xlu0 %v7150, 256
      %v7153 = vpop.permute.xlu0 %7152
      %v7154 = vlaneseq
      %v7155 = vshrl.u32 %v7154, 7
      %v7156 = vsub.s32 0, %v7155
      %v7157 = vrot.slane %v5902, %v7156
      %7159 = vbcast.lane.b32.xlu0 %v7157, 256
      %v7160 = vpop.permute.xlu0 %7159
      %v7161 = vlaneseq
      %v7162 = vshrl.u32 %v7161, 7
      %v7163 = vsub.s32 0, %v7162
      %v7164 = vrot.slane %v5903, %v7163
      %7166 = vbcast.lane.b32.xlu0 %v7164, 256
      %v7167 = vpop.permute.xlu0 %7166
      %v7168 = vlaneseq
      %v7169 = vshrl.u32 %v7168, 7
      %v7170 = vsub.s32 0, %v7169
      %v7171 = vrot.slane %v5904, %v7170
      %7173 = vbcast.lane.b32.xlu0 %v7171, 256
      %v7174 = vpop.permute.xlu0 %7173
      %v7175 = vlaneseq
      %v7176 = vshrl.u32 %v7175, 7
      %v7177 = vsub.s32 0, %v7176
      %v7178 = vrot.slane %v5905, %v7177
      %7180 = vbcast.lane.b32.xlu0 %v7178, 256
      %v7181 = vpop.permute.xlu0 %7180
      %v7182 = vlaneseq
      %v7183 = vshrl.u32 %v7182, 7
      %v7184 = vsub.s32 0, %v7183
      %v7185 = vrot.slane %v5906, %v7184
      %7187 = vbcast.lane.b32.xlu0 %v7185, 256
      %v7188 = vpop.permute.xlu0 %7187
      %v7189 = vlaneseq
      %v7190 = vshrl.u32 %v7189, 7
      %v7191 = vsub.s32 0, %v7190
      %v7192 = vrot.slane %v5907, %v7191
      %7194 = vbcast.lane.b32.xlu0 %v7192, 256
      %v7195 = vpop.permute.xlu0 %7194
      %v7196 = vlaneseq
      %v7197 = vshrl.u32 %v7196, 7
      %v7198 = vsub.s32 0, %v7197
      %v7199 = vrot.slane %v5908, %v7198
      %7201 = vbcast.lane.b32.xlu0 %v7199, 256
      %v7202 = vpop.permute.xlu0 %7201
      %v7203 = vlaneseq
      %v7204 = vshrl.u32 %v7203, 7
      %v7205 = vsub.s32 0, %v7204
      %v7206 = vrot.slane %v5909, %v7205
      %7208 = vbcast.lane.b32.xlu0 %v7206, 256
      %v7209 = vpop.permute.xlu0 %7208
      %v7210 = vlaneseq
      %v7211 = vshrl.u32 %v7210, 7
      %v7212 = vsub.s32 0, %v7211
      %v7213 = vrot.slane %v5910, %v7212
      %7215 = vbcast.lane.b32.xlu0 %v7213, 256
      %v7216 = vpop.permute.xlu0 %7215
      %v7217 = vlaneseq
      %v7218 = vshrl.u32 %v7217, 7
      %v7219 = vsub.s32 0, %v7218
      %v7220 = vrot.slane %v5911, %v7219
      %7222 = vbcast.lane.b32.xlu0 %v7220, 256
      %v7223 = vpop.permute.xlu0 %7222
      %v7224 = vlaneseq
      %v7225 = vshrl.u32 %v7224, 7
      %v7226 = vsub.s32 0, %v7225
      %v7227 = vrot.slane %v5912, %v7226
      %7229 = vbcast.lane.b32.xlu0 %v7227, 256
      %v7230 = vpop.permute.xlu0 %7229
      %v7231 = vlaneseq
      %v7232 = vshrl.u32 %v7231, 7
      %v7233 = vsub.s32 0, %v7232
      %v7234 = vrot.slane %v5913, %v7233
      %7236 = vbcast.lane.b32.xlu0 %v7234, 256
      %v7237 = vpop.permute.xlu0 %7236
      %v7238 = vlaneseq
      %v7239 = vshrl.u32 %v7238, 7
      %v7240 = vsub.s32 0, %v7239
      %v7241 = vrot.slane %v5914, %v7240
      %7243 = vbcast.lane.b32.xlu0 %v7241, 256
      %v7244 = vpop.permute.xlu0 %7243
      %v7245 = vlaneseq
      %v7246 = vshrl.u32 %v7245, 7
      %v7247 = vsub.s32 0, %v7246
      %v7248 = vrot.slane %v5915, %v7247
      %7250 = vbcast.lane.b32.xlu0 %v7248, 256
      %v7251 = vpop.permute.xlu0 %7250
      %v7252 = vlaneseq
      %v7253 = vshrl.u32 %v7252, 7
      %v7254 = vsub.s32 0, %v7253
      %v7255 = vrot.slane %v5916, %v7254
      %7257 = vbcast.lane.b32.xlu0 %v7255, 256
      %v7258 = vpop.permute.xlu0 %7257
      %v7259 = vlaneseq
      %v7260 = vshrl.u32 %v7259, 7
      %v7261 = vsub.s32 0, %v7260
      %v7262 = vrot.slane %v5917, %v7261
      %7264 = vbcast.lane.b32.xlu0 %v7262, 256
      %v7265 = vpop.permute.xlu0 %7264
      %v7266 = vlaneseq
      %v7267 = vshrl.u32 %v7266, 7
      %v7268 = vsub.s32 0, %v7267
      %v7269 = vrot.slane %v5918, %v7268
      %7271 = vbcast.lane.b32.xlu0 %v7269, 256
      %v7272 = vpop.permute.xlu0 %7271
      %v7273 = vlaneseq
      %v7274 = vshrl.u32 %v7273, 7
      %v7275 = vsub.s32 0, %v7274
      %v7276 = vrot.slane %v5919, %v7275
      %7278 = vbcast.lane.b32.xlu0 %v7276, 256
      %v7279 = vpop.permute.xlu0 %7278
      %v7280 = vlaneseq
      %v7281 = vshrl.u32 %v7280, 7
      %v7282 = vsub.s32 0, %v7281
      %v7283 = vrot.slane %v5920, %v7282
      %7285 = vbcast.lane.b32.xlu0 %v7283, 256
      %v7286 = vpop.permute.xlu0 %7285
      %v7287 = vlaneseq
      %v7288 = vshrl.u32 %v7287, 7
      %v7289 = vsub.s32 0, %v7288
      %v7290 = vrot.slane %v5921, %v7289
      %7292 = vbcast.lane.b32.xlu0 %v7290, 256
      %v7293 = vpop.permute.xlu0 %7292
      %v7294 = vlaneseq
      %v7295 = vshrl.u32 %v7294, 7
      %v7296 = vsub.s32 0, %v7295
      %v7297 = vrot.slane %v5922, %v7296
      %7299 = vbcast.lane.b32.xlu0 %v7297, 256
      %v7300 = vpop.permute.xlu0 %7299
      %v7301 = vlaneseq
      %v7302 = vshrl.u32 %v7301, 7
      %v7303 = vsub.s32 0, %v7302
      %v7304 = vrot.slane %v5923, %v7303
      %7306 = vbcast.lane.b32.xlu0 %v7304, 256
      %v7307 = vpop.permute.xlu0 %7306
      %v7308 = vlaneseq
      %v7309 = vshrl.u32 %v7308, 7
      %v7310 = vsub.s32 0, %v7309
      %v7311 = vrot.slane %v5924, %v7310
      %7313 = vbcast.lane.b32.xlu0 %v7311, 256
      %v7314 = vpop.permute.xlu0 %7313
      %v7315 = vlaneseq
      %v7316 = vshrl.u32 %v7315, 7
      %v7317 = vsub.s32 0, %v7316
      %v7318 = vrot.slane %v5925, %v7317
      %7320 = vbcast.lane.b32.xlu0 %v7318, 256
      %v7321 = vpop.permute.xlu0 %7320
      %v7322 = vlaneseq
      %v7323 = vshrl.u32 %v7322, 7
      %v7324 = vsub.s32 0, %v7323
      %v7325 = vrot.slane %v5926, %v7324
      %7327 = vbcast.lane.b32.xlu0 %v7325, 256
      %v7328 = vpop.permute.xlu0 %7327
      %v7329 = vlaneseq
      %v7330 = vshrl.u32 %v7329, 7
      %v7331 = vsub.s32 0, %v7330
      %v7332 = vrot.slane %v5927, %v7331
      %7334 = vbcast.lane.b32.xlu0 %v7332, 256
      %v7335 = vpop.permute.xlu0 %7334
      %v7336 = vlaneseq
      %v7337 = vshrl.u32 %v7336, 7
      %v7338 = vsub.s32 0, %v7337
      %v7339 = vrot.slane %v5928, %v7338
      %7341 = vbcast.lane.b32.xlu0 %v7339, 256
      %v7342 = vpop.permute.xlu0 %7341
      %v7343 = vlaneseq
      %v7344 = vshrl.u32 %v7343, 7
      %v7345 = vsub.s32 0, %v7344
      %v7346 = vrot.slane %v5929, %v7345
      %7348 = vbcast.lane.b32.xlu0 %v7346, 256
      %v7349 = vpop.permute.xlu0 %7348
      %v7350 = vlaneseq
      %v7351 = vshrl.u32 %v7350, 7
      %v7352 = vsub.s32 0, %v7351
      %v7353 = vrot.slane %v5930, %v7352
      %7355 = vbcast.lane.b32.xlu0 %v7353, 256
      %v7356 = vpop.permute.xlu0 %7355
      %v7357 = vlaneseq
      %v7358 = vshrl.u32 %v7357, 7
      %v7359 = vsub.s32 0, %v7358
      %v7360 = vrot.slane %v5931, %v7359
      %7362 = vbcast.lane.b32.xlu0 %v7360, 256
      %v7363 = vpop.permute.xlu0 %7362
      %v7364 = vlaneseq
      %v7365 = vshrl.u32 %v7364, 7
      %v7366 = vsub.s32 0, %v7365
      %v7367 = vrot.slane %v5932, %v7366
      %7369 = vbcast.lane.b32.xlu0 %v7367, 256
      %v7370 = vpop.permute.xlu0 %7369
      %v7371 = vlaneseq
      %v7372 = vshrl.u32 %v7371, 7
      %v7373 = vsub.s32 0, %v7372
      %v7374 = vrot.slane %v5933, %v7373
      %7376 = vbcast.lane.b32.xlu0 %v7374, 256
      %v7377 = vpop.permute.xlu0 %7376
      %v7378 = vlaneseq
      %v7379 = vshrl.u32 %v7378, 7
      %v7380 = vsub.s32 0, %v7379
      %v7381 = vrot.slane %v5934, %v7380
      %7383 = vbcast.lane.b32.xlu0 %v7381, 256
      %v7384 = vpop.permute.xlu0 %7383
      %v7385 = vlaneseq
      %v7386 = vshrl.u32 %v7385, 7
      %v7387 = vsub.s32 0, %v7386
      %v7388 = vrot.slane %v5935, %v7387
      %7390 = vbcast.lane.b32.xlu0 %v7388, 256
      %v7391 = vpop.permute.xlu0 %7390
      %v7392 = vlaneseq
      %v7393 = vshrl.u32 %v7392, 7
      %v7394 = vsub.s32 0, %v7393
      %v7395 = vrot.slane %v5936, %v7394
      %7397 = vbcast.lane.b32.xlu0 %v7395, 256
      %v7398 = vpop.permute.xlu0 %7397
      %v7399 = vlaneseq
      %v7400 = vshrl.u32 %v7399, 7
      %v7401 = vsub.s32 0, %v7400
      %v7402 = vrot.slane %v5937, %v7401
      %7404 = vbcast.lane.b32.xlu0 %v7402, 256
      %v7405 = vpop.permute.xlu0 %7404
      %v7406 = vlaneseq
      %v7407 = vshrl.u32 %v7406, 7
      %v7408 = vsub.s32 0, %v7407
      %v7409 = vrot.slane %v5938, %v7408
      %7411 = vbcast.lane.b32.xlu0 %v7409, 256
      %v7412 = vpop.permute.xlu0 %7411
      %v7413 = vlaneseq
      %v7414 = vshrl.u32 %v7413, 7
      %v7415 = vsub.s32 0, %v7414
      %v7416 = vrot.slane %v5939, %v7415
      %7418 = vbcast.lane.b32.xlu0 %v7416, 256
      %v7419 = vpop.permute.xlu0 %7418
      %v7420 = vlaneseq
      %v7421 = vshrl.u32 %v7420, 7
      %v7422 = vsub.s32 0, %v7421
      %v7423 = vrot.slane %v5940, %v7422
      %7425 = vbcast.lane.b32.xlu0 %v7423, 256
      %v7426 = vpop.permute.xlu0 %7425
      %v7427 = vlaneseq
      %v7428 = vshrl.u32 %v7427, 7
      %v7429 = vsub.s32 0, %v7428
      %v7430 = vrot.slane %v5941, %v7429
      %7432 = vbcast.lane.b32.xlu0 %v7430, 256
      %v7433 = vpop.permute.xlu0 %7432
      %v7434 = vlaneseq
      %v7435 = vshrl.u32 %v7434, 7
      %v7436 = vsub.s32 0, %v7435
      %v7437 = vrot.slane %v5942, %v7436
      %7439 = vbcast.lane.b32.xlu0 %v7437, 256
      %v7440 = vpop.permute.xlu0 %7439
      %v7441 = vlaneseq
      %v7442 = vshrl.u32 %v7441, 7
      %v7443 = vsub.s32 0, %v7442
      %v7444 = vrot.slane %v5943, %v7443
      %7446 = vbcast.lane.b32.xlu0 %v7444, 256
      %v7447 = vpop.permute.xlu0 %7446
      %v7448 = vlaneseq
      %v7449 = vshrl.u32 %v7448, 7
      %v7450 = vsub.s32 0, %v7449
      %v7451 = vrot.slane %v5944, %v7450
      %7453 = vbcast.lane.b32.xlu0 %v7451, 256
      %v7454 = vpop.permute.xlu0 %7453
      %v7455 = vlaneseq
      %v7456 = vshrl.u32 %v7455, 7
      %v7457 = vsub.s32 0, %v7456
      %v7458 = vrot.slane %v5945, %v7457
      %7460 = vbcast.lane.b32.xlu0 %v7458, 256
      %v7461 = vpop.permute.xlu0 %7460
      %v7462 = vlaneseq
      %v7463 = vshrl.u32 %v7462, 7
      %v7464 = vsub.s32 0, %v7463
      %v7465 = vrot.slane %v5946, %v7464
      %7467 = vbcast.lane.b32.xlu0 %v7465, 256
      %v7468 = vpop.permute.xlu0 %7467
      %v7469 = vlaneseq
      %v7470 = vshrl.u32 %v7469, 7
      %v7471 = vsub.s32 0, %v7470
      %v7472 = vrot.slane %v5947, %v7471
      %7474 = vbcast.lane.b32.xlu0 %v7472, 256
      %v7475 = vpop.permute.xlu0 %7474
      %v7476 = vlaneseq
      %v7477 = vshrl.u32 %v7476, 7
      %v7478 = vsub.s32 0, %v7477
      %v7479 = vrot.slane %v5948, %v7478
      %7481 = vbcast.lane.b32.xlu0 %v7479, 256
      %v7482 = vpop.permute.xlu0 %7481
      %v7483 = vlaneseq
      %v7484 = vshrl.u32 %v7483, 7
      %v7485 = vsub.s32 0, %v7484
      %v7486 = vrot.slane %v5949, %v7485
      %7488 = vbcast.lane.b32.xlu0 %v7486, 256
      %v7489 = vpop.permute.xlu0 %7488
      %v7490 = vlaneseq
      %v7491 = vshrl.u32 %v7490, 7
      %v7492 = vsub.s32 0, %v7491
      %v7493 = vrot.slane %v5950, %v7492
      %7495 = vbcast.lane.b32.xlu0 %v7493, 256
      %v7496 = vpop.permute.xlu0 %7495
      %v7497 = vlaneseq
      %v7498 = vshrl.u32 %v7497, 7
      %v7499 = vsub.s32 0, %v7498
      %v7500 = vrot.slane %v5951, %v7499
      %7502 = vbcast.lane.b32.xlu0 %v7500, 256
      %v7503 = vpop.permute.xlu0 %7502
      %v7504 = vlaneseq
      %v7505 = vshrl.u32 %v7504, 7
      %v7506 = vsub.s32 0, %v7505
      %v7507 = vrot.slane %v5952, %v7506
      %7509 = vbcast.lane.b32.xlu0 %v7507, 256
      %v7510 = vpop.permute.xlu0 %7509
      %v7511 = vlaneseq
      %v7512 = vshrl.u32 %v7511, 7
      %v7513 = vsub.s32 0, %v7512
      %v7514 = vrot.slane %v5953, %v7513
      %7516 = vbcast.lane.b32.xlu0 %v7514, 256
      %v7517 = vpop.permute.xlu0 %7516
      %v7518 = vlaneseq
      %v7519 = vshrl.u32 %v7518, 7
      %v7520 = vsub.s32 0, %v7519
      %v7521 = vrot.slane %v5954, %v7520
      %7523 = vbcast.lane.b32.xlu0 %v7521, 256
      %v7524 = vpop.permute.xlu0 %7523
      %v7525 = vlaneseq
      %v7526 = vshrl.u32 %v7525, 7
      %v7527 = vsub.s32 0, %v7526
      %v7528 = vrot.slane %v5955, %v7527
      %7530 = vbcast.lane.b32.xlu0 %v7528, 256
      %v7531 = vpop.permute.xlu0 %7530
      %v7532 = vlaneseq
      %v7533 = vshrl.u32 %v7532, 7
      %v7534 = vsub.s32 0, %v7533
      %v7535 = vrot.slane %v5956, %v7534
      %7537 = vbcast.lane.b32.xlu0 %v7535, 256
      %v7538 = vpop.permute.xlu0 %7537
      %v7539 = vlaneseq
      %v7540 = vshrl.u32 %v7539, 7
      %v7541 = vsub.s32 0, %v7540
      %v7542 = vrot.slane %v5957, %v7541
      %7544 = vbcast.lane.b32.xlu0 %v7542, 256
      %v7545 = vpop.permute.xlu0 %7544
      %v7546 = vlaneseq
      %v7547 = vshrl.u32 %v7546, 7
      %v7548 = vsub.s32 0, %v7547
      %v7549 = vrot.slane %v5958, %v7548
      %7551 = vbcast.lane.b32.xlu0 %v7549, 256
      %v7552 = vpop.permute.xlu0 %7551
      %v7553 = vlaneseq
      %v7554 = vshrl.u32 %v7553, 7
      %v7555 = vsub.s32 0, %v7554
      %v7556 = vrot.slane %v5959, %v7555
      %7558 = vbcast.lane.b32.xlu0 %v7556, 256
      %v7559 = vpop.permute.xlu0 %7558
      %v7560 = vlaneseq
      %v7561 = vshrl.u32 %v7560, 7
      %v7562 = vsub.s32 0, %v7561
      %v7563 = vrot.slane %v5960, %v7562
      %7565 = vbcast.lane.b32.xlu0 %v7563, 256
      %v7566 = vpop.permute.xlu0 %7565
      %v7567 = vlaneseq
      %v7568 = vshrl.u32 %v7567, 7
      %v7569 = vsub.s32 0, %v7568
      %v7570 = vrot.slane %v5961, %v7569
      %7572 = vbcast.lane.b32.xlu0 %v7570, 256
      %v7573 = vpop.permute.xlu0 %7572
      %v7574 = vlaneseq
      %v7575 = vshrl.u32 %v7574, 7
      %v7576 = vsub.s32 0, %v7575
      %v7577 = vrot.slane %v5962, %v7576
      %7579 = vbcast.lane.b32.xlu0 %v7577, 256
      %v7580 = vpop.permute.xlu0 %7579
      %v7581 = vlaneseq
      %v7582 = vshrl.u32 %v7581, 7
      %v7583 = vsub.s32 0, %v7582
      %v7584 = vrot.slane %v5963, %v7583
      %7586 = vbcast.lane.b32.xlu0 %v7584, 256
      %v7587 = vpop.permute.xlu0 %7586
      %v7588 = vlaneseq
      %v7589 = vshrl.u32 %v7588, 7
      %v7590 = vsub.s32 0, %v7589
      %v7591 = vrot.slane %v5964, %v7590
      %7593 = vbcast.lane.b32.xlu0 %v7591, 256
      %v7594 = vpop.permute.xlu0 %7593
      %v7595 = vlaneseq
      %v7596 = vshrl.u32 %v7595, 7
      %v7597 = vsub.s32 0, %v7596
      %v7598 = vrot.slane %v5965, %v7597
      %7600 = vbcast.lane.b32.xlu0 %v7598, 256
      %v7601 = vpop.permute.xlu0 %7600
      %v7602 = vlaneseq
      %v7603 = vshrl.u32 %v7602, 7
      %v7604 = vsub.s32 0, %v7603
      %v7605 = vrot.slane %v5966, %v7604
      %7607 = vbcast.lane.b32.xlu0 %v7605, 256
      %v7608 = vpop.permute.xlu0 %7607
      %v7609 = vlaneseq
      %v7610 = vshrl.u32 %v7609, 7
      %v7611 = vsub.s32 0, %v7610
      %v7612 = vrot.slane %v5967, %v7611
      %7614 = vbcast.lane.b32.xlu0 %v7612, 256
      %v7615 = vpop.permute.xlu0 %7614
      %v7616 = vlaneseq
      %v7617 = vshrl.u32 %v7616, 7
      %v7618 = vsub.s32 0, %v7617
      %v7619 = vrot.slane %v5968, %v7618
      %7621 = vbcast.lane.b32.xlu0 %v7619, 256
      %v7622 = vpop.permute.xlu0 %7621
      %v7623 = vlaneseq
      %v7624 = vshrl.u32 %v7623, 7
      %v7625 = vsub.s32 0, %v7624
      %v7626 = vrot.slane %v5969, %v7625
      %7628 = vbcast.lane.b32.xlu0 %v7626, 256
      %v7629 = vpop.permute.xlu0 %7628
      %v7630 = vlaneseq
      %v7631 = vshrl.u32 %v7630, 7
      %v7632 = vsub.s32 0, %v7631
      %v7633 = vrot.slane %v5970, %v7632
      %7635 = vbcast.lane.b32.xlu0 %v7633, 256
      %v7636 = vpop.permute.xlu0 %7635
      %v7637 = vlaneseq
      %v7638 = vshrl.u32 %v7637, 7
      %v7639 = vsub.s32 0, %v7638
      %v7640 = vrot.slane %v5971, %v7639
      %7642 = vbcast.lane.b32.xlu0 %v7640, 256
      %v7643 = vpop.permute.xlu0 %7642
      %v7644 = vlaneseq
      %v7645 = vshrl.u32 %v7644, 7
      %v7646 = vsub.s32 0, %v7645
      %v7647 = vrot.slane %v5972, %v7646
      %7649 = vbcast.lane.b32.xlu0 %v7647, 256
      %v7650 = vpop.permute.xlu0 %7649
      %v7651 = vlaneseq
      %v7652 = vshrl.u32 %v7651, 7
      %v7653 = vsub.s32 0, %v7652
      %v7654 = vrot.slane %v5973, %v7653
      %7656 = vbcast.lane.b32.xlu0 %v7654, 256
      %v7657 = vpop.permute.xlu0 %7656
      %v7658 = vlaneseq
      %v7659 = vshrl.u32 %v7658, 7
      %v7660 = vsub.s32 0, %v7659
      %v7661 = vrot.slane %v5974, %v7660
      %7663 = vbcast.lane.b32.xlu0 %v7661, 256
      %v7664 = vpop.permute.xlu0 %7663
      %v7665 = vlaneseq
      %v7666 = vshrl.u32 %v7665, 7
      %v7667 = vsub.s32 0, %v7666
      %v7668 = vrot.slane %v5975, %v7667
      %7670 = vbcast.lane.b32.xlu0 %v7668, 256
      %v7671 = vpop.permute.xlu0 %7670
      %v7672 = vlaneseq
      %v7673 = vshrl.u32 %v7672, 7
      %v7674 = vsub.s32 0, %v7673
      %v7675 = vrot.slane %v5976, %v7674
      %7677 = vbcast.lane.b32.xlu0 %v7675, 256
      %v7678 = vpop.permute.xlu0 %7677
      %v7679 = vlaneseq
      %v7680 = vshrl.u32 %v7679, 7
      %v7681 = vsub.s32 0, %v7680
      %v7682 = vrot.slane %v5977, %v7681
      %7684 = vbcast.lane.b32.xlu0 %v7682, 256
      %v7685 = vpop.permute.xlu0 %7684
      %v7686 = vlaneseq
      %v7687 = vshrl.u32 %v7686, 7
      %v7688 = vsub.s32 0, %v7687
      %v7689 = vrot.slane %v5978, %v7688
      %7691 = vbcast.lane.b32.xlu0 %v7689, 256
      %v7692 = vpop.permute.xlu0 %7691
      %v7693 = vlaneseq
      %v7694 = vshrl.u32 %v7693, 7
      %v7695 = vsub.s32 0, %v7694
      %v7696 = vrot.slane %v5979, %v7695
      %7698 = vbcast.lane.b32.xlu0 %v7696, 256
      %v7699 = vpop.permute.xlu0 %7698
      %v7700 = vlaneseq
      %v7701 = vshrl.u32 %v7700, 7
      %v7702 = vsub.s32 0, %v7701
      %v7703 = vrot.slane %v5980, %v7702
      %7705 = vbcast.lane.b32.xlu0 %v7703, 256
      %v7706 = vpop.permute.xlu0 %7705
      %v7707 = vlaneseq
      %v7708 = vshrl.u32 %v7707, 7
      %v7709 = vsub.s32 0, %v7708
      %v7710 = vrot.slane %v5981, %v7709
      %7712 = vbcast.lane.b32.xlu0 %v7710, 256
      %v7713 = vpop.permute.xlu0 %7712
      %v7714 = vlaneseq
      %v7715 = vshrl.u32 %v7714, 7
      %v7716 = vsub.s32 0, %v7715
      %v7717 = vrot.slane %v5982, %v7716
      %7719 = vbcast.lane.b32.xlu0 %v7717, 256
      %v7720 = vpop.permute.xlu0 %7719
      %v7721 = vlaneseq
      %v7722 = vshrl.u32 %v7721, 7
      %v7723 = vsub.s32 0, %v7722
      %v7724 = vrot.slane %v5983, %v7723
      %7726 = vbcast.lane.b32.xlu0 %v7724, 256
      %v7727 = vpop.permute.xlu0 %7726
      %v7728 = vlaneseq
      %v7729 = vshrl.u32 %v7728, 7
      %v7730 = vsub.s32 0, %v7729
      %v7731 = vrot.slane %v5984, %v7730
      %7733 = vbcast.lane.b32.xlu0 %v7731, 256
      %v7734 = vpop.permute.xlu0 %7733
      %v7735 = vlaneseq
      %v7736 = vshrl.u32 %v7735, 7
      %v7737 = vsub.s32 0, %v7736
      %v7738 = vrot.slane %v5985, %v7737
      %7740 = vbcast.lane.b32.xlu0 %v7738, 256
      %v7741 = vpop.permute.xlu0 %7740
      %v7742 = vlaneseq
      %v7743 = vshrl.u32 %v7742, 7
      %v7744 = vsub.s32 0, %v7743
      %v7745 = vrot.slane %v5986, %v7744
      %7747 = vbcast.lane.b32.xlu0 %v7745, 256
      %v7748 = vpop.permute.xlu0 %7747
      %v7749 = vlaneseq
      %v7750 = vshrl.u32 %v7749, 7
      %v7751 = vsub.s32 0, %v7750
      %v7752 = vrot.slane %v5987, %v7751
      %7754 = vbcast.lane.b32.xlu0 %v7752, 256
      %v7755 = vpop.permute.xlu0 %7754
      %v7756 = vlaneseq
      %v7757 = vshrl.u32 %v7756, 7
      %v7758 = vsub.s32 0, %v7757
      %v7759 = vrot.slane %v5988, %v7758
      %7761 = vbcast.lane.b32.xlu0 %v7759, 256
      %v7762 = vpop.permute.xlu0 %7761
      %v7763 = vlaneseq
      %v7764 = vshrl.u32 %v7763, 7
      %v7765 = vsub.s32 0, %v7764
      %v7766 = vrot.slane %v5989, %v7765
      %7768 = vbcast.lane.b32.xlu0 %v7766, 256
      %v7769 = vpop.permute.xlu0 %7768
      %v7770 = vlaneseq
      %v7771 = vshrl.u32 %v7770, 7
      %v7772 = vsub.s32 0, %v7771
      %v7773 = vrot.slane %v5990, %v7772
      %7775 = vbcast.lane.b32.xlu0 %v7773, 256
      %v7776 = vpop.permute.xlu0 %7775
      %v7777 = vlaneseq
      %v7778 = vshrl.u32 %v7777, 7
      %v7779 = vsub.s32 0, %v7778
      %v7780 = vrot.slane %v5991, %v7779
      %7782 = vbcast.lane.b32.xlu0 %v7780, 256
      %v7783 = vpop.permute.xlu0 %7782
      %v7784 = vmul.f32 %v5998, %v1630
      %v7785 = vmul.f32 %v6005, %v1630
      %v7786 = vmul.f32 %v6012, %v1630
      %v7787 = vmul.f32 %v6019, %v1630
      %v7788 = vmul.f32 %v6026, %v1630
      %v7789 = vmul.f32 %v6033, %v1630
      %v7790 = vmul.f32 %v6040, %v1630
      %v7791 = vmul.f32 %v6047, %v1630
      %v7792 = vmul.f32 %v6054, %v1630
      %v7793 = vmul.f32 %v6061, %v1630
      %v7794 = vmul.f32 %v6068, %v1630
      %v7795 = vmul.f32 %v6075, %v1630
      %v7796 = vmul.f32 %v6082, %v1630
      %v7797 = vmul.f32 %v6089, %v1630
      %v7798 = vmul.f32 %v6096, %v1630
      %v7799 = vmul.f32 %v6103, %v1630
      %v7800 = vmul.f32 %v6110, %v1630
      %v7801 = vmul.f32 %v6117, %v1630
      %v7802 = vmul.f32 %v6124, %v1630
      %v7803 = vmul.f32 %v6131, %v1630
      %v7804 = vmul.f32 %v6138, %v1630
      %v7805 = vmul.f32 %v6145, %v1630
      %v7806 = vmul.f32 %v6152, %v1630
      %v7807 = vmul.f32 %v6159, %v1630
      %v7808 = vmul.f32 %v6166, %v1630
      %v7809 = vmul.f32 %v6173, %v1630
      %v7810 = vmul.f32 %v6180, %v1630
      %v7811 = vmul.f32 %v6187, %v1630
      %v7812 = vmul.f32 %v6194, %v1630
      %v7813 = vmul.f32 %v6201, %v1630
      %v7814 = vmul.f32 %v6208, %v1630
      %v7815 = vmul.f32 %v6215, %v1630
      %v7816 = vmul.f32 %v6222, %v1630
      %v7817 = vmul.f32 %v6229, %v1630
      %v7818 = vmul.f32 %v6236, %v1630
      %v7819 = vmul.f32 %v6243, %v1630
      %v7820 = vmul.f32 %v6250, %v1630
      %v7821 = vmul.f32 %v6257, %v1630
      %v7822 = vmul.f32 %v6264, %v1630
      %v7823 = vmul.f32 %v6271, %v1630
      %v7824 = vmul.f32 %v6278, %v1630
      %v7825 = vmul.f32 %v6285, %v1630
      %v7826 = vmul.f32 %v6292, %v1630
      %v7827 = vmul.f32 %v6299, %v1630
      %v7828 = vmul.f32 %v6306, %v1630
      %v7829 = vmul.f32 %v6313, %v1630
      %v7830 = vmul.f32 %v6320, %v1630
      %v7831 = vmul.f32 %v6327, %v1630
      %v7832 = vmul.f32 %v6334, %v1630
      %v7833 = vmul.f32 %v6341, %v1630
      %v7834 = vmul.f32 %v6348, %v1630
      %v7835 = vmul.f32 %v6355, %v1630
      %v7836 = vmul.f32 %v6362, %v1630
      %v7837 = vmul.f32 %v6369, %v1630
      %v7838 = vmul.f32 %v6376, %v1630
      %v7839 = vmul.f32 %v6383, %v1630
      %v7840 = vmul.f32 %v6390, %v1630
      %v7841 = vmul.f32 %v6397, %v1630
      %v7842 = vmul.f32 %v6404, %v1630
      %v7843 = vmul.f32 %v6411, %v1630
      %v7844 = vmul.f32 %v6418, %v1630
      %v7845 = vmul.f32 %v6425, %v1630
      %v7846 = vmul.f32 %v6432, %v1630
      %v7847 = vmul.f32 %v6439, %v1630
      %v7848 = vmul.f32 %v6446, %v1630
      %v7849 = vmul.f32 %v6453, %v1630
      %v7850 = vmul.f32 %v6460, %v1630
      %v7851 = vmul.f32 %v6467, %v1630
      %v7852 = vmul.f32 %v6474, %v1630
      %v7853 = vmul.f32 %v6481, %v1630
      %v7854 = vmul.f32 %v6488, %v1630
      %v7855 = vmul.f32 %v6495, %v1630
      %v7856 = vmul.f32 %v6502, %v1630
      %v7857 = vmul.f32 %v6509, %v1630
      %v7858 = vmul.f32 %v6516, %v1630
      %v7859 = vmul.f32 %v6523, %v1630
      %v7860 = vmul.f32 %v6530, %v1630
      %v7861 = vmul.f32 %v6537, %v1630
      %v7862 = vmul.f32 %v6544, %v1630
      %v7863 = vmul.f32 %v6551, %v1630
      %v7864 = vmul.f32 %v6558, %v1630
      %v7865 = vmul.f32 %v6565, %v1630
      %v7866 = vmul.f32 %v6572, %v1630
      %v7867 = vmul.f32 %v6579, %v1630
      %v7868 = vmul.f32 %v6586, %v1630
      %v7869 = vmul.f32 %v6593, %v1630
      %v7870 = vmul.f32 %v6600, %v1630
      %v7871 = vmul.f32 %v6607, %v1630
      %v7872 = vmul.f32 %v6614, %v1630
      %v7873 = vmul.f32 %v6621, %v1630
      %v7874 = vmul.f32 %v6628, %v1630
      %v7875 = vmul.f32 %v6635, %v1630
      %v7876 = vmul.f32 %v6642, %v1630
      %v7877 = vmul.f32 %v6649, %v1630
      %v7878 = vmul.f32 %v6656, %v1630
      %v7879 = vmul.f32 %v6663, %v1630
      %v7880 = vmul.f32 %v6670, %v1630
      %v7881 = vmul.f32 %v6677, %v1630
      %v7882 = vmul.f32 %v6684, %v1630
      %v7883 = vmul.f32 %v6691, %v1630
      %v7884 = vmul.f32 %v6698, %v1630
      %v7885 = vmul.f32 %v6705, %v1630
      %v7886 = vmul.f32 %v6712, %v1630
      %v7887 = vmul.f32 %v6719, %v1630
      %v7888 = vmul.f32 %v6726, %v1630
      %v7889 = vmul.f32 %v6733, %v1630
      %v7890 = vmul.f32 %v6740, %v1630
      %v7891 = vmul.f32 %v6747, %v1630
      %v7892 = vmul.f32 %v6754, %v1630
      %v7893 = vmul.f32 %v6761, %v1630
      %v7894 = vmul.f32 %v6768, %v1630
      %v7895 = vmul.f32 %v6775, %v1630
      %v7896 = vmul.f32 %v6782, %v1630
      %v7897 = vmul.f32 %v6789, %v1630
      %v7898 = vmul.f32 %v6796, %v1630
      %v7899 = vmul.f32 %v6803, %v1630
      %v7900 = vmul.f32 %v6810, %v1630
      %v7901 = vmul.f32 %v6817, %v1630
      %v7902 = vmul.f32 %v6824, %v1630
      %v7903 = vmul.f32 %v6831, %v1630
      %v7904 = vmul.f32 %v6838, %v1630
      %v7905 = vmul.f32 %v6845, %v1630
      %v7906 = vmul.f32 %v6852, %v1630
      %v7907 = vmul.f32 %v6859, %v1630
      %v7908 = vmul.f32 %v6866, %v1630
      %v7909 = vmul.f32 %v6873, %v1630
      %v7910 = vmul.f32 %v6880, %v1630
      %v7911 = vmul.f32 %v6887, %v1630
      %v7912 = vmul.f32 %v6894, %v1630
      %v7913 = vmul.f32 %v6901, %v1630
      %v7914 = vmul.f32 %v6908, %v1630
      %v7915 = vmul.f32 %v6915, %v1630
      %v7916 = vmul.f32 %v6922, %v1630
      %v7917 = vmul.f32 %v6929, %v1630
      %v7918 = vmul.f32 %v6936, %v1630
      %v7919 = vmul.f32 %v6943, %v1630
      %v7920 = vmul.f32 %v6950, %v1630
      %v7921 = vmul.f32 %v6957, %v1630
      %v7922 = vmul.f32 %v6964, %v1630
      %v7923 = vmul.f32 %v6971, %v1630
      %v7924 = vmul.f32 %v6978, %v1630
      %v7925 = vmul.f32 %v6985, %v1630
      %v7926 = vmul.f32 %v6992, %v1630
      %v7927 = vmul.f32 %v6999, %v1630
      %v7928 = vmul.f32 %v7006, %v1630
      %v7929 = vmul.f32 %v7013, %v1630
      %v7930 = vmul.f32 %v7020, %v1630
      %v7931 = vmul.f32 %v7027, %v1630
      %v7932 = vmul.f32 %v7034, %v1630
      %v7933 = vmul.f32 %v7041, %v1630
      %v7934 = vmul.f32 %v7048, %v1630
      %v7935 = vmul.f32 %v7055, %v1630
      %v7936 = vmul.f32 %v7062, %v1630
      %v7937 = vmul.f32 %v7069, %v1630
      %v7938 = vmul.f32 %v7076, %v1630
      %v7939 = vmul.f32 %v7083, %v1630
      %v7940 = vmul.f32 %v7090, %v1630
      %v7941 = vmul.f32 %v7097, %v1630
      %v7942 = vmul.f32 %v7104, %v1630
      %v7943 = vmul.f32 %v7111, %v1630
      %v7944 = vmul.f32 %v7118, %v1630
      %v7945 = vmul.f32 %v7125, %v1630
      %v7946 = vmul.f32 %v7132, %v1630
      %v7947 = vmul.f32 %v7139, %v1630
      %v7948 = vmul.f32 %v7146, %v1630
      %v7949 = vmul.f32 %v7153, %v1630
      %v7950 = vmul.f32 %v7160, %v1630
      %v7951 = vmul.f32 %v7167, %v1630
      %v7952 = vmul.f32 %v7174, %v1630
      %v7953 = vmul.f32 %v7181, %v1630
      %v7954 = vmul.f32 %v7188, %v1630
      %v7955 = vmul.f32 %v7195, %v1630
      %v7956 = vmul.f32 %v7202, %v1630
      %v7957 = vmul.f32 %v7209, %v1630
      %v7958 = vmul.f32 %v7216, %v1630
      %v7959 = vmul.f32 %v7223, %v1630
      %v7960 = vmul.f32 %v7230, %v1630
      %v7961 = vmul.f32 %v7237, %v1630
      %v7962 = vmul.f32 %v7244, %v1630
      %v7963 = vmul.f32 %v7251, %v1630
      %v7964 = vmul.f32 %v7258, %v1630
      %v7965 = vmul.f32 %v7265, %v1630
      %v7966 = vmul.f32 %v7272, %v1630
      %v7967 = vmul.f32 %v7279, %v1630
      %v7968 = vmul.f32 %v7286, %v1630
      %v7969 = vmul.f32 %v7293, %v1630
      %v7970 = vmul.f32 %v7300, %v1630
      %v7971 = vmul.f32 %v7307, %v1630
      %v7972 = vmul.f32 %v7314, %v1630
      %v7973 = vmul.f32 %v7321, %v1630
      %v7974 = vmul.f32 %v7328, %v1630
      %v7975 = vmul.f32 %v7335, %v1630
      %v7976 = vmul.f32 %v7342, %v1630
      %v7977 = vmul.f32 %v7349, %v1630
      %v7978 = vmul.f32 %v7356, %v1630
      %v7979 = vmul.f32 %v7363, %v1630
      %v7980 = vmul.f32 %v7370, %v1630
      %v7981 = vmul.f32 %v7377, %v1630
      %v7982 = vmul.f32 %v7384, %v1630
      %v7983 = vmul.f32 %v7391, %v1630
      %v7984 = vmul.f32 %v7398, %v1630
      %v7985 = vmul.f32 %v7405, %v1630
      %v7986 = vmul.f32 %v7412, %v1630
      %v7987 = vmul.f32 %v7419, %v1630
      %v7988 = vmul.f32 %v7426, %v1630
      %v7989 = vmul.f32 %v7433, %v1630
      %v7990 = vmul.f32 %v7440, %v1630
      %v7991 = vmul.f32 %v7447, %v1630
      %v7992 = vmul.f32 %v7454, %v1630
      %v7993 = vmul.f32 %v7461, %v1630
      %v7994 = vmul.f32 %v7468, %v1630
      %v7995 = vmul.f32 %v7475, %v1630
      %v7996 = vmul.f32 %v7482, %v1630
      %v7997 = vmul.f32 %v7489, %v1630
      %v7998 = vmul.f32 %v7496, %v1630
      %v7999 = vmul.f32 %v7503, %v1630
      %v8000 = vmul.f32 %v7510, %v1630
      %v8001 = vmul.f32 %v7517, %v1630
      %v8002 = vmul.f32 %v7524, %v1630
      %v8003 = vmul.f32 %v7531, %v1630
      %v8004 = vmul.f32 %v7538, %v1630
      %v8005 = vmul.f32 %v7545, %v1630
      %v8006 = vmul.f32 %v7552, %v1630
      %v8007 = vmul.f32 %v7559, %v1630
      %v8008 = vmul.f32 %v7566, %v1630
      %v8009 = vmul.f32 %v7573, %v1630
      %v8010 = vmul.f32 %v7580, %v1630
      %v8011 = vmul.f32 %v7587, %v1630
      %v8012 = vmul.f32 %v7594, %v1630
      %v8013 = vmul.f32 %v7601, %v1630
      %v8014 = vmul.f32 %v7608, %v1630
      %v8015 = vmul.f32 %v7615, %v1630
      %v8016 = vmul.f32 %v7622, %v1630
      %v8017 = vmul.f32 %v7629, %v1630
      %v8018 = vmul.f32 %v7636, %v1630
      %v8019 = vmul.f32 %v7643, %v1630
      %v8020 = vmul.f32 %v7650, %v1630
      %v8021 = vmul.f32 %v7657, %v1630
      %v8022 = vmul.f32 %v7664, %v1630
      %v8023 = vmul.f32 %v7671, %v1630
      %v8024 = vmul.f32 %v7678, %v1630
      %v8025 = vmul.f32 %v7685, %v1630
      %v8026 = vmul.f32 %v7692, %v1630
      %v8027 = vmul.f32 %v7699, %v1630
      %v8028 = vmul.f32 %v7706, %v1630
      %v8029 = vmul.f32 %v7713, %v1630
      %v8030 = vmul.f32 %v7720, %v1630
      %v8031 = vmul.f32 %v7727, %v1630
      %v8032 = vmul.f32 %v7734, %v1630
      %v8033 = vmul.f32 %v7741, %v1630
      %v8034 = vmul.f32 %v7748, %v1630
      %v8035 = vmul.f32 %v7755, %v1630
      %v8036 = vmul.f32 %v7762, %v1630
      %v8037 = vmul.f32 %v7769, %v1630
      %v8038 = vmul.f32 %v7776, %v1630
      %v8039 = vmul.f32 %v7783, %v1630
      %vm8040 = vcmask 31744
      %v8041 = vsel %vm8040, %v7784, 0.0
      %v8042 = vrot.slane %v8041, 4
      %v8043 = vadd.f32 %v8041, %v8042
      %v8044 = vrot.slane %v8043, 2
      %v8045 = vadd.f32 %v8043, %v8044
      %v8046 = vrot.slane %v8045, 1
      %v8047 = vadd.f32 %v8045, %v8046
      %v8048 = vsel %vm8040, %v7785, 0.0
      %v8049 = vrot.slane %v8048, 4
      %v8050 = vadd.f32 %v8048, %v8049
      %v8051 = vrot.slane %v8050, 2
      %v8052 = vadd.f32 %v8050, %v8051
      %v8053 = vrot.slane %v8052, 1
      %v8054 = vadd.f32 %v8052, %v8053
      %v8055 = vsel %vm8040, %v7786, 0.0
      %v8056 = vrot.slane %v8055, 4
      %v8057 = vadd.f32 %v8055, %v8056
      %v8058 = vrot.slane %v8057, 2
      %v8059 = vadd.f32 %v8057, %v8058
      %v8060 = vrot.slane %v8059, 1
      %v8061 = vadd.f32 %v8059, %v8060
      %v8062 = vsel %vm8040, %v7787, 0.0
      %v8063 = vrot.slane %v8062, 4
      %v8064 = vadd.f32 %v8062, %v8063
      %v8065 = vrot.slane %v8064, 2
      %v8066 = vadd.f32 %v8064, %v8065
      %v8067 = vrot.slane %v8066, 1
      %v8068 = vadd.f32 %v8066, %v8067
      %v8069 = vsel %vm8040, %v7788, 0.0
      %v8070 = vrot.slane %v8069, 4
      %v8071 = vadd.f32 %v8069, %v8070
      %v8072 = vrot.slane %v8071, 2
      %v8073 = vadd.f32 %v8071, %v8072
      %v8074 = vrot.slane %v8073, 1
      %v8075 = vadd.f32 %v8073, %v8074
      %v8076 = vsel %vm8040, %v7789, 0.0
      %v8077 = vrot.slane %v8076, 4
      %v8078 = vadd.f32 %v8076, %v8077
      %v8079 = vrot.slane %v8078, 2
      %v8080 = vadd.f32 %v8078, %v8079
      %v8081 = vrot.slane %v8080, 1
      %v8082 = vadd.f32 %v8080, %v8081
      %v8083 = vsel %vm8040, %v7790, 0.0
      %v8084 = vrot.slane %v8083, 4
      %v8085 = vadd.f32 %v8083, %v8084
      %v8086 = vrot.slane %v8085, 2
      %v8087 = vadd.f32 %v8085, %v8086
      %v8088 = vrot.slane %v8087, 1
      %v8089 = vadd.f32 %v8087, %v8088
      %v8090 = vsel %vm8040, %v7791, 0.0
      %v8091 = vrot.slane %v8090, 4
      %v8092 = vadd.f32 %v8090, %v8091
      %v8093 = vrot.slane %v8092, 2
      %v8094 = vadd.f32 %v8092, %v8093
      %v8095 = vrot.slane %v8094, 1
      %v8096 = vadd.f32 %v8094, %v8095
      %v8097 = vsel %vm8040, %v7792, 0.0
      %v8098 = vrot.slane %v8097, 4
      %v8099 = vadd.f32 %v8097, %v8098
      %v8100 = vrot.slane %v8099, 2
      %v8101 = vadd.f32 %v8099, %v8100
      %v8102 = vrot.slane %v8101, 1
      %v8103 = vadd.f32 %v8101, %v8102
      %v8104 = vsel %vm8040, %v7793, 0.0
      %v8105 = vrot.slane %v8104, 4
      %v8106 = vadd.f32 %v8104, %v8105
      %v8107 = vrot.slane %v8106, 2
      %v8108 = vadd.f32 %v8106, %v8107
      %v8109 = vrot.slane %v8108, 1
      %v8110 = vadd.f32 %v8108, %v8109
      %v8111 = vsel %vm8040, %v7794, 0.0
      %v8112 = vrot.slane %v8111, 4
      %v8113 = vadd.f32 %v8111, %v8112
      %v8114 = vrot.slane %v8113, 2
      %v8115 = vadd.f32 %v8113, %v8114
      %v8116 = vrot.slane %v8115, 1
      %v8117 = vadd.f32 %v8115, %v8116
      %v8118 = vsel %vm8040, %v7795, 0.0
      %v8119 = vrot.slane %v8118, 4
      %v8120 = vadd.f32 %v8118, %v8119
      %v8121 = vrot.slane %v8120, 2
      %v8122 = vadd.f32 %v8120, %v8121
      %v8123 = vrot.slane %v8122, 1
      %v8124 = vadd.f32 %v8122, %v8123
      %v8125 = vsel %vm8040, %v7796, 0.0
      %v8126 = vrot.slane %v8125, 4
      %v8127 = vadd.f32 %v8125, %v8126
      %v8128 = vrot.slane %v8127, 2
      %v8129 = vadd.f32 %v8127, %v8128
      %v8130 = vrot.slane %v8129, 1
      %v8131 = vadd.f32 %v8129, %v8130
      %v8132 = vsel %vm8040, %v7797, 0.0
      %v8133 = vrot.slane %v8132, 4
      %v8134 = vadd.f32 %v8132, %v8133
      %v8135 = vrot.slane %v8134, 2
      %v8136 = vadd.f32 %v8134, %v8135
      %v8137 = vrot.slane %v8136, 1
      %v8138 = vadd.f32 %v8136, %v8137
      %v8139 = vsel %vm8040, %v7798, 0.0
      %v8140 = vrot.slane %v8139, 4
      %v8141 = vadd.f32 %v8139, %v8140
      %v8142 = vrot.slane %v8141, 2
      %v8143 = vadd.f32 %v8141, %v8142
      %v8144 = vrot.slane %v8143, 1
      %v8145 = vadd.f32 %v8143, %v8144
      %v8146 = vsel %vm8040, %v7799, 0.0
      %v8147 = vrot.slane %v8146, 4
      %v8148 = vadd.f32 %v8146, %v8147
      %v8149 = vrot.slane %v8148, 2
      %v8150 = vadd.f32 %v8148, %v8149
      %v8151 = vrot.slane %v8150, 1
      %v8152 = vadd.f32 %v8150, %v8151
      %v8153 = vsel %vm8040, %v7800, 0.0
      %v8154 = vrot.slane %v8153, 4
      %v8155 = vadd.f32 %v8153, %v8154
      %v8156 = vrot.slane %v8155, 2
      %v8157 = vadd.f32 %v8155, %v8156
      %v8158 = vrot.slane %v8157, 1
      %v8159 = vadd.f32 %v8157, %v8158
      %v8160 = vsel %vm8040, %v7801, 0.0
      %v8161 = vrot.slane %v8160, 4
      %v8162 = vadd.f32 %v8160, %v8161
      %v8163 = vrot.slane %v8162, 2
      %v8164 = vadd.f32 %v8162, %v8163
      %v8165 = vrot.slane %v8164, 1
      %v8166 = vadd.f32 %v8164, %v8165
      %v8167 = vsel %vm8040, %v7802, 0.0
      %v8168 = vrot.slane %v8167, 4
      %v8169 = vadd.f32 %v8167, %v8168
      %v8170 = vrot.slane %v8169, 2
      %v8171 = vadd.f32 %v8169, %v8170
      %v8172 = vrot.slane %v8171, 1
      %v8173 = vadd.f32 %v8171, %v8172
      %v8174 = vsel %vm8040, %v7803, 0.0
      %v8175 = vrot.slane %v8174, 4
      %v8176 = vadd.f32 %v8174, %v8175
      %v8177 = vrot.slane %v8176, 2
      %v8178 = vadd.f32 %v8176, %v8177
      %v8179 = vrot.slane %v8178, 1
      %v8180 = vadd.f32 %v8178, %v8179
      %v8181 = vsel %vm8040, %v7804, 0.0
      %v8182 = vrot.slane %v8181, 4
      %v8183 = vadd.f32 %v8181, %v8182
      %v8184 = vrot.slane %v8183, 2
      %v8185 = vadd.f32 %v8183, %v8184
      %v8186 = vrot.slane %v8185, 1
      %v8187 = vadd.f32 %v8185, %v8186
      %v8188 = vsel %vm8040, %v7805, 0.0
      %v8189 = vrot.slane %v8188, 4
      %v8190 = vadd.f32 %v8188, %v8189
      %v8191 = vrot.slane %v8190, 2
      %v8192 = vadd.f32 %v8190, %v8191
      %v8193 = vrot.slane %v8192, 1
      %v8194 = vadd.f32 %v8192, %v8193
      %v8195 = vsel %vm8040, %v7806, 0.0
      %v8196 = vrot.slane %v8195, 4
      %v8197 = vadd.f32 %v8195, %v8196
      %v8198 = vrot.slane %v8197, 2
      %v8199 = vadd.f32 %v8197, %v8198
      %v8200 = vrot.slane %v8199, 1
      %v8201 = vadd.f32 %v8199, %v8200
      %v8202 = vsel %vm8040, %v7807, 0.0
      %v8203 = vrot.slane %v8202, 4
      %v8204 = vadd.f32 %v8202, %v8203
      %v8205 = vrot.slane %v8204, 2
      %v8206 = vadd.f32 %v8204, %v8205
      %v8207 = vrot.slane %v8206, 1
      %v8208 = vadd.f32 %v8206, %v8207
      %v8209 = vsel %vm8040, %v7808, 0.0
      %v8210 = vrot.slane %v8209, 4
      %v8211 = vadd.f32 %v8209, %v8210
      %v8212 = vrot.slane %v8211, 2
      %v8213 = vadd.f32 %v8211, %v8212
      %v8214 = vrot.slane %v8213, 1
      %v8215 = vadd.f32 %v8213, %v8214
      %v8216 = vsel %vm8040, %v7809, 0.0
      %v8217 = vrot.slane %v8216, 4
      %v8218 = vadd.f32 %v8216, %v8217
      %v8219 = vrot.slane %v8218, 2
      %v8220 = vadd.f32 %v8218, %v8219
      %v8221 = vrot.slane %v8220, 1
      %v8222 = vadd.f32 %v8220, %v8221
      %v8223 = vsel %vm8040, %v7810, 0.0
      %v8224 = vrot.slane %v8223, 4
      %v8225 = vadd.f32 %v8223, %v8224
      %v8226 = vrot.slane %v8225, 2
      %v8227 = vadd.f32 %v8225, %v8226
      %v8228 = vrot.slane %v8227, 1
      %v8229 = vadd.f32 %v8227, %v8228
      %v8230 = vsel %vm8040, %v7811, 0.0
      %v8231 = vrot.slane %v8230, 4
      %v8232 = vadd.f32 %v8230, %v8231
      %v8233 = vrot.slane %v8232, 2
      %v8234 = vadd.f32 %v8232, %v8233
      %v8235 = vrot.slane %v8234, 1
      %v8236 = vadd.f32 %v8234, %v8235
      %v8237 = vsel %vm8040, %v7812, 0.0
      %v8238 = vrot.slane %v8237, 4
      %v8239 = vadd.f32 %v8237, %v8238
      %v8240 = vrot.slane %v8239, 2
      %v8241 = vadd.f32 %v8239, %v8240
      %v8242 = vrot.slane %v8241, 1
      %v8243 = vadd.f32 %v8241, %v8242
      %v8244 = vsel %vm8040, %v7813, 0.0
      %v8245 = vrot.slane %v8244, 4
      %v8246 = vadd.f32 %v8244, %v8245
      %v8247 = vrot.slane %v8246, 2
      %v8248 = vadd.f32 %v8246, %v8247
      %v8249 = vrot.slane %v8248, 1
      %v8250 = vadd.f32 %v8248, %v8249
      %v8251 = vsel %vm8040, %v7814, 0.0
      %v8252 = vrot.slane %v8251, 4
      %v8253 = vadd.f32 %v8251, %v8252
      %v8254 = vrot.slane %v8253, 2
      %v8255 = vadd.f32 %v8253, %v8254
      %v8256 = vrot.slane %v8255, 1
      %v8257 = vadd.f32 %v8255, %v8256
      %v8258 = vsel %vm8040, %v7815, 0.0
      %v8259 = vrot.slane %v8258, 4
      %v8260 = vadd.f32 %v8258, %v8259
      %v8261 = vrot.slane %v8260, 2
      %v8262 = vadd.f32 %v8260, %v8261
      %v8263 = vrot.slane %v8262, 1
      %v8264 = vadd.f32 %v8262, %v8263
      %v8265 = vsel %vm8040, %v7816, 0.0
      %v8266 = vrot.slane %v8265, 4
      %v8267 = vadd.f32 %v8265, %v8266
      %v8268 = vrot.slane %v8267, 2
      %v8269 = vadd.f32 %v8267, %v8268
      %v8270 = vrot.slane %v8269, 1
      %v8271 = vadd.f32 %v8269, %v8270
      %v8272 = vsel %vm8040, %v7817, 0.0
      %v8273 = vrot.slane %v8272, 4
      %v8274 = vadd.f32 %v8272, %v8273
      %v8275 = vrot.slane %v8274, 2
      %v8276 = vadd.f32 %v8274, %v8275
      %v8277 = vrot.slane %v8276, 1
      %v8278 = vadd.f32 %v8276, %v8277
      %v8279 = vsel %vm8040, %v7818, 0.0
      %v8280 = vrot.slane %v8279, 4
      %v8281 = vadd.f32 %v8279, %v8280
      %v8282 = vrot.slane %v8281, 2
      %v8283 = vadd.f32 %v8281, %v8282
      %v8284 = vrot.slane %v8283, 1
      %v8285 = vadd.f32 %v8283, %v8284
      %v8286 = vsel %vm8040, %v7819, 0.0
      %v8287 = vrot.slane %v8286, 4
      %v8288 = vadd.f32 %v8286, %v8287
      %v8289 = vrot.slane %v8288, 2
      %v8290 = vadd.f32 %v8288, %v8289
      %v8291 = vrot.slane %v8290, 1
      %v8292 = vadd.f32 %v8290, %v8291
      %v8293 = vsel %vm8040, %v7820, 0.0
      %v8294 = vrot.slane %v8293, 4
      %v8295 = vadd.f32 %v8293, %v8294
      %v8296 = vrot.slane %v8295, 2
      %v8297 = vadd.f32 %v8295, %v8296
      %v8298 = vrot.slane %v8297, 1
      %v8299 = vadd.f32 %v8297, %v8298
      %v8300 = vsel %vm8040, %v7821, 0.0
      %v8301 = vrot.slane %v8300, 4
      %v8302 = vadd.f32 %v8300, %v8301
      %v8303 = vrot.slane %v8302, 2
      %v8304 = vadd.f32 %v8302, %v8303
      %v8305 = vrot.slane %v8304, 1
      %v8306 = vadd.f32 %v8304, %v8305
      %v8307 = vsel %vm8040, %v7822, 0.0
      %v8308 = vrot.slane %v8307, 4
      %v8309 = vadd.f32 %v8307, %v8308
      %v8310 = vrot.slane %v8309, 2
      %v8311 = vadd.f32 %v8309, %v8310
      %v8312 = vrot.slane %v8311, 1
      %v8313 = vadd.f32 %v8311, %v8312
      %v8314 = vsel %vm8040, %v7823, 0.0
      %v8315 = vrot.slane %v8314, 4
      %v8316 = vadd.f32 %v8314, %v8315
      %v8317 = vrot.slane %v8316, 2
      %v8318 = vadd.f32 %v8316, %v8317
      %v8319 = vrot.slane %v8318, 1
      %v8320 = vadd.f32 %v8318, %v8319
      %v8321 = vsel %vm8040, %v7824, 0.0
      %v8322 = vrot.slane %v8321, 4
      %v8323 = vadd.f32 %v8321, %v8322
      %v8324 = vrot.slane %v8323, 2
      %v8325 = vadd.f32 %v8323, %v8324
      %v8326 = vrot.slane %v8325, 1
      %v8327 = vadd.f32 %v8325, %v8326
      %v8328 = vsel %vm8040, %v7825, 0.0
      %v8329 = vrot.slane %v8328, 4
      %v8330 = vadd.f32 %v8328, %v8329
      %v8331 = vrot.slane %v8330, 2
      %v8332 = vadd.f32 %v8330, %v8331
      %v8333 = vrot.slane %v8332, 1
      %v8334 = vadd.f32 %v8332, %v8333
      %v8335 = vsel %vm8040, %v7826, 0.0
      %v8336 = vrot.slane %v8335, 4
      %v8337 = vadd.f32 %v8335, %v8336
      %v8338 = vrot.slane %v8337, 2
      %v8339 = vadd.f32 %v8337, %v8338
      %v8340 = vrot.slane %v8339, 1
      %v8341 = vadd.f32 %v8339, %v8340
      %v8342 = vsel %vm8040, %v7827, 0.0
      %v8343 = vrot.slane %v8342, 4
      %v8344 = vadd.f32 %v8342, %v8343
      %v8345 = vrot.slane %v8344, 2
      %v8346 = vadd.f32 %v8344, %v8345
      %v8347 = vrot.slane %v8346, 1
      %v8348 = vadd.f32 %v8346, %v8347
      %v8349 = vsel %vm8040, %v7828, 0.0
      %v8350 = vrot.slane %v8349, 4
      %v8351 = vadd.f32 %v8349, %v8350
      %v8352 = vrot.slane %v8351, 2
      %v8353 = vadd.f32 %v8351, %v8352
      %v8354 = vrot.slane %v8353, 1
      %v8355 = vadd.f32 %v8353, %v8354
      %v8356 = vsel %vm8040, %v7829, 0.0
      %v8357 = vrot.slane %v8356, 4
      %v8358 = vadd.f32 %v8356, %v8357
      %v8359 = vrot.slane %v8358, 2
      %v8360 = vadd.f32 %v8358, %v8359
      %v8361 = vrot.slane %v8360, 1
      %v8362 = vadd.f32 %v8360, %v8361
      %v8363 = vsel %vm8040, %v7830, 0.0
      %v8364 = vrot.slane %v8363, 4
      %v8365 = vadd.f32 %v8363, %v8364
      %v8366 = vrot.slane %v8365, 2
      %v8367 = vadd.f32 %v8365, %v8366
      %v8368 = vrot.slane %v8367, 1
      %v8369 = vadd.f32 %v8367, %v8368
      %v8370 = vsel %vm8040, %v7831, 0.0
      %v8371 = vrot.slane %v8370, 4
      %v8372 = vadd.f32 %v8370, %v8371
      %v8373 = vrot.slane %v8372, 2
      %v8374 = vadd.f32 %v8372, %v8373
      %v8375 = vrot.slane %v8374, 1
      %v8376 = vadd.f32 %v8374, %v8375
      %v8377 = vsel %vm8040, %v7832, 0.0
      %v8378 = vrot.slane %v8377, 4
      %v8379 = vadd.f32 %v8377, %v8378
      %v8380 = vrot.slane %v8379, 2
      %v8381 = vadd.f32 %v8379, %v8380
      %v8382 = vrot.slane %v8381, 1
      %v8383 = vadd.f32 %v8381, %v8382
      %v8384 = vsel %vm8040, %v7833, 0.0
      %v8385 = vrot.slane %v8384, 4
      %v8386 = vadd.f32 %v8384, %v8385
      %v8387 = vrot.slane %v8386, 2
      %v8388 = vadd.f32 %v8386, %v8387
      %v8389 = vrot.slane %v8388, 1
      %v8390 = vadd.f32 %v8388, %v8389
      %v8391 = vsel %vm8040, %v7834, 0.0
      %v8392 = vrot.slane %v8391, 4
      %v8393 = vadd.f32 %v8391, %v8392
      %v8394 = vrot.slane %v8393, 2
      %v8395 = vadd.f32 %v8393, %v8394
      %v8396 = vrot.slane %v8395, 1
      %v8397 = vadd.f32 %v8395, %v8396
      %v8398 = vsel %vm8040, %v7835, 0.0
      %v8399 = vrot.slane %v8398, 4
      %v8400 = vadd.f32 %v8398, %v8399
      %v8401 = vrot.slane %v8400, 2
      %v8402 = vadd.f32 %v8400, %v8401
      %v8403 = vrot.slane %v8402, 1
      %v8404 = vadd.f32 %v8402, %v8403
      %v8405 = vsel %vm8040, %v7836, 0.0
      %v8406 = vrot.slane %v8405, 4
      %v8407 = vadd.f32 %v8405, %v8406
      %v8408 = vrot.slane %v8407, 2
      %v8409 = vadd.f32 %v8407, %v8408
      %v8410 = vrot.slane %v8409, 1
      %v8411 = vadd.f32 %v8409, %v8410
      %v8412 = vsel %vm8040, %v7837, 0.0
      %v8413 = vrot.slane %v8412, 4
      %v8414 = vadd.f32 %v8412, %v8413
      %v8415 = vrot.slane %v8414, 2
      %v8416 = vadd.f32 %v8414, %v8415
      %v8417 = vrot.slane %v8416, 1
      %v8418 = vadd.f32 %v8416, %v8417
      %v8419 = vsel %vm8040, %v7838, 0.0
      %v8420 = vrot.slane %v8419, 4
      %v8421 = vadd.f32 %v8419, %v8420
      %v8422 = vrot.slane %v8421, 2
      %v8423 = vadd.f32 %v8421, %v8422
      %v8424 = vrot.slane %v8423, 1
      %v8425 = vadd.f32 %v8423, %v8424
      %v8426 = vsel %vm8040, %v7839, 0.0
      %v8427 = vrot.slane %v8426, 4
      %v8428 = vadd.f32 %v8426, %v8427
      %v8429 = vrot.slane %v8428, 2
      %v8430 = vadd.f32 %v8428, %v8429
      %v8431 = vrot.slane %v8430, 1
      %v8432 = vadd.f32 %v8430, %v8431
      %v8433 = vsel %vm8040, %v7840, 0.0
      %v8434 = vrot.slane %v8433, 4
      %v8435 = vadd.f32 %v8433, %v8434
      %v8436 = vrot.slane %v8435, 2
      %v8437 = vadd.f32 %v8435, %v8436
      %v8438 = vrot.slane %v8437, 1
      %v8439 = vadd.f32 %v8437, %v8438
      %v8440 = vsel %vm8040, %v7841, 0.0
      %v8441 = vrot.slane %v8440, 4
      %v8442 = vadd.f32 %v8440, %v8441
      %v8443 = vrot.slane %v8442, 2
      %v8444 = vadd.f32 %v8442, %v8443
      %v8445 = vrot.slane %v8444, 1
      %v8446 = vadd.f32 %v8444, %v8445
      %v8447 = vsel %vm8040, %v7842, 0.0
      %v8448 = vrot.slane %v8447, 4
      %v8449 = vadd.f32 %v8447, %v8448
      %v8450 = vrot.slane %v8449, 2
      %v8451 = vadd.f32 %v8449, %v8450
      %v8452 = vrot.slane %v8451, 1
      %v8453 = vadd.f32 %v8451, %v8452
      %v8454 = vsel %vm8040, %v7843, 0.0
      %v8455 = vrot.slane %v8454, 4
      %v8456 = vadd.f32 %v8454, %v8455
      %v8457 = vrot.slane %v8456, 2
      %v8458 = vadd.f32 %v8456, %v8457
      %v8459 = vrot.slane %v8458, 1
      %v8460 = vadd.f32 %v8458, %v8459
      %v8461 = vsel %vm8040, %v7844, 0.0
      %v8462 = vrot.slane %v8461, 4
      %v8463 = vadd.f32 %v8461, %v8462
      %v8464 = vrot.slane %v8463, 2
      %v8465 = vadd.f32 %v8463, %v8464
      %v8466 = vrot.slane %v8465, 1
      %v8467 = vadd.f32 %v8465, %v8466
      %v8468 = vsel %vm8040, %v7845, 0.0
      %v8469 = vrot.slane %v8468, 4
      %v8470 = vadd.f32 %v8468, %v8469
      %v8471 = vrot.slane %v8470, 2
      %v8472 = vadd.f32 %v8470, %v8471
      %v8473 = vrot.slane %v8472, 1
      %v8474 = vadd.f32 %v8472, %v8473
      %v8475 = vsel %vm8040, %v7846, 0.0
      %v8476 = vrot.slane %v8475, 4
      %v8477 = vadd.f32 %v8475, %v8476
      %v8478 = vrot.slane %v8477, 2
      %v8479 = vadd.f32 %v8477, %v8478
      %v8480 = vrot.slane %v8479, 1
      %v8481 = vadd.f32 %v8479, %v8480
      %v8482 = vsel %vm8040, %v7847, 0.0
      %v8483 = vrot.slane %v8482, 4
      %v8484 = vadd.f32 %v8482, %v8483
      %v8485 = vrot.slane %v8484, 2
      %v8486 = vadd.f32 %v8484, %v8485
      %v8487 = vrot.slane %v8486, 1
      %v8488 = vadd.f32 %v8486, %v8487
      %v8489 = vsel %vm8040, %v7848, 0.0
      %v8490 = vrot.slane %v8489, 4
      %v8491 = vadd.f32 %v8489, %v8490
      %v8492 = vrot.slane %v8491, 2
      %v8493 = vadd.f32 %v8491, %v8492
      %v8494 = vrot.slane %v8493, 1
      %v8495 = vadd.f32 %v8493, %v8494
      %v8496 = vsel %vm8040, %v7849, 0.0
      %v8497 = vrot.slane %v8496, 4
      %v8498 = vadd.f32 %v8496, %v8497
      %v8499 = vrot.slane %v8498, 2
      %v8500 = vadd.f32 %v8498, %v8499
      %v8501 = vrot.slane %v8500, 1
      %v8502 = vadd.f32 %v8500, %v8501
      %v8503 = vsel %vm8040, %v7850, 0.0
      %v8504 = vrot.slane %v8503, 4
      %v8505 = vadd.f32 %v8503, %v8504
      %v8506 = vrot.slane %v8505, 2
      %v8507 = vadd.f32 %v8505, %v8506
      %v8508 = vrot.slane %v8507, 1
      %v8509 = vadd.f32 %v8507, %v8508
      %v8510 = vsel %vm8040, %v7851, 0.0
      %v8511 = vrot.slane %v8510, 4
      %v8512 = vadd.f32 %v8510, %v8511
      %v8513 = vrot.slane %v8512, 2
      %v8514 = vadd.f32 %v8512, %v8513
      %v8515 = vrot.slane %v8514, 1
      %v8516 = vadd.f32 %v8514, %v8515
      %v8517 = vsel %vm8040, %v7852, 0.0
      %v8518 = vrot.slane %v8517, 4
      %v8519 = vadd.f32 %v8517, %v8518
      %v8520 = vrot.slane %v8519, 2
      %v8521 = vadd.f32 %v8519, %v8520
      %v8522 = vrot.slane %v8521, 1
      %v8523 = vadd.f32 %v8521, %v8522
      %v8524 = vsel %vm8040, %v7853, 0.0
      %v8525 = vrot.slane %v8524, 4
      %v8526 = vadd.f32 %v8524, %v8525
      %v8527 = vrot.slane %v8526, 2
      %v8528 = vadd.f32 %v8526, %v8527
      %v8529 = vrot.slane %v8528, 1
      %v8530 = vadd.f32 %v8528, %v8529
      %v8531 = vsel %vm8040, %v7854, 0.0
      %v8532 = vrot.slane %v8531, 4
      %v8533 = vadd.f32 %v8531, %v8532
      %v8534 = vrot.slane %v8533, 2
      %v8535 = vadd.f32 %v8533, %v8534
      %v8536 = vrot.slane %v8535, 1
      %v8537 = vadd.f32 %v8535, %v8536
      %v8538 = vsel %vm8040, %v7855, 0.0
      %v8539 = vrot.slane %v8538, 4
      %v8540 = vadd.f32 %v8538, %v8539
      %v8541 = vrot.slane %v8540, 2
      %v8542 = vadd.f32 %v8540, %v8541
      %v8543 = vrot.slane %v8542, 1
      %v8544 = vadd.f32 %v8542, %v8543
      %v8545 = vsel %vm8040, %v7856, 0.0
      %v8546 = vrot.slane %v8545, 4
      %v8547 = vadd.f32 %v8545, %v8546
      %v8548 = vrot.slane %v8547, 2
      %v8549 = vadd.f32 %v8547, %v8548
      %v8550 = vrot.slane %v8549, 1
      %v8551 = vadd.f32 %v8549, %v8550
      %v8552 = vsel %vm8040, %v7857, 0.0
      %v8553 = vrot.slane %v8552, 4
      %v8554 = vadd.f32 %v8552, %v8553
      %v8555 = vrot.slane %v8554, 2
      %v8556 = vadd.f32 %v8554, %v8555
      %v8557 = vrot.slane %v8556, 1
      %v8558 = vadd.f32 %v8556, %v8557
      %v8559 = vsel %vm8040, %v7858, 0.0
      %v8560 = vrot.slane %v8559, 4
      %v8561 = vadd.f32 %v8559, %v8560
      %v8562 = vrot.slane %v8561, 2
      %v8563 = vadd.f32 %v8561, %v8562
      %v8564 = vrot.slane %v8563, 1
      %v8565 = vadd.f32 %v8563, %v8564
      %v8566 = vsel %vm8040, %v7859, 0.0
      %v8567 = vrot.slane %v8566, 4
      %v8568 = vadd.f32 %v8566, %v8567
      %v8569 = vrot.slane %v8568, 2
      %v8570 = vadd.f32 %v8568, %v8569
      %v8571 = vrot.slane %v8570, 1
      %v8572 = vadd.f32 %v8570, %v8571
      %v8573 = vsel %vm8040, %v7860, 0.0
      %v8574 = vrot.slane %v8573, 4
      %v8575 = vadd.f32 %v8573, %v8574
      %v8576 = vrot.slane %v8575, 2
      %v8577 = vadd.f32 %v8575, %v8576
      %v8578 = vrot.slane %v8577, 1
      %v8579 = vadd.f32 %v8577, %v8578
      %v8580 = vsel %vm8040, %v7861, 0.0
      %v8581 = vrot.slane %v8580, 4
      %v8582 = vadd.f32 %v8580, %v8581
      %v8583 = vrot.slane %v8582, 2
      %v8584 = vadd.f32 %v8582, %v8583
      %v8585 = vrot.slane %v8584, 1
      %v8586 = vadd.f32 %v8584, %v8585
      %v8587 = vsel %vm8040, %v7862, 0.0
      %v8588 = vrot.slane %v8587, 4
      %v8589 = vadd.f32 %v8587, %v8588
      %v8590 = vrot.slane %v8589, 2
      %v8591 = vadd.f32 %v8589, %v8590
      %v8592 = vrot.slane %v8591, 1
      %v8593 = vadd.f32 %v8591, %v8592
      %v8594 = vsel %vm8040, %v7863, 0.0
      %v8595 = vrot.slane %v8594, 4
      %v8596 = vadd.f32 %v8594, %v8595
      %v8597 = vrot.slane %v8596, 2
      %v8598 = vadd.f32 %v8596, %v8597
      %v8599 = vrot.slane %v8598, 1
      %v8600 = vadd.f32 %v8598, %v8599
      %v8601 = vsel %vm8040, %v7864, 0.0
      %v8602 = vrot.slane %v8601, 4
      %v8603 = vadd.f32 %v8601, %v8602
      %v8604 = vrot.slane %v8603, 2
      %v8605 = vadd.f32 %v8603, %v8604
      %v8606 = vrot.slane %v8605, 1
      %v8607 = vadd.f32 %v8605, %v8606
      %v8608 = vsel %vm8040, %v7865, 0.0
      %v8609 = vrot.slane %v8608, 4
      %v8610 = vadd.f32 %v8608, %v8609
      %v8611 = vrot.slane %v8610, 2
      %v8612 = vadd.f32 %v8610, %v8611
      %v8613 = vrot.slane %v8612, 1
      %v8614 = vadd.f32 %v8612, %v8613
      %v8615 = vsel %vm8040, %v7866, 0.0
      %v8616 = vrot.slane %v8615, 4
      %v8617 = vadd.f32 %v8615, %v8616
      %v8618 = vrot.slane %v8617, 2
      %v8619 = vadd.f32 %v8617, %v8618
      %v8620 = vrot.slane %v8619, 1
      %v8621 = vadd.f32 %v8619, %v8620
      %v8622 = vsel %vm8040, %v7867, 0.0
      %v8623 = vrot.slane %v8622, 4
      %v8624 = vadd.f32 %v8622, %v8623
      %v8625 = vrot.slane %v8624, 2
      %v8626 = vadd.f32 %v8624, %v8625
      %v8627 = vrot.slane %v8626, 1
      %v8628 = vadd.f32 %v8626, %v8627
      %v8629 = vsel %vm8040, %v7868, 0.0
      %v8630 = vrot.slane %v8629, 4
      %v8631 = vadd.f32 %v8629, %v8630
      %v8632 = vrot.slane %v8631, 2
      %v8633 = vadd.f32 %v8631, %v8632
      %v8634 = vrot.slane %v8633, 1
      %v8635 = vadd.f32 %v8633, %v8634
      %v8636 = vsel %vm8040, %v7869, 0.0
      %v8637 = vrot.slane %v8636, 4
      %v8638 = vadd.f32 %v8636, %v8637
      %v8639 = vrot.slane %v8638, 2
      %v8640 = vadd.f32 %v8638, %v8639
      %v8641 = vrot.slane %v8640, 1
      %v8642 = vadd.f32 %v8640, %v8641
      %v8643 = vsel %vm8040, %v7870, 0.0
      %v8644 = vrot.slane %v8643, 4
      %v8645 = vadd.f32 %v8643, %v8644
      %v8646 = vrot.slane %v8645, 2
      %v8647 = vadd.f32 %v8645, %v8646
      %v8648 = vrot.slane %v8647, 1
      %v8649 = vadd.f32 %v8647, %v8648
      %v8650 = vsel %vm8040, %v7871, 0.0
      %v8651 = vrot.slane %v8650, 4
      %v8652 = vadd.f32 %v8650, %v8651
      %v8653 = vrot.slane %v8652, 2
      %v8654 = vadd.f32 %v8652, %v8653
      %v8655 = vrot.slane %v8654, 1
      %v8656 = vadd.f32 %v8654, %v8655
      %v8657 = vsel %vm8040, %v7872, 0.0
      %v8658 = vrot.slane %v8657, 4
      %v8659 = vadd.f32 %v8657, %v8658
      %v8660 = vrot.slane %v8659, 2
      %v8661 = vadd.f32 %v8659, %v8660
      %v8662 = vrot.slane %v8661, 1
      %v8663 = vadd.f32 %v8661, %v8662
      %v8664 = vsel %vm8040, %v7873, 0.0
      %v8665 = vrot.slane %v8664, 4
      %v8666 = vadd.f32 %v8664, %v8665
      %v8667 = vrot.slane %v8666, 2
      %v8668 = vadd.f32 %v8666, %v8667
      %v8669 = vrot.slane %v8668, 1
      %v8670 = vadd.f32 %v8668, %v8669
      %v8671 = vsel %vm8040, %v7874, 0.0
      %v8672 = vrot.slane %v8671, 4
      %v8673 = vadd.f32 %v8671, %v8672
      %v8674 = vrot.slane %v8673, 2
      %v8675 = vadd.f32 %v8673, %v8674
      %v8676 = vrot.slane %v8675, 1
      %v8677 = vadd.f32 %v8675, %v8676
      %v8678 = vsel %vm8040, %v7875, 0.0
      %v8679 = vrot.slane %v8678, 4
      %v8680 = vadd.f32 %v8678, %v8679
      %v8681 = vrot.slane %v8680, 2
      %v8682 = vadd.f32 %v8680, %v8681
      %v8683 = vrot.slane %v8682, 1
      %v8684 = vadd.f32 %v8682, %v8683
      %v8685 = vsel %vm8040, %v7876, 0.0
      %v8686 = vrot.slane %v8685, 4
      %v8687 = vadd.f32 %v8685, %v8686
      %v8688 = vrot.slane %v8687, 2
      %v8689 = vadd.f32 %v8687, %v8688
      %v8690 = vrot.slane %v8689, 1
      %v8691 = vadd.f32 %v8689, %v8690
      %v8692 = vsel %vm8040, %v7877, 0.0
      %v8693 = vrot.slane %v8692, 4
      %v8694 = vadd.f32 %v8692, %v8693
      %v8695 = vrot.slane %v8694, 2
      %v8696 = vadd.f32 %v8694, %v8695
      %v8697 = vrot.slane %v8696, 1
      %v8698 = vadd.f32 %v8696, %v8697
      %v8699 = vsel %vm8040, %v7878, 0.0
      %v8700 = vrot.slane %v8699, 4
      %v8701 = vadd.f32 %v8699, %v8700
      %v8702 = vrot.slane %v8701, 2
      %v8703 = vadd.f32 %v8701, %v8702
      %v8704 = vrot.slane %v8703, 1
      %v8705 = vadd.f32 %v8703, %v8704
      %v8706 = vsel %vm8040, %v7879, 0.0
      %v8707 = vrot.slane %v8706, 4
      %v8708 = vadd.f32 %v8706, %v8707
      %v8709 = vrot.slane %v8708, 2
      %v8710 = vadd.f32 %v8708, %v8709
      %v8711 = vrot.slane %v8710, 1
      %v8712 = vadd.f32 %v8710, %v8711
      %v8713 = vsel %vm8040, %v7880, 0.0
      %v8714 = vrot.slane %v8713, 4
      %v8715 = vadd.f32 %v8713, %v8714
      %v8716 = vrot.slane %v8715, 2
      %v8717 = vadd.f32 %v8715, %v8716
      %v8718 = vrot.slane %v8717, 1
      %v8719 = vadd.f32 %v8717, %v8718
      %v8720 = vsel %vm8040, %v7881, 0.0
      %v8721 = vrot.slane %v8720, 4
      %v8722 = vadd.f32 %v8720, %v8721
      %v8723 = vrot.slane %v8722, 2
      %v8724 = vadd.f32 %v8722, %v8723
      %v8725 = vrot.slane %v8724, 1
      %v8726 = vadd.f32 %v8724, %v8725
      %v8727 = vsel %vm8040, %v7882, 0.0
      %v8728 = vrot.slane %v8727, 4
      %v8729 = vadd.f32 %v8727, %v8728
      %v8730 = vrot.slane %v8729, 2
      %v8731 = vadd.f32 %v8729, %v8730
      %v8732 = vrot.slane %v8731, 1
      %v8733 = vadd.f32 %v8731, %v8732
      %v8734 = vsel %vm8040, %v7883, 0.0
      %v8735 = vrot.slane %v8734, 4
      %v8736 = vadd.f32 %v8734, %v8735
      %v8737 = vrot.slane %v8736, 2
      %v8738 = vadd.f32 %v8736, %v8737
      %v8739 = vrot.slane %v8738, 1
      %v8740 = vadd.f32 %v8738, %v8739
      %v8741 = vsel %vm8040, %v7884, 0.0
      %v8742 = vrot.slane %v8741, 4
      %v8743 = vadd.f32 %v8741, %v8742
      %v8744 = vrot.slane %v8743, 2
      %v8745 = vadd.f32 %v8743, %v8744
      %v8746 = vrot.slane %v8745, 1
      %v8747 = vadd.f32 %v8745, %v8746
      %v8748 = vsel %vm8040, %v7885, 0.0
      %v8749 = vrot.slane %v8748, 4
      %v8750 = vadd.f32 %v8748, %v8749
      %v8751 = vrot.slane %v8750, 2
      %v8752 = vadd.f32 %v8750, %v8751
      %v8753 = vrot.slane %v8752, 1
      %v8754 = vadd.f32 %v8752, %v8753
      %v8755 = vsel %vm8040, %v7886, 0.0
      %v8756 = vrot.slane %v8755, 4
      %v8757 = vadd.f32 %v8755, %v8756
      %v8758 = vrot.slane %v8757, 2
      %v8759 = vadd.f32 %v8757, %v8758
      %v8760 = vrot.slane %v8759, 1
      %v8761 = vadd.f32 %v8759, %v8760
      %v8762 = vsel %vm8040, %v7887, 0.0
      %v8763 = vrot.slane %v8762, 4
      %v8764 = vadd.f32 %v8762, %v8763
      %v8765 = vrot.slane %v8764, 2
      %v8766 = vadd.f32 %v8764, %v8765
      %v8767 = vrot.slane %v8766, 1
      %v8768 = vadd.f32 %v8766, %v8767
      %v8769 = vsel %vm8040, %v7888, 0.0
      %v8770 = vrot.slane %v8769, 4
      %v8771 = vadd.f32 %v8769, %v8770
      %v8772 = vrot.slane %v8771, 2
      %v8773 = vadd.f32 %v8771, %v8772
      %v8774 = vrot.slane %v8773, 1
      %v8775 = vadd.f32 %v8773, %v8774
      %v8776 = vsel %vm8040, %v7889, 0.0
      %v8777 = vrot.slane %v8776, 4
      %v8778 = vadd.f32 %v8776, %v8777
      %v8779 = vrot.slane %v8778, 2
      %v8780 = vadd.f32 %v8778, %v8779
      %v8781 = vrot.slane %v8780, 1
      %v8782 = vadd.f32 %v8780, %v8781
      %v8783 = vsel %vm8040, %v7890, 0.0
      %v8784 = vrot.slane %v8783, 4
      %v8785 = vadd.f32 %v8783, %v8784
      %v8786 = vrot.slane %v8785, 2
      %v8787 = vadd.f32 %v8785, %v8786
      %v8788 = vrot.slane %v8787, 1
      %v8789 = vadd.f32 %v8787, %v8788
      %v8790 = vsel %vm8040, %v7891, 0.0
      %v8791 = vrot.slane %v8790, 4
      %v8792 = vadd.f32 %v8790, %v8791
      %v8793 = vrot.slane %v8792, 2
      %v8794 = vadd.f32 %v8792, %v8793
      %v8795 = vrot.slane %v8794, 1
      %v8796 = vadd.f32 %v8794, %v8795
      %v8797 = vsel %vm8040, %v7892, 0.0
      %v8798 = vrot.slane %v8797, 4
      %v8799 = vadd.f32 %v8797, %v8798
      %v8800 = vrot.slane %v8799, 2
      %v8801 = vadd.f32 %v8799, %v8800
      %v8802 = vrot.slane %v8801, 1
      %v8803 = vadd.f32 %v8801, %v8802
      %v8804 = vsel %vm8040, %v7893, 0.0
      %v8805 = vrot.slane %v8804, 4
      %v8806 = vadd.f32 %v8804, %v8805
      %v8807 = vrot.slane %v8806, 2
      %v8808 = vadd.f32 %v8806, %v8807
      %v8809 = vrot.slane %v8808, 1
      %v8810 = vadd.f32 %v8808, %v8809
      %v8811 = vsel %vm8040, %v7894, 0.0
      %v8812 = vrot.slane %v8811, 4
      %v8813 = vadd.f32 %v8811, %v8812
      %v8814 = vrot.slane %v8813, 2
      %v8815 = vadd.f32 %v8813, %v8814
      %v8816 = vrot.slane %v8815, 1
      %v8817 = vadd.f32 %v8815, %v8816
      %v8818 = vsel %vm8040, %v7895, 0.0
      %v8819 = vrot.slane %v8818, 4
      %v8820 = vadd.f32 %v8818, %v8819
      %v8821 = vrot.slane %v8820, 2
      %v8822 = vadd.f32 %v8820, %v8821
      %v8823 = vrot.slane %v8822, 1
      %v8824 = vadd.f32 %v8822, %v8823
      %v8825 = vsel %vm8040, %v7896, 0.0
      %v8826 = vrot.slane %v8825, 4
      %v8827 = vadd.f32 %v8825, %v8826
      %v8828 = vrot.slane %v8827, 2
      %v8829 = vadd.f32 %v8827, %v8828
      %v8830 = vrot.slane %v8829, 1
      %v8831 = vadd.f32 %v8829, %v8830
      %v8832 = vsel %vm8040, %v7897, 0.0
      %v8833 = vrot.slane %v8832, 4
      %v8834 = vadd.f32 %v8832, %v8833
      %v8835 = vrot.slane %v8834, 2
      %v8836 = vadd.f32 %v8834, %v8835
      %v8837 = vrot.slane %v8836, 1
      %v8838 = vadd.f32 %v8836, %v8837
      %v8839 = vsel %vm8040, %v7898, 0.0
      %v8840 = vrot.slane %v8839, 4
      %v8841 = vadd.f32 %v8839, %v8840
      %v8842 = vrot.slane %v8841, 2
      %v8843 = vadd.f32 %v8841, %v8842
      %v8844 = vrot.slane %v8843, 1
      %v8845 = vadd.f32 %v8843, %v8844
      %v8846 = vsel %vm8040, %v7899, 0.0
      %v8847 = vrot.slane %v8846, 4
      %v8848 = vadd.f32 %v8846, %v8847
      %v8849 = vrot.slane %v8848, 2
      %v8850 = vadd.f32 %v8848, %v8849
      %v8851 = vrot.slane %v8850, 1
      %v8852 = vadd.f32 %v8850, %v8851
      %v8853 = vsel %vm8040, %v7900, 0.0
      %v8854 = vrot.slane %v8853, 4
      %v8855 = vadd.f32 %v8853, %v8854
      %v8856 = vrot.slane %v8855, 2
      %v8857 = vadd.f32 %v8855, %v8856
      %v8858 = vrot.slane %v8857, 1
      %v8859 = vadd.f32 %v8857, %v8858
      %v8860 = vsel %vm8040, %v7901, 0.0
      %v8861 = vrot.slane %v8860, 4
      %v8862 = vadd.f32 %v8860, %v8861
      %v8863 = vrot.slane %v8862, 2
      %v8864 = vadd.f32 %v8862, %v8863
      %v8865 = vrot.slane %v8864, 1
      %v8866 = vadd.f32 %v8864, %v8865
      %v8867 = vsel %vm8040, %v7902, 0.0
      %v8868 = vrot.slane %v8867, 4
      %v8869 = vadd.f32 %v8867, %v8868
      %v8870 = vrot.slane %v8869, 2
      %v8871 = vadd.f32 %v8869, %v8870
      %v8872 = vrot.slane %v8871, 1
      %v8873 = vadd.f32 %v8871, %v8872
      %v8874 = vsel %vm8040, %v7903, 0.0
      %v8875 = vrot.slane %v8874, 4
      %v8876 = vadd.f32 %v8874, %v8875
      %v8877 = vrot.slane %v8876, 2
      %v8878 = vadd.f32 %v8876, %v8877
      %v8879 = vrot.slane %v8878, 1
      %v8880 = vadd.f32 %v8878, %v8879
      %v8881 = vsel %vm8040, %v7904, 0.0
      %v8882 = vrot.slane %v8881, 4
      %v8883 = vadd.f32 %v8881, %v8882
      %v8884 = vrot.slane %v8883, 2
      %v8885 = vadd.f32 %v8883, %v8884
      %v8886 = vrot.slane %v8885, 1
      %v8887 = vadd.f32 %v8885, %v8886
      %v8888 = vsel %vm8040, %v7905, 0.0
      %v8889 = vrot.slane %v8888, 4
      %v8890 = vadd.f32 %v8888, %v8889
      %v8891 = vrot.slane %v8890, 2
      %v8892 = vadd.f32 %v8890, %v8891
      %v8893 = vrot.slane %v8892, 1
      %v8894 = vadd.f32 %v8892, %v8893
      %v8895 = vsel %vm8040, %v7906, 0.0
      %v8896 = vrot.slane %v8895, 4
      %v8897 = vadd.f32 %v8895, %v8896
      %v8898 = vrot.slane %v8897, 2
      %v8899 = vadd.f32 %v8897, %v8898
      %v8900 = vrot.slane %v8899, 1
      %v8901 = vadd.f32 %v8899, %v8900
      %v8902 = vsel %vm8040, %v7907, 0.0
      %v8903 = vrot.slane %v8902, 4
      %v8904 = vadd.f32 %v8902, %v8903
      %v8905 = vrot.slane %v8904, 2
      %v8906 = vadd.f32 %v8904, %v8905
      %v8907 = vrot.slane %v8906, 1
      %v8908 = vadd.f32 %v8906, %v8907
      %v8909 = vsel %vm8040, %v7908, 0.0
      %v8910 = vrot.slane %v8909, 4
      %v8911 = vadd.f32 %v8909, %v8910
      %v8912 = vrot.slane %v8911, 2
      %v8913 = vadd.f32 %v8911, %v8912
      %v8914 = vrot.slane %v8913, 1
      %v8915 = vadd.f32 %v8913, %v8914
      %v8916 = vsel %vm8040, %v7909, 0.0
      %v8917 = vrot.slane %v8916, 4
      %v8918 = vadd.f32 %v8916, %v8917
      %v8919 = vrot.slane %v8918, 2
      %v8920 = vadd.f32 %v8918, %v8919
      %v8921 = vrot.slane %v8920, 1
      %v8922 = vadd.f32 %v8920, %v8921
      %v8923 = vsel %vm8040, %v7910, 0.0
      %v8924 = vrot.slane %v8923, 4
      %v8925 = vadd.f32 %v8923, %v8924
      %v8926 = vrot.slane %v8925, 2
      %v8927 = vadd.f32 %v8925, %v8926
      %v8928 = vrot.slane %v8927, 1
      %v8929 = vadd.f32 %v8927, %v8928
      %v8930 = vsel %vm8040, %v7911, 0.0
      %v8931 = vrot.slane %v8930, 4
      %v8932 = vadd.f32 %v8930, %v8931
      %v8933 = vrot.slane %v8932, 2
      %v8934 = vadd.f32 %v8932, %v8933
      %v8935 = vrot.slane %v8934, 1
      %v8936 = vadd.f32 %v8934, %v8935
      %v8937 = vsel %vm8040, %v7912, 0.0
      %v8938 = vrot.slane %v8937, 4
      %v8939 = vadd.f32 %v8937, %v8938
      %v8940 = vrot.slane %v8939, 2
      %v8941 = vadd.f32 %v8939, %v8940
      %v8942 = vrot.slane %v8941, 1
      %v8943 = vadd.f32 %v8941, %v8942
      %v8944 = vsel %vm8040, %v7913, 0.0
      %v8945 = vrot.slane %v8944, 4
      %v8946 = vadd.f32 %v8944, %v8945
      %v8947 = vrot.slane %v8946, 2
      %v8948 = vadd.f32 %v8946, %v8947
      %v8949 = vrot.slane %v8948, 1
      %v8950 = vadd.f32 %v8948, %v8949
      %v8951 = vsel %vm8040, %v7914, 0.0
      %v8952 = vrot.slane %v8951, 4
      %v8953 = vadd.f32 %v8951, %v8952
      %v8954 = vrot.slane %v8953, 2
      %v8955 = vadd.f32 %v8953, %v8954
      %v8956 = vrot.slane %v8955, 1
      %v8957 = vadd.f32 %v8955, %v8956
      %v8958 = vsel %vm8040, %v7915, 0.0
      %v8959 = vrot.slane %v8958, 4
      %v8960 = vadd.f32 %v8958, %v8959
      %v8961 = vrot.slane %v8960, 2
      %v8962 = vadd.f32 %v8960, %v8961
      %v8963 = vrot.slane %v8962, 1
      %v8964 = vadd.f32 %v8962, %v8963
      %v8965 = vsel %vm8040, %v7916, 0.0
      %v8966 = vrot.slane %v8965, 4
      %v8967 = vadd.f32 %v8965, %v8966
      %v8968 = vrot.slane %v8967, 2
      %v8969 = vadd.f32 %v8967, %v8968
      %v8970 = vrot.slane %v8969, 1
      %v8971 = vadd.f32 %v8969, %v8970
      %v8972 = vsel %vm8040, %v7917, 0.0
      %v8973 = vrot.slane %v8972, 4
      %v8974 = vadd.f32 %v8972, %v8973
      %v8975 = vrot.slane %v8974, 2
      %v8976 = vadd.f32 %v8974, %v8975
      %v8977 = vrot.slane %v8976, 1
      %v8978 = vadd.f32 %v8976, %v8977
      %v8979 = vsel %vm8040, %v7918, 0.0
      %v8980 = vrot.slane %v8979, 4
      %v8981 = vadd.f32 %v8979, %v8980
      %v8982 = vrot.slane %v8981, 2
      %v8983 = vadd.f32 %v8981, %v8982
      %v8984 = vrot.slane %v8983, 1
      %v8985 = vadd.f32 %v8983, %v8984
      %v8986 = vsel %vm8040, %v7919, 0.0
      %v8987 = vrot.slane %v8986, 4
      %v8988 = vadd.f32 %v8986, %v8987
      %v8989 = vrot.slane %v8988, 2
      %v8990 = vadd.f32 %v8988, %v8989
      %v8991 = vrot.slane %v8990, 1
      %v8992 = vadd.f32 %v8990, %v8991
      %v8993 = vsel %vm8040, %v7920, 0.0
      %v8994 = vrot.slane %v8993, 4
      %v8995 = vadd.f32 %v8993, %v8994
      %v8996 = vrot.slane %v8995, 2
      %v8997 = vadd.f32 %v8995, %v8996
      %v8998 = vrot.slane %v8997, 1
      %v8999 = vadd.f32 %v8997, %v8998
      %v9000 = vsel %vm8040, %v7921, 0.0
      %v9001 = vrot.slane %v9000, 4
      %v9002 = vadd.f32 %v9000, %v9001
      %v9003 = vrot.slane %v9002, 2
      %v9004 = vadd.f32 %v9002, %v9003
      %v9005 = vrot.slane %v9004, 1
      %v9006 = vadd.f32 %v9004, %v9005
      %v9007 = vsel %vm8040, %v7922, 0.0
      %v9008 = vrot.slane %v9007, 4
      %v9009 = vadd.f32 %v9007, %v9008
      %v9010 = vrot.slane %v9009, 2
      %v9011 = vadd.f32 %v9009, %v9010
      %v9012 = vrot.slane %v9011, 1
      %v9013 = vadd.f32 %v9011, %v9012
      %v9014 = vsel %vm8040, %v7923, 0.0
      %v9015 = vrot.slane %v9014, 4
      %v9016 = vadd.f32 %v9014, %v9015
      %v9017 = vrot.slane %v9016, 2
      %v9018 = vadd.f32 %v9016, %v9017
      %v9019 = vrot.slane %v9018, 1
      %v9020 = vadd.f32 %v9018, %v9019
      %v9021 = vsel %vm8040, %v7924, 0.0
      %v9022 = vrot.slane %v9021, 4
      %v9023 = vadd.f32 %v9021, %v9022
      %v9024 = vrot.slane %v9023, 2
      %v9025 = vadd.f32 %v9023, %v9024
      %v9026 = vrot.slane %v9025, 1
      %v9027 = vadd.f32 %v9025, %v9026
      %v9028 = vsel %vm8040, %v7925, 0.0
      %v9029 = vrot.slane %v9028, 4
      %v9030 = vadd.f32 %v9028, %v9029
      %v9031 = vrot.slane %v9030, 2
      %v9032 = vadd.f32 %v9030, %v9031
      %v9033 = vrot.slane %v9032, 1
      %v9034 = vadd.f32 %v9032, %v9033
      %v9035 = vsel %vm8040, %v7926, 0.0
      %v9036 = vrot.slane %v9035, 4
      %v9037 = vadd.f32 %v9035, %v9036
      %v9038 = vrot.slane %v9037, 2
      %v9039 = vadd.f32 %v9037, %v9038
      %v9040 = vrot.slane %v9039, 1
      %v9041 = vadd.f32 %v9039, %v9040
      %v9042 = vsel %vm8040, %v7927, 0.0
      %v9043 = vrot.slane %v9042, 4
      %v9044 = vadd.f32 %v9042, %v9043
      %v9045 = vrot.slane %v9044, 2
      %v9046 = vadd.f32 %v9044, %v9045
      %v9047 = vrot.slane %v9046, 1
      %v9048 = vadd.f32 %v9046, %v9047
      %v9049 = vsel %vm8040, %v7928, 0.0
      %v9050 = vrot.slane %v9049, 4
      %v9051 = vadd.f32 %v9049, %v9050
      %v9052 = vrot.slane %v9051, 2
      %v9053 = vadd.f32 %v9051, %v9052
      %v9054 = vrot.slane %v9053, 1
      %v9055 = vadd.f32 %v9053, %v9054
      %v9056 = vsel %vm8040, %v7929, 0.0
      %v9057 = vrot.slane %v9056, 4
      %v9058 = vadd.f32 %v9056, %v9057
      %v9059 = vrot.slane %v9058, 2
      %v9060 = vadd.f32 %v9058, %v9059
      %v9061 = vrot.slane %v9060, 1
      %v9062 = vadd.f32 %v9060, %v9061
      %v9063 = vsel %vm8040, %v7930, 0.0
      %v9064 = vrot.slane %v9063, 4
      %v9065 = vadd.f32 %v9063, %v9064
      %v9066 = vrot.slane %v9065, 2
      %v9067 = vadd.f32 %v9065, %v9066
      %v9068 = vrot.slane %v9067, 1
      %v9069 = vadd.f32 %v9067, %v9068
      %v9070 = vsel %vm8040, %v7931, 0.0
      %v9071 = vrot.slane %v9070, 4
      %v9072 = vadd.f32 %v9070, %v9071
      %v9073 = vrot.slane %v9072, 2
      %v9074 = vadd.f32 %v9072, %v9073
      %v9075 = vrot.slane %v9074, 1
      %v9076 = vadd.f32 %v9074, %v9075
      %v9077 = vsel %vm8040, %v7932, 0.0
      %v9078 = vrot.slane %v9077, 4
      %v9079 = vadd.f32 %v9077, %v9078
      %v9080 = vrot.slane %v9079, 2
      %v9081 = vadd.f32 %v9079, %v9080
      %v9082 = vrot.slane %v9081, 1
      %v9083 = vadd.f32 %v9081, %v9082
      %v9084 = vsel %vm8040, %v7933, 0.0
      %v9085 = vrot.slane %v9084, 4
      %v9086 = vadd.f32 %v9084, %v9085
      %v9087 = vrot.slane %v9086, 2
      %v9088 = vadd.f32 %v9086, %v9087
      %v9089 = vrot.slane %v9088, 1
      %v9090 = vadd.f32 %v9088, %v9089
      %v9091 = vsel %vm8040, %v7934, 0.0
      %v9092 = vrot.slane %v9091, 4
      %v9093 = vadd.f32 %v9091, %v9092
      %v9094 = vrot.slane %v9093, 2
      %v9095 = vadd.f32 %v9093, %v9094
      %v9096 = vrot.slane %v9095, 1
      %v9097 = vadd.f32 %v9095, %v9096
      %v9098 = vsel %vm8040, %v7935, 0.0
      %v9099 = vrot.slane %v9098, 4
      %v9100 = vadd.f32 %v9098, %v9099
      %v9101 = vrot.slane %v9100, 2
      %v9102 = vadd.f32 %v9100, %v9101
      %v9103 = vrot.slane %v9102, 1
      %v9104 = vadd.f32 %v9102, %v9103
      %v9105 = vsel %vm8040, %v7936, 0.0
      %v9106 = vrot.slane %v9105, 4
      %v9107 = vadd.f32 %v9105, %v9106
      %v9108 = vrot.slane %v9107, 2
      %v9109 = vadd.f32 %v9107, %v9108
      %v9110 = vrot.slane %v9109, 1
      %v9111 = vadd.f32 %v9109, %v9110
      %v9112 = vsel %vm8040, %v7937, 0.0
      %v9113 = vrot.slane %v9112, 4
      %v9114 = vadd.f32 %v9112, %v9113
      %v9115 = vrot.slane %v9114, 2
      %v9116 = vadd.f32 %v9114, %v9115
      %v9117 = vrot.slane %v9116, 1
      %v9118 = vadd.f32 %v9116, %v9117
      %v9119 = vsel %vm8040, %v7938, 0.0
      %v9120 = vrot.slane %v9119, 4
      %v9121 = vadd.f32 %v9119, %v9120
      %v9122 = vrot.slane %v9121, 2
      %v9123 = vadd.f32 %v9121, %v9122
      %v9124 = vrot.slane %v9123, 1
      %v9125 = vadd.f32 %v9123, %v9124
      %v9126 = vsel %vm8040, %v7939, 0.0
      %v9127 = vrot.slane %v9126, 4
      %v9128 = vadd.f32 %v9126, %v9127
      %v9129 = vrot.slane %v9128, 2
      %v9130 = vadd.f32 %v9128, %v9129
      %v9131 = vrot.slane %v9130, 1
      %v9132 = vadd.f32 %v9130, %v9131
      %v9133 = vsel %vm8040, %v7940, 0.0
      %v9134 = vrot.slane %v9133, 4
      %v9135 = vadd.f32 %v9133, %v9134
      %v9136 = vrot.slane %v9135, 2
      %v9137 = vadd.f32 %v9135, %v9136
      %v9138 = vrot.slane %v9137, 1
      %v9139 = vadd.f32 %v9137, %v9138
      %v9140 = vsel %vm8040, %v7941, 0.0
      %v9141 = vrot.slane %v9140, 4
      %v9142 = vadd.f32 %v9140, %v9141
      %v9143 = vrot.slane %v9142, 2
      %v9144 = vadd.f32 %v9142, %v9143
      %v9145 = vrot.slane %v9144, 1
      %v9146 = vadd.f32 %v9144, %v9145
      %v9147 = vsel %vm8040, %v7942, 0.0
      %v9148 = vrot.slane %v9147, 4
      %v9149 = vadd.f32 %v9147, %v9148
      %v9150 = vrot.slane %v9149, 2
      %v9151 = vadd.f32 %v9149, %v9150
      %v9152 = vrot.slane %v9151, 1
      %v9153 = vadd.f32 %v9151, %v9152
      %v9154 = vsel %vm8040, %v7943, 0.0
      %v9155 = vrot.slane %v9154, 4
      %v9156 = vadd.f32 %v9154, %v9155
      %v9157 = vrot.slane %v9156, 2
      %v9158 = vadd.f32 %v9156, %v9157
      %v9159 = vrot.slane %v9158, 1
      %v9160 = vadd.f32 %v9158, %v9159
      %v9161 = vsel %vm8040, %v7944, 0.0
      %v9162 = vrot.slane %v9161, 4
      %v9163 = vadd.f32 %v9161, %v9162
      %v9164 = vrot.slane %v9163, 2
      %v9165 = vadd.f32 %v9163, %v9164
      %v9166 = vrot.slane %v9165, 1
      %v9167 = vadd.f32 %v9165, %v9166
      %v9168 = vsel %vm8040, %v7945, 0.0
      %v9169 = vrot.slane %v9168, 4
      %v9170 = vadd.f32 %v9168, %v9169
      %v9171 = vrot.slane %v9170, 2
      %v9172 = vadd.f32 %v9170, %v9171
      %v9173 = vrot.slane %v9172, 1
      %v9174 = vadd.f32 %v9172, %v9173
      %v9175 = vsel %vm8040, %v7946, 0.0
      %v9176 = vrot.slane %v9175, 4
      %v9177 = vadd.f32 %v9175, %v9176
      %v9178 = vrot.slane %v9177, 2
      %v9179 = vadd.f32 %v9177, %v9178
      %v9180 = vrot.slane %v9179, 1
      %v9181 = vadd.f32 %v9179, %v9180
      %v9182 = vsel %vm8040, %v7947, 0.0
      %v9183 = vrot.slane %v9182, 4
      %v9184 = vadd.f32 %v9182, %v9183
      %v9185 = vrot.slane %v9184, 2
      %v9186 = vadd.f32 %v9184, %v9185
      %v9187 = vrot.slane %v9186, 1
      %v9188 = vadd.f32 %v9186, %v9187
      %v9189 = vsel %vm8040, %v7948, 0.0
      %v9190 = vrot.slane %v9189, 4
      %v9191 = vadd.f32 %v9189, %v9190
      %v9192 = vrot.slane %v9191, 2
      %v9193 = vadd.f32 %v9191, %v9192
      %v9194 = vrot.slane %v9193, 1
      %v9195 = vadd.f32 %v9193, %v9194
      %v9196 = vsel %vm8040, %v7949, 0.0
      %v9197 = vrot.slane %v9196, 4
      %v9198 = vadd.f32 %v9196, %v9197
      %v9199 = vrot.slane %v9198, 2
      %v9200 = vadd.f32 %v9198, %v9199
      %v9201 = vrot.slane %v9200, 1
      %v9202 = vadd.f32 %v9200, %v9201
      %v9203 = vsel %vm8040, %v7950, 0.0
      %v9204 = vrot.slane %v9203, 4
      %v9205 = vadd.f32 %v9203, %v9204
      %v9206 = vrot.slane %v9205, 2
      %v9207 = vadd.f32 %v9205, %v9206
      %v9208 = vrot.slane %v9207, 1
      %v9209 = vadd.f32 %v9207, %v9208
      %v9210 = vsel %vm8040, %v7951, 0.0
      %v9211 = vrot.slane %v9210, 4
      %v9212 = vadd.f32 %v9210, %v9211
      %v9213 = vrot.slane %v9212, 2
      %v9214 = vadd.f32 %v9212, %v9213
      %v9215 = vrot.slane %v9214, 1
      %v9216 = vadd.f32 %v9214, %v9215
      %v9217 = vsel %vm8040, %v7952, 0.0
      %v9218 = vrot.slane %v9217, 4
      %v9219 = vadd.f32 %v9217, %v9218
      %v9220 = vrot.slane %v9219, 2
      %v9221 = vadd.f32 %v9219, %v9220
      %v9222 = vrot.slane %v9221, 1
      %v9223 = vadd.f32 %v9221, %v9222
      %v9224 = vsel %vm8040, %v7953, 0.0
      %v9225 = vrot.slane %v9224, 4
      %v9226 = vadd.f32 %v9224, %v9225
      %v9227 = vrot.slane %v9226, 2
      %v9228 = vadd.f32 %v9226, %v9227
      %v9229 = vrot.slane %v9228, 1
      %v9230 = vadd.f32 %v9228, %v9229
      %v9231 = vsel %vm8040, %v7954, 0.0
      %v9232 = vrot.slane %v9231, 4
      %v9233 = vadd.f32 %v9231, %v9232
      %v9234 = vrot.slane %v9233, 2
      %v9235 = vadd.f32 %v9233, %v9234
      %v9236 = vrot.slane %v9235, 1
      %v9237 = vadd.f32 %v9235, %v9236
      %v9238 = vsel %vm8040, %v7955, 0.0
      %v9239 = vrot.slane %v9238, 4
      %v9240 = vadd.f32 %v9238, %v9239
      %v9241 = vrot.slane %v9240, 2
      %v9242 = vadd.f32 %v9240, %v9241
      %v9243 = vrot.slane %v9242, 1
      %v9244 = vadd.f32 %v9242, %v9243
      %v9245 = vsel %vm8040, %v7956, 0.0
      %v9246 = vrot.slane %v9245, 4
      %v9247 = vadd.f32 %v9245, %v9246
      %v9248 = vrot.slane %v9247, 2
      %v9249 = vadd.f32 %v9247, %v9248
      %v9250 = vrot.slane %v9249, 1
      %v9251 = vadd.f32 %v9249, %v9250
      %v9252 = vsel %vm8040, %v7957, 0.0
      %v9253 = vrot.slane %v9252, 4
      %v9254 = vadd.f32 %v9252, %v9253
      %v9255 = vrot.slane %v9254, 2
      %v9256 = vadd.f32 %v9254, %v9255
      %v9257 = vrot.slane %v9256, 1
      %v9258 = vadd.f32 %v9256, %v9257
      %v9259 = vsel %vm8040, %v7958, 0.0
      %v9260 = vrot.slane %v9259, 4
      %v9261 = vadd.f32 %v9259, %v9260
      %v9262 = vrot.slane %v9261, 2
      %v9263 = vadd.f32 %v9261, %v9262
      %v9264 = vrot.slane %v9263, 1
      %v9265 = vadd.f32 %v9263, %v9264
      %v9266 = vsel %vm8040, %v7959, 0.0
      %v9267 = vrot.slane %v9266, 4
      %v9268 = vadd.f32 %v9266, %v9267
      %v9269 = vrot.slane %v9268, 2
      %v9270 = vadd.f32 %v9268, %v9269
      %v9271 = vrot.slane %v9270, 1
      %v9272 = vadd.f32 %v9270, %v9271
      %v9273 = vsel %vm8040, %v7960, 0.0
      %v9274 = vrot.slane %v9273, 4
      %v9275 = vadd.f32 %v9273, %v9274
      %v9276 = vrot.slane %v9275, 2
      %v9277 = vadd.f32 %v9275, %v9276
      %v9278 = vrot.slane %v9277, 1
      %v9279 = vadd.f32 %v9277, %v9278
      %v9280 = vsel %vm8040, %v7961, 0.0
      %v9281 = vrot.slane %v9280, 4
      %v9282 = vadd.f32 %v9280, %v9281
      %v9283 = vrot.slane %v9282, 2
      %v9284 = vadd.f32 %v9282, %v9283
      %v9285 = vrot.slane %v9284, 1
      %v9286 = vadd.f32 %v9284, %v9285
      %v9287 = vsel %vm8040, %v7962, 0.0
      %v9288 = vrot.slane %v9287, 4
      %v9289 = vadd.f32 %v9287, %v9288
      %v9290 = vrot.slane %v9289, 2
      %v9291 = vadd.f32 %v9289, %v9290
      %v9292 = vrot.slane %v9291, 1
      %v9293 = vadd.f32 %v9291, %v9292
      %v9294 = vsel %vm8040, %v7963, 0.0
      %v9295 = vrot.slane %v9294, 4
      %v9296 = vadd.f32 %v9294, %v9295
      %v9297 = vrot.slane %v9296, 2
      %v9298 = vadd.f32 %v9296, %v9297
      %v9299 = vrot.slane %v9298, 1
      %v9300 = vadd.f32 %v9298, %v9299
      %v9301 = vsel %vm8040, %v7964, 0.0
      %v9302 = vrot.slane %v9301, 4
      %v9303 = vadd.f32 %v9301, %v9302
      %v9304 = vrot.slane %v9303, 2
      %v9305 = vadd.f32 %v9303, %v9304
      %v9306 = vrot.slane %v9305, 1
      %v9307 = vadd.f32 %v9305, %v9306
      %v9308 = vsel %vm8040, %v7965, 0.0
      %v9309 = vrot.slane %v9308, 4
      %v9310 = vadd.f32 %v9308, %v9309
      %v9311 = vrot.slane %v9310, 2
      %v9312 = vadd.f32 %v9310, %v9311
      %v9313 = vrot.slane %v9312, 1
      %v9314 = vadd.f32 %v9312, %v9313
      %v9315 = vsel %vm8040, %v7966, 0.0
      %v9316 = vrot.slane %v9315, 4
      %v9317 = vadd.f32 %v9315, %v9316
      %v9318 = vrot.slane %v9317, 2
      %v9319 = vadd.f32 %v9317, %v9318
      %v9320 = vrot.slane %v9319, 1
      %v9321 = vadd.f32 %v9319, %v9320
      %v9322 = vsel %vm8040, %v7967, 0.0
      %v9323 = vrot.slane %v9322, 4
      %v9324 = vadd.f32 %v9322, %v9323
      %v9325 = vrot.slane %v9324, 2
      %v9326 = vadd.f32 %v9324, %v9325
      %v9327 = vrot.slane %v9326, 1
      %v9328 = vadd.f32 %v9326, %v9327
      %v9329 = vsel %vm8040, %v7968, 0.0
      %v9330 = vrot.slane %v9329, 4
      %v9331 = vadd.f32 %v9329, %v9330
      %v9332 = vrot.slane %v9331, 2
      %v9333 = vadd.f32 %v9331, %v9332
      %v9334 = vrot.slane %v9333, 1
      %v9335 = vadd.f32 %v9333, %v9334
      %v9336 = vsel %vm8040, %v7969, 0.0
      %v9337 = vrot.slane %v9336, 4
      %v9338 = vadd.f32 %v9336, %v9337
      %v9339 = vrot.slane %v9338, 2
      %v9340 = vadd.f32 %v9338, %v9339
      %v9341 = vrot.slane %v9340, 1
      %v9342 = vadd.f32 %v9340, %v9341
      %v9343 = vsel %vm8040, %v7970, 0.0
      %v9344 = vrot.slane %v9343, 4
      %v9345 = vadd.f32 %v9343, %v9344
      %v9346 = vrot.slane %v9345, 2
      %v9347 = vadd.f32 %v9345, %v9346
      %v9348 = vrot.slane %v9347, 1
      %v9349 = vadd.f32 %v9347, %v9348
      %v9350 = vsel %vm8040, %v7971, 0.0
      %v9351 = vrot.slane %v9350, 4
      %v9352 = vadd.f32 %v9350, %v9351
      %v9353 = vrot.slane %v9352, 2
      %v9354 = vadd.f32 %v9352, %v9353
      %v9355 = vrot.slane %v9354, 1
      %v9356 = vadd.f32 %v9354, %v9355
      %v9357 = vsel %vm8040, %v7972, 0.0
      %v9358 = vrot.slane %v9357, 4
      %v9359 = vadd.f32 %v9357, %v9358
      %v9360 = vrot.slane %v9359, 2
      %v9361 = vadd.f32 %v9359, %v9360
      %v9362 = vrot.slane %v9361, 1
      %v9363 = vadd.f32 %v9361, %v9362
      %v9364 = vsel %vm8040, %v7973, 0.0
      %v9365 = vrot.slane %v9364, 4
      %v9366 = vadd.f32 %v9364, %v9365
      %v9367 = vrot.slane %v9366, 2
      %v9368 = vadd.f32 %v9366, %v9367
      %v9369 = vrot.slane %v9368, 1
      %v9370 = vadd.f32 %v9368, %v9369
      %v9371 = vsel %vm8040, %v7974, 0.0
      %v9372 = vrot.slane %v9371, 4
      %v9373 = vadd.f32 %v9371, %v9372
      %v9374 = vrot.slane %v9373, 2
      %v9375 = vadd.f32 %v9373, %v9374
      %v9376 = vrot.slane %v9375, 1
      %v9377 = vadd.f32 %v9375, %v9376
      %v9378 = vsel %vm8040, %v7975, 0.0
      %v9379 = vrot.slane %v9378, 4
      %v9380 = vadd.f32 %v9378, %v9379
      %v9381 = vrot.slane %v9380, 2
      %v9382 = vadd.f32 %v9380, %v9381
      %v9383 = vrot.slane %v9382, 1
      %v9384 = vadd.f32 %v9382, %v9383
      %v9385 = vsel %vm8040, %v7976, 0.0
      %v9386 = vrot.slane %v9385, 4
      %v9387 = vadd.f32 %v9385, %v9386
      %v9388 = vrot.slane %v9387, 2
      %v9389 = vadd.f32 %v9387, %v9388
      %v9390 = vrot.slane %v9389, 1
      %v9391 = vadd.f32 %v9389, %v9390
      %v9392 = vsel %vm8040, %v7977, 0.0
      %v9393 = vrot.slane %v9392, 4
      %v9394 = vadd.f32 %v9392, %v9393
      %v9395 = vrot.slane %v9394, 2
      %v9396 = vadd.f32 %v9394, %v9395
      %v9397 = vrot.slane %v9396, 1
      %v9398 = vadd.f32 %v9396, %v9397
      %v9399 = vsel %vm8040, %v7978, 0.0
      %v9400 = vrot.slane %v9399, 4
      %v9401 = vadd.f32 %v9399, %v9400
      %v9402 = vrot.slane %v9401, 2
      %v9403 = vadd.f32 %v9401, %v9402
      %v9404 = vrot.slane %v9403, 1
      %v9405 = vadd.f32 %v9403, %v9404
      %v9406 = vsel %vm8040, %v7979, 0.0
      %v9407 = vrot.slane %v9406, 4
      %v9408 = vadd.f32 %v9406, %v9407
      %v9409 = vrot.slane %v9408, 2
      %v9410 = vadd.f32 %v9408, %v9409
      %v9411 = vrot.slane %v9410, 1
      %v9412 = vadd.f32 %v9410, %v9411
      %v9413 = vsel %vm8040, %v7980, 0.0
      %v9414 = vrot.slane %v9413, 4
      %v9415 = vadd.f32 %v9413, %v9414
      %v9416 = vrot.slane %v9415, 2
      %v9417 = vadd.f32 %v9415, %v9416
      %v9418 = vrot.slane %v9417, 1
      %v9419 = vadd.f32 %v9417, %v9418
      %v9420 = vsel %vm8040, %v7981, 0.0
      %v9421 = vrot.slane %v9420, 4
      %v9422 = vadd.f32 %v9420, %v9421
      %v9423 = vrot.slane %v9422, 2
      %v9424 = vadd.f32 %v9422, %v9423
      %v9425 = vrot.slane %v9424, 1
      %v9426 = vadd.f32 %v9424, %v9425
      %v9427 = vsel %vm8040, %v7982, 0.0
      %v9428 = vrot.slane %v9427, 4
      %v9429 = vadd.f32 %v9427, %v9428
      %v9430 = vrot.slane %v9429, 2
      %v9431 = vadd.f32 %v9429, %v9430
      %v9432 = vrot.slane %v9431, 1
      %v9433 = vadd.f32 %v9431, %v9432
      %v9434 = vsel %vm8040, %v7983, 0.0
      %v9435 = vrot.slane %v9434, 4
      %v9436 = vadd.f32 %v9434, %v9435
      %v9437 = vrot.slane %v9436, 2
      %v9438 = vadd.f32 %v9436, %v9437
      %v9439 = vrot.slane %v9438, 1
      %v9440 = vadd.f32 %v9438, %v9439
      %v9441 = vsel %vm8040, %v7984, 0.0
      %v9442 = vrot.slane %v9441, 4
      %v9443 = vadd.f32 %v9441, %v9442
      %v9444 = vrot.slane %v9443, 2
      %v9445 = vadd.f32 %v9443, %v9444
      %v9446 = vrot.slane %v9445, 1
      %v9447 = vadd.f32 %v9445, %v9446
      %v9448 = vsel %vm8040, %v7985, 0.0
      %v9449 = vrot.slane %v9448, 4
      %v9450 = vadd.f32 %v9448, %v9449
      %v9451 = vrot.slane %v9450, 2
      %v9452 = vadd.f32 %v9450, %v9451
      %v9453 = vrot.slane %v9452, 1
      %v9454 = vadd.f32 %v9452, %v9453
      %v9455 = vsel %vm8040, %v7986, 0.0
      %v9456 = vrot.slane %v9455, 4
      %v9457 = vadd.f32 %v9455, %v9456
      %v9458 = vrot.slane %v9457, 2
      %v9459 = vadd.f32 %v9457, %v9458
      %v9460 = vrot.slane %v9459, 1
      %v9461 = vadd.f32 %v9459, %v9460
      %v9462 = vsel %vm8040, %v7987, 0.0
      %v9463 = vrot.slane %v9462, 4
      %v9464 = vadd.f32 %v9462, %v9463
      %v9465 = vrot.slane %v9464, 2
      %v9466 = vadd.f32 %v9464, %v9465
      %v9467 = vrot.slane %v9466, 1
      %v9468 = vadd.f32 %v9466, %v9467
      %v9469 = vsel %vm8040, %v7988, 0.0
      %v9470 = vrot.slane %v9469, 4
      %v9471 = vadd.f32 %v9469, %v9470
      %v9472 = vrot.slane %v9471, 2
      %v9473 = vadd.f32 %v9471, %v9472
      %v9474 = vrot.slane %v9473, 1
      %v9475 = vadd.f32 %v9473, %v9474
      %v9476 = vsel %vm8040, %v7989, 0.0
      %v9477 = vrot.slane %v9476, 4
      %v9478 = vadd.f32 %v9476, %v9477
      %v9479 = vrot.slane %v9478, 2
      %v9480 = vadd.f32 %v9478, %v9479
      %v9481 = vrot.slane %v9480, 1
      %v9482 = vadd.f32 %v9480, %v9481
      %v9483 = vsel %vm8040, %v7990, 0.0
      %v9484 = vrot.slane %v9483, 4
      %v9485 = vadd.f32 %v9483, %v9484
      %v9486 = vrot.slane %v9485, 2
      %v9487 = vadd.f32 %v9485, %v9486
      %v9488 = vrot.slane %v9487, 1
      %v9489 = vadd.f32 %v9487, %v9488
      %v9490 = vsel %vm8040, %v7991, 0.0
      %v9491 = vrot.slane %v9490, 4
      %v9492 = vadd.f32 %v9490, %v9491
      %v9493 = vrot.slane %v9492, 2
      %v9494 = vadd.f32 %v9492, %v9493
      %v9495 = vrot.slane %v9494, 1
      %v9496 = vadd.f32 %v9494, %v9495
      %v9497 = vsel %vm8040, %v7992, 0.0
      %v9498 = vrot.slane %v9497, 4
      %v9499 = vadd.f32 %v9497, %v9498
      %v9500 = vrot.slane %v9499, 2
      %v9501 = vadd.f32 %v9499, %v9500
      %v9502 = vrot.slane %v9501, 1
      %v9503 = vadd.f32 %v9501, %v9502
      %v9504 = vsel %vm8040, %v7993, 0.0
      %v9505 = vrot.slane %v9504, 4
      %v9506 = vadd.f32 %v9504, %v9505
      %v9507 = vrot.slane %v9506, 2
      %v9508 = vadd.f32 %v9506, %v9507
      %v9509 = vrot.slane %v9508, 1
      %v9510 = vadd.f32 %v9508, %v9509
      %v9511 = vsel %vm8040, %v7994, 0.0
      %v9512 = vrot.slane %v9511, 4
      %v9513 = vadd.f32 %v9511, %v9512
      %v9514 = vrot.slane %v9513, 2
      %v9515 = vadd.f32 %v9513, %v9514
      %v9516 = vrot.slane %v9515, 1
      %v9517 = vadd.f32 %v9515, %v9516
      %v9518 = vsel %vm8040, %v7995, 0.0
      %v9519 = vrot.slane %v9518, 4
      %v9520 = vadd.f32 %v9518, %v9519
      %v9521 = vrot.slane %v9520, 2
      %v9522 = vadd.f32 %v9520, %v9521
      %v9523 = vrot.slane %v9522, 1
      %v9524 = vadd.f32 %v9522, %v9523
      %v9525 = vsel %vm8040, %v7996, 0.0
      %v9526 = vrot.slane %v9525, 4
      %v9527 = vadd.f32 %v9525, %v9526
      %v9528 = vrot.slane %v9527, 2
      %v9529 = vadd.f32 %v9527, %v9528
      %v9530 = vrot.slane %v9529, 1
      %v9531 = vadd.f32 %v9529, %v9530
      %v9532 = vsel %vm8040, %v7997, 0.0
      %v9533 = vrot.slane %v9532, 4
      %v9534 = vadd.f32 %v9532, %v9533
      %v9535 = vrot.slane %v9534, 2
      %v9536 = vadd.f32 %v9534, %v9535
      %v9537 = vrot.slane %v9536, 1
      %v9538 = vadd.f32 %v9536, %v9537
      %v9539 = vsel %vm8040, %v7998, 0.0
      %v9540 = vrot.slane %v9539, 4
      %v9541 = vadd.f32 %v9539, %v9540
      %v9542 = vrot.slane %v9541, 2
      %v9543 = vadd.f32 %v9541, %v9542
      %v9544 = vrot.slane %v9543, 1
      %v9545 = vadd.f32 %v9543, %v9544
      %v9546 = vsel %vm8040, %v7999, 0.0
      %v9547 = vrot.slane %v9546, 4
      %v9548 = vadd.f32 %v9546, %v9547
      %v9549 = vrot.slane %v9548, 2
      %v9550 = vadd.f32 %v9548, %v9549
      %v9551 = vrot.slane %v9550, 1
      %v9552 = vadd.f32 %v9550, %v9551
      %v9553 = vsel %vm8040, %v8000, 0.0
      %v9554 = vrot.slane %v9553, 4
      %v9555 = vadd.f32 %v9553, %v9554
      %v9556 = vrot.slane %v9555, 2
      %v9557 = vadd.f32 %v9555, %v9556
      %v9558 = vrot.slane %v9557, 1
      %v9559 = vadd.f32 %v9557, %v9558
      %v9560 = vsel %vm8040, %v8001, 0.0
      %v9561 = vrot.slane %v9560, 4
      %v9562 = vadd.f32 %v9560, %v9561
      %v9563 = vrot.slane %v9562, 2
      %v9564 = vadd.f32 %v9562, %v9563
      %v9565 = vrot.slane %v9564, 1
      %v9566 = vadd.f32 %v9564, %v9565
      %v9567 = vsel %vm8040, %v8002, 0.0
      %v9568 = vrot.slane %v9567, 4
      %v9569 = vadd.f32 %v9567, %v9568
      %v9570 = vrot.slane %v9569, 2
      %v9571 = vadd.f32 %v9569, %v9570
      %v9572 = vrot.slane %v9571, 1
      %v9573 = vadd.f32 %v9571, %v9572
      %v9574 = vsel %vm8040, %v8003, 0.0
      %v9575 = vrot.slane %v9574, 4
      %v9576 = vadd.f32 %v9574, %v9575
      %v9577 = vrot.slane %v9576, 2
      %v9578 = vadd.f32 %v9576, %v9577
      %v9579 = vrot.slane %v9578, 1
      %v9580 = vadd.f32 %v9578, %v9579
      %v9581 = vsel %vm8040, %v8004, 0.0
      %v9582 = vrot.slane %v9581, 4
      %v9583 = vadd.f32 %v9581, %v9582
      %v9584 = vrot.slane %v9583, 2
      %v9585 = vadd.f32 %v9583, %v9584
      %v9586 = vrot.slane %v9585, 1
      %v9587 = vadd.f32 %v9585, %v9586
      %v9588 = vsel %vm8040, %v8005, 0.0
      %v9589 = vrot.slane %v9588, 4
      %v9590 = vadd.f32 %v9588, %v9589
      %v9591 = vrot.slane %v9590, 2
      %v9592 = vadd.f32 %v9590, %v9591
      %v9593 = vrot.slane %v9592, 1
      %v9594 = vadd.f32 %v9592, %v9593
      %v9595 = vsel %vm8040, %v8006, 0.0
      %v9596 = vrot.slane %v9595, 4
      %v9597 = vadd.f32 %v9595, %v9596
      %v9598 = vrot.slane %v9597, 2
      %v9599 = vadd.f32 %v9597, %v9598
      %v9600 = vrot.slane %v9599, 1
      %v9601 = vadd.f32 %v9599, %v9600
      %v9602 = vsel %vm8040, %v8007, 0.0
      %v9603 = vrot.slane %v9602, 4
      %v9604 = vadd.f32 %v9602, %v9603
      %v9605 = vrot.slane %v9604, 2
      %v9606 = vadd.f32 %v9604, %v9605
      %v9607 = vrot.slane %v9606, 1
      %v9608 = vadd.f32 %v9606, %v9607
      %v9609 = vsel %vm8040, %v8008, 0.0
      %v9610 = vrot.slane %v9609, 4
      %v9611 = vadd.f32 %v9609, %v9610
      %v9612 = vrot.slane %v9611, 2
      %v9613 = vadd.f32 %v9611, %v9612
      %v9614 = vrot.slane %v9613, 1
      %v9615 = vadd.f32 %v9613, %v9614
      %v9616 = vsel %vm8040, %v8009, 0.0
      %v9617 = vrot.slane %v9616, 4
      %v9618 = vadd.f32 %v9616, %v9617
      %v9619 = vrot.slane %v9618, 2
      %v9620 = vadd.f32 %v9618, %v9619
      %v9621 = vrot.slane %v9620, 1
      %v9622 = vadd.f32 %v9620, %v9621
      %v9623 = vsel %vm8040, %v8010, 0.0
      %v9624 = vrot.slane %v9623, 4
      %v9625 = vadd.f32 %v9623, %v9624
      %v9626 = vrot.slane %v9625, 2
      %v9627 = vadd.f32 %v9625, %v9626
      %v9628 = vrot.slane %v9627, 1
      %v9629 = vadd.f32 %v9627, %v9628
      %v9630 = vsel %vm8040, %v8011, 0.0
      %v9631 = vrot.slane %v9630, 4
      %v9632 = vadd.f32 %v9630, %v9631
      %v9633 = vrot.slane %v9632, 2
      %v9634 = vadd.f32 %v9632, %v9633
      %v9635 = vrot.slane %v9634, 1
      %v9636 = vadd.f32 %v9634, %v9635
      %v9637 = vsel %vm8040, %v8012, 0.0
      %v9638 = vrot.slane %v9637, 4
      %v9639 = vadd.f32 %v9637, %v9638
      %v9640 = vrot.slane %v9639, 2
      %v9641 = vadd.f32 %v9639, %v9640
      %v9642 = vrot.slane %v9641, 1
      %v9643 = vadd.f32 %v9641, %v9642
      %v9644 = vsel %vm8040, %v8013, 0.0
      %v9645 = vrot.slane %v9644, 4
      %v9646 = vadd.f32 %v9644, %v9645
      %v9647 = vrot.slane %v9646, 2
      %v9648 = vadd.f32 %v9646, %v9647
      %v9649 = vrot.slane %v9648, 1
      %v9650 = vadd.f32 %v9648, %v9649
      %v9651 = vsel %vm8040, %v8014, 0.0
      %v9652 = vrot.slane %v9651, 4
      %v9653 = vadd.f32 %v9651, %v9652
      %v9654 = vrot.slane %v9653, 2
      %v9655 = vadd.f32 %v9653, %v9654
      %v9656 = vrot.slane %v9655, 1
      %v9657 = vadd.f32 %v9655, %v9656
      %v9658 = vsel %vm8040, %v8015, 0.0
      %v9659 = vrot.slane %v9658, 4
      %v9660 = vadd.f32 %v9658, %v9659
      %v9661 = vrot.slane %v9660, 2
      %v9662 = vadd.f32 %v9660, %v9661
      %v9663 = vrot.slane %v9662, 1
      %v9664 = vadd.f32 %v9662, %v9663
      %v9665 = vsel %vm8040, %v8016, 0.0
      %v9666 = vrot.slane %v9665, 4
      %v9667 = vadd.f32 %v9665, %v9666
      %v9668 = vrot.slane %v9667, 2
      %v9669 = vadd.f32 %v9667, %v9668
      %v9670 = vrot.slane %v9669, 1
      %v9671 = vadd.f32 %v9669, %v9670
      %v9672 = vsel %vm8040, %v8017, 0.0
      %v9673 = vrot.slane %v9672, 4
      %v9674 = vadd.f32 %v9672, %v9673
      %v9675 = vrot.slane %v9674, 2
      %v9676 = vadd.f32 %v9674, %v9675
      %v9677 = vrot.slane %v9676, 1
      %v9678 = vadd.f32 %v9676, %v9677
      %v9679 = vsel %vm8040, %v8018, 0.0
      %v9680 = vrot.slane %v9679, 4
      %v9681 = vadd.f32 %v9679, %v9680
      %v9682 = vrot.slane %v9681, 2
      %v9683 = vadd.f32 %v9681, %v9682
      %v9684 = vrot.slane %v9683, 1
      %v9685 = vadd.f32 %v9683, %v9684
      %v9686 = vsel %vm8040, %v8019, 0.0
      %v9687 = vrot.slane %v9686, 4
      %v9688 = vadd.f32 %v9686, %v9687
      %v9689 = vrot.slane %v9688, 2
      %v9690 = vadd.f32 %v9688, %v9689
      %v9691 = vrot.slane %v9690, 1
      %v9692 = vadd.f32 %v9690, %v9691
      %v9693 = vsel %vm8040, %v8020, 0.0
      %v9694 = vrot.slane %v9693, 4
      %v9695 = vadd.f32 %v9693, %v9694
      %v9696 = vrot.slane %v9695, 2
      %v9697 = vadd.f32 %v9695, %v9696
      %v9698 = vrot.slane %v9697, 1
      %v9699 = vadd.f32 %v9697, %v9698
      %v9700 = vsel %vm8040, %v8021, 0.0
      %v9701 = vrot.slane %v9700, 4
      %v9702 = vadd.f32 %v9700, %v9701
      %v9703 = vrot.slane %v9702, 2
      %v9704 = vadd.f32 %v9702, %v9703
      %v9705 = vrot.slane %v9704, 1
      %v9706 = vadd.f32 %v9704, %v9705
      %v9707 = vsel %vm8040, %v8022, 0.0
      %v9708 = vrot.slane %v9707, 4
      %v9709 = vadd.f32 %v9707, %v9708
      %v9710 = vrot.slane %v9709, 2
      %v9711 = vadd.f32 %v9709, %v9710
      %v9712 = vrot.slane %v9711, 1
      %v9713 = vadd.f32 %v9711, %v9712
      %v9714 = vsel %vm8040, %v8023, 0.0
      %v9715 = vrot.slane %v9714, 4
      %v9716 = vadd.f32 %v9714, %v9715
      %v9717 = vrot.slane %v9716, 2
      %v9718 = vadd.f32 %v9716, %v9717
      %v9719 = vrot.slane %v9718, 1
      %v9720 = vadd.f32 %v9718, %v9719
      %v9721 = vsel %vm8040, %v8024, 0.0
      %v9722 = vrot.slane %v9721, 4
      %v9723 = vadd.f32 %v9721, %v9722
      %v9724 = vrot.slane %v9723, 2
      %v9725 = vadd.f32 %v9723, %v9724
      %v9726 = vrot.slane %v9725, 1
      %v9727 = vadd.f32 %v9725, %v9726
      %v9728 = vsel %vm8040, %v8025, 0.0
      %v9729 = vrot.slane %v9728, 4
      %v9730 = vadd.f32 %v9728, %v9729
      %v9731 = vrot.slane %v9730, 2
      %v9732 = vadd.f32 %v9730, %v9731
      %v9733 = vrot.slane %v9732, 1
      %v9734 = vadd.f32 %v9732, %v9733
      %v9735 = vsel %vm8040, %v8026, 0.0
      %v9736 = vrot.slane %v9735, 4
      %v9737 = vadd.f32 %v9735, %v9736
      %v9738 = vrot.slane %v9737, 2
      %v9739 = vadd.f32 %v9737, %v9738
      %v9740 = vrot.slane %v9739, 1
      %v9741 = vadd.f32 %v9739, %v9740
      %v9742 = vsel %vm8040, %v8027, 0.0
      %v9743 = vrot.slane %v9742, 4
      %v9744 = vadd.f32 %v9742, %v9743
      %v9745 = vrot.slane %v9744, 2
      %v9746 = vadd.f32 %v9744, %v9745
      %v9747 = vrot.slane %v9746, 1
      %v9748 = vadd.f32 %v9746, %v9747
      %v9749 = vsel %vm8040, %v8028, 0.0
      %v9750 = vrot.slane %v9749, 4
      %v9751 = vadd.f32 %v9749, %v9750
      %v9752 = vrot.slane %v9751, 2
      %v9753 = vadd.f32 %v9751, %v9752
      %v9754 = vrot.slane %v9753, 1
      %v9755 = vadd.f32 %v9753, %v9754
      %v9756 = vsel %vm8040, %v8029, 0.0
      %v9757 = vrot.slane %v9756, 4
      %v9758 = vadd.f32 %v9756, %v9757
      %v9759 = vrot.slane %v9758, 2
      %v9760 = vadd.f32 %v9758, %v9759
      %v9761 = vrot.slane %v9760, 1
      %v9762 = vadd.f32 %v9760, %v9761
      %v9763 = vsel %vm8040, %v8030, 0.0
      %v9764 = vrot.slane %v9763, 4
      %v9765 = vadd.f32 %v9763, %v9764
      %v9766 = vrot.slane %v9765, 2
      %v9767 = vadd.f32 %v9765, %v9766
      %v9768 = vrot.slane %v9767, 1
      %v9769 = vadd.f32 %v9767, %v9768
      %v9770 = vsel %vm8040, %v8031, 0.0
      %v9771 = vrot.slane %v9770, 4
      %v9772 = vadd.f32 %v9770, %v9771
      %v9773 = vrot.slane %v9772, 2
      %v9774 = vadd.f32 %v9772, %v9773
      %v9775 = vrot.slane %v9774, 1
      %v9776 = vadd.f32 %v9774, %v9775
      %v9777 = vsel %vm8040, %v8032, 0.0
      %v9778 = vrot.slane %v9777, 4
      %v9779 = vadd.f32 %v9777, %v9778
      %v9780 = vrot.slane %v9779, 2
      %v9781 = vadd.f32 %v9779, %v9780
      %v9782 = vrot.slane %v9781, 1
      %v9783 = vadd.f32 %v9781, %v9782
      %v9784 = vsel %vm8040, %v8033, 0.0
      %v9785 = vrot.slane %v9784, 4
      %v9786 = vadd.f32 %v9784, %v9785
      %v9787 = vrot.slane %v9786, 2
      %v9788 = vadd.f32 %v9786, %v9787
      %v9789 = vrot.slane %v9788, 1
      %v9790 = vadd.f32 %v9788, %v9789
      %v9791 = vsel %vm8040, %v8034, 0.0
      %v9792 = vrot.slane %v9791, 4
      %v9793 = vadd.f32 %v9791, %v9792
      %v9794 = vrot.slane %v9793, 2
      %v9795 = vadd.f32 %v9793, %v9794
      %v9796 = vrot.slane %v9795, 1
      %v9797 = vadd.f32 %v9795, %v9796
      %v9798 = vsel %vm8040, %v8035, 0.0
      %v9799 = vrot.slane %v9798, 4
      %v9800 = vadd.f32 %v9798, %v9799
      %v9801 = vrot.slane %v9800, 2
      %v9802 = vadd.f32 %v9800, %v9801
      %v9803 = vrot.slane %v9802, 1
      %v9804 = vadd.f32 %v9802, %v9803
      %v9805 = vsel %vm8040, %v8036, 0.0
      %v9806 = vrot.slane %v9805, 4
      %v9807 = vadd.f32 %v9805, %v9806
      %v9808 = vrot.slane %v9807, 2
      %v9809 = vadd.f32 %v9807, %v9808
      %v9810 = vrot.slane %v9809, 1
      %v9811 = vadd.f32 %v9809, %v9810
      %v9812 = vsel %vm8040, %v8037, 0.0
      %v9813 = vrot.slane %v9812, 4
      %v9814 = vadd.f32 %v9812, %v9813
      %v9815 = vrot.slane %v9814, 2
      %v9816 = vadd.f32 %v9814, %v9815
      %v9817 = vrot.slane %v9816, 1
      %v9818 = vadd.f32 %v9816, %v9817
      %v9819 = vsel %vm8040, %v8038, 0.0
      %v9820 = vrot.slane %v9819, 4
      %v9821 = vadd.f32 %v9819, %v9820
      %v9822 = vrot.slane %v9821, 2
      %v9823 = vadd.f32 %v9821, %v9822
      %v9824 = vrot.slane %v9823, 1
      %v9825 = vadd.f32 %v9823, %v9824
      %v9826 = vsel %vm8040, %v8039, 0.0
      %v9827 = vrot.slane %v9826, 4
      %v9828 = vadd.f32 %v9826, %v9827
      %v9829 = vrot.slane %v9828, 2
      %v9830 = vadd.f32 %v9828, %v9829
      %v9831 = vrot.slane %v9830, 1
      %v9832 = vadd.f32 %v9830, %v9831
      %v9834 = vlaneseq
      %v9835 = vshrl.u32 %v9834, 7
      %v9836 = vsub.s32 0, %v9835
      %v9837 = vrot.slane %v1632, %v9836
      %v9839 = vadd.f32 %v8047, %v9837
      %v9840 = vadd.f32 %v8054, %v9837
      %v9841 = vadd.f32 %v8061, %v9837
      %v9842 = vadd.f32 %v8068, %v9837
      %v9843 = vadd.f32 %v8075, %v9837
      %v9844 = vadd.f32 %v8082, %v9837
      %v9845 = vadd.f32 %v8089, %v9837
      %v9846 = vadd.f32 %v8096, %v9837
      %v9847 = vadd.f32 %v8103, %v9837
      %v9848 = vadd.f32 %v8110, %v9837
      %v9849 = vadd.f32 %v8117, %v9837
      %v9850 = vadd.f32 %v8124, %v9837
      %v9851 = vadd.f32 %v8131, %v9837
      %v9852 = vadd.f32 %v8138, %v9837
      %v9853 = vadd.f32 %v8145, %v9837
      %v9854 = vadd.f32 %v8152, %v9837
      %v9855 = vadd.f32 %v8159, %v9837
      %v9856 = vadd.f32 %v8166, %v9837
      %v9857 = vadd.f32 %v8173, %v9837
      %v9858 = vadd.f32 %v8180, %v9837
      %v9859 = vadd.f32 %v8187, %v9837
      %v9860 = vadd.f32 %v8194, %v9837
      %v9861 = vadd.f32 %v8201, %v9837
      %v9862 = vadd.f32 %v8208, %v9837
      %v9863 = vadd.f32 %v8215, %v9837
      %v9864 = vadd.f32 %v8222, %v9837
      %v9865 = vadd.f32 %v8229, %v9837
      %v9866 = vadd.f32 %v8236, %v9837
      %v9867 = vadd.f32 %v8243, %v9837
      %v9868 = vadd.f32 %v8250, %v9837
      %v9869 = vadd.f32 %v8257, %v9837
      %v9870 = vadd.f32 %v8264, %v9837
      %v9871 = vadd.f32 %v8271, %v9837
      %v9872 = vadd.f32 %v8278, %v9837
      %v9873 = vadd.f32 %v8285, %v9837
      %v9874 = vadd.f32 %v8292, %v9837
      %v9875 = vadd.f32 %v8299, %v9837
      %v9876 = vadd.f32 %v8306, %v9837
      %v9877 = vadd.f32 %v8313, %v9837
      %v9878 = vadd.f32 %v8320, %v9837
      %v9879 = vadd.f32 %v8327, %v9837
      %v9880 = vadd.f32 %v8334, %v9837
      %v9881 = vadd.f32 %v8341, %v9837
      %v9882 = vadd.f32 %v8348, %v9837
      %v9883 = vadd.f32 %v8355, %v9837
      %v9884 = vadd.f32 %v8362, %v9837
      %v9885 = vadd.f32 %v8369, %v9837
      %v9886 = vadd.f32 %v8376, %v9837
      %v9887 = vadd.f32 %v8383, %v9837
      %v9888 = vadd.f32 %v8390, %v9837
      %v9889 = vadd.f32 %v8397, %v9837
      %v9890 = vadd.f32 %v8404, %v9837
      %v9891 = vadd.f32 %v8411, %v9837
      %v9892 = vadd.f32 %v8418, %v9837
      %v9893 = vadd.f32 %v8425, %v9837
      %v9894 = vadd.f32 %v8432, %v9837
      %v9895 = vadd.f32 %v8439, %v9837
      %v9896 = vadd.f32 %v8446, %v9837
      %v9897 = vadd.f32 %v8453, %v9837
      %v9898 = vadd.f32 %v8460, %v9837
      %v9899 = vadd.f32 %v8467, %v9837
      %v9900 = vadd.f32 %v8474, %v9837
      %v9901 = vadd.f32 %v8481, %v9837
      %v9902 = vadd.f32 %v8488, %v9837
      %v9903 = vadd.f32 %v8495, %v9837
      %v9904 = vadd.f32 %v8502, %v9837
      %v9905 = vadd.f32 %v8509, %v9837
      %v9906 = vadd.f32 %v8516, %v9837
      %v9907 = vadd.f32 %v8523, %v9837
      %v9908 = vadd.f32 %v8530, %v9837
      %v9909 = vadd.f32 %v8537, %v9837
      %v9910 = vadd.f32 %v8544, %v9837
      %v9911 = vadd.f32 %v8551, %v9837
      %v9912 = vadd.f32 %v8558, %v9837
      %v9913 = vadd.f32 %v8565, %v9837
      %v9914 = vadd.f32 %v8572, %v9837
      %v9915 = vadd.f32 %v8579, %v9837
      %v9916 = vadd.f32 %v8586, %v9837
      %v9917 = vadd.f32 %v8593, %v9837
      %v9918 = vadd.f32 %v8600, %v9837
      %v9919 = vadd.f32 %v8607, %v9837
      %v9920 = vadd.f32 %v8614, %v9837
      %v9921 = vadd.f32 %v8621, %v9837
      %v9922 = vadd.f32 %v8628, %v9837
      %v9923 = vadd.f32 %v8635, %v9837
      %v9924 = vadd.f32 %v8642, %v9837
      %v9925 = vadd.f32 %v8649, %v9837
      %v9926 = vadd.f32 %v8656, %v9837
      %v9927 = vadd.f32 %v8663, %v9837
      %v9928 = vadd.f32 %v8670, %v9837
      %v9929 = vadd.f32 %v8677, %v9837
      %v9930 = vadd.f32 %v8684, %v9837
      %v9931 = vadd.f32 %v8691, %v9837
      %v9932 = vadd.f32 %v8698, %v9837
      %v9933 = vadd.f32 %v8705, %v9837
      %v9934 = vadd.f32 %v8712, %v9837
      %v9935 = vadd.f32 %v8719, %v9837
      %v9936 = vadd.f32 %v8726, %v9837
      %v9937 = vadd.f32 %v8733, %v9837
      %v9938 = vadd.f32 %v8740, %v9837
      %v9939 = vadd.f32 %v8747, %v9837
      %v9940 = vadd.f32 %v8754, %v9837
      %v9941 = vadd.f32 %v8761, %v9837
      %v9942 = vadd.f32 %v8768, %v9837
      %v9943 = vadd.f32 %v8775, %v9837
      %v9944 = vadd.f32 %v8782, %v9837
      %v9945 = vadd.f32 %v8789, %v9837
      %v9946 = vadd.f32 %v8796, %v9837
      %v9947 = vadd.f32 %v8803, %v9837
      %v9948 = vadd.f32 %v8810, %v9837
      %v9949 = vadd.f32 %v8817, %v9837
      %v9950 = vadd.f32 %v8824, %v9837
      %v9951 = vadd.f32 %v8831, %v9837
      %v9952 = vadd.f32 %v8838, %v9837
      %v9953 = vadd.f32 %v8845, %v9837
      %v9954 = vadd.f32 %v8852, %v9837
      %v9955 = vadd.f32 %v8859, %v9837
      %v9956 = vadd.f32 %v8866, %v9837
      %v9957 = vadd.f32 %v8873, %v9837
      %v9958 = vadd.f32 %v8880, %v9837
      %v9959 = vadd.f32 %v8887, %v9837
      %v9960 = vadd.f32 %v8894, %v9837
      %v9961 = vadd.f32 %v8901, %v9837
      %v9962 = vadd.f32 %v8908, %v9837
      %v9963 = vadd.f32 %v8915, %v9837
      %v9964 = vadd.f32 %v8922, %v9837
      %v9965 = vadd.f32 %v8929, %v9837
      %v9966 = vadd.f32 %v8936, %v9837
      %v9967 = vadd.f32 %v8943, %v9837
      %v9968 = vadd.f32 %v8950, %v9837
      %v9969 = vadd.f32 %v8957, %v9837
      %v9970 = vadd.f32 %v8964, %v9837
      %v9971 = vadd.f32 %v8971, %v9837
      %v9972 = vadd.f32 %v8978, %v9837
      %v9973 = vadd.f32 %v8985, %v9837
      %v9974 = vadd.f32 %v8992, %v9837
      %v9975 = vadd.f32 %v8999, %v9837
      %v9976 = vadd.f32 %v9006, %v9837
      %v9977 = vadd.f32 %v9013, %v9837
      %v9978 = vadd.f32 %v9020, %v9837
      %v9979 = vadd.f32 %v9027, %v9837
      %v9980 = vadd.f32 %v9034, %v9837
      %v9981 = vadd.f32 %v9041, %v9837
      %v9982 = vadd.f32 %v9048, %v9837
      %v9983 = vadd.f32 %v9055, %v9837
      %v9984 = vadd.f32 %v9062, %v9837
      %v9985 = vadd.f32 %v9069, %v9837
      %v9986 = vadd.f32 %v9076, %v9837
      %v9987 = vadd.f32 %v9083, %v9837
      %v9988 = vadd.f32 %v9090, %v9837
      %v9989 = vadd.f32 %v9097, %v9837
      %v9990 = vadd.f32 %v9104, %v9837
      %v9991 = vadd.f32 %v9111, %v9837
      %v9992 = vadd.f32 %v9118, %v9837
      %v9993 = vadd.f32 %v9125, %v9837
      %v9994 = vadd.f32 %v9132, %v9837
      %v9995 = vadd.f32 %v9139, %v9837
      %v9996 = vadd.f32 %v9146, %v9837
      %v9997 = vadd.f32 %v9153, %v9837
      %v9998 = vadd.f32 %v9160, %v9837
      %v9999 = vadd.f32 %v9167, %v9837
      %v10000 = vadd.f32 %v9174, %v9837
      %v10001 = vadd.f32 %v9181, %v9837
      %v10002 = vadd.f32 %v9188, %v9837
      %v10003 = vadd.f32 %v9195, %v9837
      %v10004 = vadd.f32 %v9202, %v9837
      %v10005 = vadd.f32 %v9209, %v9837
      %v10006 = vadd.f32 %v9216, %v9837
      %v10007 = vadd.f32 %v9223, %v9837
      %v10008 = vadd.f32 %v9230, %v9837
      %v10009 = vadd.f32 %v9237, %v9837
      %v10010 = vadd.f32 %v9244, %v9837
      %v10011 = vadd.f32 %v9251, %v9837
      %v10012 = vadd.f32 %v9258, %v9837
      %v10013 = vadd.f32 %v9265, %v9837
      %v10014 = vadd.f32 %v9272, %v9837
      %v10015 = vadd.f32 %v9279, %v9837
      %v10016 = vadd.f32 %v9286, %v9837
      %v10017 = vadd.f32 %v9293, %v9837
      %v10018 = vadd.f32 %v9300, %v9837
      %v10019 = vadd.f32 %v9307, %v9837
      %v10020 = vadd.f32 %v9314, %v9837
      %v10021 = vadd.f32 %v9321, %v9837
      %v10022 = vadd.f32 %v9328, %v9837
      %v10023 = vadd.f32 %v9335, %v9837
      %v10024 = vadd.f32 %v9342, %v9837
      %v10025 = vadd.f32 %v9349, %v9837
      %v10026 = vadd.f32 %v9356, %v9837
      %v10027 = vadd.f32 %v9363, %v9837
      %v10028 = vadd.f32 %v9370, %v9837
      %v10029 = vadd.f32 %v9377, %v9837
      %v10030 = vadd.f32 %v9384, %v9837
      %v10031 = vadd.f32 %v9391, %v9837
      %v10032 = vadd.f32 %v9398, %v9837
      %v10033 = vadd.f32 %v9405, %v9837
      %v10034 = vadd.f32 %v9412, %v9837
      %v10035 = vadd.f32 %v9419, %v9837
      %v10036 = vadd.f32 %v9426, %v9837
      %v10037 = vadd.f32 %v9433, %v9837
      %v10038 = vadd.f32 %v9440, %v9837
      %v10039 = vadd.f32 %v9447, %v9837
      %v10040 = vadd.f32 %v9454, %v9837
      %v10041 = vadd.f32 %v9461, %v9837
      %v10042 = vadd.f32 %v9468, %v9837
      %v10043 = vadd.f32 %v9475, %v9837
      %v10044 = vadd.f32 %v9482, %v9837
      %v10045 = vadd.f32 %v9489, %v9837
      %v10046 = vadd.f32 %v9496, %v9837
      %v10047 = vadd.f32 %v9503, %v9837
      %v10048 = vadd.f32 %v9510, %v9837
      %v10049 = vadd.f32 %v9517, %v9837
      %v10050 = vadd.f32 %v9524, %v9837
      %v10051 = vadd.f32 %v9531, %v9837
      %v10052 = vadd.f32 %v9538, %v9837
      %v10053 = vadd.f32 %v9545, %v9837
      %v10054 = vadd.f32 %v9552, %v9837
      %v10055 = vadd.f32 %v9559, %v9837
      %v10056 = vadd.f32 %v9566, %v9837
      %v10057 = vadd.f32 %v9573, %v9837
      %v10058 = vadd.f32 %v9580, %v9837
      %v10059 = vadd.f32 %v9587, %v9837
      %v10060 = vadd.f32 %v9594, %v9837
      %v10061 = vadd.f32 %v9601, %v9837
      %v10062 = vadd.f32 %v9608, %v9837
      %v10063 = vadd.f32 %v9615, %v9837
      %v10064 = vadd.f32 %v9622, %v9837
      %v10065 = vadd.f32 %v9629, %v9837
      %v10066 = vadd.f32 %v9636, %v9837
      %v10067 = vadd.f32 %v9643, %v9837
      %v10068 = vadd.f32 %v9650, %v9837
      %v10069 = vadd.f32 %v9657, %v9837
      %v10070 = vadd.f32 %v9664, %v9837
      %v10071 = vadd.f32 %v9671, %v9837
      %v10072 = vadd.f32 %v9678, %v9837
      %v10073 = vadd.f32 %v9685, %v9837
      %v10074 = vadd.f32 %v9692, %v9837
      %v10075 = vadd.f32 %v9699, %v9837
      %v10076 = vadd.f32 %v9706, %v9837
      %v10077 = vadd.f32 %v9713, %v9837
      %v10078 = vadd.f32 %v9720, %v9837
      %v10079 = vadd.f32 %v9727, %v9837
      %v10080 = vadd.f32 %v9734, %v9837
      %v10081 = vadd.f32 %v9741, %v9837
      %v10082 = vadd.f32 %v9748, %v9837
      %v10083 = vadd.f32 %v9755, %v9837
      %v10084 = vadd.f32 %v9762, %v9837
      %v10085 = vadd.f32 %v9769, %v9837
      %v10086 = vadd.f32 %v9776, %v9837
      %v10087 = vadd.f32 %v9783, %v9837
      %v10088 = vadd.f32 %v9790, %v9837
      %v10089 = vadd.f32 %v9797, %v9837
      %v10090 = vadd.f32 %v9804, %v9837
      %v10091 = vadd.f32 %v9811, %v9837
      %v10092 = vadd.f32 %v9818, %v9837
      %v10093 = vadd.f32 %v9825, %v9837
      %v10094 = vadd.f32 %v9832, %v9837
      %v10351 = vrot.slane %v9840, 7
      %vm10352 = vcmask 1041409
      %v10353 = vsel %vm10352, %v10351, %v9839
      %v10354 = vrot.slane %v9841, 6
      %vm10355 = vcmask 1042434
      %v10356 = vsel %vm10355, %v10354, %v10353
      %v10357 = vrot.slane %v9842, 5
      %vm10358 = vcmask 1043459
      %v10359 = vsel %vm10358, %v10357, %v10356
      %v10360 = vrot.slane %v9843, 4
      %vm10361 = vcmask 1044484
      %v10362 = vsel %vm10361, %v10360, %v10359
      %v10363 = vrot.slane %v9844, 3
      %vm10364 = vcmask 1045509
      %v10365 = vsel %vm10364, %v10363, %v10362
      %v10366 = vrot.slane %v9845, 2
      %vm10367 = vcmask 1046534
      %v10368 = vsel %vm10367, %v10366, %v10365
      %v10369 = vrot.slane %v9846, 1
      %vm10370 = vcmask 1047559
      %v10371 = vsel %vm10370, %v10369, %v10368
      %v10372 = vrot.slane %v9848, 7
      %v10373 = vsel %vm10352, %v10372, %v9847
      %v10374 = vrot.slane %v9849, 6
      %v10375 = vsel %vm10355, %v10374, %v10373
      %v10376 = vrot.slane %v9850, 5
      %v10377 = vsel %vm10358, %v10376, %v10375
      %v10378 = vrot.slane %v9851, 4
      %v10379 = vsel %vm10361, %v10378, %v10377
      %v10380 = vrot.slane %v9852, 3
      %v10381 = vsel %vm10364, %v10380, %v10379
      %v10382 = vrot.slane %v9853, 2
      %v10383 = vsel %vm10367, %v10382, %v10381
      %v10384 = vrot.slane %v9854, 1
      %v10385 = vsel %vm10370, %v10384, %v10383
      %v10386 = vrot.slane %v9856, 7
      %v10387 = vsel %vm10352, %v10386, %v9855
      %v10388 = vrot.slane %v9857, 6
      %v10389 = vsel %vm10355, %v10388, %v10387
      %v10390 = vrot.slane %v9858, 5
      %v10391 = vsel %vm10358, %v10390, %v10389
      %v10392 = vrot.slane %v9859, 4
      %v10393 = vsel %vm10361, %v10392, %v10391
      %v10394 = vrot.slane %v9860, 3
      %v10395 = vsel %vm10364, %v10394, %v10393
      %v10396 = vrot.slane %v9861, 2
      %v10397 = vsel %vm10367, %v10396, %v10395
      %v10398 = vrot.slane %v9862, 1
      %v10399 = vsel %vm10370, %v10398, %v10397
      %v10400 = vrot.slane %v9864, 7
      %v10401 = vsel %vm10352, %v10400, %v9863
      %v10402 = vrot.slane %v9865, 6
      %v10403 = vsel %vm10355, %v10402, %v10401
      %v10404 = vrot.slane %v9866, 5
      %v10405 = vsel %vm10358, %v10404, %v10403
      %v10406 = vrot.slane %v9867, 4
      %v10407 = vsel %vm10361, %v10406, %v10405
      %v10408 = vrot.slane %v9868, 3
      %v10409 = vsel %vm10364, %v10408, %v10407
      %v10410 = vrot.slane %v9869, 2
      %v10411 = vsel %vm10367, %v10410, %v10409
      %v10412 = vrot.slane %v9870, 1
      %v10413 = vsel %vm10370, %v10412, %v10411
      %v10414 = vrot.slane %v9872, 7
      %v10415 = vsel %vm10352, %v10414, %v9871
      %v10416 = vrot.slane %v9873, 6
      %v10417 = vsel %vm10355, %v10416, %v10415
      %v10418 = vrot.slane %v9874, 5
      %v10419 = vsel %vm10358, %v10418, %v10417
      %v10420 = vrot.slane %v9875, 4
      %v10421 = vsel %vm10361, %v10420, %v10419
      %v10422 = vrot.slane %v9876, 3
      %v10423 = vsel %vm10364, %v10422, %v10421
      %v10424 = vrot.slane %v9877, 2
      %v10425 = vsel %vm10367, %v10424, %v10423
      %v10426 = vrot.slane %v9878, 1
      %v10427 = vsel %vm10370, %v10426, %v10425
      %v10428 = vrot.slane %v9880, 7
      %v10429 = vsel %vm10352, %v10428, %v9879
      %v10430 = vrot.slane %v9881, 6
      %v10431 = vsel %vm10355, %v10430, %v10429
      %v10432 = vrot.slane %v9882, 5
      %v10433 = vsel %vm10358, %v10432, %v10431
      %v10434 = vrot.slane %v9883, 4
      %v10435 = vsel %vm10361, %v10434, %v10433
      %v10436 = vrot.slane %v9884, 3
      %v10437 = vsel %vm10364, %v10436, %v10435
      %v10438 = vrot.slane %v9885, 2
      %v10439 = vsel %vm10367, %v10438, %v10437
      %v10440 = vrot.slane %v9886, 1
      %v10441 = vsel %vm10370, %v10440, %v10439
      %v10442 = vrot.slane %v9888, 7
      %v10443 = vsel %vm10352, %v10442, %v9887
      %v10444 = vrot.slane %v9889, 6
      %v10445 = vsel %vm10355, %v10444, %v10443
      %v10446 = vrot.slane %v9890, 5
      %v10447 = vsel %vm10358, %v10446, %v10445
      %v10448 = vrot.slane %v9891, 4
      %v10449 = vsel %vm10361, %v10448, %v10447
      %v10450 = vrot.slane %v9892, 3
      %v10451 = vsel %vm10364, %v10450, %v10449
      %v10452 = vrot.slane %v9893, 2
      %v10453 = vsel %vm10367, %v10452, %v10451
      %v10454 = vrot.slane %v9894, 1
      %v10455 = vsel %vm10370, %v10454, %v10453
      %v10456 = vrot.slane %v9896, 7
      %v10457 = vsel %vm10352, %v10456, %v9895
      %v10458 = vrot.slane %v9897, 6
      %v10459 = vsel %vm10355, %v10458, %v10457
      %v10460 = vrot.slane %v9898, 5
      %v10461 = vsel %vm10358, %v10460, %v10459
      %v10462 = vrot.slane %v9899, 4
      %v10463 = vsel %vm10361, %v10462, %v10461
      %v10464 = vrot.slane %v9900, 3
      %v10465 = vsel %vm10364, %v10464, %v10463
      %v10466 = vrot.slane %v9901, 2
      %v10467 = vsel %vm10367, %v10466, %v10465
      %v10468 = vrot.slane %v9902, 1
      %v10469 = vsel %vm10370, %v10468, %v10467
      %v10470 = vrot.slane %v9904, 7
      %v10471 = vsel %vm10352, %v10470, %v9903
      %v10472 = vrot.slane %v9905, 6
      %v10473 = vsel %vm10355, %v10472, %v10471
      %v10474 = vrot.slane %v9906, 5
      %v10475 = vsel %vm10358, %v10474, %v10473
      %v10476 = vrot.slane %v9907, 4
      %v10477 = vsel %vm10361, %v10476, %v10475
      %v10478 = vrot.slane %v9908, 3
      %v10479 = vsel %vm10364, %v10478, %v10477
      %v10480 = vrot.slane %v9909, 2
      %v10481 = vsel %vm10367, %v10480, %v10479
      %v10482 = vrot.slane %v9910, 1
      %v10483 = vsel %vm10370, %v10482, %v10481
      %v10484 = vrot.slane %v9912, 7
      %v10485 = vsel %vm10352, %v10484, %v9911
      %v10486 = vrot.slane %v9913, 6
      %v10487 = vsel %vm10355, %v10486, %v10485
      %v10488 = vrot.slane %v9914, 5
      %v10489 = vsel %vm10358, %v10488, %v10487
      %v10490 = vrot.slane %v9915, 4
      %v10491 = vsel %vm10361, %v10490, %v10489
      %v10492 = vrot.slane %v9916, 3
      %v10493 = vsel %vm10364, %v10492, %v10491
      %v10494 = vrot.slane %v9917, 2
      %v10495 = vsel %vm10367, %v10494, %v10493
      %v10496 = vrot.slane %v9918, 1
      %v10497 = vsel %vm10370, %v10496, %v10495
      %v10498 = vrot.slane %v9920, 7
      %v10499 = vsel %vm10352, %v10498, %v9919
      %v10500 = vrot.slane %v9921, 6
      %v10501 = vsel %vm10355, %v10500, %v10499
      %v10502 = vrot.slane %v9922, 5
      %v10503 = vsel %vm10358, %v10502, %v10501
      %v10504 = vrot.slane %v9923, 4
      %v10505 = vsel %vm10361, %v10504, %v10503
      %v10506 = vrot.slane %v9924, 3
      %v10507 = vsel %vm10364, %v10506, %v10505
      %v10508 = vrot.slane %v9925, 2
      %v10509 = vsel %vm10367, %v10508, %v10507
      %v10510 = vrot.slane %v9926, 1
      %v10511 = vsel %vm10370, %v10510, %v10509
      %v10512 = vrot.slane %v9928, 7
      %v10513 = vsel %vm10352, %v10512, %v9927
      %v10514 = vrot.slane %v9929, 6
      %v10515 = vsel %vm10355, %v10514, %v10513
      %v10516 = vrot.slane %v9930, 5
      %v10517 = vsel %vm10358, %v10516, %v10515
      %v10518 = vrot.slane %v9931, 4
      %v10519 = vsel %vm10361, %v10518, %v10517
      %v10520 = vrot.slane %v9932, 3
      %v10521 = vsel %vm10364, %v10520, %v10519
      %v10522 = vrot.slane %v9933, 2
      %v10523 = vsel %vm10367, %v10522, %v10521
      %v10524 = vrot.slane %v9934, 1
      %v10525 = vsel %vm10370, %v10524, %v10523
      %v10526 = vrot.slane %v9936, 7
      %v10527 = vsel %vm10352, %v10526, %v9935
      %v10528 = vrot.slane %v9937, 6
      %v10529 = vsel %vm10355, %v10528, %v10527
      %v10530 = vrot.slane %v9938, 5
      %v10531 = vsel %vm10358, %v10530, %v10529
      %v10532 = vrot.slane %v9939, 4
      %v10533 = vsel %vm10361, %v10532, %v10531
      %v10534 = vrot.slane %v9940, 3
      %v10535 = vsel %vm10364, %v10534, %v10533
      %v10536 = vrot.slane %v9941, 2
      %v10537 = vsel %vm10367, %v10536, %v10535
      %v10538 = vrot.slane %v9942, 1
      %v10539 = vsel %vm10370, %v10538, %v10537
      %v10540 = vrot.slane %v9944, 7
      %v10541 = vsel %vm10352, %v10540, %v9943
      %v10542 = vrot.slane %v9945, 6
      %v10543 = vsel %vm10355, %v10542, %v10541
      %v10544 = vrot.slane %v9946, 5
      %v10545 = vsel %vm10358, %v10544, %v10543
      %v10546 = vrot.slane %v9947, 4
      %v10547 = vsel %vm10361, %v10546, %v10545
      %v10548 = vrot.slane %v9948, 3
      %v10549 = vsel %vm10364, %v10548, %v10547
      %v10550 = vrot.slane %v9949, 2
      %v10551 = vsel %vm10367, %v10550, %v10549
      %v10552 = vrot.slane %v9950, 1
      %v10553 = vsel %vm10370, %v10552, %v10551
      %v10554 = vrot.slane %v9952, 7
      %v10555 = vsel %vm10352, %v10554, %v9951
      %v10556 = vrot.slane %v9953, 6
      %v10557 = vsel %vm10355, %v10556, %v10555
      %v10558 = vrot.slane %v9954, 5
      %v10559 = vsel %vm10358, %v10558, %v10557
      %v10560 = vrot.slane %v9955, 4
      %v10561 = vsel %vm10361, %v10560, %v10559
      %v10562 = vrot.slane %v9956, 3
      %v10563 = vsel %vm10364, %v10562, %v10561
      %v10564 = vrot.slane %v9957, 2
      %v10565 = vsel %vm10367, %v10564, %v10563
      %v10566 = vrot.slane %v9958, 1
      %v10567 = vsel %vm10370, %v10566, %v10565
      %v10568 = vrot.slane %v9960, 7
      %v10569 = vsel %vm10352, %v10568, %v9959
      %v10570 = vrot.slane %v9961, 6
      %v10571 = vsel %vm10355, %v10570, %v10569
      %v10572 = vrot.slane %v9962, 5
      %v10573 = vsel %vm10358, %v10572, %v10571
      %v10574 = vrot.slane %v9963, 4
      %v10575 = vsel %vm10361, %v10574, %v10573
      %v10576 = vrot.slane %v9964, 3
      %v10577 = vsel %vm10364, %v10576, %v10575
      %v10578 = vrot.slane %v9965, 2
      %v10579 = vsel %vm10367, %v10578, %v10577
      %v10580 = vrot.slane %v9966, 1
      %v10581 = vsel %vm10370, %v10580, %v10579
      %v10582 = vrot.slane %v9968, 7
      %v10583 = vsel %vm10352, %v10582, %v9967
      %v10584 = vrot.slane %v9969, 6
      %v10585 = vsel %vm10355, %v10584, %v10583
      %v10586 = vrot.slane %v9970, 5
      %v10587 = vsel %vm10358, %v10586, %v10585
      %v10588 = vrot.slane %v9971, 4
      %v10589 = vsel %vm10361, %v10588, %v10587
      %v10590 = vrot.slane %v9972, 3
      %v10591 = vsel %vm10364, %v10590, %v10589
      %v10592 = vrot.slane %v9973, 2
      %v10593 = vsel %vm10367, %v10592, %v10591
      %v10594 = vrot.slane %v9974, 1
      %v10595 = vsel %vm10370, %v10594, %v10593
      %v10596 = vrot.slane %v9976, 7
      %v10597 = vsel %vm10352, %v10596, %v9975
      %v10598 = vrot.slane %v9977, 6
      %v10599 = vsel %vm10355, %v10598, %v10597
      %v10600 = vrot.slane %v9978, 5
      %v10601 = vsel %vm10358, %v10600, %v10599
      %v10602 = vrot.slane %v9979, 4
      %v10603 = vsel %vm10361, %v10602, %v10601
      %v10604 = vrot.slane %v9980, 3
      %v10605 = vsel %vm10364, %v10604, %v10603
      %v10606 = vrot.slane %v9981, 2
      %v10607 = vsel %vm10367, %v10606, %v10605
      %v10608 = vrot.slane %v9982, 1
      %v10609 = vsel %vm10370, %v10608, %v10607
      %v10610 = vrot.slane %v9984, 7
      %v10611 = vsel %vm10352, %v10610, %v9983
      %v10612 = vrot.slane %v9985, 6
      %v10613 = vsel %vm10355, %v10612, %v10611
      %v10614 = vrot.slane %v9986, 5
      %v10615 = vsel %vm10358, %v10614, %v10613
      %v10616 = vrot.slane %v9987, 4
      %v10617 = vsel %vm10361, %v10616, %v10615
      %v10618 = vrot.slane %v9988, 3
      %v10619 = vsel %vm10364, %v10618, %v10617
      %v10620 = vrot.slane %v9989, 2
      %v10621 = vsel %vm10367, %v10620, %v10619
      %v10622 = vrot.slane %v9990, 1
      %v10623 = vsel %vm10370, %v10622, %v10621
      %v10624 = vrot.slane %v9992, 7
      %v10625 = vsel %vm10352, %v10624, %v9991
      %v10626 = vrot.slane %v9993, 6
      %v10627 = vsel %vm10355, %v10626, %v10625
      %v10628 = vrot.slane %v9994, 5
      %v10629 = vsel %vm10358, %v10628, %v10627
      %v10630 = vrot.slane %v9995, 4
      %v10631 = vsel %vm10361, %v10630, %v10629
      %v10632 = vrot.slane %v9996, 3
      %v10633 = vsel %vm10364, %v10632, %v10631
      %v10634 = vrot.slane %v9997, 2
      %v10635 = vsel %vm10367, %v10634, %v10633
      %v10636 = vrot.slane %v9998, 1
      %v10637 = vsel %vm10370, %v10636, %v10635
      %v10638 = vrot.slane %v10000, 7
      %v10639 = vsel %vm10352, %v10638, %v9999
      %v10640 = vrot.slane %v10001, 6
      %v10641 = vsel %vm10355, %v10640, %v10639
      %v10642 = vrot.slane %v10002, 5
      %v10643 = vsel %vm10358, %v10642, %v10641
      %v10644 = vrot.slane %v10003, 4
      %v10645 = vsel %vm10361, %v10644, %v10643
      %v10646 = vrot.slane %v10004, 3
      %v10647 = vsel %vm10364, %v10646, %v10645
      %v10648 = vrot.slane %v10005, 2
      %v10649 = vsel %vm10367, %v10648, %v10647
      %v10650 = vrot.slane %v10006, 1
      %v10651 = vsel %vm10370, %v10650, %v10649
      %v10652 = vrot.slane %v10008, 7
      %v10653 = vsel %vm10352, %v10652, %v10007
      %v10654 = vrot.slane %v10009, 6
      %v10655 = vsel %vm10355, %v10654, %v10653
      %v10656 = vrot.slane %v10010, 5
      %v10657 = vsel %vm10358, %v10656, %v10655
      %v10658 = vrot.slane %v10011, 4
      %v10659 = vsel %vm10361, %v10658, %v10657
      %v10660 = vrot.slane %v10012, 3
      %v10661 = vsel %vm10364, %v10660, %v10659
      %v10662 = vrot.slane %v10013, 2
      %v10663 = vsel %vm10367, %v10662, %v10661
      %v10664 = vrot.slane %v10014, 1
      %v10665 = vsel %vm10370, %v10664, %v10663
      %v10666 = vrot.slane %v10016, 7
      %v10667 = vsel %vm10352, %v10666, %v10015
      %v10668 = vrot.slane %v10017, 6
      %v10669 = vsel %vm10355, %v10668, %v10667
      %v10670 = vrot.slane %v10018, 5
      %v10671 = vsel %vm10358, %v10670, %v10669
      %v10672 = vrot.slane %v10019, 4
      %v10673 = vsel %vm10361, %v10672, %v10671
      %v10674 = vrot.slane %v10020, 3
      %v10675 = vsel %vm10364, %v10674, %v10673
      %v10676 = vrot.slane %v10021, 2
      %v10677 = vsel %vm10367, %v10676, %v10675
      %v10678 = vrot.slane %v10022, 1
      %v10679 = vsel %vm10370, %v10678, %v10677
      %v10680 = vrot.slane %v10024, 7
      %v10681 = vsel %vm10352, %v10680, %v10023
      %v10682 = vrot.slane %v10025, 6
      %v10683 = vsel %vm10355, %v10682, %v10681
      %v10684 = vrot.slane %v10026, 5
      %v10685 = vsel %vm10358, %v10684, %v10683
      %v10686 = vrot.slane %v10027, 4
      %v10687 = vsel %vm10361, %v10686, %v10685
      %v10688 = vrot.slane %v10028, 3
      %v10689 = vsel %vm10364, %v10688, %v10687
      %v10690 = vrot.slane %v10029, 2
      %v10691 = vsel %vm10367, %v10690, %v10689
      %v10692 = vrot.slane %v10030, 1
      %v10693 = vsel %vm10370, %v10692, %v10691
      %v10694 = vrot.slane %v10032, 7
      %v10695 = vsel %vm10352, %v10694, %v10031
      %v10696 = vrot.slane %v10033, 6
      %v10697 = vsel %vm10355, %v10696, %v10695
      %v10698 = vrot.slane %v10034, 5
      %v10699 = vsel %vm10358, %v10698, %v10697
      %v10700 = vrot.slane %v10035, 4
      %v10701 = vsel %vm10361, %v10700, %v10699
      %v10702 = vrot.slane %v10036, 3
      %v10703 = vsel %vm10364, %v10702, %v10701
      %v10704 = vrot.slane %v10037, 2
      %v10705 = vsel %vm10367, %v10704, %v10703
      %v10706 = vrot.slane %v10038, 1
      %v10707 = vsel %vm10370, %v10706, %v10705
      %v10708 = vrot.slane %v10040, 7
      %v10709 = vsel %vm10352, %v10708, %v10039
      %v10710 = vrot.slane %v10041, 6
      %v10711 = vsel %vm10355, %v10710, %v10709
      %v10712 = vrot.slane %v10042, 5
      %v10713 = vsel %vm10358, %v10712, %v10711
      %v10714 = vrot.slane %v10043, 4
      %v10715 = vsel %vm10361, %v10714, %v10713
      %v10716 = vrot.slane %v10044, 3
      %v10717 = vsel %vm10364, %v10716, %v10715
      %v10718 = vrot.slane %v10045, 2
      %v10719 = vsel %vm10367, %v10718, %v10717
      %v10720 = vrot.slane %v10046, 1
      %v10721 = vsel %vm10370, %v10720, %v10719
      %v10722 = vrot.slane %v10048, 7
      %v10723 = vsel %vm10352, %v10722, %v10047
      %v10724 = vrot.slane %v10049, 6
      %v10725 = vsel %vm10355, %v10724, %v10723
      %v10726 = vrot.slane %v10050, 5
      %v10727 = vsel %vm10358, %v10726, %v10725
      %v10728 = vrot.slane %v10051, 4
      %v10729 = vsel %vm10361, %v10728, %v10727
      %v10730 = vrot.slane %v10052, 3
      %v10731 = vsel %vm10364, %v10730, %v10729
      %v10732 = vrot.slane %v10053, 2
      %v10733 = vsel %vm10367, %v10732, %v10731
      %v10734 = vrot.slane %v10054, 1
      %v10735 = vsel %vm10370, %v10734, %v10733
      %v10736 = vrot.slane %v10056, 7
      %v10737 = vsel %vm10352, %v10736, %v10055
      %v10738 = vrot.slane %v10057, 6
      %v10739 = vsel %vm10355, %v10738, %v10737
      %v10740 = vrot.slane %v10058, 5
      %v10741 = vsel %vm10358, %v10740, %v10739
      %v10742 = vrot.slane %v10059, 4
      %v10743 = vsel %vm10361, %v10742, %v10741
      %v10744 = vrot.slane %v10060, 3
      %v10745 = vsel %vm10364, %v10744, %v10743
      %v10746 = vrot.slane %v10061, 2
      %v10747 = vsel %vm10367, %v10746, %v10745
      %v10748 = vrot.slane %v10062, 1
      %v10749 = vsel %vm10370, %v10748, %v10747
      %v10750 = vrot.slane %v10064, 7
      %v10751 = vsel %vm10352, %v10750, %v10063
      %v10752 = vrot.slane %v10065, 6
      %v10753 = vsel %vm10355, %v10752, %v10751
      %v10754 = vrot.slane %v10066, 5
      %v10755 = vsel %vm10358, %v10754, %v10753
      %v10756 = vrot.slane %v10067, 4
      %v10757 = vsel %vm10361, %v10756, %v10755
      %v10758 = vrot.slane %v10068, 3
      %v10759 = vsel %vm10364, %v10758, %v10757
      %v10760 = vrot.slane %v10069, 2
      %v10761 = vsel %vm10367, %v10760, %v10759
      %v10762 = vrot.slane %v10070, 1
      %v10763 = vsel %vm10370, %v10762, %v10761
      %v10764 = vrot.slane %v10072, 7
      %v10765 = vsel %vm10352, %v10764, %v10071
      %v10766 = vrot.slane %v10073, 6
      %v10767 = vsel %vm10355, %v10766, %v10765
      %v10768 = vrot.slane %v10074, 5
      %v10769 = vsel %vm10358, %v10768, %v10767
      %v10770 = vrot.slane %v10075, 4
      %v10771 = vsel %vm10361, %v10770, %v10769
      %v10772 = vrot.slane %v10076, 3
      %v10773 = vsel %vm10364, %v10772, %v10771
      %v10774 = vrot.slane %v10077, 2
      %v10775 = vsel %vm10367, %v10774, %v10773
      %v10776 = vrot.slane %v10078, 1
      %v10777 = vsel %vm10370, %v10776, %v10775
      %v10778 = vrot.slane %v10080, 7
      %v10779 = vsel %vm10352, %v10778, %v10079
      %v10780 = vrot.slane %v10081, 6
      %v10781 = vsel %vm10355, %v10780, %v10779
      %v10782 = vrot.slane %v10082, 5
      %v10783 = vsel %vm10358, %v10782, %v10781
      %v10784 = vrot.slane %v10083, 4
      %v10785 = vsel %vm10361, %v10784, %v10783
      %v10786 = vrot.slane %v10084, 3
      %v10787 = vsel %vm10364, %v10786, %v10785
      %v10788 = vrot.slane %v10085, 2
      %v10789 = vsel %vm10367, %v10788, %v10787
      %v10790 = vrot.slane %v10086, 1
      %v10791 = vsel %vm10370, %v10790, %v10789
      %v10792 = vrot.slane %v10088, 7
      %v10793 = vsel %vm10352, %v10792, %v10087
      %v10794 = vrot.slane %v10089, 6
      %v10795 = vsel %vm10355, %v10794, %v10793
      %v10796 = vrot.slane %v10090, 5
      %v10797 = vsel %vm10358, %v10796, %v10795
      %v10798 = vrot.slane %v10091, 4
      %v10799 = vsel %vm10361, %v10798, %v10797
      %v10800 = vrot.slane %v10092, 3
      %v10801 = vsel %vm10364, %v10800, %v10799
      %v10802 = vrot.slane %v10093, 2
      %v10803 = vsel %vm10367, %v10802, %v10801
      %v10804 = vrot.slane %v10094, 1
      %v10805 = vsel %vm10370, %v10804, %v10803
      %v10838 = vadd.f32 %v1597, %v10371
      %v10839 = vadd.f32 %v1598, %v10385
      %v10840 = vadd.f32 %v1599, %v10399
      %v10841 = vadd.f32 %v1600, %v10413
      %v10842 = vadd.f32 %v1601, %v10427
      %v10843 = vadd.f32 %v1602, %v10441
      %v10844 = vadd.f32 %v1603, %v10455
      %v10845 = vadd.f32 %v1604, %v10469
      %v10846 = vadd.f32 %v1605, %v10483
      %v10847 = vadd.f32 %v1606, %v10497
      %v10848 = vadd.f32 %v1607, %v10511
      %v10849 = vadd.f32 %v1608, %v10525
      %v10850 = vadd.f32 %v1609, %v10539
      %v10851 = vadd.f32 %v1610, %v10553
      %v10852 = vadd.f32 %v1611, %v10567
      %v10853 = vadd.f32 %v1612, %v10581
      %v10854 = vadd.f32 %v1613, %v10595
      %v10855 = vadd.f32 %v1614, %v10609
      %v10856 = vadd.f32 %v1615, %v10623
      %v10857 = vadd.f32 %v1616, %v10637
      %v10858 = vadd.f32 %v1617, %v10651
      %v10859 = vadd.f32 %v1618, %v10665
      %v10860 = vadd.f32 %v1619, %v10679
      %v10861 = vadd.f32 %v1620, %v10693
      %v10862 = vadd.f32 %v1621, %v10707
      %v10863 = vadd.f32 %v1622, %v10721
      %v10864 = vadd.f32 %v1623, %v10735
      %v10865 = vadd.f32 %v1624, %v10749
      %v10866 = vadd.f32 %v1625, %v10763
      %v10867 = vadd.f32 %v1626, %v10777
      %v10868 = vadd.f32 %v1627, %v10791
      %v10869 = vadd.f32 %v1628, %v10805
      %10870 = vst.msk [vmem:[%s332] sm:$0xff] %vm8040, %v10838
      %10871 = vst.msk [vmem:[%s332 + $0x8] sm:$0xff] %vm8040, %v10839
      %10872 = vst.msk [vmem:[%s332 + $0x10] sm:$0xff] %vm8040, %v10840
      %10873 = vst.msk [vmem:[%s332 + $0x18] sm:$0xff] %vm8040, %v10841
      %10874 = vst.msk [vmem:[%s332 + $0x20] sm:$0xff] %vm8040, %v10842
      %10875 = vst.msk [vmem:[%s332 + $0x28] sm:$0xff] %vm8040, %v10843
      %10876 = vst.msk [vmem:[%s332 + $0x30] sm:$0xff] %vm8040, %v10844
      %10877 = vst.msk [vmem:[%s332 + $0x38] sm:$0xff] %vm8040, %v10845
      %10878 = vst.msk [vmem:[%s332 + $0x40] sm:$0xff] %vm8040, %v10846
      %10879 = vst.msk [vmem:[%s332 + $0x48] sm:$0xff] %vm8040, %v10847
      %10880 = vst.msk [vmem:[%s332 + $0x50] sm:$0xff] %vm8040, %v10848
      %10881 = vst.msk [vmem:[%s332 + $0x58] sm:$0xff] %vm8040, %v10849
      %10882 = vst.msk [vmem:[%s332 + $0x60] sm:$0xff] %vm8040, %v10850
      %10883 = vst.msk [vmem:[%s332 + $0x68] sm:$0xff] %vm8040, %v10851
      %10884 = vst.msk [vmem:[%s332 + $0x70] sm:$0xff] %vm8040, %v10852
      %10885 = vst.msk [vmem:[%s332 + $0x78] sm:$0xff] %vm8040, %v10853
      %10886 = vst.msk [vmem:[%s332 + $0x80] sm:$0xff] %vm8040, %v10854
      %10887 = vst.msk [vmem:[%s332 + $0x88] sm:$0xff] %vm8040, %v10855
      %10888 = vst.msk [vmem:[%s332 + $0x90] sm:$0xff] %vm8040, %v10856
      %10889 = vst.msk [vmem:[%s332 + $0x98] sm:$0xff] %vm8040, %v10857
      %10890 = vst.msk [vmem:[%s332 + $0xa0] sm:$0xff] %vm8040, %v10858
      %10891 = vst.msk [vmem:[%s332 + $0xa8] sm:$0xff] %vm8040, %v10859
      %10892 = vst.msk [vmem:[%s332 + $0xb0] sm:$0xff] %vm8040, %v10860
      %10893 = vst.msk [vmem:[%s332 + $0xb8] sm:$0xff] %vm8040, %v10861
      %10894 = vst.msk [vmem:[%s332 + $0xc0] sm:$0xff] %vm8040, %v10862
      %10895 = vst.msk [vmem:[%s332 + $0xc8] sm:$0xff] %vm8040, %v10863
      %10896 = vst.msk [vmem:[%s332 + $0xd0] sm:$0xff] %vm8040, %v10864
      %10897 = vst.msk [vmem:[%s332 + $0xd8] sm:$0xff] %vm8040, %v10865
      %10898 = vst.msk [vmem:[%s332 + $0xe0] sm:$0xff] %vm8040, %v10866
      %10899 = vst.msk [vmem:[%s332 + $0xe8] sm:$0xff] %vm8040, %v10867
      %10900 = vst.msk [vmem:[%s332 + $0xf0] sm:$0xff] %vm8040, %v10868
      %10901 = vst.msk [vmem:[%s332 + $0xf8] sm:$0xff] %vm8040, %v10869
      %p10902 = scmp.lt.s32.totalorder %s20, 1
      %s10903 = scalar_select %p10902, %s20, 1
      %s10904 = smul.addr %s10903, 32
      %s10905 = smul.addr %s10904, 8
      %s10906 = scalar_lea.vmem %s9, %s10905
      // Predicated region
      $region57: #{tpu_custom_call.1} parent=55 // pred_check
        %p10907 = pneg %p232
      $region58: #{tpu_custom_call.1} parent=55 // pred_check_branch
        %10909 = sbr.rel (%p10907) target = $region60
      $region59: #{tpu_custom_call.1} parent=55 // pred_region
        _
      $region60: #{tpu_custom_call.1} parent=55 // pred_fallthru
        _
    $region56: #{tpu_custom_call.1} parent=5 // pred_fallthru
      _
    %p10910 = scmp.le.s32.totalorder 2, %s15
    // Predicated region
    $region61: #{tpu_custom_call.1} parent=5 // pred_check
      %p10911 = pneg %p10910
    $region62: #{tpu_custom_call.1} parent=5 // pred_check_branch
      %10913 = sbr.rel (%p10911) target = $region64
    $region63: #{tpu_custom_call.1} parent=5 // pred_region
      %s10914 = ssub.s32 %s15, 2
      // Predicated region
      $region65: #{tpu_custom_call.1} parent=63 // pred_check
        %p10915 = pneg %p238
      $region66: #{tpu_custom_call.1} parent=63 // pred_check_branch
        %10917 = sbr.rel (%p10915) target = $region68
      $region67: #{tpu_custom_call.1} parent=63 // pred_region
        %p10918 = scmp.lt.s32.totalorder %s21, 1
        %s10919 = scalar_select %p10918, %s21, 1
        %s10920 = smul.addr %s10919, 32
        %s10921 = smul.addr %s10920, 8
        %s10922 = scalar_lea.vmem %s9, %s10921
      $region68: #{tpu_custom_call.1} parent=63 // pred_fallthru
        _
    $region64: #{tpu_custom_call.1} parent=5 // pred_fallthru
      _
  $region6: #{tpu_custom_call.1} parent=0 // loop_footer
    %s19 = sadd.s32 1, %s15
  $region7: #{tpu_custom_call.1} parent=0 // loop_footer_branch
    %14 = sbr.rel target = $region3
  $region8: #{tpu_custom_call.1} parent=0 // loop_exit
    _

</llo_original>
